<compile_context>
chip_gen: v6e
topology: v6e:2x2x1
jax: 0.10.0
libtpu: 0.0.40
codegen_flags: <defaults>
</compile_context>

<pallas_src>
import jax
import jax.numpy as jnp
from jax import lax
from jax.experimental import pallas as pl
from jax.experimental.pallas import tpu as pltpu


# --------------------------------------------------------------------------- #
# Helpers
# --------------------------------------------------------------------------- #
def _padding(kernel_size):
    if kernel_size % 2 == 0:
        pad_l = (kernel_size - 2) // 2 + 1
        pad_r = kernel_size // 2 + 1
    else:
        pad_l = pad_r = (kernel_size - 1) // 2 + 1
    return pad_l, pad_r


def _round_up(x, m):
    return ((x + m - 1) // m) * m


def _vmem_capacity_bytes():
    """Per-core VMEM capacity; conservative 64 MiB (v7x) if query unavailable."""
    try:
        info = pltpu.get_tpu_info()
        cap = getattr(info, "vmem_capacity_bytes", None)
        if cap:
            return int(cap)
    except Exception:
        pass
    return 64 * 1024 * 1024


def _choose_batch_tile(B, Lp, C, H, param_bytes, budget_bytes):
    """Largest divisor of B that fits the VMEM budget; grid kept >= 2 if B >= 2."""
    max_bt = 1 if B < 2 else B // 2
    best = 1
    for bt in range(1, max_bt + 1):
        if B % bt:
            continue
        wl = _round_up(bt * Lp, 128)
        # Rough per-step VMEM: double-buffered xe/xo inputs + (2C) output,
        # residual/mask slabs and per-branch conv working set, + weights.
        est = wl * 4 * (18 * C + 6 * H) + param_bytes + 2 * wl * 4
        if est <= budget_bytes:
            best = bt
    return best


_ROLL_LIKE_JNP = None


def _detect_roll_convention():
    """True if pltpu.roll matches jnp.roll (out[i] = in[(i - shift) % n]).

    A tiny one-off probe kernel guards the conv/repad shifts against any
    shift-sign convention drift across JAX versions.
    """
    global _ROLL_LIKE_JNP
    if _ROLL_LIKE_JNP is None:
        try:
            def probe(x_ref, o_ref):
                o_ref[...] = pltpu.roll(x_ref[...], 1, axis=1)

            x = jnp.arange(8 * 128, dtype=jnp.float32).reshape(8, 128)
            y = pl.pallas_call(
                probe, out_shape=jax.ShapeDtypeStruct((8, 128), jnp.float32))(x)
            _ROLL_LIKE_JNP = bool(y[0, 1] == x[0, 0])
        except Exception:
            _ROLL_LIKE_JNP = True  # jnp.roll convention (the documented one)
    return _ROLL_LIKE_JNP


# --------------------------------------------------------------------------- #
# Kernel
# --------------------------------------------------------------------------- #
def _make_interactor_kernel(C, H, L, Lp, pad_l, pad_r, K1, WL, INN,
                            cdtype, roll_like_jnp):
    K2 = 3

    def lshift(x, s):
        # out[:, j] = x[:, (j + s) % WL]
        if s == 0:
            return x
        return pltpu.roll(x, (WL - s) if roll_like_jnp else s, axis=1)

    def rshift(x, s):
        # out[:, j] = x[:, (j - s) % WL]
        if s == 0:
            return x
        return pltpu.roll(x, s if roll_like_jnp else (WL - s), axis=1)

    def conv(x, w_ref, b, K):
        # x: (Cin, WL) f32.  w_ref: (K, Cout, Cin) cdtype.  b: (Cout, 1) f32.
        # Conv1d as K accumulated matmuls over lane-shifted whole-slab views.
        # Circular wrap only pollutes columns past every segment's valid range.
        acc = None
        for k in range(K):
            v = lshift(x, k).astype(cdtype)
            pk = jnp.dot(w_ref[k], v, preferred_element_type=jnp.float32)
            acc = pk if acc is None else acc + pk
        return acc + b

    def branch(zp, w1_ref, b1_ref, w2_ref, b2_ref):
        # ReplicationPad1d is already materialized in zp's segment layout.
        h = conv(zp, w1_ref, b1_ref[...], K1)            # (H, WL) f32
        h = jnp.where(h >= 0.0, h, 0.01 * h)             # LeakyReLU(0.01)
        # nn.Dropout(p): identity in eval mode.
        y = conv(h, w2_ref, b2_ref[...], K2)             # (C, WL) f32
        y = jnp.tanh(y)
        return rshift(y, pad_l)                          # align output to core cols

    def kernel(xe_ref, xo_ref, pos_ref,
               phi_w1, phi_b1, phi_w2, phi_b2,
               psi_w1, psi_b1, psi_w2, psi_b2,
               u_w1, u_b1, u_w2, u_b2,
               p_w1, p_b1, p_w2, p_b2,
               out_ref):
        xe = xe_ref[0]                                   # (C, WL) f32, padded layout
        xo = xo_ref[0]
        pos = jnp.broadcast_to(pos_ref[...], (C, WL))    # within-segment position
        left_m = pos < pad_l
        right_m = pos >= pad_l + L

        def repad(z):
            # Rebuild replication pads of z (valid at core columns) so it can
            # feed another padded-conv branch: propagate first / last core value
            # into the pad columns with pad_l / pad_r roll+selects.
            for _ in range(pad_l):
                z = jnp.where(left_m, lshift(z, 1), z)
            for _ in range(pad_r):
                z = jnp.where(right_m, rshift(z, 1), z)
            return z

        if INN:
            d = xo * jnp.exp(branch(xe, phi_w1, phi_b1, phi_w2, phi_b2))
            c = xe * jnp.exp(branch(xo, psi_w1, psi_b1, psi_w2, psi_b2))
            d = repad(d)
            c = repad(c)
            e_upd = c + branch(d, u_w1, u_b1, u_w2, u_b2)
            o_upd = d - branch(c, p_w1, p_b1, p_w2, p_b2)
        else:
            d = repad(xo - branch(xe, p_w1, p_b1, p_w2, p_b2))
            c = xe + branch(d, u_w1, u_b1, u_w2, u_b2)
            e_upd, o_upd = c, d

        # Pack both outputs along sublanes -> single unmasked full-tile store.
        out_ref[0] = jnp.concatenate([e_upd, o_upd], axis=0).astype(out_ref.dtype)

    return kernel


# --------------------------------------------------------------------------- #
# Parameters (synthetic, PyTorch Conv1d layouts)
# --------------------------------------------------------------------------- #
def init_params(key, in_planes, kernel_size, hidden_size):
    """w1 (H, C, K1), b1 (H,), w2 (C, H, 3), b2 (C,) for phi/psi/U/P."""
    C = in_planes
    H = int(C * hidden_size)

    def uinit(k, shape, fan_in):
        bound = 1.0 / (fan_in ** 0.5)
        return jax.random.uniform(k, shape, jnp.float32, -bound, bound)

    names = ("phi", "psi", "U", "P")
    keys = jax.random.split(key, len(names) * 4)
    params = {}
    i = 0
    for n in names:
        w1 = uinit(keys[i], (H, C, kernel_size), C * kernel_size); i += 1
        b1 = uinit(keys[i], (H,), C * kernel_size); i += 1
        w2 = uinit(keys[i], (C, H, 3), H * 3); i += 1
        b2 = uinit(keys[i], (C,), H * 3); i += 1
        params[n] = (w1, b1, w2, b2)
    return params


# --------------------------------------------------------------------------- #
# Forward wrapper
# --------------------------------------------------------------------------- #
def interactor_level_forward(x, params, *, kernel_size=5, hidden_size=1,
                             INN=True, compute_dtype=jnp.bfloat16):
    """x: (B, T, C) -> (x_even_update, x_odd_update), each (B, C, seq)."""
    B, T, C = x.shape
    H = int(C * hidden_size)
    x = x.astype(jnp.float32)

    # ---- Splitting (matches torch Splitting) ----
    x_even = x[:, ::2, :]
    x_odd = x[:, 1::2, :]
    even_len, odd_len = x_even.shape[1], x_odd.shape[1]
    flag = 0
    if odd_len < even_len:
        pad = even_len - odd_len
        x_odd = jnp.concatenate(
            [x_odd, jnp.broadcast_to(x_odd[:, -1:, :], (B, pad, C))], axis=1)
        flag = 1
    elif even_len < odd_len:
        pad = odd_len - even_len
        x_even = jnp.concatenate(
            [x_even, jnp.broadcast_to(x_even[:, -1:, :], (B, pad, C))], axis=1)
        flag = 2
    L = x_even.shape[1]

    pad_l, pad_r = _padding(kernel_size)
    K1 = kernel_size
    Lp = L + pad_l + pad_r
    assert Lp - K1 + 1 == L + 2  # conv1 output length (== conv2 input length)

    # ---- Repack params: w1 -> (K1, H, C), w2 -> (3, C, H), biases 2-D f32 ----
    flat = []
    for name in ("phi", "psi", "U", "P"):
        w1, b1, w2, b2 = params[name]
        flat += [jnp.transpose(w1, (2, 0, 1)).astype(compute_dtype),
                 b1.reshape(H, 1).astype(jnp.float32),
                 jnp.transpose(w2, (2, 0, 1)).astype(compute_dtype),
                 b2.reshape(C, 1).astype(jnp.float32)]
    param_bytes = sum(int(p.size) * p.dtype.itemsize for p in flat)

    # ---- VMEM-driven tiling ----
    vmem_cap = _vmem_capacity_bytes()
    vmem_limit = int(vmem_cap * 0.75)
    Bt = _choose_batch_tile(B, Lp, C, H, param_bytes, int(vmem_limit * 0.6))
    nb = B // Bt
    WL = _round_up(Bt * Lp, 128)

    # ---- Lane-dense padded packing: (B, L, C) -> (nb, C, WL), pitch Lp ----
    def pack(z_blc):
        z = jnp.transpose(z_blc, (0, 2, 1))                              # (B, C, L)
        z = jnp.pad(z, ((0, 0), (0, 0), (pad_l, pad_r)), mode="edge")    # (B, C, Lp)
        z = z.reshape(nb, Bt, C, Lp).transpose(0, 2, 1, 3).reshape(nb, C, Bt * Lp)
        if WL > Bt * Lp:
            z = jnp.pad(z, ((0, 0), (0, 0), (0, WL - Bt * Lp)))
        return z

    xe_p = pack(x_even)
    xo_p = pack(x_odd)

    pos = jnp.tile(jnp.arange(Lp, dtype=jnp.int32), Bt)
    if WL > Bt * Lp:
        pos = jnp.concatenate(
            [pos, jnp.full((WL - Bt * Lp,), pad_l, jnp.int32)])
    pos = pos.reshape(1, WL)

    roll_like_jnp = _detect_roll_convention()
    kernel = _make_interactor_kernel(C, H, L, Lp, pad_l, pad_r, K1, WL, INN,
                                     compute_dtype, roll_like_jnp)

    data_spec = pl.BlockSpec((1, C, WL), lambda i: (i, 0, 0))
    out_spec = pl.BlockSpec((1, 2 * C, WL), lambda i: (i, 0, 0))

    n_br = 4 if INN else 2
    flops = n_br * B * (2 * H * C * K1 * (L + 2) + 2 * C * H * 3 * L)
    transcend = n_br * B * C * L + (2 * B * C * L if INN else 0)
    bytes_acc = int(2 * xe_p.size * 4 + nb * 2 * C * WL * 4 + param_bytes)

    def run(single_buffer_params):
        def const_spec(shape):
            idx = (lambda i, _n=len(shape): (0,) * _n)
            if single_buffer_params:
                # Constant index map -> never re-fetched; 1 buffer saves VMEM.
                return pl.BlockSpec(shape, idx, pipeline_mode=pl.Buffered(1))
            return pl.BlockSpec(shape, idx)

        in_specs = ([data_spec, data_spec, const_spec((1, WL))]
                    + [const_spec(tuple(p.shape)) for p in flat])
        return pl.pallas_call(
            kernel,
            out_shape=jax.ShapeDtypeStruct((nb, 2 * C, WL), jnp.float32),
            grid_spec=pltpu.PrefetchScalarGridSpec(
                num_scalar_prefetch=0,
                grid=(nb,),
                in_specs=in_specs,
                out_specs=out_spec,
            ),
            compiler_params=pltpu.CompilerParams(
                dimension_semantics=("parallel",),
                vmem_limit_bytes=vmem_limit,
            ),
            cost_estimate=pl.CostEstimate(
                flops=int(flops),
                transcendentals=int(transcend),
                bytes_accessed=bytes_acc,
            ),
        )(xe_p, xo_p, pos, *flat)

    try:
        out = run(True)            # single-buffered weight/bias blocks
    except Exception:
        out = run(False)           # fallback: default double-buffered blocks

    # ---- Unpack (nb, 2C, WL) -> two (B, C, L) arrays (torch output layout) ----
    out = out[:, :, :Bt * Lp].reshape(nb, 2, C, Bt, Lp)[..., pad_l:pad_l + L]
    out = jnp.transpose(out, (1, 0, 3, 2, 4)).reshape(2, B, C, L)
    out_e, out_o = out[0], out[1]

    if INN:
        if flag == 1:
            out_o = out_o[:, :, :-1]
        elif flag == 2:
            out_e = out_e[:, :, :-1]
    # Non-INN path intentionally keeps the replicated extra step (matches torch).
    return out_e, out_o


# --------------------------------------------------------------------------- #
# Pure-JAX reference of the PyTorch module (for validation)
# --------------------------------------------------------------------------- #
def _reference_forward(x, params, *, kernel_size=5, hidden_size=1, INN=True):
    B, T, C = x.shape
    x = x.astype(jnp.float32)
    x_even = x[:, ::2, :]
    x_odd = x[:, 1::2, :]
    even_len, odd_len = x_even.shape[1], x_odd.shape[1]
    flag = 0
    if odd_len < even_len:
        pad = even_len - odd_len
        x_odd = jnp.concatenate(
            [x_odd, jnp.broadcast_to(x_odd[:, -1:, :], (B, pad, C))], axis=1)
        flag = 1
    elif even_len < odd_len:
        pad = odd_len - even_len
        x_even = jnp.concatenate(
            [x_even, jnp.broadcast_to(x_even[:, -1:, :], (B, pad, C))], axis=1)
        flag = 2
    xe = jnp.transpose(x_even, (0, 2, 1))   # (B, C, L)
    xo = jnp.transpose(x_odd, (0, 2, 1))
    pad_l, pad_r = _padding(kernel_size)
    K1, K2 = kernel_size, 3
    hp = lax.Precision.HIGHEST

    def seq(z, prm):
        w1, b1, w2, b2 = prm
        zp = jnp.concatenate(
            [jnp.repeat(z[:, :, :1], pad_l, axis=2), z,
             jnp.repeat(z[:, :, -1:], pad_r, axis=2)], axis=2)
        L1 = zp.shape[2] - K1 + 1
        u = jnp.stack([zp[:, :, t:t + K1] for t in range(L1)], axis=2)
        h = jnp.einsum('bclk,hck->bhl', u, w1, precision=hp) + b1[None, :, None]
        h = jnp.where(h >= 0, h, 0.01 * h)
        L2 = L1 - K2 + 1
        v = jnp.stack([h[:, :, t:t + K2] for t in range(L2)], axis=2)
        y = jnp.einsum('bhlk,chk->bcl', v, w2, precision=hp) + b2[None, :, None]
        return jnp.tanh(y)

    if INN:
        d = xo * jnp.exp(seq(xe, params["phi"]))
        c = xe * jnp.exp(seq(xo, params["psi"]))
        e_upd = c + seq(d, params["U"])
        o_upd = d - seq(c, params["P"])
        if flag == 1:
            o_upd = o_upd[:, :, :-1]
        elif flag == 2:
            e_upd = e_upd[:, :, :-1]
        return e_upd, o_upd
    else:
        d = xo - seq(xe, params["P"])
        c = xe + seq(d, params["U"])
        return c, d


# --------------------------------------------------------------------------- #
# Demo / self-check
# --------------------------------------------------------------------------- #
if __name__ == "__main__":
    # Small shapes consistent with the module: batch=2, seq=16, in_planes=4.
    B, T, C = 2, 16, 4
    kernel_size, dropout, groups, hidden_size = 5, 0.5, 1, 1
    # TODO(synk): grouped Conv1d (groups > 1) not implemented; groups=1 assumed.

    key = jax.random.PRNGKey(0)
    kx, kp = jax.random.split(key)
    x = jax.random.normal(kx, (B, T, C), jnp.float32)
    params = init_params(kp, C, kernel_size, hidden_size)

    ref_e, ref_o = _reference_forward(
        x, params, kernel_size=kernel_size, hidden_size=hidden_size, INN=True)

    # Default fast path: bf16 MXU operands, f32 accumulation / residual path.
    out_e, out_o = interactor_level_forward(
        x, params, kernel_size=kernel_size, hidden_size=hidden_size, INN=True)
    jax.block_until_ready((out_e, out_o))
    assert out_e.shape == (B, C, T // 2) and out_o.shape == (B, C, T // 2)
    assert bool(jnp.all(jnp.isfinite(out_e))) and bool(jnp.all(jnp.isfinite(out_o)))
    assert jnp.allclose(out_e, ref_e, atol=5e-2, rtol=5e-2), \
        float(jnp.max(jnp.abs(out_e - ref_e)))
    assert jnp.allclose(out_o, ref_o, atol=5e-2, rtol=5e-2), \
        float(jnp.max(jnp.abs(out_o - ref_o)))

    # Exact-parity path (f32 MXU operands).
    oe32, oo32 = interactor_level_forward(
        x, params, kernel_size=kernel_size, hidden_size=hidden_size, INN=True,
        compute_dtype=jnp.float32)
    jax.block_until_ready((oe32, oo32))
    assert jnp.allclose(oe32, ref_e, atol=5e-3, rtol=5e-3), \
        float(jnp.max(jnp.abs(oe32 - ref_e)))
    assert jnp.allclose(oo32, ref_o, atol=5e-3, rtol=5e-3), \
        float(jnp.max(jnp.abs(oo32 - ref_o)))

    # Non-INN (additive/subtractive) path, f32 parity.
    nie, nio = interactor_level_forward(
        x, params, kernel_size=kernel_size, hidden_size=hidden_size, INN=False,
        compute_dtype=jnp.float32)
    rne, rno = _reference_forward(
        x, params, kernel_size=kernel_size, hidden_size=hidden_size, INN=False)
    jax.block_until_ready((nie, nio))
    assert jnp.allclose(nie, rne, atol=5e-3, rtol=5e-3)
    assert jnp.allclose(nio, rno, atol=5e-3, rtol=5e-3)

    print("KERNEL_OK")
</pallas_src>

<mosaic_0001>
module attributes {stable_mosaic.version = 11 : i64} {
  func.func @probe(%arg0: memref<8x128xf32, #tpu.memory_space<vmem>>, %arg1: memref<8x128xf32, #tpu.memory_space<vmem>>) attributes {dimension_semantics = [], scalar_prefetch = 0 : i64, scratch_operands = 0 : i64, tpu.core_type = #tpu.core_type<tc>} {
    %c0 = arith.constant 0 : index
    %c0_0 = arith.constant 0 : index
    %0 = vector.load %arg0[%c0, %c0_0] : memref<8x128xf32, #tpu.memory_space<vmem>>, vector<8x128xf32>
    %c1_i32 = arith.constant 1 : i32
    %1 = tpu.dynamic_rotate %0 by %c1_i32 dim 1 : vector<8x128xf32>, i32 -> vector<8x128xf32>
    %c0_1 = arith.constant 0 : index
    %c0_2 = arith.constant 0 : index
    %2 = vector.load %arg1[%c0_1, %c0_2] : memref<8x128xf32, #tpu.memory_space<vmem>>, vector<8x128xf32>
    tpu.vector_store %arg1[%c0_1, %c0_2], %1 {strides = array<i32>} : memref<8x128xf32, #tpu.memory_space<vmem>>, vector<8x128xf32>,
    return
  }
}

module attributes {stable_mosaic.version = 11 : i64} {
  func.func @kernel(%arg0: i32, %arg1: memref<1x4x128xf32, #tpu.memory_space<vmem>>, %arg2: memref<1x4x128xf32, #tpu.memory_space<vmem>>, %arg3: memref<1x128xi32, #tpu.memory_space<vmem>>, %arg4: memref<5x4x4xbf16, #tpu.memory_space<vmem>>, %arg5: memref<4x1xf32, #tpu.memory_space<vmem>>, %arg6: memref<3x4x4xbf16, #tpu.memory_space<vmem>>, %arg7: memref<4x1xf32, #tpu.memory_space<vmem>>, %arg8: memref<5x4x4xbf16, #tpu.memory_space<vmem>>, %arg9: memref<4x1xf32, #tpu.memory_space<vmem>>, %arg10: memref<3x4x4xbf16, #tpu.memory_space<vmem>>, %arg11: memref<4x1xf32, #tpu.memory_space<vmem>>, %arg12: memref<5x4x4xbf16, #tpu.memory_space<vmem>>, %arg13: memref<4x1xf32, #tpu.memory_space<vmem>>, %arg14: memref<3x4x4xbf16, #tpu.memory_space<vmem>>, %arg15: memref<4x1xf32, #tpu.memory_space<vmem>>, %arg16: memref<5x4x4xbf16, #tpu.memory_space<vmem>>, %arg17: memref<4x1xf32, #tpu.memory_space<vmem>>, %arg18: memref<3x4x4xbf16, #tpu.memory_space<vmem>>, %arg19: memref<4x1xf32, #tpu.memory_space<vmem>>, %arg20: memref<1x8x128xf32, #tpu.memory_space<vmem>>) attributes {dimension_semantics = [#tpu.dimension_semantics<parallel>], iteration_bounds = array<i64: 2>, scalar_prefetch = 0 : i64, scratch_operands = 0 : i64, tpu.core_type = #tpu.core_type<tc>, window_params = [{transform_indices = @transform_0, window_bounds = array<i64: 1, 4, 128>}, {transform_indices = @transform_1, window_bounds = array<i64: 1, 4, 128>}, {pipeline_mode = #tpu.pipeline_mode<synchronous>, transform_indices = @transform_2, window_bounds = array<i64: 1, 128>}, {pipeline_mode = #tpu.pipeline_mode<synchronous>, transform_indices = @transform_3, window_bounds = array<i64: 5, 4, 4>}, {pipeline_mode = #tpu.pipeline_mode<synchronous>, transform_indices = @transform_4, window_bounds = array<i64: 4, 1>}, {pipeline_mode = #tpu.pipeline_mode<synchronous>, transform_indices = @transform_5, window_bounds = array<i64: 3, 4, 4>}, {pipeline_mode = #tpu.pipeline_mode<synchronous>, transform_indices = @transform_6, window_bounds = array<i64: 4, 1>}, {pipeline_mode = #tpu.pipeline_mode<synchronous>, transform_indices = @transform_7, window_bounds = array<i64: 5, 4, 4>}, {pipeline_mode = #tpu.pipeline_mode<synchronous>, transform_indices = @transform_8, window_bounds = array<i64: 4, 1>}, {pipeline_mode = #tpu.pipeline_mode<synchronous>, transform_indices = @transform_9, window_bounds = array<i64: 3, 4, 4>}, {pipeline_mode = #tpu.pipeline_mode<synchronous>, transform_indices = @transform_10, window_bounds = array<i64: 4, 1>}, {pipeline_mode = #tpu.pipeline_mode<synchronous>, transform_indices = @transform_11, window_bounds = array<i64: 5, 4, 4>}, {pipeline_mode = #tpu.pipeline_mode<synchronous>, transform_indices = @transform_12, window_bounds = array<i64: 4, 1>}, {pipeline_mode = #tpu.pipeline_mode<synchronous>, transform_indices = @transform_13, window_bounds = array<i64: 3, 4, 4>}, {pipeline_mode = #tpu.pipeline_mode<synchronous>, transform_indices = @transform_14, window_bounds = array<i64: 4, 1>}, {pipeline_mode = #tpu.pipeline_mode<synchronous>, transform_indices = @transform_15, window_bounds = array<i64: 5, 4, 4>}, {pipeline_mode = #tpu.pipeline_mode<synchronous>, transform_indices = @transform_16, window_bounds = array<i64: 4, 1>}, {pipeline_mode = #tpu.pipeline_mode<synchronous>, transform_indices = @transform_17, window_bounds = array<i64: 3, 4, 4>}, {pipeline_mode = #tpu.pipeline_mode<synchronous>, transform_indices = @transform_18, window_bounds = array<i64: 4, 1>}, {transform_indices = @transform_19, window_bounds = array<i64: 1, 8, 128>}]} {
    %c0 = arith.constant 0 : index
    %c0_0 = arith.constant 0 : index
    %c0_1 = arith.constant 0 : index
    %0 = vector.load %arg1[%c0, %c0_0, %c0_1] : memref<1x4x128xf32, #tpu.memory_space<vmem>>, vector<1x4x128xf32>
    %1 = vector.shape_cast %0 : vector<1x4x128xf32> to vector<4x128xf32>
    %c0_2 = arith.constant 0 : index
    %c0_3 = arith.constant 0 : index
    %c0_4 = arith.constant 0 : index
    %2 = vector.load %arg2[%c0_2, %c0_3, %c0_4] : memref<1x4x128xf32, #tpu.memory_space<vmem>>, vector<1x4x128xf32>
    %3 = vector.shape_cast %2 : vector<1x4x128xf32> to vector<4x128xf32>
    %c0_5 = arith.constant 0 : index
    %c0_6 = arith.constant 0 : index
    %4 = vector.load %arg3[%c0_5, %c0_6] : memref<1x128xi32, #tpu.memory_space<vmem>>, vector<1x128xi32>
    %5 = vector.shape_cast %4 : vector<1x128xi32> to vector<1x128xi32>
    %6 = vector.broadcast %5 : vector<1x128xi32> to vector<4x128xi32>
    %c3_i32 = arith.constant 3 : i32
    %7 = vector.broadcast %c3_i32 : i32 to vector<4x128xi32>
    %8 = arith.cmpi slt, %6, %7 : vector<4x128xi32>
    %c11_i32 = arith.constant 11 : i32
    %9 = vector.broadcast %c11_i32 : i32 to vector<4x128xi32>
    %10 = arith.cmpi sge, %6, %9 : vector<4x128xi32>
    %c0_7 = arith.constant 0 : index
    %c0_8 = arith.constant 0 : index
    %11 = vector.load %arg5[%c0_7, %c0_8] : memref<4x1xf32, #tpu.memory_space<vmem>>, vector<4x1xf32>
    %12 = arith.truncf %1 : vector<4x128xf32> to vector<4x128xbf16>
    %c0_9 = arith.constant 0 : index
    %c0_10 = arith.constant 0 : index
    %c0_11 = arith.constant 0 : index
    %13 = vector.load %arg4[%c0_9, %c0_10, %c0_11] : memref<5x4x4xbf16, #tpu.memory_space<vmem>>, vector<1x4x4xbf16>
    %14 = vector.shape_cast %13 : vector<1x4x4xbf16> to vector<4x4xbf16>
    %cst = arith.constant dense<0.000000e+00> : vector<4x128xf32>
    %15 = tpu.matmul %14, %12, %cst {dimension_numbers = #tpu.dot_dimension_numbers<[1], [0], [0], [1], [0, 0, 1, 1], [], []>} : vector<4x4xbf16>, vector<4x128xbf16>, vector<4x128xf32> -> vector<4x128xf32>
    %c127_i32 = arith.constant 127 : i32
    %16 = tpu.dynamic_rotate %1 by %c127_i32 dim 1 : vector<4x128xf32>, i32 -> vector<4x128xf32>
    %17 = arith.truncf %16 : vector<4x128xf32> to vector<4x128xbf16>
    %c1 = arith.constant 1 : index
    %c0_12 = arith.constant 0 : index
    %c0_13 = arith.constant 0 : index
    %18 = vector.load %arg4[%c1, %c0_12, %c0_13] : memref<5x4x4xbf16, #tpu.memory_space<vmem>>, vector<1x4x4xbf16>
    %19 = vector.shape_cast %18 : vector<1x4x4xbf16> to vector<4x4xbf16>
    %cst_14 = arith.constant dense<0.000000e+00> : vector<4x128xf32>
    %20 = tpu.matmul %19, %17, %cst_14 {dimension_numbers = #tpu.dot_dimension_numbers<[1], [0], [0], [1], [0, 0, 1, 1], [], []>} : vector<4x4xbf16>, vector<4x128xbf16>, vector<4x128xf32> -> vector<4x128xf32>
    %21 = arith.addf %15, %20 : vector<4x128xf32>
    %c126_i32 = arith.constant 126 : i32
    %22 = tpu.dynamic_rotate %1 by %c126_i32 dim 1 : vector<4x128xf32>, i32 -> vector<4x128xf32>
    %23 = arith.truncf %22 : vector<4x128xf32> to vector<4x128xbf16>
    %c2 = arith.constant 2 : index
    %c0_15 = arith.constant 0 : index
    %c0_16 = arith.constant 0 : index
    %24 = vector.load %arg4[%c2, %c0_15, %c0_16] : memref<5x4x4xbf16, #tpu.memory_space<vmem>>, vector<1x4x4xbf16>
    %25 = vector.shape_cast %24 : vector<1x4x4xbf16> to vector<4x4xbf16>
    %cst_17 = arith.constant dense<0.000000e+00> : vector<4x128xf32>
    %26 = tpu.matmul %25, %23, %cst_17 {dimension_numbers = #tpu.dot_dimension_numbers<[1], [0], [0], [1], [0, 0, 1, 1], [], []>} : vector<4x4xbf16>, vector<4x128xbf16>, vector<4x128xf32> -> vector<4x128xf32>
    %27 = arith.addf %21, %26 : vector<4x128xf32>
    %c125_i32 = arith.constant 125 : i32
    %28 = tpu.dynamic_rotate %1 by %c125_i32 dim 1 : vector<4x128xf32>, i32 -> vector<4x128xf32>
    %29 = arith.truncf %28 : vector<4x128xf32> to vector<4x128xbf16>
    %c3 = arith.constant 3 : index
    %c0_18 = arith.constant 0 : index
    %c0_19 = arith.constant 0 : index
    %30 = vector.load %arg4[%c3, %c0_18, %c0_19] : memref<5x4x4xbf16, #tpu.memory_space<vmem>>, vector<1x4x4xbf16>
    %31 = vector.shape_cast %30 : vector<1x4x4xbf16> to vector<4x4xbf16>
    %cst_20 = arith.constant dense<0.000000e+00> : vector<4x128xf32>
    %32 = tpu.matmul %31, %29, %cst_20 {dimension_numbers = #tpu.dot_dimension_numbers<[1], [0], [0], [1], [0, 0, 1, 1], [], []>} : vector<4x4xbf16>, vector<4x128xbf16>, vector<4x128xf32> -> vector<4x128xf32>
    %33 = arith.addf %27, %32 : vector<4x128xf32>
    %c124_i32 = arith.constant 124 : i32
    %34 = tpu.dynamic_rotate %1 by %c124_i32 dim 1 : vector<4x128xf32>, i32 -> vector<4x128xf32>
    %35 = arith.truncf %34 : vector<4x128xf32> to vector<4x128xbf16>
    %c4 = arith.constant 4 : index
    %c0_21 = arith.constant 0 : index
    %c0_22 = arith.constant 0 : index
    %36 = vector.load %arg4[%c4, %c0_21, %c0_22] : memref<5x4x4xbf16, #tpu.memory_space<vmem>>, vector<1x4x4xbf16>
    %37 = vector.shape_cast %36 : vector<1x4x4xbf16> to vector<4x4xbf16>
    %cst_23 = arith.constant dense<0.000000e+00> : vector<4x128xf32>
    %38 = tpu.matmul %37, %35, %cst_23 {dimension_numbers = #tpu.dot_dimension_numbers<[1], [0], [0], [1], [0, 0, 1, 1], [], []>} : vector<4x4xbf16>, vector<4x128xbf16>, vector<4x128xf32> -> vector<4x128xf32>
    %39 = arith.addf %33, %38 : vector<4x128xf32>
    %40 = vector.broadcast %11 : vector<4x1xf32> to vector<4x128xf32>
    %41 = arith.addf %39, %40 : vector<4x128xf32>
    %cst_24 = arith.constant 0.000000e+00 : f32
    %42 = vector.broadcast %cst_24 : f32 to vector<4x128xf32>
    %43 = arith.cmpf oge, %41, %42 : vector<4x128xf32>
    %cst_25 = arith.constant 0.00999999977 : f32
    %44 = vector.broadcast %cst_25 : f32 to vector<4x128xf32>
    %45 = arith.mulf %44, %41 : vector<4x128xf32>
    %46 = arith.select %43, %41, %45 : vector<4x128xi1>, vector<4x128xf32>
    %c0_26 = arith.constant 0 : index
    %c0_27 = arith.constant 0 : index
    %47 = vector.load %arg7[%c0_26, %c0_27] : memref<4x1xf32, #tpu.memory_space<vmem>>, vector<4x1xf32>
    %48 = arith.truncf %46 : vector<4x128xf32> to vector<4x128xbf16>
    %c0_28 = arith.constant 0 : index
    %c0_29 = arith.constant 0 : index
    %c0_30 = arith.constant 0 : index
    %49 = vector.load %arg6[%c0_28, %c0_29, %c0_30] : memref<3x4x4xbf16, #tpu.memory_space<vmem>>, vector<1x4x4xbf16>
    %50 = vector.shape_cast %49 : vector<1x4x4xbf16> to vector<4x4xbf16>
    %cst_31 = arith.constant dense<0.000000e+00> : vector<4x128xf32>
    %51 = tpu.matmul %50, %48, %cst_31 {dimension_numbers = #tpu.dot_dimension_numbers<[1], [0], [0], [1], [0, 0, 1, 1], [], []>} : vector<4x4xbf16>, vector<4x128xbf16>, vector<4x128xf32> -> vector<4x128xf32>
    %c127_i32_32 = arith.constant 127 : i32
    %52 = tpu.dynamic_rotate %46 by %c127_i32_32 dim 1 : vector<4x128xf32>, i32 -> vector<4x128xf32>
    %53 = arith.truncf %52 : vector<4x128xf32> to vector<4x128xbf16>
    %c1_33 = arith.constant 1 : index
    %c0_34 = arith.constant 0 : index
    %c0_35 = arith.constant 0 : index
    %54 = vector.load %arg6[%c1_33, %c0_34, %c0_35] : memref<3x4x4xbf16, #tpu.memory_space<vmem>>, vector<1x4x4xbf16>
    %55 = vector.shape_cast %54 : vector<1x4x4xbf16> to vector<4x4xbf16>
    %cst_36 = arith.constant dense<0.000000e+00> : vector<4x128xf32>
    %56 = tpu.matmul %55, %53, %cst_36 {dimension_numbers = #tpu.dot_dimension_numbers<[1], [0], [0], [1], [0, 0, 1, 1], [], []>} : vector<4x4xbf16>, vector<4x128xbf16>, vector<4x128xf32> -> vector<4x128xf32>
    %57 = arith.addf %51, %56 : vector<4x128xf32>
    %c126_i32_37 = arith.constant 126 : i32
    %58 = tpu.dynamic_rotate %46 by %c126_i32_37 dim 1 : vector<4x128xf32>, i32 -> vector<4x128xf32>
    %59 = arith.truncf %58 : vector<4x128xf32> to vector<4x128xbf16>
    %c2_38 = arith.constant 2 : index
    %c0_39 = arith.constant 0 : index
    %c0_40 = arith.constant 0 : index
    %60 = vector.load %arg6[%c2_38, %c0_39, %c0_40] : memref<3x4x4xbf16, #tpu.memory_space<vmem>>, vector<1x4x4xbf16>
    %61 = vector.shape_cast %60 : vector<1x4x4xbf16> to vector<4x4xbf16>
    %cst_41 = arith.constant dense<0.000000e+00> : vector<4x128xf32>
    %62 = tpu.matmul %61, %59, %cst_41 {dimension_numbers = #tpu.dot_dimension_numbers<[1], [0], [0], [1], [0, 0, 1, 1], [], []>} : vector<4x4xbf16>, vector<4x128xbf16>, vector<4x128xf32> -> vector<4x128xf32>
    %63 = arith.addf %57, %62 : vector<4x128xf32>
    %64 = vector.broadcast %47 : vector<4x1xf32> to vector<4x128xf32>
    %65 = arith.addf %63, %64 : vector<4x128xf32>
    %66 = math.tanh %65 : vector<4x128xf32>
    %c3_i32_42 = arith.constant 3 : i32
    %67 = tpu.dynamic_rotate %66 by %c3_i32_42 dim 1 : vector<4x128xf32>, i32 -> vector<4x128xf32>
    %68 = math.exp %67 : vector<4x128xf32>
    %69 = arith.mulf %3, %68 : vector<4x128xf32>
    %c0_43 = arith.constant 0 : index
    %c0_44 = arith.constant 0 : index
    %70 = vector.load %arg9[%c0_43, %c0_44] : memref<4x1xf32, #tpu.memory_space<vmem>>, vector<4x1xf32>
    %71 = arith.truncf %3 : vector<4x128xf32> to vector<4x128xbf16>
    %c0_45 = arith.constant 0 : index
    %c0_46 = arith.constant 0 : index
    %c0_47 = arith.constant 0 : index
    %72 = vector.load %arg8[%c0_45, %c0_46, %c0_47] : memref<5x4x4xbf16, #tpu.memory_space<vmem>>, vector<1x4x4xbf16>
    %73 = vector.shape_cast %72 : vector<1x4x4xbf16> to vector<4x4xbf16>
    %cst_48 = arith.constant dense<0.000000e+00> : vector<4x128xf32>
    %74 = tpu.matmul %73, %71, %cst_48 {dimension_numbers = #tpu.dot_dimension_numbers<[1], [0], [0], [1], [0, 0, 1, 1], [], []>} : vector<4x4xbf16>, vector<4x128xbf16>, vector<4x128xf32> -> vector<4x128xf32>
    %c127_i32_49 = arith.constant 127 : i32
    %75 = tpu.dynamic_rotate %3 by %c127_i32_49 dim 1 : vector<4x128xf32>, i32 -> vector<4x128xf32>
    %76 = arith.truncf %75 : vector<4x128xf32> to vector<4x128xbf16>
    %c1_50 = arith.constant 1 : index
    %c0_51 = arith.constant 0 : index
    %c0_52 = arith.constant 0 : index
    %77 = vector.load %arg8[%c1_50, %c0_51, %c0_52] : memref<5x4x4xbf16, #tpu.memory_space<vmem>>, vector<1x4x4xbf16>
    %78 = vector.shape_cast %77 : vector<1x4x4xbf16> to vector<4x4xbf16>
    %cst_53 = arith.constant dense<0.000000e+00> : vector<4x128xf32>
    %79 = tpu.matmul %78, %76, %cst_53 {dimension_numbers = #tpu.dot_dimension_numbers<[1], [0], [0], [1], [0, 0, 1, 1], [], []>} : vector<4x4xbf16>, vector<4x128xbf16>, vector<4x128xf32> -> vector<4x128xf32>
    %80 = arith.addf %74, %79 : vector<4x128xf32>
    %c126_i32_54 = arith.constant 126 : i32
    %81 = tpu.dynamic_rotate %3 by %c126_i32_54 dim 1 : vector<4x128xf32>, i32 -> vector<4x128xf32>
    %82 = arith.truncf %81 : vector<4x128xf32> to vector<4x128xbf16>
    %c2_55 = arith.constant 2 : index
    %c0_56 = arith.constant 0 : index
    %c0_57 = arith.constant 0 : index
    %83 = vector.load %arg8[%c2_55, %c0_56, %c0_57] : memref<5x4x4xbf16, #tpu.memory_space<vmem>>, vector<1x4x4xbf16>
    %84 = vector.shape_cast %83 : vector<1x4x4xbf16> to vector<4x4xbf16>
    %cst_58 = arith.constant dense<0.000000e+00> : vector<4x128xf32>
    %85 = tpu.matmul %84, %82, %cst_58 {dimension_numbers = #tpu.dot_dimension_numbers<[1], [0], [0], [1], [0, 0, 1, 1], [], []>} : vector<4x4xbf16>, vector<4x128xbf16>, vector<4x128xf32> -> vector<4x128xf32>
    %86 = arith.addf %80, %85 : vector<4x128xf32>
    %c125_i32_59 = arith.constant 125 : i32
    %87 = tpu.dynamic_rotate %3 by %c125_i32_59 dim 1 : vector<4x128xf32>, i32 -> vector<4x128xf32>
    %88 = arith.truncf %87 : vector<4x128xf32> to vector<4x128xbf16>
    %c3_60 = arith.constant 3 : index
    %c0_61 = arith.constant 0 : index
    %c0_62 = arith.constant 0 : index
    %89 = vector.load %arg8[%c3_60, %c0_61, %c0_62] : memref<5x4x4xbf16, #tpu.memory_space<vmem>>, vector<1x4x4xbf16>
    %90 = vector.shape_cast %89 : vector<1x4x4xbf16> to vector<4x4xbf16>
    %cst_63 = arith.constant dense<0.000000e+00> : vector<4x128xf32>
    %91 = tpu.matmul %90, %88, %cst_63 {dimension_numbers = #tpu.dot_dimension_numbers<[1], [0], [0], [1], [0, 0, 1, 1], [], []>} : vector<4x4xbf16>, vector<4x128xbf16>, vector<4x128xf32> -> vector<4x128xf32>
    %92 = arith.addf %86, %91 : vector<4x128xf32>
    %c124_i32_64 = arith.constant 124 : i32
    %93 = tpu.dynamic_rotate %3 by %c124_i32_64 dim 1 : vector<4x128xf32>, i32 -> vector<4x128xf32>
    %94 = arith.truncf %93 : vector<4x128xf32> to vector<4x128xbf16>
    %c4_65 = arith.constant 4 : index
    %c0_66 = arith.constant 0 : index
    %c0_67 = arith.constant 0 : index
    %95 = vector.load %arg8[%c4_65, %c0_66, %c0_67] : memref<5x4x4xbf16, #tpu.memory_space<vmem>>, vector<1x4x4xbf16>
    %96 = vector.shape_cast %95 : vector<1x4x4xbf16> to vector<4x4xbf16>
    %cst_68 = arith.constant dense<0.000000e+00> : vector<4x128xf32>
    %97 = tpu.matmul %96, %94, %cst_68 {dimension_numbers = #tpu.dot_dimension_numbers<[1], [0], [0], [1], [0, 0, 1, 1], [], []>} : vector<4x4xbf16>, vector<4x128xbf16>, vector<4x128xf32> -> vector<4x128xf32>
    %98 = arith.addf %92, %97 : vector<4x128xf32>
    %99 = vector.broadcast %70 : vector<4x1xf32> to vector<4x128xf32>
    %100 = arith.addf %98, %99 : vector<4x128xf32>
    %cst_69 = arith.constant 0.000000e+00 : f32
    %101 = vector.broadcast %cst_69 : f32 to vector<4x128xf32>
    %102 = arith.cmpf oge, %100, %101 : vector<4x128xf32>
    %cst_70 = arith.constant 0.00999999977 : f32
    %103 = vector.broadcast %cst_70 : f32 to vector<4x128xf32>
    %104 = arith.mulf %103, %100 : vector<4x128xf32>
    %105 = arith.select %102, %100, %104 : vector<4x128xi1>, vector<4x128xf32>
    %c0_71 = arith.constant 0 : index
    %c0_72 = arith.constant 0 : index
    %106 = vector.load %arg11[%c0_71, %c0_72] : memref<4x1xf32, #tpu.memory_space<vmem>>, vector<4x1xf32>
    %107 = arith.truncf %105 : vector<4x128xf32> to vector<4x128xbf16>
    %c0_73 = arith.constant 0 : index
    %c0_74 = arith.constant 0 : index
    %c0_75 = arith.constant 0 : index
    %108 = vector.load %arg10[%c0_73, %c0_74, %c0_75] : memref<3x4x4xbf16, #tpu.memory_space<vmem>>, vector<1x4x4xbf16>
    %109 = vector.shape_cast %108 : vector<1x4x4xbf16> to vector<4x4xbf16>
    %cst_76 = arith.constant dense<0.000000e+00> : vector<4x128xf32>
    %110 = tpu.matmul %109, %107, %cst_76 {dimension_numbers = #tpu.dot_dimension_numbers<[1], [0], [0], [1], [0, 0, 1, 1], [], []>} : vector<4x4xbf16>, vector<4x128xbf16>, vector<4x128xf32> -> vector<4x128xf32>
    %c127_i32_77 = arith.constant 127 : i32
    %111 = tpu.dynamic_rotate %105 by %c127_i32_77 dim 1 : vector<4x128xf32>, i32 -> vector<4x128xf32>
    %112 = arith.truncf %111 : vector<4x128xf32> to vector<4x128xbf16>
    %c1_78 = arith.constant 1 : index
    %c0_79 = arith.constant 0 : index
    %c0_80 = arith.constant 0 : index
    %113 = vector.load %arg10[%c1_78, %c0_79, %c0_80] : memref<3x4x4xbf16, #tpu.memory_space<vmem>>, vector<1x4x4xbf16>
    %114 = vector.shape_cast %113 : vector<1x4x4xbf16> to vector<4x4xbf16>
    %cst_81 = arith.constant dense<0.000000e+00> : vector<4x128xf32>
    %115 = tpu.matmul %114, %112, %cst_81 {dimension_numbers = #tpu.dot_dimension_numbers<[1], [0], [0], [1], [0, 0, 1, 1], [], []>} : vector<4x4xbf16>, vector<4x128xbf16>, vector<4x128xf32> -> vector<4x128xf32>
    %116 = arith.addf %110, %115 : vector<4x128xf32>
    %c126_i32_82 = arith.constant 126 : i32
    %117 = tpu.dynamic_rotate %105 by %c126_i32_82 dim 1 : vector<4x128xf32>, i32 -> vector<4x128xf32>
    %118 = arith.truncf %117 : vector<4x128xf32> to vector<4x128xbf16>
    %c2_83 = arith.constant 2 : index
    %c0_84 = arith.constant 0 : index
    %c0_85 = arith.constant 0 : index
    %119 = vector.load %arg10[%c2_83, %c0_84, %c0_85] : memref<3x4x4xbf16, #tpu.memory_space<vmem>>, vector<1x4x4xbf16>
    %120 = vector.shape_cast %119 : vector<1x4x4xbf16> to vector<4x4xbf16>
    %cst_86 = arith.constant dense<0.000000e+00> : vector<4x128xf32>
    %121 = tpu.matmul %120, %118, %cst_86 {dimension_numbers = #tpu.dot_dimension_numbers<[1], [0], [0], [1], [0, 0, 1, 1], [], []>} : vector<4x4xbf16>, vector<4x128xbf16>, vector<4x128xf32> -> vector<4x128xf32>
    %122 = arith.addf %116, %121 : vector<4x128xf32>
    %123 = vector.broadcast %106 : vector<4x1xf32> to vector<4x128xf32>
    %124 = arith.addf %122, %123 : vector<4x128xf32>
    %125 = math.tanh %124 : vector<4x128xf32>
    %c3_i32_87 = arith.constant 3 : i32
    %126 = tpu.dynamic_rotate %125 by %c3_i32_87 dim 1 : vector<4x128xf32>, i32 -> vector<4x128xf32>
    %127 = math.exp %126 : vector<4x128xf32>
    %128 = arith.mulf %1, %127 : vector<4x128xf32>
    %c127_i32_88 = arith.constant 127 : i32
    %129 = tpu.dynamic_rotate %69 by %c127_i32_88 dim 1 : vector<4x128xf32>, i32 -> vector<4x128xf32>
    %130 = arith.select %8, %129, %69 : vector<4x128xi1>, vector<4x128xf32>
    %c127_i32_89 = arith.constant 127 : i32
    %131 = tpu.dynamic_rotate %130 by %c127_i32_89 dim 1 : vector<4x128xf32>, i32 -> vector<4x128xf32>
    %132 = arith.select %8, %131, %130 : vector<4x128xi1>, vector<4x128xf32>
    %c127_i32_90 = arith.constant 127 : i32
    %133 = tpu.dynamic_rotate %132 by %c127_i32_90 dim 1 : vector<4x128xf32>, i32 -> vector<4x128xf32>
    %134 = arith.select %8, %133, %132 : vector<4x128xi1>, vector<4x128xf32>
    %c1_i32 = arith.constant 1 : i32
    %135 = tpu.dynamic_rotate %134 by %c1_i32 dim 1 : vector<4x128xf32>, i32 -> vector<4x128xf32>
    %136 = arith.select %10, %135, %134 : vector<4x128xi1>, vector<4x128xf32>
    %c1_i32_91 = arith.constant 1 : i32
    %137 = tpu.dynamic_rotate %136 by %c1_i32_91 dim 1 : vector<4x128xf32>, i32 -> vector<4x128xf32>
    %138 = arith.select %10, %137, %136 : vector<4x128xi1>, vector<4x128xf32>
    %c1_i32_92 = arith.constant 1 : i32
    %139 = tpu.dynamic_rotate %138 by %c1_i32_92 dim 1 : vector<4x128xf32>, i32 -> vector<4x128xf32>
    %140 = arith.select %10, %139, %138 : vector<4x128xi1>, vector<4x128xf32>
    %c127_i32_93 = arith.constant 127 : i32
    %141 = tpu.dynamic_rotate %128 by %c127_i32_93 dim 1 : vector<4x128xf32>, i32 -> vector<4x128xf32>
    %142 = arith.select %8, %141, %128 : vector<4x128xi1>, vector<4x128xf32>
    %c127_i32_94 = arith.constant 127 : i32
    %143 = tpu.dynamic_rotate %142 by %c127_i32_94 dim 1 : vector<4x128xf32>, i32 -> vector<4x128xf32>
    %144 = arith.select %8, %143, %142 : vector<4x128xi1>, vector<4x128xf32>
    %c127_i32_95 = arith.constant 127 : i32
    %145 = tpu.dynamic_rotate %144 by %c127_i32_95 dim 1 : vector<4x128xf32>, i32 -> vector<4x128xf32>
    %146 = arith.select %8, %145, %144 : vector<4x128xi1>, vector<4x128xf32>
    %c1_i32_96 = arith.constant 1 : i32
    %147 = tpu.dynamic_rotate %146 by %c1_i32_96 dim 1 : vector<4x128xf32>, i32 -> vector<4x128xf32>
    %148 = arith.select %10, %147, %146 : vector<4x128xi1>, vector<4x128xf32>
    %c1_i32_97 = arith.constant 1 : i32
    %149 = tpu.dynamic_rotate %148 by %c1_i32_97 dim 1 : vector<4x128xf32>, i32 -> vector<4x128xf32>
    %150 = arith.select %10, %149, %148 : vector<4x128xi1>, vector<4x128xf32>
    %c1_i32_98 = arith.constant 1 : i32
    %151 = tpu.dynamic_rotate %150 by %c1_i32_98 dim 1 : vector<4x128xf32>, i32 -> vector<4x128xf32>
    %152 = arith.select %10, %151, %150 : vector<4x128xi1>, vector<4x128xf32>
    %c0_99 = arith.constant 0 : index
    %c0_100 = arith.constant 0 : index
    %153 = vector.load %arg13[%c0_99, %c0_100] : memref<4x1xf32, #tpu.memory_space<vmem>>, vector<4x1xf32>
    %154 = arith.truncf %140 : vector<4x128xf32> to vector<4x128xbf16>
    %c0_101 = arith.constant 0 : index
    %c0_102 = arith.constant 0 : index
    %c0_103 = arith.constant 0 : index
    %155 = vector.load %arg12[%c0_101, %c0_102, %c0_103] : memref<5x4x4xbf16, #tpu.memory_space<vmem>>, vector<1x4x4xbf16>
    %156 = vector.shape_cast %155 : vector<1x4x4xbf16> to vector<4x4xbf16>
    %cst_104 = arith.constant dense<0.000000e+00> : vector<4x128xf32>
    %157 = tpu.matmul %156, %154, %cst_104 {dimension_numbers = #tpu.dot_dimension_numbers<[1], [0], [0], [1], [0, 0, 1, 1], [], []>} : vector<4x4xbf16>, vector<4x128xbf16>, vector<4x128xf32> -> vector<4x128xf32>
    %c127_i32_105 = arith.constant 127 : i32
    %158 = tpu.dynamic_rotate %140 by %c127_i32_105 dim 1 : vector<4x128xf32>, i32 -> vector<4x128xf32>
    %159 = arith.truncf %158 : vector<4x128xf32> to vector<4x128xbf16>
    %c1_106 = arith.constant 1 : index
    %c0_107 = arith.constant 0 : index
    %c0_108 = arith.constant 0 : index
    %160 = vector.load %arg12[%c1_106, %c0_107, %c0_108] : memref<5x4x4xbf16, #tpu.memory_space<vmem>>, vector<1x4x4xbf16>
    %161 = vector.shape_cast %160 : vector<1x4x4xbf16> to vector<4x4xbf16>
    %cst_109 = arith.constant dense<0.000000e+00> : vector<4x128xf32>
    %162 = tpu.matmul %161, %159, %cst_109 {dimension_numbers = #tpu.dot_dimension_numbers<[1], [0], [0], [1], [0, 0, 1, 1], [], []>} : vector<4x4xbf16>, vector<4x128xbf16>, vector<4x128xf32> -> vector<4x128xf32>
    %163 = arith.addf %157, %162 : vector<4x128xf32>
    %c126_i32_110 = arith.constant 126 : i32
    %164 = tpu.dynamic_rotate %140 by %c126_i32_110 dim 1 : vector<4x128xf32>, i32 -> vector<4x128xf32>
    %165 = arith.truncf %164 : vector<4x128xf32> to vector<4x128xbf16>
    %c2_111 = arith.constant 2 : index
    %c0_112 = arith.constant 0 : index
    %c0_113 = arith.constant 0 : index
    %166 = vector.load %arg12[%c2_111, %c0_112, %c0_113] : memref<5x4x4xbf16, #tpu.memory_space<vmem>>, vector<1x4x4xbf16>
    %167 = vector.shape_cast %166 : vector<1x4x4xbf16> to vector<4x4xbf16>
    %cst_114 = arith.constant dense<0.000000e+00> : vector<4x128xf32>
    %168 = tpu.matmul %167, %165, %cst_114 {dimension_numbers = #tpu.dot_dimension_numbers<[1], [0], [0], [1], [0, 0, 1, 1], [], []>} : vector<4x4xbf16>, vector<4x128xbf16>, vector<4x128xf32> -> vector<4x128xf32>
    %169 = arith.addf %163, %168 : vector<4x128xf32>
    %c125_i32_115 = arith.constant 125 : i32
    %170 = tpu.dynamic_rotate %140 by %c125_i32_115 dim 1 : vector<4x128xf32>, i32 -> vector<4x128xf32>
    %171 = arith.truncf %170 : vector<4x128xf32> to vector<4x128xbf16>
    %c3_116 = arith.constant 3 : index
    %c0_117 = arith.constant 0 : index
    %c0_118 = arith.constant 0 : index
    %172 = vector.load %arg12[%c3_116, %c0_117, %c0_118] : memref<5x4x4xbf16, #tpu.memory_space<vmem>>, vector<1x4x4xbf16>
    %173 = vector.shape_cast %172 : vector<1x4x4xbf16> to vector<4x4xbf16>
    %cst_119 = arith.constant dense<0.000000e+00> : vector<4x128xf32>
    %174 = tpu.matmul %173, %171, %cst_119 {dimension_numbers = #tpu.dot_dimension_numbers<[1], [0], [0], [1], [0, 0, 1, 1], [], []>} : vector<4x4xbf16>, vector<4x128xbf16>, vector<4x128xf32> -> vector<4x128xf32>
    %175 = arith.addf %169, %174 : vector<4x128xf32>
    %c124_i32_120 = arith.constant 124 : i32
    %176 = tpu.dynamic_rotate %140 by %c124_i32_120 dim 1 : vector<4x128xf32>, i32 -> vector<4x128xf32>
    %177 = arith.truncf %176 : vector<4x128xf32> to vector<4x128xbf16>
    %c4_121 = arith.constant 4 : index
    %c0_122 = arith.constant 0 : index
    %c0_123 = arith.constant 0 : index
    %178 = vector.load %arg12[%c4_121, %c0_122, %c0_123] : memref<5x4x4xbf16, #tpu.memory_space<vmem>>, vector<1x4x4xbf16>
    %179 = vector.shape_cast %178 : vector<1x4x4xbf16> to vector<4x4xbf16>
    %cst_124 = arith.constant dense<0.000000e+00> : vector<4x128xf32>
    %180 = tpu.matmul %179, %177, %cst_124 {dimension_numbers = #tpu.dot_dimension_numbers<[1], [0], [0], [1], [0, 0, 1, 1], [], []>} : vector<4x4xbf16>, vector<4x128xbf16>, vector<4x128xf32> -> vector<4x128xf32>
    %181 = arith.addf %175, %180 : vector<4x128xf32>
    %182 = vector.broadcast %153 : vector<4x1xf32> to vector<4x128xf32>
    %183 = arith.addf %181, %182 : vector<4x128xf32>
    %cst_125 = arith.constant 0.000000e+00 : f32
    %184 = vector.broadcast %cst_125 : f32 to vector<4x128xf32>
    %185 = arith.cmpf oge, %183, %184 : vector<4x128xf32>
    %cst_126 = arith.constant 0.00999999977 : f32
    %186 = vector.broadcast %cst_126 : f32 to vector<4x128xf32>
    %187 = arith.mulf %186, %183 : vector<4x128xf32>
    %188 = arith.select %185, %183, %187 : vector<4x128xi1>, vector<4x128xf32>
    %c0_127 = arith.constant 0 : index
    %c0_128 = arith.constant 0 : index
    %189 = vector.load %arg15[%c0_127, %c0_128] : memref<4x1xf32, #tpu.memory_space<vmem>>, vector<4x1xf32>
    %190 = arith.truncf %188 : vector<4x128xf32> to vector<4x128xbf16>
    %c0_129 = arith.constant 0 : index
    %c0_130 = arith.constant 0 : index
    %c0_131 = arith.constant 0 : index
    %191 = vector.load %arg14[%c0_129, %c0_130, %c0_131] : memref<3x4x4xbf16, #tpu.memory_space<vmem>>, vector<1x4x4xbf16>
    %192 = vector.shape_cast %191 : vector<1x4x4xbf16> to vector<4x4xbf16>
    %cst_132 = arith.constant dense<0.000000e+00> : vector<4x128xf32>
    %193 = tpu.matmul %192, %190, %cst_132 {dimension_numbers = #tpu.dot_dimension_numbers<[1], [0], [0], [1], [0, 0, 1, 1], [], []>} : vector<4x4xbf16>, vector<4x128xbf16>, vector<4x128xf32> -> vector<4x128xf32>
    %c127_i32_133 = arith.constant 127 : i32
    %194 = tpu.dynamic_rotate %188 by %c127_i32_133 dim 1 : vector<4x128xf32>, i32 -> vector<4x128xf32>
    %195 = arith.truncf %194 : vector<4x128xf32> to vector<4x128xbf16>
    %c1_134 = arith.constant 1 : index
    %c0_135 = arith.constant 0 : index
    %c0_136 = arith.constant 0 : index
    %196 = vector.load %arg14[%c1_134, %c0_135, %c0_136] : memref<3x4x4xbf16, #tpu.memory_space<vmem>>, vector<1x4x4xbf16>
    %197 = vector.shape_cast %196 : vector<1x4x4xbf16> to vector<4x4xbf16>
    %cst_137 = arith.constant dense<0.000000e+00> : vector<4x128xf32>
    %198 = tpu.matmul %197, %195, %cst_137 {dimension_numbers = #tpu.dot_dimension_numbers<[1], [0], [0], [1], [0, 0, 1, 1], [], []>} : vector<4x4xbf16>, vector<4x128xbf16>, vector<4x128xf32> -> vector<4x128xf32>
    %199 = arith.addf %193, %198 : vector<4x128xf32>
    %c126_i32_138 = arith.constant 126 : i32
    %200 = tpu.dynamic_rotate %188 by %c126_i32_138 dim 1 : vector<4x128xf32>, i32 -> vector<4x128xf32>
    %201 = arith.truncf %200 : vector<4x128xf32> to vector<4x128xbf16>
    %c2_139 = arith.constant 2 : index
    %c0_140 = arith.constant 0 : index
    %c0_141 = arith.constant 0 : index
    %202 = vector.load %arg14[%c2_139, %c0_140, %c0_141] : memref<3x4x4xbf16, #tpu.memory_space<vmem>>, vector<1x4x4xbf16>
    %203 = vector.shape_cast %202 : vector<1x4x4xbf16> to vector<4x4xbf16>
    %cst_142 = arith.constant dense<0.000000e+00> : vector<4x128xf32>
    %204 = tpu.matmul %203, %201, %cst_142 {dimension_numbers = #tpu.dot_dimension_numbers<[1], [0], [0], [1], [0, 0, 1, 1], [], []>} : vector<4x4xbf16>, vector<4x128xbf16>, vector<4x128xf32> -> vector<4x128xf32>
    %205 = arith.addf %199, %204 : vector<4x128xf32>
    %206 = vector.broadcast %189 : vector<4x1xf32> to vector<4x128xf32>
    %207 = arith.addf %205, %206 : vector<4x128xf32>
    %208 = math.tanh %207 : vector<4x128xf32>
    %c3_i32_143 = arith.constant 3 : i32
    %209 = tpu.dynamic_rotate %208 by %c3_i32_143 dim 1 : vector<4x128xf32>, i32 -> vector<4x128xf32>
    %210 = arith.addf %152, %209 : vector<4x128xf32>
    %c0_144 = arith.constant 0 : index
    %c0_145 = arith.constant 0 : index
    %211 = vector.load %arg17[%c0_144, %c0_145] : memref<4x1xf32, #tpu.memory_space<vmem>>, vector<4x1xf32>
    %212 = arith.truncf %152 : vector<4x128xf32> to vector<4x128xbf16>
    %c0_146 = arith.constant 0 : index
    %c0_147 = arith.constant 0 : index
    %c0_148 = arith.constant 0 : index
    %213 = vector.load %arg16[%c0_146, %c0_147, %c0_148] : memref<5x4x4xbf16, #tpu.memory_space<vmem>>, vector<1x4x4xbf16>
    %214 = vector.shape_cast %213 : vector<1x4x4xbf16> to vector<4x4xbf16>
    %cst_149 = arith.constant dense<0.000000e+00> : vector<4x128xf32>
    %215 = tpu.matmul %214, %212, %cst_149 {dimension_numbers = #tpu.dot_dimension_numbers<[1], [0], [0], [1], [0, 0, 1, 1], [], []>} : vector<4x4xbf16>, vector<4x128xbf16>, vector<4x128xf32> -> vector<4x128xf32>
    %c127_i32_150 = arith.constant 127 : i32
    %216 = tpu.dynamic_rotate %152 by %c127_i32_150 dim 1 : vector<4x128xf32>, i32 -> vector<4x128xf32>
    %217 = arith.truncf %216 : vector<4x128xf32> to vector<4x128xbf16>
    %c1_151 = arith.constant 1 : index
    %c0_152 = arith.constant 0 : index
    %c0_153 = arith.constant 0 : index
    %218 = vector.load %arg16[%c1_151, %c0_152, %c0_153] : memref<5x4x4xbf16, #tpu.memory_space<vmem>>, vector<1x4x4xbf16>
    %219 = vector.shape_cast %218 : vector<1x4x4xbf16> to vector<4x4xbf16>
    %cst_154 = arith.constant dense<0.000000e+00> : vector<4x128xf32>
    %220 = tpu.matmul %219, %217, %cst_154 {dimension_numbers = #tpu.dot_dimension_numbers<[1], [0], [0], [1], [0, 0, 1, 1], [], []>} : vector<4x4xbf16>, vector<4x128xbf16>, vector<4x128xf32> -> vector<4x128xf32>
    %221 = arith.addf %215, %220 : vector<4x128xf32>
    %c126_i32_155 = arith.constant 126 : i32
    %222 = tpu.dynamic_rotate %152 by %c126_i32_155 dim 1 : vector<4x128xf32>, i32 -> vector<4x128xf32>
    %223 = arith.truncf %222 : vector<4x128xf32> to vector<4x128xbf16>
    %c2_156 = arith.constant 2 : index
    %c0_157 = arith.constant 0 : index
    %c0_158 = arith.constant 0 : index
    %224 = vector.load %arg16[%c2_156, %c0_157, %c0_158] : memref<5x4x4xbf16, #tpu.memory_space<vmem>>, vector<1x4x4xbf16>
    %225 = vector.shape_cast %224 : vector<1x4x4xbf16> to vector<4x4xbf16>
    %cst_159 = arith.constant dense<0.000000e+00> : vector<4x128xf32>
    %226 = tpu.matmul %225, %223, %cst_159 {dimension_numbers = #tpu.dot_dimension_numbers<[1], [0], [0], [1], [0, 0, 1, 1], [], []>} : vector<4x4xbf16>, vector<4x128xbf16>, vector<4x128xf32> -> vector<4x128xf32>
    %227 = arith.addf %221, %226 : vector<4x128xf32>
    %c125_i32_160 = arith.constant 125 : i32
    %228 = tpu.dynamic_rotate %152 by %c125_i32_160 dim 1 : vector<4x128xf32>, i32 -> vector<4x128xf32>
    %229 = arith.truncf %228 : vector<4x128xf32> to vector<4x128xbf16>
    %c3_161 = arith.constant 3 : index
    %c0_162 = arith.constant 0 : index
    %c0_163 = arith.constant 0 : index
    %230 = vector.load %arg16[%c3_161, %c0_162, %c0_163] : memref<5x4x4xbf16, #tpu.memory_space<vmem>>, vector<1x4x4xbf16>
    %231 = vector.shape_cast %230 : vector<1x4x4xbf16> to vector<4x4xbf16>
    %cst_164 = arith.constant dense<0.000000e+00> : vector<4x128xf32>
    %232 = tpu.matmul %231, %229, %cst_164 {dimension_numbers = #tpu.dot_dimension_numbers<[1], [0], [0], [1], [0, 0, 1, 1], [], []>} : vector<4x4xbf16>, vector<4x128xbf16>, vector<4x128xf32> -> vector<4x128xf32>
    %233 = arith.addf %227, %232 : vector<4x128xf32>
    %c124_i32_165 = arith.constant 124 : i32
    %234 = tpu.dynamic_rotate %152 by %c124_i32_165 dim 1 : vector<4x128xf32>, i32 -> vector<4x128xf32>
    %235 = arith.truncf %234 : vector<4x128xf32> to vector<4x128xbf16>
    %c4_166 = arith.constant 4 : index
    %c0_167 = arith.constant 0 : index
    %c0_168 = arith.constant 0 : index
    %236 = vector.load %arg16[%c4_166, %c0_167, %c0_168] : memref<5x4x4xbf16, #tpu.memory_space<vmem>>, vector<1x4x4xbf16>
    %237 = vector.shape_cast %236 : vector<1x4x4xbf16> to vector<4x4xbf16>
    %cst_169 = arith.constant dense<0.000000e+00> : vector<4x128xf32>
    %238 = tpu.matmul %237, %235, %cst_169 {dimension_numbers = #tpu.dot_dimension_numbers<[1], [0], [0], [1], [0, 0, 1, 1], [], []>} : vector<4x4xbf16>, vector<4x128xbf16>, vector<4x128xf32> -> vector<4x128xf32>
    %239 = arith.addf %233, %238 : vector<4x128xf32>
    %240 = vector.broadcast %211 : vector<4x1xf32> to vector<4x128xf32>
    %241 = arith.addf %239, %240 : vector<4x128xf32>
    %cst_170 = arith.constant 0.000000e+00 : f32
    %242 = vector.broadcast %cst_170 : f32 to vector<4x128xf32>
    %243 = arith.cmpf oge, %241, %242 : vector<4x128xf32>
    %cst_171 = arith.constant 0.00999999977 : f32
    %244 = vector.broadcast %cst_171 : f32 to vector<4x128xf32>
    %245 = arith.mulf %244, %241 : vector<4x128xf32>
    %246 = arith.select %243, %241, %245 : vector<4x128xi1>, vector<4x128xf32>
    %c0_172 = arith.constant 0 : index
    %c0_173 = arith.constant 0 : index
    %247 = vector.load %arg19[%c0_172, %c0_173] : memref<4x1xf32, #tpu.memory_space<vmem>>, vector<4x1xf32>
    %248 = arith.truncf %246 : vector<4x128xf32> to vector<4x128xbf16>
    %c0_174 = arith.constant 0 : index
    %c0_175 = arith.constant 0 : index
    %c0_176 = arith.constant 0 : index
    %249 = vector.load %arg18[%c0_174, %c0_175, %c0_176] : memref<3x4x4xbf16, #tpu.memory_space<vmem>>, vector<1x4x4xbf16>
    %250 = vector.shape_cast %249 : vector<1x4x4xbf16> to vector<4x4xbf16>
    %cst_177 = arith.constant dense<0.000000e+00> : vector<4x128xf32>
    %251 = tpu.matmul %250, %248, %cst_177 {dimension_numbers = #tpu.dot_dimension_numbers<[1], [0], [0], [1], [0, 0, 1, 1], [], []>} : vector<4x4xbf16>, vector<4x128xbf16>, vector<4x128xf32> -> vector<4x128xf32>
    %c127_i32_178 = arith.constant 127 : i32
    %252 = tpu.dynamic_rotate %246 by %c127_i32_178 dim 1 : vector<4x128xf32>, i32 -> vector<4x128xf32>
    %253 = arith.truncf %252 : vector<4x128xf32> to vector<4x128xbf16>
    %c1_179 = arith.constant 1 : index
    %c0_180 = arith.constant 0 : index
    %c0_181 = arith.constant 0 : index
    %254 = vector.load %arg18[%c1_179, %c0_180, %c0_181] : memref<3x4x4xbf16, #tpu.memory_space<vmem>>, vector<1x4x4xbf16>
    %255 = vector.shape_cast %254 : vector<1x4x4xbf16> to vector<4x4xbf16>
    %cst_182 = arith.constant dense<0.000000e+00> : vector<4x128xf32>
    %256 = tpu.matmul %255, %253, %cst_182 {dimension_numbers = #tpu.dot_dimension_numbers<[1], [0], [0], [1], [0, 0, 1, 1], [], []>} : vector<4x4xbf16>, vector<4x128xbf16>, vector<4x128xf32> -> vector<4x128xf32>
    %257 = arith.addf %251, %256 : vector<4x128xf32>
    %c126_i32_183 = arith.constant 126 : i32
    %258 = tpu.dynamic_rotate %246 by %c126_i32_183 dim 1 : vector<4x128xf32>, i32 -> vector<4x128xf32>
    %259 = arith.truncf %258 : vector<4x128xf32> to vector<4x128xbf16>
    %c2_184 = arith.constant 2 : index
    %c0_185 = arith.constant 0 : index
    %c0_186 = arith.constant 0 : index
    %260 = vector.load %arg18[%c2_184, %c0_185, %c0_186] : memref<3x4x4xbf16, #tpu.memory_space<vmem>>, vector<1x4x4xbf16>
    %261 = vector.shape_cast %260 : vector<1x4x4xbf16> to vector<4x4xbf16>
    %cst_187 = arith.constant dense<0.000000e+00> : vector<4x128xf32>
    %262 = tpu.matmul %261, %259, %cst_187 {dimension_numbers = #tpu.dot_dimension_numbers<[1], [0], [0], [1], [0, 0, 1, 1], [], []>} : vector<4x4xbf16>, vector<4x128xbf16>, vector<4x128xf32> -> vector<4x128xf32>
    %263 = arith.addf %257, %262 : vector<4x128xf32>
    %264 = vector.broadcast %247 : vector<4x1xf32> to vector<4x128xf32>
    %265 = arith.addf %263, %264 : vector<4x128xf32>
    %266 = math.tanh %265 : vector<4x128xf32>
    %c3_i32_188 = arith.constant 3 : i32
    %267 = tpu.dynamic_rotate %266 by %c3_i32_188 dim 1 : vector<4x128xf32>, i32 -> vector<4x128xf32>
    %268 = arith.subf %140, %267 : vector<4x128xf32>
    %269 = tpu.concatenate %210, %268 in 0 : vector<4x128xf32>, vector<4x128xf32> -> vector<8x128xf32>
    %c0_189 = arith.constant 0 : index
    %c0_190 = arith.constant 0 : index
    %c0_191 = arith.constant 0 : index
    %270 = vector.load %arg20[%c0_189, %c0_190, %c0_191] : memref<1x8x128xf32, #tpu.memory_space<vmem>>, vector<1x8x128xf32>
    %271 = vector.shape_cast %270 : vector<1x8x128xf32> to vector<8x128xf32>
    %272 = vector.shape_cast %269 : vector<8x128xf32> to vector<1x8x128xf32>
    tpu.vector_store %arg20[%c0_189, %c0_190, %c0_191], %272 {strides = array<i32>} : memref<1x8x128xf32, #tpu.memory_space<vmem>>, vector<1x8x128xf32>,
    return
  }
  func.func @transform_0(%arg0: i32) -> (i32, i32, i32) {
    %c0_i32 = arith.constant 0 : i32
    %c0_i32_0 = arith.constant 0 : i32
    %c0_i32_1 = arith.constant 0 : i32
    return %arg0, %c0_i32, %c0_i32_0 : i32, i32, i32
  }
  func.func @transform_1(%arg0: i32) -> (i32, i32, i32) {
    %c0_i32 = arith.constant 0 : i32
    %c0_i32_0 = arith.constant 0 : i32
    %c0_i32_1 = arith.constant 0 : i32
    return %arg0, %c0_i32, %c0_i32_0 : i32, i32, i32
  }
  func.func @transform_2(%arg0: i32) -> (i32, i32) {
    %c0_i32 = arith.constant 0 : i32
    %c0_i32_0 = arith.constant 0 : i32
    %c0_i32_1 = arith.constant 0 : i32
    return %c0_i32, %c0_i32_0 : i32, i32
  }
  func.func @transform_3(%arg0: i32) -> (i32, i32, i32) {
    %c0_i32 = arith.constant 0 : i32
    %c0_i32_0 = arith.constant 0 : i32
    %c0_i32_1 = arith.constant 0 : i32
    %c0_i32_2 = arith.constant 0 : i32
    return %c0_i32, %c0_i32_0, %c0_i32_1 : i32, i32, i32
  }
  func.func @transform_4(%arg0: i32) -> (i32, i32) {
    %c0_i32 = arith.constant 0 : i32
    %c0_i32_0 = arith.constant 0 : i32
    %c0_i32_1 = arith.constant 0 : i32
    return %c0_i32, %c0_i32_0 : i32, i32
  }
  func.func @transform_5(%arg0: i32) -> (i32, i32, i32) {
    %c0_i32 = arith.constant 0 : i32
    %c0_i32_0 = arith.constant 0 : i32
    %c0_i32_1 = arith.constant 0 : i32
    %c0_i32_2 = arith.constant 0 : i32
    return %c0_i32, %c0_i32_0, %c0_i32_1 : i32, i32, i32
  }
  func.func @transform_6(%arg0: i32) -> (i32, i32) {
    %c0_i32 = arith.constant 0 : i32
    %c0_i32_0 = arith.constant 0 : i32
    %c0_i32_1 = arith.constant 0 : i32
    return %c0_i32, %c0_i32_0 : i32, i32
  }
  func.func @transform_7(%arg0: i32) -> (i32, i32, i32) {
    %c0_i32 = arith.constant 0 : i32
    %c0_i32_0 = arith.constant 0 : i32
    %c0_i32_1 = arith.constant 0 : i32
    %c0_i32_2 = arith.constant 0 : i32
    return %c0_i32, %c0_i32_0, %c0_i32_1 : i32, i32, i32
  }
  func.func @transform_8(%arg0: i32) -> (i32, i32) {
    %c0_i32 = arith.constant 0 : i32
    %c0_i32_0 = arith.constant 0 : i32
    %c0_i32_1 = arith.constant 0 : i32
    return %c0_i32, %c0_i32_0 : i32, i32
  }
  func.func @transform_9(%arg0: i32) -> (i32, i32, i32) {
    %c0_i32 = arith.constant 0 : i32
    %c0_i32_0 = arith.constant 0 : i32
    %c0_i32_1 = arith.constant 0 : i32
    %c0_i32_2 = arith.constant 0 : i32
    return %c0_i32, %c0_i32_0, %c0_i32_1 : i32, i32, i32
  }
  func.func @transform_10(%arg0: i32) -> (i32, i32) {
    %c0_i32 = arith.constant 0 : i32
    %c0_i32_0 = arith.constant 0 : i32
    %c0_i32_1 = arith.constant 0 : i32
    return %c0_i32, %c0_i32_0 : i32, i32
  }
  func.func @transform_11(%arg0: i32) -> (i32, i32, i32) {
    %c0_i32 = arith.constant 0 : i32
    %c0_i32_0 = arith.constant 0 : i32
    %c0_i32_1 = arith.constant 0 : i32
    %c0_i32_2 = arith.constant 0 : i32
    return %c0_i32, %c0_i32_0, %c0_i32_1 : i32, i32, i32
  }
  func.func @transform_12(%arg0: i32) -> (i32, i32) {
    %c0_i32 = arith.constant 0 : i32
    %c0_i32_0 = arith.constant 0 : i32
    %c0_i32_1 = arith.constant 0 : i32
    return %c0_i32, %c0_i32_0 : i32, i32
  }
  func.func @transform_13(%arg0: i32) -> (i32, i32, i32) {
    %c0_i32 = arith.constant 0 : i32
    %c0_i32_0 = arith.constant 0 : i32
    %c0_i32_1 = arith.constant 0 : i32
    %c0_i32_2 = arith.constant 0 : i32
    return %c0_i32, %c0_i32_0, %c0_i32_1 : i32, i32, i32
  }
  func.func @transform_14(%arg0: i32) -> (i32, i32) {
    %c0_i32 = arith.constant 0 : i32
    %c0_i32_0 = arith.constant 0 : i32
    %c0_i32_1 = arith.constant 0 : i32
    return %c0_i32, %c0_i32_0 : i32, i32
  }
  func.func @transform_15(%arg0: i32) -> (i32, i32, i32) {
    %c0_i32 = arith.constant 0 : i32
    %c0_i32_0 = arith.constant 0 : i32
    %c0_i32_1 = arith.constant 0 : i32
    %c0_i32_2 = arith.constant 0 : i32
    return %c0_i32, %c0_i32_0, %c0_i32_1 : i32, i32, i32
  }
  func.func @transform_16(%arg0: i32) -> (i32, i32) {
    %c0_i32 = arith.constant 0 : i32
    %c0_i32_0 = arith.constant 0 : i32
    %c0_i32_1 = arith.constant 0 : i32
    return %c0_i32, %c0_i32_0 : i32, i32
  }
  func.func @transform_17(%arg0: i32) -> (i32, i32, i32) {
    %c0_i32 = arith.constant 0 : i32
    %c0_i32_0 = arith.constant 0 : i32
    %c0_i32_1 = arith.constant 0 : i32
    %c0_i32_2 = arith.constant 0 : i32
    return %c0_i32, %c0_i32_0, %c0_i32_1 : i32, i32, i32
  }
  func.func @transform_18(%arg0: i32) -> (i32, i32) {
    %c0_i32 = arith.constant 0 : i32
    %c0_i32_0 = arith.constant 0 : i32
    %c0_i32_1 = arith.constant 0 : i32
    return %c0_i32, %c0_i32_0 : i32, i32
  }
  func.func @transform_19(%arg0: i32) -> (i32, i32, i32) {
    %c0_i32 = arith.constant 0 : i32
    %c0_i32_0 = arith.constant 0 : i32
    %c0_i32_1 = arith.constant 0 : i32
    return %arg0, %c0_i32, %c0_i32_0 : i32, i32, i32
  }
}

module attributes {stable_mosaic.version = 11 : i64} {
  func.func @kernel(%arg0: i32, %arg1: memref<1x4x128xf32, #tpu.memory_space<vmem>>, %arg2: memref<1x4x128xf32, #tpu.memory_space<vmem>>, %arg3: memref<1x128xi32, #tpu.memory_space<vmem>>, %arg4: memref<5x4x4xbf16, #tpu.memory_space<vmem>>, %arg5: memref<4x1xf32, #tpu.memory_space<vmem>>, %arg6: memref<3x4x4xbf16, #tpu.memory_space<vmem>>, %arg7: memref<4x1xf32, #tpu.memory_space<vmem>>, %arg8: memref<5x4x4xbf16, #tpu.memory_space<vmem>>, %arg9: memref<4x1xf32, #tpu.memory_space<vmem>>, %arg10: memref<3x4x4xbf16, #tpu.memory_space<vmem>>, %arg11: memref<4x1xf32, #tpu.memory_space<vmem>>, %arg12: memref<5x4x4xbf16, #tpu.memory_space<vmem>>, %arg13: memref<4x1xf32, #tpu.memory_space<vmem>>, %arg14: memref<3x4x4xbf16, #tpu.memory_space<vmem>>, %arg15: memref<4x1xf32, #tpu.memory_space<vmem>>, %arg16: memref<5x4x4xbf16, #tpu.memory_space<vmem>>, %arg17: memref<4x1xf32, #tpu.memory_space<vmem>>, %arg18: memref<3x4x4xbf16, #tpu.memory_space<vmem>>, %arg19: memref<4x1xf32, #tpu.memory_space<vmem>>, %arg20: memref<1x8x128xf32, #tpu.memory_space<vmem>>) attributes {dimension_semantics = [#tpu.dimension_semantics<parallel>], iteration_bounds = array<i64: 2>, scalar_prefetch = 0 : i64, scratch_operands = 0 : i64, tpu.core_type = #tpu.core_type<tc>, window_params = [{transform_indices = @transform_0, window_bounds = array<i64: 1, 4, 128>}, {transform_indices = @transform_1, window_bounds = array<i64: 1, 4, 128>}, {pipeline_mode = #tpu.pipeline_mode<synchronous>, transform_indices = @transform_2, window_bounds = array<i64: 1, 128>}, {pipeline_mode = #tpu.pipeline_mode<synchronous>, transform_indices = @transform_3, window_bounds = array<i64: 5, 4, 4>}, {pipeline_mode = #tpu.pipeline_mode<synchronous>, transform_indices = @transform_4, window_bounds = array<i64: 4, 1>}, {pipeline_mode = #tpu.pipeline_mode<synchronous>, transform_indices = @transform_5, window_bounds = array<i64: 3, 4, 4>}, {pipeline_mode = #tpu.pipeline_mode<synchronous>, transform_indices = @transform_6, window_bounds = array<i64: 4, 1>}, {pipeline_mode = #tpu.pipeline_mode<synchronous>, transform_indices = @transform_7, window_bounds = array<i64: 5, 4, 4>}, {pipeline_mode = #tpu.pipeline_mode<synchronous>, transform_indices = @transform_8, window_bounds = array<i64: 4, 1>}, {pipeline_mode = #tpu.pipeline_mode<synchronous>, transform_indices = @transform_9, window_bounds = array<i64: 3, 4, 4>}, {pipeline_mode = #tpu.pipeline_mode<synchronous>, transform_indices = @transform_10, window_bounds = array<i64: 4, 1>}, {pipeline_mode = #tpu.pipeline_mode<synchronous>, transform_indices = @transform_11, window_bounds = array<i64: 5, 4, 4>}, {pipeline_mode = #tpu.pipeline_mode<synchronous>, transform_indices = @transform_12, window_bounds = array<i64: 4, 1>}, {pipeline_mode = #tpu.pipeline_mode<synchronous>, transform_indices = @transform_13, window_bounds = array<i64: 3, 4, 4>}, {pipeline_mode = #tpu.pipeline_mode<synchronous>, transform_indices = @transform_14, window_bounds = array<i64: 4, 1>}, {pipeline_mode = #tpu.pipeline_mode<synchronous>, transform_indices = @transform_15, window_bounds = array<i64: 5, 4, 4>}, {pipeline_mode = #tpu.pipeline_mode<synchronous>, transform_indices = @transform_16, window_bounds = array<i64: 4, 1>}, {pipeline_mode = #tpu.pipeline_mode<synchronous>, transform_indices = @transform_17, window_bounds = array<i64: 3, 4, 4>}, {pipeline_mode = #tpu.pipeline_mode<synchronous>, transform_indices = @transform_18, window_bounds = array<i64: 4, 1>}, {transform_indices = @transform_19, window_bounds = array<i64: 1, 8, 128>}]} {
    %c0 = arith.constant 0 : index
    %c0_0 = arith.constant 0 : index
    %c0_1 = arith.constant 0 : index
    %0 = vector.load %arg1[%c0, %c0_0, %c0_1] : memref<1x4x128xf32, #tpu.memory_space<vmem>>, vector<1x4x128xf32>
    %1 = vector.shape_cast %0 : vector<1x4x128xf32> to vector<4x128xf32>
    %c0_2 = arith.constant 0 : index
    %c0_3 = arith.constant 0 : index
    %c0_4 = arith.constant 0 : index
    %2 = vector.load %arg2[%c0_2, %c0_3, %c0_4] : memref<1x4x128xf32, #tpu.memory_space<vmem>>, vector<1x4x128xf32>
    %3 = vector.shape_cast %2 : vector<1x4x128xf32> to vector<4x128xf32>
    %c0_5 = arith.constant 0 : index
    %c0_6 = arith.constant 0 : index
    %4 = vector.load %arg3[%c0_5, %c0_6] : memref<1x128xi32, #tpu.memory_space<vmem>>, vector<1x128xi32>
    %5 = vector.shape_cast %4 : vector<1x128xi32> to vector<1x128xi32>
    %6 = vector.broadcast %5 : vector<1x128xi32> to vector<4x128xi32>
    %c3_i32 = arith.constant 3 : i32
    %7 = vector.broadcast %c3_i32 : i32 to vector<4x128xi32>
    %8 = arith.cmpi slt, %6, %7 : vector<4x128xi32>
    %c11_i32 = arith.constant 11 : i32
    %9 = vector.broadcast %c11_i32 : i32 to vector<4x128xi32>
    %10 = arith.cmpi sge, %6, %9 : vector<4x128xi32>
    %c0_7 = arith.constant 0 : index
    %c0_8 = arith.constant 0 : index
    %11 = vector.load %arg5[%c0_7, %c0_8] : memref<4x1xf32, #tpu.memory_space<vmem>>, vector<4x1xf32>
    %12 = arith.truncf %1 : vector<4x128xf32> to vector<4x128xbf16>
    %c0_9 = arith.constant 0 : index
    %c0_10 = arith.constant 0 : index
    %c0_11 = arith.constant 0 : index
    %13 = vector.load %arg4[%c0_9, %c0_10, %c0_11] : memref<5x4x4xbf16, #tpu.memory_space<vmem>>, vector<1x4x4xbf16>
    %14 = vector.shape_cast %13 : vector<1x4x4xbf16> to vector<4x4xbf16>
    %cst = arith.constant dense<0.000000e+00> : vector<4x128xf32>
    %15 = tpu.matmul %14, %12, %cst {dimension_numbers = #tpu.dot_dimension_numbers<[1], [0], [0], [1], [0, 0, 1, 1], [], []>} : vector<4x4xbf16>, vector<4x128xbf16>, vector<4x128xf32> -> vector<4x128xf32>
    %c127_i32 = arith.constant 127 : i32
    %16 = tpu.dynamic_rotate %1 by %c127_i32 dim 1 : vector<4x128xf32>, i32 -> vector<4x128xf32>
    %17 = arith.truncf %16 : vector<4x128xf32> to vector<4x128xbf16>
    %c1 = arith.constant 1 : index
    %c0_12 = arith.constant 0 : index
    %c0_13 = arith.constant 0 : index
    %18 = vector.load %arg4[%c1, %c0_12, %c0_13] : memref<5x4x4xbf16, #tpu.memory_space<vmem>>, vector<1x4x4xbf16>
    %19 = vector.shape_cast %18 : vector<1x4x4xbf16> to vector<4x4xbf16>
    %cst_14 = arith.constant dense<0.000000e+00> : vector<4x128xf32>
    %20 = tpu.matmul %19, %17, %cst_14 {dimension_numbers = #tpu.dot_dimension_numbers<[1], [0], [0], [1], [0, 0, 1, 1], [], []>} : vector<4x4xbf16>, vector<4x128xbf16>, vector<4x128xf32> -> vector<4x128xf32>
    %21 = arith.addf %15, %20 : vector<4x128xf32>
    %c126_i32 = arith.constant 126 : i32
    %22 = tpu.dynamic_rotate %1 by %c126_i32 dim 1 : vector<4x128xf32>, i32 -> vector<4x128xf32>
    %23 = arith.truncf %22 : vector<4x128xf32> to vector<4x128xbf16>
    %c2 = arith.constant 2 : index
    %c0_15 = arith.constant 0 : index
    %c0_16 = arith.constant 0 : index
    %24 = vector.load %arg4[%c2, %c0_15, %c0_16] : memref<5x4x4xbf16, #tpu.memory_space<vmem>>, vector<1x4x4xbf16>
    %25 = vector.shape_cast %24 : vector<1x4x4xbf16> to vector<4x4xbf16>
    %cst_17 = arith.constant dense<0.000000e+00> : vector<4x128xf32>
    %26 = tpu.matmul %25, %23, %cst_17 {dimension_numbers = #tpu.dot_dimension_numbers<[1], [0], [0], [1], [0, 0, 1, 1], [], []>} : vector<4x4xbf16>, vector<4x128xbf16>, vector<4x128xf32> -> vector<4x128xf32>
    %27 = arith.addf %21, %26 : vector<4x128xf32>
    %c125_i32 = arith.constant 125 : i32
    %28 = tpu.dynamic_rotate %1 by %c125_i32 dim 1 : vector<4x128xf32>, i32 -> vector<4x128xf32>
    %29 = arith.truncf %28 : vector<4x128xf32> to vector<4x128xbf16>
    %c3 = arith.constant 3 : index
    %c0_18 = arith.constant 0 : index
    %c0_19 = arith.constant 0 : index
    %30 = vector.load %arg4[%c3, %c0_18, %c0_19] : memref<5x4x4xbf16, #tpu.memory_space<vmem>>, vector<1x4x4xbf16>
    %31 = vector.shape_cast %30 : vector<1x4x4xbf16> to vector<4x4xbf16>
    %cst_20 = arith.constant dense<0.000000e+00> : vector<4x128xf32>
    %32 = tpu.matmul %31, %29, %cst_20 {dimension_numbers = #tpu.dot_dimension_numbers<[1], [0], [0], [1], [0, 0, 1, 1], [], []>} : vector<4x4xbf16>, vector<4x128xbf16>, vector<4x128xf32> -> vector<4x128xf32>
    %33 = arith.addf %27, %32 : vector<4x128xf32>
    %c124_i32 = arith.constant 124 : i32
    %34 = tpu.dynamic_rotate %1 by %c124_i32 dim 1 : vector<4x128xf32>, i32 -> vector<4x128xf32>
    %35 = arith.truncf %34 : vector<4x128xf32> to vector<4x128xbf16>
    %c4 = arith.constant 4 : index
    %c0_21 = arith.constant 0 : index
    %c0_22 = arith.constant 0 : index
    %36 = vector.load %arg4[%c4, %c0_21, %c0_22] : memref<5x4x4xbf16, #tpu.memory_space<vmem>>, vector<1x4x4xbf16>
    %37 = vector.shape_cast %36 : vector<1x4x4xbf16> to vector<4x4xbf16>
    %cst_23 = arith.constant dense<0.000000e+00> : vector<4x128xf32>
    %38 = tpu.matmul %37, %35, %cst_23 {dimension_numbers = #tpu.dot_dimension_numbers<[1], [0], [0], [1], [0, 0, 1, 1], [], []>} : vector<4x4xbf16>, vector<4x128xbf16>, vector<4x128xf32> -> vector<4x128xf32>
    %39 = arith.addf %33, %38 : vector<4x128xf32>
    %40 = vector.broadcast %11 : vector<4x1xf32> to vector<4x128xf32>
    %41 = arith.addf %39, %40 : vector<4x128xf32>
    %cst_24 = arith.constant 0.000000e+00 : f32
    %42 = vector.broadcast %cst_24 : f32 to vector<4x128xf32>
    %43 = arith.cmpf oge, %41, %42 : vector<4x128xf32>
    %cst_25 = arith.constant 0.00999999977 : f32
    %44 = vector.broadcast %cst_25 : f32 to vector<4x128xf32>
    %45 = arith.mulf %44, %41 : vector<4x128xf32>
    %46 = arith.select %43, %41, %45 : vector<4x128xi1>, vector<4x128xf32>
    %c0_26 = arith.constant 0 : index
    %c0_27 = arith.constant 0 : index
    %47 = vector.load %arg7[%c0_26, %c0_27] : memref<4x1xf32, #tpu.memory_space<vmem>>, vector<4x1xf32>
    %48 = arith.truncf %46 : vector<4x128xf32> to vector<4x128xbf16>
    %c0_28 = arith.constant 0 : index
    %c0_29 = arith.constant 0 : index
    %c0_30 = arith.constant 0 : index
    %49 = vector.load %arg6[%c0_28, %c0_29, %c0_30] : memref<3x4x4xbf16, #tpu.memory_space<vmem>>, vector<1x4x4xbf16>
    %50 = vector.shape_cast %49 : vector<1x4x4xbf16> to vector<4x4xbf16>
    %cst_31 = arith.constant dense<0.000000e+00> : vector<4x128xf32>
    %51 = tpu.matmul %50, %48, %cst_31 {dimension_numbers = #tpu.dot_dimension_numbers<[1], [0], [0], [1], [0, 0, 1, 1], [], []>} : vector<4x4xbf16>, vector<4x128xbf16>, vector<4x128xf32> -> vector<4x128xf32>
    %c127_i32_32 = arith.constant 127 : i32
    %52 = tpu.dynamic_rotate %46 by %c127_i32_32 dim 1 : vector<4x128xf32>, i32 -> vector<4x128xf32>
    %53 = arith.truncf %52 : vector<4x128xf32> to vector<4x128xbf16>
    %c1_33 = arith.constant 1 : index
    %c0_34 = arith.constant 0 : index
    %c0_35 = arith.constant 0 : index
    %54 = vector.load %arg6[%c1_33, %c0_34, %c0_35] : memref<3x4x4xbf16, #tpu.memory_space<vmem>>, vector<1x4x4xbf16>
    %55 = vector.shape_cast %54 : vector<1x4x4xbf16> to vector<4x4xbf16>
    %cst_36 = arith.constant dense<0.000000e+00> : vector<4x128xf32>
    %56 = tpu.matmul %55, %53, %cst_36 {dimension_numbers = #tpu.dot_dimension_numbers<[1], [0], [0], [1], [0, 0, 1, 1], [], []>} : vector<4x4xbf16>, vector<4x128xbf16>, vector<4x128xf32> -> vector<4x128xf32>
    %57 = arith.addf %51, %56 : vector<4x128xf32>
    %c126_i32_37 = arith.constant 126 : i32
    %58 = tpu.dynamic_rotate %46 by %c126_i32_37 dim 1 : vector<4x128xf32>, i32 -> vector<4x128xf32>
    %59 = arith.truncf %58 : vector<4x128xf32> to vector<4x128xbf16>
    %c2_38 = arith.constant 2 : index
    %c0_39 = arith.constant 0 : index
    %c0_40 = arith.constant 0 : index
    %60 = vector.load %arg6[%c2_38, %c0_39, %c0_40] : memref<3x4x4xbf16, #tpu.memory_space<vmem>>, vector<1x4x4xbf16>
    %61 = vector.shape_cast %60 : vector<1x4x4xbf16> to vector<4x4xbf16>
    %cst_41 = arith.constant dense<0.000000e+00> : vector<4x128xf32>
    %62 = tpu.matmul %61, %59, %cst_41 {dimension_numbers = #tpu.dot_dimension_numbers<[1], [0], [0], [1], [0, 0, 1, 1], [], []>} : vector<4x4xbf16>, vector<4x128xbf16>, vector<4x128xf32> -> vector<4x128xf32>
    %63 = arith.addf %57, %62 : vector<4x128xf32>
    %64 = vector.broadcast %47 : vector<4x1xf32> to vector<4x128xf32>
    %65 = arith.addf %63, %64 : vector<4x128xf32>
    %66 = math.tanh %65 : vector<4x128xf32>
    %c3_i32_42 = arith.constant 3 : i32
    %67 = tpu.dynamic_rotate %66 by %c3_i32_42 dim 1 : vector<4x128xf32>, i32 -> vector<4x128xf32>
    %68 = math.exp %67 : vector<4x128xf32>
    %69 = arith.mulf %3, %68 : vector<4x128xf32>
    %c0_43 = arith.constant 0 : index
    %c0_44 = arith.constant 0 : index
    %70 = vector.load %arg9[%c0_43, %c0_44] : memref<4x1xf32, #tpu.memory_space<vmem>>, vector<4x1xf32>
    %71 = arith.truncf %3 : vector<4x128xf32> to vector<4x128xbf16>
    %c0_45 = arith.constant 0 : index
    %c0_46 = arith.constant 0 : index
    %c0_47 = arith.constant 0 : index
    %72 = vector.load %arg8[%c0_45, %c0_46, %c0_47] : memref<5x4x4xbf16, #tpu.memory_space<vmem>>, vector<1x4x4xbf16>
    %73 = vector.shape_cast %72 : vector<1x4x4xbf16> to vector<4x4xbf16>
    %cst_48 = arith.constant dense<0.000000e+00> : vector<4x128xf32>
    %74 = tpu.matmul %73, %71, %cst_48 {dimension_numbers = #tpu.dot_dimension_numbers<[1], [0], [0], [1], [0, 0, 1, 1], [], []>} : vector<4x4xbf16>, vector<4x128xbf16>, vector<4x128xf32> -> vector<4x128xf32>
    %c127_i32_49 = arith.constant 127 : i32
    %75 = tpu.dynamic_rotate %3 by %c127_i32_49 dim 1 : vector<4x128xf32>, i32 -> vector<4x128xf32>
    %76 = arith.truncf %75 : vector<4x128xf32> to vector<4x128xbf16>
    %c1_50 = arith.constant 1 : index
    %c0_51 = arith.constant 0 : index
    %c0_52 = arith.constant 0 : index
    %77 = vector.load %arg8[%c1_50, %c0_51, %c0_52] : memref<5x4x4xbf16, #tpu.memory_space<vmem>>, vector<1x4x4xbf16>
    %78 = vector.shape_cast %77 : vector<1x4x4xbf16> to vector<4x4xbf16>
    %cst_53 = arith.constant dense<0.000000e+00> : vector<4x128xf32>
    %79 = tpu.matmul %78, %76, %cst_53 {dimension_numbers = #tpu.dot_dimension_numbers<[1], [0], [0], [1], [0, 0, 1, 1], [], []>} : vector<4x4xbf16>, vector<4x128xbf16>, vector<4x128xf32> -> vector<4x128xf32>
    %80 = arith.addf %74, %79 : vector<4x128xf32>
    %c126_i32_54 = arith.constant 126 : i32
    %81 = tpu.dynamic_rotate %3 by %c126_i32_54 dim 1 : vector<4x128xf32>, i32 -> vector<4x128xf32>
    %82 = arith.truncf %81 : vector<4x128xf32> to vector<4x128xbf16>
    %c2_55 = arith.constant 2 : index
    %c0_56 = arith.constant 0 : index
    %c0_57 = arith.constant 0 : index
    %83 = vector.load %arg8[%c2_55, %c0_56, %c0_57] : memref<5x4x4xbf16, #tpu.memory_space<vmem>>, vector<1x4x4xbf16>
    %84 = vector.shape_cast %83 : vector<1x4x4xbf16> to vector<4x4xbf16>
    %cst_58 = arith.constant dense<0.000000e+00> : vector<4x128xf32>
    %85 = tpu.matmul %84, %82, %cst_58 {dimension_numbers = #tpu.dot_dimension_numbers<[1], [0], [0], [1], [0, 0, 1, 1], [], []>} : vector<4x4xbf16>, vector<4x128xbf16>, vector<4x128xf32> -> vector<4x128xf32>
    %86 = arith.addf %80, %85 : vector<4x128xf32>
    %c125_i32_59 = arith.constant 125 : i32
    %87 = tpu.dynamic_rotate %3 by %c125_i32_59 dim 1 : vector<4x128xf32>, i32 -> vector<4x128xf32>
    %88 = arith.truncf %87 : vector<4x128xf32> to vector<4x128xbf16>
    %c3_60 = arith.constant 3 : index
    %c0_61 = arith.constant 0 : index
    %c0_62 = arith.constant 0 : index
    %89 = vector.load %arg8[%c3_60, %c0_61, %c0_62] : memref<5x4x4xbf16, #tpu.memory_space<vmem>>, vector<1x4x4xbf16>
    %90 = vector.shape_cast %89 : vector<1x4x4xbf16> to vector<4x4xbf16>
    %cst_63 = arith.constant dense<0.000000e+00> : vector<4x128xf32>
    %91 = tpu.matmul %90, %88, %cst_63 {dimension_numbers = #tpu.dot_dimension_numbers<[1], [0], [0], [1], [0, 0, 1, 1], [], []>} : vector<4x4xbf16>, vector<4x128xbf16>, vector<4x128xf32> -> vector<4x128xf32>
    %92 = arith.addf %86, %91 : vector<4x128xf32>
    %c124_i32_64 = arith.constant 124 : i32
    %93 = tpu.dynamic_rotate %3 by %c124_i32_64 dim 1 : vector<4x128xf32>, i32 -> vector<4x128xf32>
    %94 = arith.truncf %93 : vector<4x128xf32> to vector<4x128xbf16>
    %c4_65 = arith.constant 4 : index
    %c0_66 = arith.constant 0 : index
    %c0_67 = arith.constant 0 : index
    %95 = vector.load %arg8[%c4_65, %c0_66, %c0_67] : memref<5x4x4xbf16, #tpu.memory_space<vmem>>, vector<1x4x4xbf16>
    %96 = vector.shape_cast %95 : vector<1x4x4xbf16> to vector<4x4xbf16>
    %cst_68 = arith.constant dense<0.000000e+00> : vector<4x128xf32>
    %97 = tpu.matmul %96, %94, %cst_68 {dimension_numbers = #tpu.dot_dimension_numbers<[1], [0], [0], [1], [0, 0, 1, 1], [], []>} : vector<4x4xbf16>, vector<4x128xbf16>, vector<4x128xf32> -> vector<4x128xf32>
    %98 = arith.addf %92, %97 : vector<4x128xf32>
    %99 = vector.broadcast %70 : vector<4x1xf32> to vector<4x128xf32>
    %100 = arith.addf %98, %99 : vector<4x128xf32>
    %cst_69 = arith.constant 0.000000e+00 : f32
    %101 = vector.broadcast %cst_69 : f32 to vector<4x128xf32>
    %102 = arith.cmpf oge, %100, %101 : vector<4x128xf32>
    %cst_70 = arith.constant 0.00999999977 : f32
    %103 = vector.broadcast %cst_70 : f32 to vector<4x128xf32>
    %104 = arith.mulf %103, %100 : vector<4x128xf32>
    %105 = arith.select %102, %100, %104 : vector<4x128xi1>, vector<4x128xf32>
    %c0_71 = arith.constant 0 : index
    %c0_72 = arith.constant 0 : index
    %106 = vector.load %arg11[%c0_71, %c0_72] : memref<4x1xf32, #tpu.memory_space<vmem>>, vector<4x1xf32>
    %107 = arith.truncf %105 : vector<4x128xf32> to vector<4x128xbf16>
    %c0_73 = arith.constant 0 : index
    %c0_74 = arith.constant 0 : index
    %c0_75 = arith.constant 0 : index
    %108 = vector.load %arg10[%c0_73, %c0_74, %c0_75] : memref<3x4x4xbf16, #tpu.memory_space<vmem>>, vector<1x4x4xbf16>
    %109 = vector.shape_cast %108 : vector<1x4x4xbf16> to vector<4x4xbf16>
    %cst_76 = arith.constant dense<0.000000e+00> : vector<4x128xf32>
    %110 = tpu.matmul %109, %107, %cst_76 {dimension_numbers = #tpu.dot_dimension_numbers<[1], [0], [0], [1], [0, 0, 1, 1], [], []>} : vector<4x4xbf16>, vector<4x128xbf16>, vector<4x128xf32> -> vector<4x128xf32>
    %c127_i32_77 = arith.constant 127 : i32
    %111 = tpu.dynamic_rotate %105 by %c127_i32_77 dim 1 : vector<4x128xf32>, i32 -> vector<4x128xf32>
    %112 = arith.truncf %111 : vector<4x128xf32> to vector<4x128xbf16>
    %c1_78 = arith.constant 1 : index
    %c0_79 = arith.constant 0 : index
    %c0_80 = arith.constant 0 : index
    %113 = vector.load %arg10[%c1_78, %c0_79, %c0_80] : memref<3x4x4xbf16, #tpu.memory_space<vmem>>, vector<1x4x4xbf16>
    %114 = vector.shape_cast %113 : vector<1x4x4xbf16> to vector<4x4xbf16>
    %cst_81 = arith.constant dense<0.000000e+00> : vector<4x128xf32>
    %115 = tpu.matmul %114, %112, %cst_81 {dimension_numbers = #tpu.dot_dimension_numbers<[1], [0], [0], [1], [0, 0, 1, 1], [], []>} : vector<4x4xbf16>, vector<4x128xbf16>, vector<4x128xf32> -> vector<4x128xf32>
    %116 = arith.addf %110, %115 : vector<4x128xf32>
    %c126_i32_82 = arith.constant 126 : i32
    %117 = tpu.dynamic_rotate %105 by %c126_i32_82 dim 1 : vector<4x128xf32>, i32 -> vector<4x128xf32>
    %118 = arith.truncf %117 : vector<4x128xf32> to vector<4x128xbf16>
    %c2_83 = arith.constant 2 : index
    %c0_84 = arith.constant 0 : index
    %c0_85 = arith.constant 0 : index
    %119 = vector.load %arg10[%c2_83, %c0_84, %c0_85] : memref<3x4x4xbf16, #tpu.memory_space<vmem>>, vector<1x4x4xbf16>
    %120 = vector.shape_cast %119 : vector<1x4x4xbf16> to vector<4x4xbf16>
    %cst_86 = arith.constant dense<0.000000e+00> : vector<4x128xf32>
    %121 = tpu.matmul %120, %118, %cst_86 {dimension_numbers = #tpu.dot_dimension_numbers<[1], [0], [0], [1], [0, 0, 1, 1], [], []>} : vector<4x4xbf16>, vector<4x128xbf16>, vector<4x128xf32> -> vector<4x128xf32>
    %122 = arith.addf %116, %121 : vector<4x128xf32>
    %123 = vector.broadcast %106 : vector<4x1xf32> to vector<4x128xf32>
    %124 = arith.addf %122, %123 : vector<4x128xf32>
    %125 = math.tanh %124 : vector<4x128xf32>
    %c3_i32_87 = arith.constant 3 : i32
    %126 = tpu.dynamic_rotate %125 by %c3_i32_87 dim 1 : vector<4x128xf32>, i32 -> vector<4x128xf32>
    %127 = math.exp %126 : vector<4x128xf32>
    %128 = arith.mulf %1, %127 : vector<4x128xf32>
    %c127_i32_88 = arith.constant 127 : i32
    %129 = tpu.dynamic_rotate %69 by %c127_i32_88 dim 1 : vector<4x128xf32>, i32 -> vector<4x128xf32>
    %130 = arith.select %8, %129, %69 : vector<4x128xi1>, vector<4x128xf32>
    %c127_i32_89 = arith.constant 127 : i32
    %131 = tpu.dynamic_rotate %130 by %c127_i32_89 dim 1 : vector<4x128xf32>, i32 -> vector<4x128xf32>
    %132 = arith.select %8, %131, %130 : vector<4x128xi1>, vector<4x128xf32>
    %c127_i32_90 = arith.constant 127 : i32
    %133 = tpu.dynamic_rotate %132 by %c127_i32_90 dim 1 : vector<4x128xf32>, i32 -> vector<4x128xf32>
    %134 = arith.select %8, %133, %132 : vector<4x128xi1>, vector<4x128xf32>
    %c1_i32 = arith.constant 1 : i32
    %135 = tpu.dynamic_rotate %134 by %c1_i32 dim 1 : vector<4x128xf32>, i32 -> vector<4x128xf32>
    %136 = arith.select %10, %135, %134 : vector<4x128xi1>, vector<4x128xf32>
    %c1_i32_91 = arith.constant 1 : i32
    %137 = tpu.dynamic_rotate %136 by %c1_i32_91 dim 1 : vector<4x128xf32>, i32 -> vector<4x128xf32>
    %138 = arith.select %10, %137, %136 : vector<4x128xi1>, vector<4x128xf32>
    %c1_i32_92 = arith.constant 1 : i32
    %139 = tpu.dynamic_rotate %138 by %c1_i32_92 dim 1 : vector<4x128xf32>, i32 -> vector<4x128xf32>
    %140 = arith.select %10, %139, %138 : vector<4x128xi1>, vector<4x128xf32>
    %c127_i32_93 = arith.constant 127 : i32
    %141 = tpu.dynamic_rotate %128 by %c127_i32_93 dim 1 : vector<4x128xf32>, i32 -> vector<4x128xf32>
    %142 = arith.select %8, %141, %128 : vector<4x128xi1>, vector<4x128xf32>
    %c127_i32_94 = arith.constant 127 : i32
    %143 = tpu.dynamic_rotate %142 by %c127_i32_94 dim 1 : vector<4x128xf32>, i32 -> vector<4x128xf32>
    %144 = arith.select %8, %143, %142 : vector<4x128xi1>, vector<4x128xf32>
    %c127_i32_95 = arith.constant 127 : i32
    %145 = tpu.dynamic_rotate %144 by %c127_i32_95 dim 1 : vector<4x128xf32>, i32 -> vector<4x128xf32>
    %146 = arith.select %8, %145, %144 : vector<4x128xi1>, vector<4x128xf32>
    %c1_i32_96 = arith.constant 1 : i32
    %147 = tpu.dynamic_rotate %146 by %c1_i32_96 dim 1 : vector<4x128xf32>, i32 -> vector<4x128xf32>
    %148 = arith.select %10, %147, %146 : vector<4x128xi1>, vector<4x128xf32>
    %c1_i32_97 = arith.constant 1 : i32
    %149 = tpu.dynamic_rotate %148 by %c1_i32_97 dim 1 : vector<4x128xf32>, i32 -> vector<4x128xf32>
    %150 = arith.select %10, %149, %148 : vector<4x128xi1>, vector<4x128xf32>
    %c1_i32_98 = arith.constant 1 : i32
    %151 = tpu.dynamic_rotate %150 by %c1_i32_98 dim 1 : vector<4x128xf32>, i32 -> vector<4x128xf32>
    %152 = arith.select %10, %151, %150 : vector<4x128xi1>, vector<4x128xf32>
    %c0_99 = arith.constant 0 : index
    %c0_100 = arith.constant 0 : index
    %153 = vector.load %arg13[%c0_99, %c0_100] : memref<4x1xf32, #tpu.memory_space<vmem>>, vector<4x1xf32>
    %154 = arith.truncf %140 : vector<4x128xf32> to vector<4x128xbf16>
    %c0_101 = arith.constant 0 : index
    %c0_102 = arith.constant 0 : index
    %c0_103 = arith.constant 0 : index
    %155 = vector.load %arg12[%c0_101, %c0_102, %c0_103] : memref<5x4x4xbf16, #tpu.memory_space<vmem>>, vector<1x4x4xbf16>
    %156 = vector.shape_cast %155 : vector<1x4x4xbf16> to vector<4x4xbf16>
    %cst_104 = arith.constant dense<0.000000e+00> : vector<4x128xf32>
    %157 = tpu.matmul %156, %154, %cst_104 {dimension_numbers = #tpu.dot_dimension_numbers<[1], [0], [0], [1], [0, 0, 1, 1], [], []>} : vector<4x4xbf16>, vector<4x128xbf16>, vector<4x128xf32> -> vector<4x128xf32>
    %c127_i32_105 = arith.constant 127 : i32
    %158 = tpu.dynamic_rotate %140 by %c127_i32_105 dim 1 : vector<4x128xf32>, i32 -> vector<4x128xf32>
    %159 = arith.truncf %158 : vector<4x128xf32> to vector<4x128xbf16>
    %c1_106 = arith.constant 1 : index
    %c0_107 = arith.constant 0 : index
    %c0_108 = arith.constant 0 : index
    %160 = vector.load %arg12[%c1_106, %c0_107, %c0_108] : memref<5x4x4xbf16, #tpu.memory_space<vmem>>, vector<1x4x4xbf16>
    %161 = vector.shape_cast %160 : vector<1x4x4xbf16> to vector<4x4xbf16>
    %cst_109 = arith.constant dense<0.000000e+00> : vector<4x128xf32>
    %162 = tpu.matmul %161, %159, %cst_109 {dimension_numbers = #tpu.dot_dimension_numbers<[1], [0], [0], [1], [0, 0, 1, 1], [], []>} : vector<4x4xbf16>, vector<4x128xbf16>, vector<4x128xf32> -> vector<4x128xf32>
    %163 = arith.addf %157, %162 : vector<4x128xf32>
    %c126_i32_110 = arith.constant 126 : i32
    %164 = tpu.dynamic_rotate %140 by %c126_i32_110 dim 1 : vector<4x128xf32>, i32 -> vector<4x128xf32>
    %165 = arith.truncf %164 : vector<4x128xf32> to vector<4x128xbf16>
    %c2_111 = arith.constant 2 : index
    %c0_112 = arith.constant 0 : index
    %c0_113 = arith.constant 0 : index
    %166 = vector.load %arg12[%c2_111, %c0_112, %c0_113] : memref<5x4x4xbf16, #tpu.memory_space<vmem>>, vector<1x4x4xbf16>
    %167 = vector.shape_cast %166 : vector<1x4x4xbf16> to vector<4x4xbf16>
    %cst_114 = arith.constant dense<0.000000e+00> : vector<4x128xf32>
    %168 = tpu.matmul %167, %165, %cst_114 {dimension_numbers = #tpu.dot_dimension_numbers<[1], [0], [0], [1], [0, 0, 1, 1], [], []>} : vector<4x4xbf16>, vector<4x128xbf16>, vector<4x128xf32> -> vector<4x128xf32>
    %169 = arith.addf %163, %168 : vector<4x128xf32>
    %c125_i32_115 = arith.constant 125 : i32
    %170 = tpu.dynamic_rotate %140 by %c125_i32_115 dim 1 : vector<4x128xf32>, i32 -> vector<4x128xf32>
    %171 = arith.truncf %170 : vector<4x128xf32> to vector<4x128xbf16>
    %c3_116 = arith.constant 3 : index
    %c0_117 = arith.constant 0 : index
    %c0_118 = arith.constant 0 : index
    %172 = vector.load %arg12[%c3_116, %c0_117, %c0_118] : memref<5x4x4xbf16, #tpu.memory_space<vmem>>, vector<1x4x4xbf16>
    %173 = vector.shape_cast %172 : vector<1x4x4xbf16> to vector<4x4xbf16>
    %cst_119 = arith.constant dense<0.000000e+00> : vector<4x128xf32>
    %174 = tpu.matmul %173, %171, %cst_119 {dimension_numbers = #tpu.dot_dimension_numbers<[1], [0], [0], [1], [0, 0, 1, 1], [], []>} : vector<4x4xbf16>, vector<4x128xbf16>, vector<4x128xf32> -> vector<4x128xf32>
    %175 = arith.addf %169, %174 : vector<4x128xf32>
    %c124_i32_120 = arith.constant 124 : i32
    %176 = tpu.dynamic_rotate %140 by %c124_i32_120 dim 1 : vector<4x128xf32>, i32 -> vector<4x128xf32>
    %177 = arith.truncf %176 : vector<4x128xf32> to vector<4x128xbf16>
    %c4_121 = arith.constant 4 : index
    %c0_122 = arith.constant 0 : index
    %c0_123 = arith.constant 0 : index
    %178 = vector.load %arg12[%c4_121, %c0_122, %c0_123] : memref<5x4x4xbf16, #tpu.memory_space<vmem>>, vector<1x4x4xbf16>
    %179 = vector.shape_cast %178 : vector<1x4x4xbf16> to vector<4x4xbf16>
    %cst_124 = arith.constant dense<0.000000e+00> : vector<4x128xf32>
    %180 = tpu.matmul %179, %177, %cst_124 {dimension_numbers = #tpu.dot_dimension_numbers<[1], [0], [0], [1], [0, 0, 1, 1], [], []>} : vector<4x4xbf16>, vector<4x128xbf16>, vector<4x128xf32> -> vector<4x128xf32>
    %181 = arith.addf %175, %180 : vector<4x128xf32>
    %182 = vector.broadcast %153 : vector<4x1xf32> to vector<4x128xf32>
    %183 = arith.addf %181, %182 : vector<4x128xf32>
    %cst_125 = arith.constant 0.000000e+00 : f32
    %184 = vector.broadcast %cst_125 : f32 to vector<4x128xf32>
    %185 = arith.cmpf oge, %183, %184 : vector<4x128xf32>
    %cst_126 = arith.constant 0.00999999977 : f32
    %186 = vector.broadcast %cst_126 : f32 to vector<4x128xf32>
    %187 = arith.mulf %186, %183 : vector<4x128xf32>
    %188 = arith.select %185, %183, %187 : vector<4x128xi1>, vector<4x128xf32>
    %c0_127 = arith.constant 0 : index
    %c0_128 = arith.constant 0 : index
    %189 = vector.load %arg15[%c0_127, %c0_128] : memref<4x1xf32, #tpu.memory_space<vmem>>, vector<4x1xf32>
    %190 = arith.truncf %188 : vector<4x128xf32> to vector<4x128xbf16>
    %c0_129 = arith.constant 0 : index
    %c0_130 = arith.constant 0 : index
    %c0_131 = arith.constant 0 : index
    %191 = vector.load %arg14[%c0_129, %c0_130, %c0_131] : memref<3x4x4xbf16, #tpu.memory_space<vmem>>, vector<1x4x4xbf16>
    %192 = vector.shape_cast %191 : vector<1x4x4xbf16> to vector<4x4xbf16>
    %cst_132 = arith.constant dense<0.000000e+00> : vector<4x128xf32>
    %193 = tpu.matmul %192, %190, %cst_132 {dimension_numbers = #tpu.dot_dimension_numbers<[1], [0], [0], [1], [0, 0, 1, 1], [], []>} : vector<4x4xbf16>, vector<4x128xbf16>, vector<4x128xf32> -> vector<4x128xf32>
    %c127_i32_133 = arith.constant 127 : i32
    %194 = tpu.dynamic_rotate %188 by %c127_i32_133 dim 1 : vector<4x128xf32>, i32 -> vector<4x128xf32>
    %195 = arith.truncf %194 : vector<4x128xf32> to vector<4x128xbf16>
    %c1_134 = arith.constant 1 : index
    %c0_135 = arith.constant 0 : index
    %c0_136 = arith.constant 0 : index
    %196 = vector.load %arg14[%c1_134, %c0_135, %c0_136] : memref<3x4x4xbf16, #tpu.memory_space<vmem>>, vector<1x4x4xbf16>
    %197 = vector.shape_cast %196 : vector<1x4x4xbf16> to vector<4x4xbf16>
    %cst_137 = arith.constant dense<0.000000e+00> : vector<4x128xf32>
    %198 = tpu.matmul %197, %195, %cst_137 {dimension_numbers = #tpu.dot_dimension_numbers<[1], [0], [0], [1], [0, 0, 1, 1], [], []>} : vector<4x4xbf16>, vector<4x128xbf16>, vector<4x128xf32> -> vector<4x128xf32>
    %199 = arith.addf %193, %198 : vector<4x128xf32>
    %c126_i32_138 = arith.constant 126 : i32
    %200 = tpu.dynamic_rotate %188 by %c126_i32_138 dim 1 : vector<4x128xf32>, i32 -> vector<4x128xf32>
    %201 = arith.truncf %200 : vector<4x128xf32> to vector<4x128xbf16>
    %c2_139 = arith.constant 2 : index
    %c0_140 = arith.constant 0 : index
    %c0_141 = arith.constant 0 : index
    %202 = vector.load %arg14[%c2_139, %c0_140, %c0_141] : memref<3x4x4xbf16, #tpu.memory_space<vmem>>, vector<1x4x4xbf16>
    %203 = vector.shape_cast %202 : vector<1x4x4xbf16> to vector<4x4xbf16>
    %cst_142 = arith.constant dense<0.000000e+00> : vector<4x128xf32>
    %204 = tpu.matmul %203, %201, %cst_142 {dimension_numbers = #tpu.dot_dimension_numbers<[1], [0], [0], [1], [0, 0, 1, 1], [], []>} : vector<4x4xbf16>, vector<4x128xbf16>, vector<4x128xf32> -> vector<4x128xf32>
    %205 = arith.addf %199, %204 : vector<4x128xf32>
    %206 = vector.broadcast %189 : vector<4x1xf32> to vector<4x128xf32>
    %207 = arith.addf %205, %206 : vector<4x128xf32>
    %208 = math.tanh %207 : vector<4x128xf32>
    %c3_i32_143 = arith.constant 3 : i32
    %209 = tpu.dynamic_rotate %208 by %c3_i32_143 dim 1 : vector<4x128xf32>, i32 -> vector<4x128xf32>
    %210 = arith.addf %152, %209 : vector<4x128xf32>
    %c0_144 = arith.constant 0 : index
    %c0_145 = arith.constant 0 : index
    %211 = vector.load %arg17[%c0_144, %c0_145] : memref<4x1xf32, #tpu.memory_space<vmem>>, vector<4x1xf32>
    %212 = arith.truncf %152 : vector<4x128xf32> to vector<4x128xbf16>
    %c0_146 = arith.constant 0 : index
    %c0_147 = arith.constant 0 : index
    %c0_148 = arith.constant 0 : index
    %213 = vector.load %arg16[%c0_146, %c0_147, %c0_148] : memref<5x4x4xbf16, #tpu.memory_space<vmem>>, vector<1x4x4xbf16>
    %214 = vector.shape_cast %213 : vector<1x4x4xbf16> to vector<4x4xbf16>
    %cst_149 = arith.constant dense<0.000000e+00> : vector<4x128xf32>
    %215 = tpu.matmul %214, %212, %cst_149 {dimension_numbers = #tpu.dot_dimension_numbers<[1], [0], [0], [1], [0, 0, 1, 1], [], []>} : vector<4x4xbf16>, vector<4x128xbf16>, vector<4x128xf32> -> vector<4x128xf32>
    %c127_i32_150 = arith.constant 127 : i32
    %216 = tpu.dynamic_rotate %152 by %c127_i32_150 dim 1 : vector<4x128xf32>, i32 -> vector<4x128xf32>
    %217 = arith.truncf %216 : vector<4x128xf32> to vector<4x128xbf16>
    %c1_151 = arith.constant 1 : index
    %c0_152 = arith.constant 0 : index
    %c0_153 = arith.constant 0 : index
    %218 = vector.load %arg16[%c1_151, %c0_152, %c0_153] : memref<5x4x4xbf16, #tpu.memory_space<vmem>>, vector<1x4x4xbf16>
    %219 = vector.shape_cast %218 : vector<1x4x4xbf16> to vector<4x4xbf16>
    %cst_154 = arith.constant dense<0.000000e+00> : vector<4x128xf32>
    %220 = tpu.matmul %219, %217, %cst_154 {dimension_numbers = #tpu.dot_dimension_numbers<[1], [0], [0], [1], [0, 0, 1, 1], [], []>} : vector<4x4xbf16>, vector<4x128xbf16>, vector<4x128xf32> -> vector<4x128xf32>
    %221 = arith.addf %215, %220 : vector<4x128xf32>
    %c126_i32_155 = arith.constant 126 : i32
    %222 = tpu.dynamic_rotate %152 by %c126_i32_155 dim 1 : vector<4x128xf32>, i32 -> vector<4x128xf32>
    %223 = arith.truncf %222 : vector<4x128xf32> to vector<4x128xbf16>
    %c2_156 = arith.constant 2 : index
    %c0_157 = arith.constant 0 : index
    %c0_158 = arith.constant 0 : index
    %224 = vector.load %arg16[%c2_156, %c0_157, %c0_158] : memref<5x4x4xbf16, #tpu.memory_space<vmem>>, vector<1x4x4xbf16>
    %225 = vector.shape_cast %224 : vector<1x4x4xbf16> to vector<4x4xbf16>
    %cst_159 = arith.constant dense<0.000000e+00> : vector<4x128xf32>
    %226 = tpu.matmul %225, %223, %cst_159 {dimension_numbers = #tpu.dot_dimension_numbers<[1], [0], [0], [1], [0, 0, 1, 1], [], []>} : vector<4x4xbf16>, vector<4x128xbf16>, vector<4x128xf32> -> vector<4x128xf32>
    %227 = arith.addf %221, %226 : vector<4x128xf32>
    %c125_i32_160 = arith.constant 125 : i32
    %228 = tpu.dynamic_rotate %152 by %c125_i32_160 dim 1 : vector<4x128xf32>, i32 -> vector<4x128xf32>
    %229 = arith.truncf %228 : vector<4x128xf32> to vector<4x128xbf16>
    %c3_161 = arith.constant 3 : index
    %c0_162 = arith.constant 0 : index
    %c0_163 = arith.constant 0 : index
    %230 = vector.load %arg16[%c3_161, %c0_162, %c0_163] : memref<5x4x4xbf16, #tpu.memory_space<vmem>>, vector<1x4x4xbf16>
    %231 = vector.shape_cast %230 : vector<1x4x4xbf16> to vector<4x4xbf16>
    %cst_164 = arith.constant dense<0.000000e+00> : vector<4x128xf32>
    %232 = tpu.matmul %231, %229, %cst_164 {dimension_numbers = #tpu.dot_dimension_numbers<[1], [0], [0], [1], [0, 0, 1, 1], [], []>} : vector<4x4xbf16>, vector<4x128xbf16>, vector<4x128xf32> -> vector<4x128xf32>
    %233 = arith.addf %227, %232 : vector<4x128xf32>
    %c124_i32_165 = arith.constant 124 : i32
    %234 = tpu.dynamic_rotate %152 by %c124_i32_165 dim 1 : vector<4x128xf32>, i32 -> vector<4x128xf32>
    %235 = arith.truncf %234 : vector<4x128xf32> to vector<4x128xbf16>
    %c4_166 = arith.constant 4 : index
    %c0_167 = arith.constant 0 : index
    %c0_168 = arith.constant 0 : index
    %236 = vector.load %arg16[%c4_166, %c0_167, %c0_168] : memref<5x4x4xbf16, #tpu.memory_space<vmem>>, vector<1x4x4xbf16>
    %237 = vector.shape_cast %236 : vector<1x4x4xbf16> to vector<4x4xbf16>
    %cst_169 = arith.constant dense<0.000000e+00> : vector<4x128xf32>
    %238 = tpu.matmul %237, %235, %cst_169 {dimension_numbers = #tpu.dot_dimension_numbers<[1], [0], [0], [1], [0, 0, 1, 1], [], []>} : vector<4x4xbf16>, vector<4x128xbf16>, vector<4x128xf32> -> vector<4x128xf32>
    %239 = arith.addf %233, %238 : vector<4x128xf32>
    %240 = vector.broadcast %211 : vector<4x1xf32> to vector<4x128xf32>
    %241 = arith.addf %239, %240 : vector<4x128xf32>
    %cst_170 = arith.constant 0.000000e+00 : f32
    %242 = vector.broadcast %cst_170 : f32 to vector<4x128xf32>
    %243 = arith.cmpf oge, %241, %242 : vector<4x128xf32>
    %cst_171 = arith.constant 0.00999999977 : f32
    %244 = vector.broadcast %cst_171 : f32 to vector<4x128xf32>
    %245 = arith.mulf %244, %241 : vector<4x128xf32>
    %246 = arith.select %243, %241, %245 : vector<4x128xi1>, vector<4x128xf32>
    %c0_172 = arith.constant 0 : index
    %c0_173 = arith.constant 0 : index
    %247 = vector.load %arg19[%c0_172, %c0_173] : memref<4x1xf32, #tpu.memory_space<vmem>>, vector<4x1xf32>
    %248 = arith.truncf %246 : vector<4x128xf32> to vector<4x128xbf16>
    %c0_174 = arith.constant 0 : index
    %c0_175 = arith.constant 0 : index
    %c0_176 = arith.constant 0 : index
    %249 = vector.load %arg18[%c0_174, %c0_175, %c0_176] : memref<3x4x4xbf16, #tpu.memory_space<vmem>>, vector<1x4x4xbf16>
    %250 = vector.shape_cast %249 : vector<1x4x4xbf16> to vector<4x4xbf16>
    %cst_177 = arith.constant dense<0.000000e+00> : vector<4x128xf32>
    %251 = tpu.matmul %250, %248, %cst_177 {dimension_numbers = #tpu.dot_dimension_numbers<[1], [0], [0], [1], [0, 0, 1, 1], [], []>} : vector<4x4xbf16>, vector<4x128xbf16>, vector<4x128xf32> -> vector<4x128xf32>
    %c127_i32_178 = arith.constant 127 : i32
    %252 = tpu.dynamic_rotate %246 by %c127_i32_178 dim 1 : vector<4x128xf32>, i32 -> vector<4x128xf32>
    %253 = arith.truncf %252 : vector<4x128xf32> to vector<4x128xbf16>
    %c1_179 = arith.constant 1 : index
    %c0_180 = arith.constant 0 : index
    %c0_181 = arith.constant 0 : index
    %254 = vector.load %arg18[%c1_179, %c0_180, %c0_181] : memref<3x4x4xbf16, #tpu.memory_space<vmem>>, vector<1x4x4xbf16>
    %255 = vector.shape_cast %254 : vector<1x4x4xbf16> to vector<4x4xbf16>
    %cst_182 = arith.constant dense<0.000000e+00> : vector<4x128xf32>
    %256 = tpu.matmul %255, %253, %cst_182 {dimension_numbers = #tpu.dot_dimension_numbers<[1], [0], [0], [1], [0, 0, 1, 1], [], []>} : vector<4x4xbf16>, vector<4x128xbf16>, vector<4x128xf32> -> vector<4x128xf32>
    %257 = arith.addf %251, %256 : vector<4x128xf32>
    %c126_i32_183 = arith.constant 126 : i32
    %258 = tpu.dynamic_rotate %246 by %c126_i32_183 dim 1 : vector<4x128xf32>, i32 -> vector<4x128xf32>
    %259 = arith.truncf %258 : vector<4x128xf32> to vector<4x128xbf16>
    %c2_184 = arith.constant 2 : index
    %c0_185 = arith.constant 0 : index
    %c0_186 = arith.constant 0 : index
    %260 = vector.load %arg18[%c2_184, %c0_185, %c0_186] : memref<3x4x4xbf16, #tpu.memory_space<vmem>>, vector<1x4x4xbf16>
    %261 = vector.shape_cast %260 : vector<1x4x4xbf16> to vector<4x4xbf16>
    %cst_187 = arith.constant dense<0.000000e+00> : vector<4x128xf32>
    %262 = tpu.matmul %261, %259, %cst_187 {dimension_numbers = #tpu.dot_dimension_numbers<[1], [0], [0], [1], [0, 0, 1, 1], [], []>} : vector<4x4xbf16>, vector<4x128xbf16>, vector<4x128xf32> -> vector<4x128xf32>
    %263 = arith.addf %257, %262 : vector<4x128xf32>
    %264 = vector.broadcast %247 : vector<4x1xf32> to vector<4x128xf32>
    %265 = arith.addf %263, %264 : vector<4x128xf32>
    %266 = math.tanh %265 : vector<4x128xf32>
    %c3_i32_188 = arith.constant 3 : i32
    %267 = tpu.dynamic_rotate %266 by %c3_i32_188 dim 1 : vector<4x128xf32>, i32 -> vector<4x128xf32>
    %268 = arith.subf %140, %267 : vector<4x128xf32>
    %269 = tpu.concatenate %210, %268 in 0 : vector<4x128xf32>, vector<4x128xf32> -> vector<8x128xf32>
    %c0_189 = arith.constant 0 : index
    %c0_190 = arith.constant 0 : index
    %c0_191 = arith.constant 0 : index
    %270 = vector.load %arg20[%c0_189, %c0_190, %c0_191] : memref<1x8x128xf32, #tpu.memory_space<vmem>>, vector<1x8x128xf32>
    %271 = vector.shape_cast %270 : vector<1x8x128xf32> to vector<8x128xf32>
    %272 = vector.shape_cast %269 : vector<8x128xf32> to vector<1x8x128xf32>
    tpu.vector_store %arg20[%c0_189, %c0_190, %c0_191], %272 {strides = array<i32>} : memref<1x8x128xf32, #tpu.memory_space<vmem>>, vector<1x8x128xf32>,
    return
  }
  func.func @transform_0(%arg0: i32) -> (i32, i32, i32) {
    %c0_i32 = arith.constant 0 : i32
    %c0_i32_0 = arith.constant 0 : i32
    %c0_i32_1 = arith.constant 0 : i32
    return %arg0, %c0_i32, %c0_i32_0 : i32, i32, i32
  }
  func.func @transform_1(%arg0: i32) -> (i32, i32, i32) {
    %c0_i32 = arith.constant 0 : i32
    %c0_i32_0 = arith.constant 0 : i32
    %c0_i32_1 = arith.constant 0 : i32
    return %arg0, %c0_i32, %c0_i32_0 : i32, i32, i32
  }
  func.func @transform_2(%arg0: i32) -> (i32, i32) {
    %c0_i32 = arith.constant 0 : i32
    %c0_i32_0 = arith.constant 0 : i32
    %c0_i32_1 = arith.constant 0 : i32
    return %c0_i32, %c0_i32_0 : i32, i32
  }
  func.func @transform_3(%arg0: i32) -> (i32, i32, i32) {
    %c0_i32 = arith.constant 0 : i32
    %c0_i32_0 = arith.constant 0 : i32
    %c0_i32_1 = arith.constant 0 : i32
    %c0_i32_2 = arith.constant 0 : i32
    return %c0_i32, %c0_i32_0, %c0_i32_1 : i32, i32, i32
  }
  func.func @transform_4(%arg0: i32) -> (i32, i32) {
    %c0_i32 = arith.constant 0 : i32
    %c0_i32_0 = arith.constant 0 : i32
    %c0_i32_1 = arith.constant 0 : i32
    return %c0_i32, %c0_i32_0 : i32, i32
  }
  func.func @transform_5(%arg0: i32) -> (i32, i32, i32) {
    %c0_i32 = arith.constant 0 : i32
    %c0_i32_0 = arith.constant 0 : i32
    %c0_i32_1 = arith.constant 0 : i32
    %c0_i32_2 = arith.constant 0 : i32
    return %c0_i32, %c0_i32_0, %c0_i32_1 : i32, i32, i32
  }
  func.func @transform_6(%arg0: i32) -> (i32, i32) {
    %c0_i32 = arith.constant 0 : i32
    %c0_i32_0 = arith.constant 0 : i32
    %c0_i32_1 = arith.constant 0 : i32
    return %c0_i32, %c0_i32_0 : i32, i32
  }
  func.func @transform_7(%arg0: i32) -> (i32, i32, i32) {
    %c0_i32 = arith.constant 0 : i32
    %c0_i32_0 = arith.constant 0 : i32
    %c0_i32_1 = arith.constant 0 : i32
    %c0_i32_2 = arith.constant 0 : i32
    return %c0_i32, %c0_i32_0, %c0_i32_1 : i32, i32, i32
  }
  func.func @transform_8(%arg0: i32) -> (i32, i32) {
    %c0_i32 = arith.constant 0 : i32
    %c0_i32_0 = arith.constant 0 : i32
    %c0_i32_1 = arith.constant 0 : i32
    return %c0_i32, %c0_i32_0 : i32, i32
  }
  func.func @transform_9(%arg0: i32) -> (i32, i32, i32) {
    %c0_i32 = arith.constant 0 : i32
    %c0_i32_0 = arith.constant 0 : i32
    %c0_i32_1 = arith.constant 0 : i32
    %c0_i32_2 = arith.constant 0 : i32
    return %c0_i32, %c0_i32_0, %c0_i32_1 : i32, i32, i32
  }
  func.func @transform_10(%arg0: i32) -> (i32, i32) {
    %c0_i32 = arith.constant 0 : i32
    %c0_i32_0 = arith.constant 0 : i32
    %c0_i32_1 = arith.constant 0 : i32
    return %c0_i32, %c0_i32_0 : i32, i32
  }
  func.func @transform_11(%arg0: i32) -> (i32, i32, i32) {
    %c0_i32 = arith.constant 0 : i32
    %c0_i32_0 = arith.constant 0 : i32
    %c0_i32_1 = arith.constant 0 : i32
    %c0_i32_2 = arith.constant 0 : i32
    return %c0_i32, %c0_i32_0, %c0_i32_1 : i32, i32, i32
  }
  func.func @transform_12(%arg0: i32) -> (i32, i32) {
    %c0_i32 = arith.constant 0 : i32
    %c0_i32_0 = arith.constant 0 : i32
    %c0_i32_1 = arith.constant 0 : i32
    return %c0_i32, %c0_i32_0 : i32, i32
  }
  func.func @transform_13(%arg0: i32) -> (i32, i32, i32) {
    %c0_i32 = arith.constant 0 : i32
    %c0_i32_0 = arith.constant 0 : i32
    %c0_i32_1 = arith.constant 0 : i32
    %c0_i32_2 = arith.constant 0 : i32
    return %c0_i32, %c0_i32_0, %c0_i32_1 : i32, i32, i32
  }
  func.func @transform_14(%arg0: i32) -> (i32, i32) {
    %c0_i32 = arith.constant 0 : i32
    %c0_i32_0 = arith.constant 0 : i32
    %c0_i32_1 = arith.constant 0 : i32
    return %c0_i32, %c0_i32_0 : i32, i32
  }
  func.func @transform_15(%arg0: i32) -> (i32, i32, i32) {
    %c0_i32 = arith.constant 0 : i32
    %c0_i32_0 = arith.constant 0 : i32
    %c0_i32_1 = arith.constant 0 : i32
    %c0_i32_2 = arith.constant 0 : i32
    return %c0_i32, %c0_i32_0, %c0_i32_1 : i32, i32, i32
  }
  func.func @transform_16(%arg0: i32) -> (i32, i32) {
    %c0_i32 = arith.constant 0 : i32
    %c0_i32_0 = arith.constant 0 : i32
    %c0_i32_1 = arith.constant 0 : i32
    return %c0_i32, %c0_i32_0 : i32, i32
  }
  func.func @transform_17(%arg0: i32) -> (i32, i32, i32) {
    %c0_i32 = arith.constant 0 : i32
    %c0_i32_0 = arith.constant 0 : i32
    %c0_i32_1 = arith.constant 0 : i32
    %c0_i32_2 = arith.constant 0 : i32
    return %c0_i32, %c0_i32_0, %c0_i32_1 : i32, i32, i32
  }
  func.func @transform_18(%arg0: i32) -> (i32, i32) {
    %c0_i32 = arith.constant 0 : i32
    %c0_i32_0 = arith.constant 0 : i32
    %c0_i32_1 = arith.constant 0 : i32
    return %c0_i32, %c0_i32_0 : i32, i32
  }
  func.func @transform_19(%arg0: i32) -> (i32, i32, i32) {
    %c0_i32 = arith.constant 0 : i32
    %c0_i32_0 = arith.constant 0 : i32
    %c0_i32_1 = arith.constant 0 : i32
    return %arg0, %c0_i32, %c0_i32_0 : i32, i32, i32
  }
}

</mosaic_0001>

<llo_original>
// kernel: tpu_custom_call.1
$region0: #{tpu_custom_call.1}
  #allocation0 [shape = 'u32[]', space=smem, size = 0x4, offset = 0x4, fixed_abs, tag = 'smem constant byte address 0x4 - core index']
  #allocation1 [shape = 'u32[144,128]{1,0:T(1,128)}', space=vmem, size = 0x12000, scoped, tag = 'internal scratch']
  %s0 = inlined_call_operand.hbm [shape: f32[8,128], index: 0, kind: input, shape index: {}]
  %s1 = inlined_call_operand.hbm [shape: f32[8,128], index: 1, kind: output, shape index: {}]
  %s2 = sld [smem:[#allocation0]]
  $region18: #{tpu_custom_call.1} parent=0
    _
  %s4 = ssub.s32 1, %s2
  %s5 = scalar_select 0, %s4, %s2
  $region1: #{tpu_custom_call.1} parent=0
    #allocation2 [shape = 'u8[4096]{0}', space=vmem, size = 0x1000, scoped, tag = 'input window, operand 0, single buffered']
    #allocation3 [shape = 's32[1]{0}', space=sflag, size = 0x4, scoped, tag = 'scoped memory for tpu_custom_call.1']
    #allocation4 [shape = 's32[1]{0}', space=sflag, size = 0x4, scoped, tag = 'scoped memory for tpu_custom_call.1']
    #allocation5 [shape = 'u8[4096]{0}', space=vmem, size = 0x1000, scoped, tag = 'output window, operand 0, single buffered']
    %6 = vsyncpa [#allocation3], 0
    %7 = vsyncpa [#allocation4], 0
    // Predicated region
    $region2: #{tpu_custom_call.1} parent=1 // pred_check
      _
    $region3: #{tpu_custom_call.1} parent=1 // pred_check_branch
      %9 = sbr.rel (0) target = $region5
    $region4: #{tpu_custom_call.1} parent=1 // pred_region
      %s11 = ssub.s32 128, 128
      %12 = vsyncadd [#allocation3], %s11
      %s14 = sshll.u32 [#allocation2], 4
      %s15 = int_to_ptr.vmem [resolvable:$true] %s14
      %17 = dma.hbm_to_vmem [thread:$0]  %s0, 128, %s15, [#allocation3]
    $region5: #{tpu_custom_call.1} parent=1 // pred_fallthru
      _
    // Predicated region
    $region6: #{tpu_custom_call.1} parent=1 // pred_check
      _
    $region7: #{tpu_custom_call.1} parent=1 // pred_check_branch
      %19 = sbr.rel (0) target = $region9
    $region8: #{tpu_custom_call.1} parent=1 // pred_region
      %20 = dma.done [#allocation3], 128
    $region9: #{tpu_custom_call.1} parent=1 // pred_fallthru
      _
    %v21 = vld [vmem:[#allocation2] sm:$0xff]
    %22 = vrot.lane.b32.xlu0 %v21, 1
    %v23 = vpop.permute.xlu0 %22
    %24 = vst [vmem:[#allocation5] sm:$0xff] %v23
    // Predicated region
    $region10: #{tpu_custom_call.1} parent=1 // pred_check
      _
    $region11: #{tpu_custom_call.1} parent=1 // pred_check_branch
      %26 = sbr.rel (0) target = $region13
    $region12: #{tpu_custom_call.1} parent=1 // pred_region
      %s28 = ssub.s32 128, 128
      %29 = vsyncadd [#allocation4], %s28
      %s31 = sshll.u32 [#allocation5], 4
      %s32 = int_to_ptr.vmem [resolvable:$true] %s31
      %34 = dma.vmem_to_hbm [thread:$0]  %s32, 128, %s1, [#allocation4]
    $region13: #{tpu_custom_call.1} parent=1 // pred_fallthru
      _
    // Predicated region
    $region14: #{tpu_custom_call.1} parent=1 // pred_check
      _
    $region15: #{tpu_custom_call.1} parent=1 // pred_check_branch
      %36 = sbr.rel (0) target = $region17
    $region16: #{tpu_custom_call.1} parent=1 // pred_region
      %37 = dma.done [#allocation4], 128
    $region17: #{tpu_custom_call.1} parent=1 // pred_fallthru
      _
    %38 = vsyncpa [#allocation3], 1
    %39 = vsyncpa [#allocation4], 1

// kernel: tpu_custom_call.1
$region0: #{tpu_custom_call.1}
  #allocation0 [shape = 'u32[]', space=smem, size = 0x4, offset = 0x4, fixed_abs, tag = 'smem constant byte address 0x4 - core index']
  #allocation1 [shape = 'u32[144,128]{1,0:T(1,128)}', space=vmem, size = 0x12000, scoped, tag = 'internal scratch']
  %s0 = inlined_call_operand.vmem [shape: f32[2,4,128], index: 0, kind: input, shape index: {}]
  %s1 = inlined_call_operand.vmem [shape: f32[2,4,128], index: 1, kind: input, shape index: {}]
  %s2 = inlined_call_operand.vmem [shape: s32[1,128], index: 2, kind: input, shape index: {}]
  %s3 = inlined_call_operand.vmem [shape: bf16[5,4,4], index: 3, kind: input, shape index: {}]
  %s4 = inlined_call_operand.vmem [shape: f32[4,1], index: 4, kind: input, shape index: {}]
  %s5 = inlined_call_operand.vmem [shape: bf16[3,4,4], index: 5, kind: input, shape index: {}]
  %s6 = inlined_call_operand.vmem [shape: f32[4,1], index: 6, kind: input, shape index: {}]
  %s7 = inlined_call_operand.vmem [shape: bf16[5,4,4], index: 7, kind: input, shape index: {}]
  %s8 = inlined_call_operand.vmem [shape: f32[4,1], index: 8, kind: input, shape index: {}]
  %s9 = inlined_call_operand.vmem [shape: bf16[3,4,4], index: 9, kind: input, shape index: {}]
  %s10 = inlined_call_operand.vmem [shape: f32[4,1], index: 10, kind: input, shape index: {}]
  %s11 = inlined_call_operand.vmem [shape: bf16[5,4,4], index: 11, kind: input, shape index: {}]
  %s12 = inlined_call_operand.vmem [shape: f32[4,1], index: 12, kind: input, shape index: {}]
  %s13 = inlined_call_operand.vmem [shape: bf16[3,4,4], index: 13, kind: input, shape index: {}]
  %s14 = inlined_call_operand.vmem [shape: f32[4,1], index: 14, kind: input, shape index: {}]
  %s15 = inlined_call_operand.vmem [shape: bf16[5,4,4], index: 15, kind: input, shape index: {}]
  %s16 = inlined_call_operand.vmem [shape: f32[4,1], index: 16, kind: input, shape index: {}]
  %s17 = inlined_call_operand.vmem [shape: bf16[3,4,4], index: 17, kind: input, shape index: {}]
  %s18 = inlined_call_operand.vmem [shape: f32[4,1], index: 18, kind: input, shape index: {}]
  %s19 = inlined_call_operand.hbm [shape: f32[2,8,128], index: 19, kind: output, shape index: {}]
  %s20 = sld [smem:[#allocation0]]
  $region109: #{tpu_custom_call.1} parent=0
    _
  %s22 = ssub.s32 1, %s20
  %s23 = scalar_select 0, %s22, %s20
  $region1: #{tpu_custom_call.1} parent=0
    #allocation2 [shape = 'u8[8192]{0}', space=vmem, size = 0x2000, scoped, tag = 'output window, operand 0']
    #allocation3 [shape = 's32[2]{0}', space=sflag, size = 0x8, scoped, tag = 'scoped memory for tpu_custom_call.1']
    %24 = vsyncpa [#allocation3], 0
    %s25 = scalar_lea.sflag [#allocation3], 1
    %26 = vsyncpa %s25, 0
    loop: start=0, step=1, limit=4
    $region2: #{tpu_custom_call.1} parent=1 // loop_pre_header
      _
    $region3: #{tpu_custom_call.1} parent=1 // loop_header
      %s28 = sphi 0, %s32
      %p29 = scmp.ge.s32.totalorder %s28, 4
      %s38 = sphi 0, %s40
      %s41 = sphi 0, %s38
      %s42 = sphi 0, %s41
      %s58 = sphi 0, %s42
      %s64 = sphi 0, %s66
      %s67 = sphi 0, %s64
      %s68 = sphi 0, %s67
      %s84 = sphi 0, %s68
      %s88 = sphi 0, %s88
      %s90 = sphi 0, %s88
      %s91 = sphi 0, %s90
      %s105 = sphi 0, %s91
      %s109 = sphi 0, %s109
      %s111 = sphi 0, %s109
      %s112 = sphi 0, %s111
      %s126 = sphi 0, %s112
      %s130 = sphi 0, %s130
      %s132 = sphi 0, %s130
      %s133 = sphi 0, %s132
      %s147 = sphi 0, %s133
      %s151 = sphi 0, %s151
      %s153 = sphi 0, %s151
      %s154 = sphi 0, %s153
      %s168 = sphi 0, %s154
      %s172 = sphi 0, %s172
      %s174 = sphi 0, %s172
      %s175 = sphi 0, %s174
      %s189 = sphi 0, %s175
      %s193 = sphi 0, %s193
      %s195 = sphi 0, %s193
      %s196 = sphi 0, %s195
      %s210 = sphi 0, %s196
      %s214 = sphi 0, %s214
      %s216 = sphi 0, %s214
      %s217 = sphi 0, %s216
      %s231 = sphi 0, %s217
      %s235 = sphi 0, %s235
      %s237 = sphi 0, %s235
      %s238 = sphi 0, %s237
      %s252 = sphi 0, %s238
      %s256 = sphi 0, %s256
      %s258 = sphi 0, %s256
      %s259 = sphi 0, %s258
      %s273 = sphi 0, %s259
      %s277 = sphi 0, %s277
      %s279 = sphi 0, %s277
      %s280 = sphi 0, %s279
      %s294 = sphi 0, %s280
      %s298 = sphi 0, %s298
      %s300 = sphi 0, %s298
      %s301 = sphi 0, %s300
      %s315 = sphi 0, %s301
      %s319 = sphi 0, %s319
      %s321 = sphi 0, %s319
      %s322 = sphi 0, %s321
      %s336 = sphi 0, %s322
      %s340 = sphi 0, %s340
      %s342 = sphi 0, %s340
      %s343 = sphi 0, %s342
      %s357 = sphi 0, %s343
      %s361 = sphi 0, %s361
      %s363 = sphi 0, %s361
      %s364 = sphi 0, %s363
      %s378 = sphi 0, %s364
      %s382 = sphi 0, %s382
      %s384 = sphi 0, %s382
      %s385 = sphi 0, %s384
      %s399 = sphi 0, %s385
      %s403 = sphi 0, %s403
      %s405 = sphi 0, %s403
      %s406 = sphi 0, %s405
      %s420 = sphi 0, %s406
      %s424 = sphi 0, %s424
      %s426 = sphi 0, %s424
      %s427 = sphi 0, %s426
      %s441 = sphi 0, %s427
      %s447 = sphi 0, %s449
      %s450 = sphi 0, %s447
      %s451 = sphi 0, %s450
      %s467 = sphi 0, %s451
    $region4: #{tpu_custom_call.1} parent=1 // loop_header_branch
      %31 = sbr.rel (%p29) target = $region8
    $region5: #{tpu_custom_call.1} parent=1 // loop_body
      %s33 = ssub.s32 %s28, 1
      %s34 = ssub.s32 %s28, 2
      %s35 = sadd.s32 %s28, 1
      %s36 = ssub.s32 %s28, %s35
      %p37 = scmp.eq.s32.totalorder %s36, 0
      %s39 = sadd.s32 %s38, 1
      %s40 = scalar_select %p37, %s38, %s39
      %p43 = pneg %p37
      %p44 = scmp.eq.s32.totalorder %s28, 1
      %p45 = por %p43, %p44
      %p46 = scmp.ne.s32.totalorder %s38, %s41
      %p47 = scmp.eq.s32.totalorder %s28, 0
      %p48 = por %p46, %p47
      %p49 = scmp.ne.s32.totalorder %s38, %s41
      %p50 = scmp.eq.s32.totalorder %s33, 1
      %p51 = por %p49, %p50
      %p52 = scmp.ne.s32.totalorder %s41, %s42
      %p53 = scmp.eq.s32.totalorder %s33, 0
      %p54 = por %p52, %p53
      %p55 = scmp.ne.s32.totalorder %s41, %s42
      %p56 = scmp.eq.s32.totalorder %s34, 1
      %p57 = por %p55, %p56
      %p59 = scmp.ne.s32.totalorder %s42, %s58
      %p60 = scmp.eq.s32.totalorder %s34, 0
      %p61 = por %p59, %p60
      %s62 = ssub.s32 %s28, %s35
      %p63 = scmp.eq.s32.totalorder %s62, 0
      %s65 = sadd.s32 %s64, 1
      %s66 = scalar_select %p63, %s64, %s65
      %p69 = pneg %p63
      %p70 = scmp.eq.s32.totalorder %s28, 1
      %p71 = por %p69, %p70
      %p72 = scmp.ne.s32.totalorder %s64, %s67
      %p73 = scmp.eq.s32.totalorder %s28, 0
      %p74 = por %p72, %p73
      %p75 = scmp.ne.s32.totalorder %s64, %s67
      %p76 = scmp.eq.s32.totalorder %s33, 1
      %p77 = por %p75, %p76
      %p78 = scmp.ne.s32.totalorder %s67, %s68
      %p79 = scmp.eq.s32.totalorder %s33, 0
      %p80 = por %p78, %p79
      %p81 = scmp.ne.s32.totalorder %s67, %s68
      %p82 = scmp.eq.s32.totalorder %s34, 1
      %p83 = por %p81, %p82
      %p85 = scmp.ne.s32.totalorder %s68, %s84
      %p86 = scmp.eq.s32.totalorder %s34, 0
      %p87 = por %p85, %p86
      %s89 = sadd.s32 %s88, 1
      %p92 = scmp.eq.s32.totalorder %s28, 1
      %p93 = scmp.ne.s32.totalorder %s88, %s90
      %p94 = scmp.eq.s32.totalorder %s28, 0
      %p95 = por %p93, %p94
      %p96 = scmp.ne.s32.totalorder %s88, %s90
      %p97 = scmp.eq.s32.totalorder %s33, 1
      %p98 = por %p96, %p97
      %p99 = scmp.ne.s32.totalorder %s90, %s91
      %p100 = scmp.eq.s32.totalorder %s33, 0
      %p101 = por %p99, %p100
      %p102 = scmp.ne.s32.totalorder %s90, %s91
      %p103 = scmp.eq.s32.totalorder %s34, 1
      %p104 = por %p102, %p103
      %p106 = scmp.ne.s32.totalorder %s91, %s105
      %p107 = scmp.eq.s32.totalorder %s34, 0
      %p108 = por %p106, %p107
      %s110 = sadd.s32 %s109, 1
      %p113 = scmp.eq.s32.totalorder %s28, 1
      %p114 = scmp.ne.s32.totalorder %s109, %s111
      %p115 = scmp.eq.s32.totalorder %s28, 0
      %p116 = por %p114, %p115
      %p117 = scmp.ne.s32.totalorder %s109, %s111
      %p118 = scmp.eq.s32.totalorder %s33, 1
      %p119 = por %p117, %p118
      %p120 = scmp.ne.s32.totalorder %s111, %s112
      %p121 = scmp.eq.s32.totalorder %s33, 0
      %p122 = por %p120, %p121
      %p123 = scmp.ne.s32.totalorder %s111, %s112
      %p124 = scmp.eq.s32.totalorder %s34, 1
      %p125 = por %p123, %p124
      %p127 = scmp.ne.s32.totalorder %s112, %s126
      %p128 = scmp.eq.s32.totalorder %s34, 0
      %p129 = por %p127, %p128
      %s131 = sadd.s32 %s130, 1
      %p134 = scmp.eq.s32.totalorder %s28, 1
      %p135 = scmp.ne.s32.totalorder %s130, %s132
      %p136 = scmp.eq.s32.totalorder %s28, 0
      %p137 = por %p135, %p136
      %p138 = scmp.ne.s32.totalorder %s130, %s132
      %p139 = scmp.eq.s32.totalorder %s33, 1
      %p140 = por %p138, %p139
      %p141 = scmp.ne.s32.totalorder %s132, %s133
      %p142 = scmp.eq.s32.totalorder %s33, 0
      %p143 = por %p141, %p142
      %p144 = scmp.ne.s32.totalorder %s132, %s133
      %p145 = scmp.eq.s32.totalorder %s34, 1
      %p146 = por %p144, %p145
      %p148 = scmp.ne.s32.totalorder %s133, %s147
      %p149 = scmp.eq.s32.totalorder %s34, 0
      %p150 = por %p148, %p149
      %s152 = sadd.s32 %s151, 1
      %p155 = scmp.eq.s32.totalorder %s28, 1
      %p156 = scmp.ne.s32.totalorder %s151, %s153
      %p157 = scmp.eq.s32.totalorder %s28, 0
      %p158 = por %p156, %p157
      %p159 = scmp.ne.s32.totalorder %s151, %s153
      %p160 = scmp.eq.s32.totalorder %s33, 1
      %p161 = por %p159, %p160
      %p162 = scmp.ne.s32.totalorder %s153, %s154
      %p163 = scmp.eq.s32.totalorder %s33, 0
      %p164 = por %p162, %p163
      %p165 = scmp.ne.s32.totalorder %s153, %s154
      %p166 = scmp.eq.s32.totalorder %s34, 1
      %p167 = por %p165, %p166
      %p169 = scmp.ne.s32.totalorder %s154, %s168
      %p170 = scmp.eq.s32.totalorder %s34, 0
      %p171 = por %p169, %p170
      %s173 = sadd.s32 %s172, 1
      %p176 = scmp.eq.s32.totalorder %s28, 1
      %p177 = scmp.ne.s32.totalorder %s172, %s174
      %p178 = scmp.eq.s32.totalorder %s28, 0
      %p179 = por %p177, %p178
      %p180 = scmp.ne.s32.totalorder %s172, %s174
      %p181 = scmp.eq.s32.totalorder %s33, 1
      %p182 = por %p180, %p181
      %p183 = scmp.ne.s32.totalorder %s174, %s175
      %p184 = scmp.eq.s32.totalorder %s33, 0
      %p185 = por %p183, %p184
      %p186 = scmp.ne.s32.totalorder %s174, %s175
      %p187 = scmp.eq.s32.totalorder %s34, 1
      %p188 = por %p186, %p187
      %p190 = scmp.ne.s32.totalorder %s175, %s189
      %p191 = scmp.eq.s32.totalorder %s34, 0
      %p192 = por %p190, %p191
      %s194 = sadd.s32 %s193, 1
      %p197 = scmp.eq.s32.totalorder %s28, 1
      %p198 = scmp.ne.s32.totalorder %s193, %s195
      %p199 = scmp.eq.s32.totalorder %s28, 0
      %p200 = por %p198, %p199
      %p201 = scmp.ne.s32.totalorder %s193, %s195
      %p202 = scmp.eq.s32.totalorder %s33, 1
      %p203 = por %p201, %p202
      %p204 = scmp.ne.s32.totalorder %s195, %s196
      %p205 = scmp.eq.s32.totalorder %s33, 0
      %p206 = por %p204, %p205
      %p207 = scmp.ne.s32.totalorder %s195, %s196
      %p208 = scmp.eq.s32.totalorder %s34, 1
      %p209 = por %p207, %p208
      %p211 = scmp.ne.s32.totalorder %s196, %s210
      %p212 = scmp.eq.s32.totalorder %s34, 0
      %p213 = por %p211, %p212
      %s215 = sadd.s32 %s214, 1
      %p218 = scmp.eq.s32.totalorder %s28, 1
      %p219 = scmp.ne.s32.totalorder %s214, %s216
      %p220 = scmp.eq.s32.totalorder %s28, 0
      %p221 = por %p219, %p220
      %p222 = scmp.ne.s32.totalorder %s214, %s216
      %p223 = scmp.eq.s32.totalorder %s33, 1
      %p224 = por %p222, %p223
      %p225 = scmp.ne.s32.totalorder %s216, %s217
      %p226 = scmp.eq.s32.totalorder %s33, 0
      %p227 = por %p225, %p226
      %p228 = scmp.ne.s32.totalorder %s216, %s217
      %p229 = scmp.eq.s32.totalorder %s34, 1
      %p230 = por %p228, %p229
      %p232 = scmp.ne.s32.totalorder %s217, %s231
      %p233 = scmp.eq.s32.totalorder %s34, 0
      %p234 = por %p232, %p233
      %s236 = sadd.s32 %s235, 1
      %p239 = scmp.eq.s32.totalorder %s28, 1
      %p240 = scmp.ne.s32.totalorder %s235, %s237
      %p241 = scmp.eq.s32.totalorder %s28, 0
      %p242 = por %p240, %p241
      %p243 = scmp.ne.s32.totalorder %s235, %s237
      %p244 = scmp.eq.s32.totalorder %s33, 1
      %p245 = por %p243, %p244
      %p246 = scmp.ne.s32.totalorder %s237, %s238
      %p247 = scmp.eq.s32.totalorder %s33, 0
      %p248 = por %p246, %p247
      %p249 = scmp.ne.s32.totalorder %s237, %s238
      %p250 = scmp.eq.s32.totalorder %s34, 1
      %p251 = por %p249, %p250
      %p253 = scmp.ne.s32.totalorder %s238, %s252
      %p254 = scmp.eq.s32.totalorder %s34, 0
      %p255 = por %p253, %p254
      %s257 = sadd.s32 %s256, 1
      %p260 = scmp.eq.s32.totalorder %s28, 1
      %p261 = scmp.ne.s32.totalorder %s256, %s258
      %p262 = scmp.eq.s32.totalorder %s28, 0
      %p263 = por %p261, %p262
      %p264 = scmp.ne.s32.totalorder %s256, %s258
      %p265 = scmp.eq.s32.totalorder %s33, 1
      %p266 = por %p264, %p265
      %p267 = scmp.ne.s32.totalorder %s258, %s259
      %p268 = scmp.eq.s32.totalorder %s33, 0
      %p269 = por %p267, %p268
      %p270 = scmp.ne.s32.totalorder %s258, %s259
      %p271 = scmp.eq.s32.totalorder %s34, 1
      %p272 = por %p270, %p271
      %p274 = scmp.ne.s32.totalorder %s259, %s273
      %p275 = scmp.eq.s32.totalorder %s34, 0
      %p276 = por %p274, %p275
      %s278 = sadd.s32 %s277, 1
      %p281 = scmp.eq.s32.totalorder %s28, 1
      %p282 = scmp.ne.s32.totalorder %s277, %s279
      %p283 = scmp.eq.s32.totalorder %s28, 0
      %p284 = por %p282, %p283
      %p285 = scmp.ne.s32.totalorder %s277, %s279
      %p286 = scmp.eq.s32.totalorder %s33, 1
      %p287 = por %p285, %p286
      %p288 = scmp.ne.s32.totalorder %s279, %s280
      %p289 = scmp.eq.s32.totalorder %s33, 0
      %p290 = por %p288, %p289
      %p291 = scmp.ne.s32.totalorder %s279, %s280
      %p292 = scmp.eq.s32.totalorder %s34, 1
      %p293 = por %p291, %p292
      %p295 = scmp.ne.s32.totalorder %s280, %s294
      %p296 = scmp.eq.s32.totalorder %s34, 0
      %p297 = por %p295, %p296
      %s299 = sadd.s32 %s298, 1
      %p302 = scmp.eq.s32.totalorder %s28, 1
      %p303 = scmp.ne.s32.totalorder %s298, %s300
      %p304 = scmp.eq.s32.totalorder %s28, 0
      %p305 = por %p303, %p304
      %p306 = scmp.ne.s32.totalorder %s298, %s300
      %p307 = scmp.eq.s32.totalorder %s33, 1
      %p308 = por %p306, %p307
      %p309 = scmp.ne.s32.totalorder %s300, %s301
      %p310 = scmp.eq.s32.totalorder %s33, 0
      %p311 = por %p309, %p310
      %p312 = scmp.ne.s32.totalorder %s300, %s301
      %p313 = scmp.eq.s32.totalorder %s34, 1
      %p314 = por %p312, %p313
      %p316 = scmp.ne.s32.totalorder %s301, %s315
      %p317 = scmp.eq.s32.totalorder %s34, 0
      %p318 = por %p316, %p317
      %s320 = sadd.s32 %s319, 1
      %p323 = scmp.eq.s32.totalorder %s28, 1
      %p324 = scmp.ne.s32.totalorder %s319, %s321
      %p325 = scmp.eq.s32.totalorder %s28, 0
      %p326 = por %p324, %p325
      %p327 = scmp.ne.s32.totalorder %s319, %s321
      %p328 = scmp.eq.s32.totalorder %s33, 1
      %p329 = por %p327, %p328
      %p330 = scmp.ne.s32.totalorder %s321, %s322
      %p331 = scmp.eq.s32.totalorder %s33, 0
      %p332 = por %p330, %p331
      %p333 = scmp.ne.s32.totalorder %s321, %s322
      %p334 = scmp.eq.s32.totalorder %s34, 1
      %p335 = por %p333, %p334
      %p337 = scmp.ne.s32.totalorder %s322, %s336
      %p338 = scmp.eq.s32.totalorder %s34, 0
      %p339 = por %p337, %p338
      %s341 = sadd.s32 %s340, 1
      %p344 = scmp.eq.s32.totalorder %s28, 1
      %p345 = scmp.ne.s32.totalorder %s340, %s342
      %p346 = scmp.eq.s32.totalorder %s28, 0
      %p347 = por %p345, %p346
      %p348 = scmp.ne.s32.totalorder %s340, %s342
      %p349 = scmp.eq.s32.totalorder %s33, 1
      %p350 = por %p348, %p349
      %p351 = scmp.ne.s32.totalorder %s342, %s343
      %p352 = scmp.eq.s32.totalorder %s33, 0
      %p353 = por %p351, %p352
      %p354 = scmp.ne.s32.totalorder %s342, %s343
      %p355 = scmp.eq.s32.totalorder %s34, 1
      %p356 = por %p354, %p355
      %p358 = scmp.ne.s32.totalorder %s343, %s357
      %p359 = scmp.eq.s32.totalorder %s34, 0
      %p360 = por %p358, %p359
      %s362 = sadd.s32 %s361, 1
      %p365 = scmp.eq.s32.totalorder %s28, 1
      %p366 = scmp.ne.s32.totalorder %s361, %s363
      %p367 = scmp.eq.s32.totalorder %s28, 0
      %p368 = por %p366, %p367
      %p369 = scmp.ne.s32.totalorder %s361, %s363
      %p370 = scmp.eq.s32.totalorder %s33, 1
      %p371 = por %p369, %p370
      %p372 = scmp.ne.s32.totalorder %s363, %s364
      %p373 = scmp.eq.s32.totalorder %s33, 0
      %p374 = por %p372, %p373
      %p375 = scmp.ne.s32.totalorder %s363, %s364
      %p376 = scmp.eq.s32.totalorder %s34, 1
      %p377 = por %p375, %p376
      %p379 = scmp.ne.s32.totalorder %s364, %s378
      %p380 = scmp.eq.s32.totalorder %s34, 0
      %p381 = por %p379, %p380
      %s383 = sadd.s32 %s382, 1
      %p386 = scmp.eq.s32.totalorder %s28, 1
      %p387 = scmp.ne.s32.totalorder %s382, %s384
      %p388 = scmp.eq.s32.totalorder %s28, 0
      %p389 = por %p387, %p388
      %p390 = scmp.ne.s32.totalorder %s382, %s384
      %p391 = scmp.eq.s32.totalorder %s33, 1
      %p392 = por %p390, %p391
      %p393 = scmp.ne.s32.totalorder %s384, %s385
      %p394 = scmp.eq.s32.totalorder %s33, 0
      %p395 = por %p393, %p394
      %p396 = scmp.ne.s32.totalorder %s384, %s385
      %p397 = scmp.eq.s32.totalorder %s34, 1
      %p398 = por %p396, %p397
      %p400 = scmp.ne.s32.totalorder %s385, %s399
      %p401 = scmp.eq.s32.totalorder %s34, 0
      %p402 = por %p400, %p401
      %s404 = sadd.s32 %s403, 1
      %p407 = scmp.eq.s32.totalorder %s28, 1
      %p408 = scmp.ne.s32.totalorder %s403, %s405
      %p409 = scmp.eq.s32.totalorder %s28, 0
      %p410 = por %p408, %p409
      %p411 = scmp.ne.s32.totalorder %s403, %s405
      %p412 = scmp.eq.s32.totalorder %s33, 1
      %p413 = por %p411, %p412
      %p414 = scmp.ne.s32.totalorder %s405, %s406
      %p415 = scmp.eq.s32.totalorder %s33, 0
      %p416 = por %p414, %p415
      %p417 = scmp.ne.s32.totalorder %s405, %s406
      %p418 = scmp.eq.s32.totalorder %s34, 1
      %p419 = por %p417, %p418
      %p421 = scmp.ne.s32.totalorder %s406, %s420
      %p422 = scmp.eq.s32.totalorder %s34, 0
      %p423 = por %p421, %p422
      %s425 = sadd.s32 %s424, 1
      %p428 = scmp.eq.s32.totalorder %s28, 1
      %p429 = scmp.ne.s32.totalorder %s424, %s426
      %p430 = scmp.eq.s32.totalorder %s28, 0
      %p431 = por %p429, %p430
      %p432 = scmp.ne.s32.totalorder %s424, %s426
      %p433 = scmp.eq.s32.totalorder %s33, 1
      %p434 = por %p432, %p433
      %p435 = scmp.ne.s32.totalorder %s426, %s427
      %p436 = scmp.eq.s32.totalorder %s33, 0
      %p437 = por %p435, %p436
      %p438 = scmp.ne.s32.totalorder %s426, %s427
      %p439 = scmp.eq.s32.totalorder %s34, 1
      %p440 = por %p438, %p439
      %p442 = scmp.ne.s32.totalorder %s427, %s441
      %p443 = scmp.eq.s32.totalorder %s34, 0
      %p444 = por %p442, %p443
      %s445 = ssub.s32 %s28, %s35
      %p446 = scmp.eq.s32.totalorder %s445, 0
      %s448 = sadd.s32 %s447, 1
      %s449 = scalar_select %p446, %s447, %s448
      %p452 = pneg %p446
      %p453 = scmp.eq.s32.totalorder %s28, 1
      %p454 = por %p452, %p453
      %p455 = scmp.ne.s32.totalorder %s447, %s450
      %p456 = scmp.eq.s32.totalorder %s28, 0
      %p457 = por %p455, %p456
      %p458 = scmp.ne.s32.totalorder %s447, %s450
      %p459 = scmp.eq.s32.totalorder %s33, 1
      %p460 = por %p458, %p459
      %p461 = scmp.ne.s32.totalorder %s450, %s451
      %p462 = scmp.eq.s32.totalorder %s33, 0
      %p463 = por %p461, %p462
      %p464 = scmp.ne.s32.totalorder %s450, %s451
      %p465 = scmp.eq.s32.totalorder %s34, 1
      %p466 = por %p464, %p465
      %p468 = scmp.ne.s32.totalorder %s451, %s467
      %p469 = scmp.eq.s32.totalorder %s34, 0
      %p470 = por %p468, %p469
      %p471 = scmp.le.s32.totalorder 1, %s28
      %p472 = scmp.lt.s32.totalorder %s28, 3
      %p473 = pnand %p471, %p472
      %p474 = pneg %p473
      // Predicated region
      $region9: #{tpu_custom_call.1} parent=5 // pred_check
        _
      $region10: #{tpu_custom_call.1} parent=5 // pred_check_branch
        %476 = sbr.rel (%p473) target = $region12
      $region11: #{tpu_custom_call.1} parent=5 // pred_region
        %s477 = ssub.s32 %s28, 1
        // Predicated region
        $region13: #{tpu_custom_call.1} parent=11 // pred_check
          %p478 = pneg %p101
        $region14: #{tpu_custom_call.1} parent=11 // pred_check_branch
          %480 = sbr.rel (%p478) target = $region16
        $region15: #{tpu_custom_call.1} parent=11 // pred_region
          _
        $region16: #{tpu_custom_call.1} parent=11 // pred_fallthru
          _
        // Predicated region
        $region17: #{tpu_custom_call.1} parent=11 // pred_check
          %p481 = pneg %p122
        $region18: #{tpu_custom_call.1} parent=11 // pred_check_branch
          %483 = sbr.rel (%p481) target = $region20
        $region19: #{tpu_custom_call.1} parent=11 // pred_region
          _
        $region20: #{tpu_custom_call.1} parent=11 // pred_fallthru
          _
        // Predicated region
        $region21: #{tpu_custom_call.1} parent=11 // pred_check
          %p484 = pneg %p143
        $region22: #{tpu_custom_call.1} parent=11 // pred_check_branch
          %486 = sbr.rel (%p484) target = $region24
        $region23: #{tpu_custom_call.1} parent=11 // pred_region
          _
        $region24: #{tpu_custom_call.1} parent=11 // pred_fallthru
          _
        // Predicated region
        $region25: #{tpu_custom_call.1} parent=11 // pred_check
          %p487 = pneg %p164
        $region26: #{tpu_custom_call.1} parent=11 // pred_check_branch
          %489 = sbr.rel (%p487) target = $region28
        $region27: #{tpu_custom_call.1} parent=11 // pred_region
          _
        $region28: #{tpu_custom_call.1} parent=11 // pred_fallthru
          _
        // Predicated region
        $region29: #{tpu_custom_call.1} parent=11 // pred_check
          %p490 = pneg %p185
        $region30: #{tpu_custom_call.1} parent=11 // pred_check_branch
          %492 = sbr.rel (%p490) target = $region32
        $region31: #{tpu_custom_call.1} parent=11 // pred_region
          _
        $region32: #{tpu_custom_call.1} parent=11 // pred_fallthru
          _
        // Predicated region
        $region33: #{tpu_custom_call.1} parent=11 // pred_check
          %p493 = pneg %p206
        $region34: #{tpu_custom_call.1} parent=11 // pred_check_branch
          %495 = sbr.rel (%p493) target = $region36
        $region35: #{tpu_custom_call.1} parent=11 // pred_region
          _
        $region36: #{tpu_custom_call.1} parent=11 // pred_fallthru
          _
        // Predicated region
        $region37: #{tpu_custom_call.1} parent=11 // pred_check
          %p496 = pneg %p227
        $region38: #{tpu_custom_call.1} parent=11 // pred_check_branch
          %498 = sbr.rel (%p496) target = $region40
        $region39: #{tpu_custom_call.1} parent=11 // pred_region
          _
        $region40: #{tpu_custom_call.1} parent=11 // pred_fallthru
          _
        // Predicated region
        $region41: #{tpu_custom_call.1} parent=11 // pred_check
          %p499 = pneg %p248
        $region42: #{tpu_custom_call.1} parent=11 // pred_check_branch
          %501 = sbr.rel (%p499) target = $region44
        $region43: #{tpu_custom_call.1} parent=11 // pred_region
          _
        $region44: #{tpu_custom_call.1} parent=11 // pred_fallthru
          _
        // Predicated region
        $region45: #{tpu_custom_call.1} parent=11 // pred_check
          %p502 = pneg %p269
        $region46: #{tpu_custom_call.1} parent=11 // pred_check_branch
          %504 = sbr.rel (%p502) target = $region48
        $region47: #{tpu_custom_call.1} parent=11 // pred_region
          _
        $region48: #{tpu_custom_call.1} parent=11 // pred_fallthru
          _
        // Predicated region
        $region49: #{tpu_custom_call.1} parent=11 // pred_check
          %p505 = pneg %p290
        $region50: #{tpu_custom_call.1} parent=11 // pred_check_branch
          %507 = sbr.rel (%p505) target = $region52
        $region51: #{tpu_custom_call.1} parent=11 // pred_region
          _
        $region52: #{tpu_custom_call.1} parent=11 // pred_fallthru
          _
        // Predicated region
        $region53: #{tpu_custom_call.1} parent=11 // pred_check
          %p508 = pneg %p311
        $region54: #{tpu_custom_call.1} parent=11 // pred_check_branch
          %510 = sbr.rel (%p508) target = $region56
        $region55: #{tpu_custom_call.1} parent=11 // pred_region
          _
        $region56: #{tpu_custom_call.1} parent=11 // pred_fallthru
          _
        // Predicated region
        $region57: #{tpu_custom_call.1} parent=11 // pred_check
          %p511 = pneg %p332
        $region58: #{tpu_custom_call.1} parent=11 // pred_check_branch
          %513 = sbr.rel (%p511) target = $region60
        $region59: #{tpu_custom_call.1} parent=11 // pred_region
          _
        $region60: #{tpu_custom_call.1} parent=11 // pred_fallthru
          _
        // Predicated region
        $region61: #{tpu_custom_call.1} parent=11 // pred_check
          %p514 = pneg %p353
        $region62: #{tpu_custom_call.1} parent=11 // pred_check_branch
          %516 = sbr.rel (%p514) target = $region64
        $region63: #{tpu_custom_call.1} parent=11 // pred_region
          _
        $region64: #{tpu_custom_call.1} parent=11 // pred_fallthru
          _
        // Predicated region
        $region65: #{tpu_custom_call.1} parent=11 // pred_check
          %p517 = pneg %p374
        $region66: #{tpu_custom_call.1} parent=11 // pred_check_branch
          %519 = sbr.rel (%p517) target = $region68
        $region67: #{tpu_custom_call.1} parent=11 // pred_region
          _
        $region68: #{tpu_custom_call.1} parent=11 // pred_fallthru
          _
        // Predicated region
        $region69: #{tpu_custom_call.1} parent=11 // pred_check
          %p520 = pneg %p395
        $region70: #{tpu_custom_call.1} parent=11 // pred_check_branch
          %522 = sbr.rel (%p520) target = $region72
        $region71: #{tpu_custom_call.1} parent=11 // pred_region
          _
        $region72: #{tpu_custom_call.1} parent=11 // pred_fallthru
          _
        // Predicated region
        $region73: #{tpu_custom_call.1} parent=11 // pred_check
          %p523 = pneg %p416
        $region74: #{tpu_custom_call.1} parent=11 // pred_check_branch
          %525 = sbr.rel (%p523) target = $region76
        $region75: #{tpu_custom_call.1} parent=11 // pred_region
          _
        $region76: #{tpu_custom_call.1} parent=11 // pred_fallthru
          _
        // Predicated region
        $region77: #{tpu_custom_call.1} parent=11 // pred_check
          %p526 = pneg %p437
        $region78: #{tpu_custom_call.1} parent=11 // pred_check_branch
          %528 = sbr.rel (%p526) target = $region80
        $region79: #{tpu_custom_call.1} parent=11 // pred_region
          _
        $region80: #{tpu_custom_call.1} parent=11 // pred_fallthru
          _
      $region12: #{tpu_custom_call.1} parent=5 // pred_fallthru
        _
      %p529 = scmp.lt.s32.totalorder %s28, 2
      // Predicated region
      $region81: #{tpu_custom_call.1} parent=5 // pred_check
        %p530 = pneg %p529
      $region82: #{tpu_custom_call.1} parent=5 // pred_check_branch
        %532 = sbr.rel (%p530) target = $region84
      $region83: #{tpu_custom_call.1} parent=5 // pred_region
        // Predicated region
        $region85: #{tpu_custom_call.1} parent=83 // pred_check
          %p533 = pneg %p48
        $region86: #{tpu_custom_call.1} parent=83 // pred_check_branch
          %535 = sbr.rel (%p533) target = $region88
        $region87: #{tpu_custom_call.1} parent=83 // pred_region
          %p536 = scmp.lt.s32.totalorder %s28, 1
          %s537 = scalar_select %p536, %s28, 1
          %s538 = smul.addr %s537, 4
          %s539 = scalar_lea.vmem %s0, %s538
        $region88: #{tpu_custom_call.1} parent=83 // pred_fallthru
          _
        // Predicated region
        $region89: #{tpu_custom_call.1} parent=83 // pred_check
          %p540 = pneg %p74
        $region90: #{tpu_custom_call.1} parent=83 // pred_check_branch
          %542 = sbr.rel (%p540) target = $region92
        $region91: #{tpu_custom_call.1} parent=83 // pred_region
          %p543 = scmp.lt.s32.totalorder %s28, 1
          %s544 = scalar_select %p543, %s28, 1
          %s545 = smul.addr %s544, 4
          %s546 = scalar_lea.vmem %s1, %s545
        $region92: #{tpu_custom_call.1} parent=83 // pred_fallthru
          _
      $region84: #{tpu_custom_call.1} parent=5 // pred_fallthru
        _
      %p547 = scmp.le.s32.totalorder 1, %s28
      %p548 = scmp.lt.s32.totalorder %s28, 3
      %p549 = pnand %p547, %p548
      %p550 = pneg %p549
      // Predicated region
      $region93: #{tpu_custom_call.1} parent=5 // pred_check
        _
      $region94: #{tpu_custom_call.1} parent=5 // pred_check_branch
        %552 = sbr.rel (%p549) target = $region96
      $region95: #{tpu_custom_call.1} parent=5 // pred_region
        %s553 = ssub.s32 %s28, 1
        %p554 = scmp.lt.s32.totalorder %s33, 1
        %s555 = scalar_select %p554, %s33, 1
        %s556 = smul.addr %s555, 4
        %s557 = scalar_lea.vmem %s0, %s556
        %p558 = pneg %p54
        %p559 = pneg %p51
        %p560 = scmp.lt.s32.totalorder %s33, 1
        %s561 = scalar_select %p560, %s33, 1
        %s562 = smul.addr %s561, 4
        %s563 = scalar_lea.vmem %s1, %s562
        %p564 = pneg %p80
        %p565 = pneg %p77
        %p566 = pneg %p101
        %p567 = pneg %p98
        %p568 = pneg %p122
        %p569 = pneg %p119
        %p570 = pneg %p143
        %p571 = pneg %p140
        %p572 = pneg %p164
        %p573 = pneg %p161
        %p574 = pneg %p185
        %p575 = pneg %p182
        %p576 = pneg %p206
        %p577 = pneg %p203
        %p578 = pneg %p227
        %p579 = pneg %p224
        %p580 = pneg %p248
        %p581 = pneg %p245
        %p582 = pneg %p269
        %p583 = pneg %p266
        %p584 = pneg %p290
        %p585 = pneg %p287
        %p586 = pneg %p311
        %p587 = pneg %p308
        %p588 = pneg %p332
        %p589 = pneg %p329
        %p590 = pneg %p353
        %p591 = pneg %p350
        %p592 = pneg %p374
        %p593 = pneg %p371
        %p594 = pneg %p395
        %p595 = pneg %p392
        %p596 = pneg %p416
        %p597 = pneg %p413
        %p598 = pneg %p437
        %p599 = pneg %p434
        %p600 = pneg %p463
        %p601 = pneg %p460
        %s602 = sand.u32 %s450, 1
        %s603 = scalar_lea.sflag [#allocation3], %s602
        %s604 = sand.u32 %s450, 1
        %s605 = smul.addr %s604, 8
        %s606 = scalar_lea.vmem [#allocation2], %s605
        %p607 = scmp.lt.s32.totalorder %s33, 1
        %s608 = scalar_select %p607, %s33, 1
        %s609 = smul.addr %s608, 4
        %s610 = scalar_lea.vmem %s0, %s609
        %p611 = scmp.lt.s32.totalorder %s33, 1
        %s612 = scalar_select %p611, %s33, 1
        %s613 = smul.addr %s612, 4
        %s614 = scalar_lea.vmem %s1, %s613
        %v616 = vld [vmem:[%s610] sm:$0xf]
        %v617 = vld [vmem:[%s614] sm:$0xf]
        %v618 = vld [vmem:[%s2] sm:$0x1]
        %v619 = vlaneseq
        %v620 = vshrl.u32 %v619, 7
        %v621 = vsub.s32 0, %v620
        %v622 = vrot.slane %v618, %v621
        %vm623 = vcmp.lt.s32.totalorder %v622, 3
        %vm624 = vcmp.ge.s32.totalorder %v622, 11
        %v625 = vld [vmem:[%s4] sm:$0xf]
        %v626 = vpack.c.bf16 %v616, %v616
        %v627 = vld [vmem:[%s3] sm:$0x3]
        %628 = vrot.lane.b32.xlu0 %v616, 127
        %v629 = vpop.permute.xlu0 %628
        %v630 = vpack.c.bf16 %v629, %v629
        %s631 = scalar_lea.vmem %s3, 2
        %v632 = vld [vmem:[%s631] sm:$0x3]
        %vm633 = vcmask 31744
        %v635 = vsel %vm633, %v632, 0
        %vm637 = vcmask 1041408
        %v639 = vsel %vm637, %v630, 0
        %641 = vmatprep.subr.bf16.mxu0 0
        %642 = vmatpush1.bf16.msra.mxu0 0
        %643 = vmatprep.subr.bf16.mxu0 0
        %644 = vmatpush1.bf16.msra.mxu0 0
        %645 = vmatprep.subr.bf16.mxu0 0
        %646 = vmatpush1.bf16.msra.mxu0 0
        %647 = vmatprep.subr.bf16.mxu0 0
        %648 = vmatpush1.bf16.msra.mxu0 0
        %649 = vmatprep.subr.bf16.mxu0 0
        %650 = vmatpush1.bf16.msra.mxu0 0
        %651 = vmatprep.subr.bf16.mxu0 0
        %652 = vmatpush1.bf16.msra.mxu0 0
        %653 = vmatprep.subr.bf16.mxu0 0
        %654 = vmatpush1.bf16.msra.mxu0 0
        %655 = vmatprep.subr.bf16.mxu0 0
        %656 = vmatpush1.bf16.msra.mxu0 %v639
        %657 = vmatprep.subr.bf16.mxu0 0
        %658 = vmatpush2.bf16.msra.mxu0 0
        %659 = vmatprep.subr.bf16.mxu0 0
        %660 = vmatpush2.bf16.msra.mxu0 0
        %661 = vmatprep.subr.bf16.mxu0 0
        %662 = vmatpush2.bf16.msra.mxu0 0
        %663 = vmatprep.subr.bf16.mxu0 0
        %664 = vmatpush2.bf16.msra.mxu0 0
        %665 = vmatprep.subr.bf16.mxu0 0
        %666 = vmatpush2.bf16.msra.mxu0 0
        %667 = vmatprep.subr.bf16.mxu0 0
        %668 = vmatpush2.bf16.msra.mxu0 0
        %669 = vmatprep.subr.bf16.mxu0 0
        %670 = vmatpush2.bf16.msra.mxu0 0
        %671 = vmatprep.subr.bf16.mxu0 0
        %672 = vmatpush2.bf16.msra.mxu0 0
        %673 = vmatprep.mubr.bf16.mxu0 0
        %674 = vmatmul.mubr.bf16.gmra.mxu0 %v635
        %v675 = vpop.f32.mrf.mxu0
        %v676 = vadd.f32 0.0, %v675
        %v677 = vpop.f32.mrf.mxu0
        %v678 = vpop.f32.mrf.mxu0
        %v679 = vpop.f32.mrf.mxu0
        %680 = vdwg.mxu0
        %v682 = vsel %vm633, %v627, 0
        %v685 = vsel %vm637, %v626, 0
        %687 = vmatprep.subr.bf16.mxu0 0
        %688 = vmatpush1.bf16.msra.mxu0 0
        %689 = vmatprep.subr.bf16.mxu0 0
        %690 = vmatpush1.bf16.msra.mxu0 0
        %691 = vmatprep.subr.bf16.mxu0 0
        %692 = vmatpush1.bf16.msra.mxu0 0
        %693 = vmatprep.subr.bf16.mxu0 0
        %694 = vmatpush1.bf16.msra.mxu0 0
        %695 = vmatprep.subr.bf16.mxu0 0
        %696 = vmatpush1.bf16.msra.mxu0 0
        %697 = vmatprep.subr.bf16.mxu0 0
        %698 = vmatpush1.bf16.msra.mxu0 0
        %699 = vmatprep.subr.bf16.mxu0 0
        %700 = vmatpush1.bf16.msra.mxu0 0
        %701 = vmatprep.subr.bf16.mxu0 0
        %702 = vmatpush1.bf16.msra.mxu0 %v685
        %703 = vmatprep.subr.bf16.mxu0 0
        %704 = vmatpush2.bf16.msra.mxu0 0
        %705 = vmatprep.subr.bf16.mxu0 0
        %706 = vmatpush2.bf16.msra.mxu0 0
        %707 = vmatprep.subr.bf16.mxu0 0
        %708 = vmatpush2.bf16.msra.mxu0 0
        %709 = vmatprep.subr.bf16.mxu0 0
        %710 = vmatpush2.bf16.msra.mxu0 0
        %711 = vmatprep.subr.bf16.mxu0 0
        %712 = vmatpush2.bf16.msra.mxu0 0
        %713 = vmatprep.subr.bf16.mxu0 0
        %714 = vmatpush2.bf16.msra.mxu0 0
        %715 = vmatprep.subr.bf16.mxu0 0
        %716 = vmatpush2.bf16.msra.mxu0 0
        %717 = vmatprep.subr.bf16.mxu0 0
        %718 = vmatpush2.bf16.msra.mxu0 0
        %719 = vmatprep.mubr.bf16.mxu0 0
        %720 = vmatmul.mubr.bf16.gmra.mxu0 %v682
        %v721 = vpop.f32.mrf.mxu0
        %v722 = vadd.f32 %v676, %v721
        %v723 = vpop.f32.mrf.mxu0
        %v724 = vpop.f32.mrf.mxu0
        %v725 = vpop.f32.mrf.mxu0
        %726 = vdwg.mxu0
        %727 = vrot.lane.b32.xlu0 %v616, 126
        %v728 = vpop.permute.xlu0 %727
        %v729 = vpack.c.bf16 %v728, %v728
        %s730 = scalar_lea.vmem %s3, 4
        %v731 = vld [vmem:[%s730] sm:$0x3]
        %v733 = vsel %vm633, %v731, 0
        %v736 = vsel %vm637, %v729, 0
        %738 = vmatprep.subr.bf16.mxu0 0
        %739 = vmatpush1.bf16.msra.mxu0 0
        %740 = vmatprep.subr.bf16.mxu0 0
        %741 = vmatpush1.bf16.msra.mxu0 0
        %742 = vmatprep.subr.bf16.mxu0 0
        %743 = vmatpush1.bf16.msra.mxu0 0
        %744 = vmatprep.subr.bf16.mxu0 0
        %745 = vmatpush1.bf16.msra.mxu0 0
        %746 = vmatprep.subr.bf16.mxu0 0
        %747 = vmatpush1.bf16.msra.mxu0 0
        %748 = vmatprep.subr.bf16.mxu0 0
        %749 = vmatpush1.bf16.msra.mxu0 0
        %750 = vmatprep.subr.bf16.mxu0 0
        %751 = vmatpush1.bf16.msra.mxu0 0
        %752 = vmatprep.subr.bf16.mxu0 0
        %753 = vmatpush1.bf16.msra.mxu0 %v736
        %754 = vmatprep.subr.bf16.mxu0 0
        %755 = vmatpush2.bf16.msra.mxu0 0
        %756 = vmatprep.subr.bf16.mxu0 0
        %757 = vmatpush2.bf16.msra.mxu0 0
        %758 = vmatprep.subr.bf16.mxu0 0
        %759 = vmatpush2.bf16.msra.mxu0 0
        %760 = vmatprep.subr.bf16.mxu0 0
        %761 = vmatpush2.bf16.msra.mxu0 0
        %762 = vmatprep.subr.bf16.mxu0 0
        %763 = vmatpush2.bf16.msra.mxu0 0
        %764 = vmatprep.subr.bf16.mxu0 0
        %765 = vmatpush2.bf16.msra.mxu0 0
        %766 = vmatprep.subr.bf16.mxu0 0
        %767 = vmatpush2.bf16.msra.mxu0 0
        %768 = vmatprep.subr.bf16.mxu0 0
        %769 = vmatpush2.bf16.msra.mxu0 0
        %770 = vmatprep.mubr.bf16.mxu0 0
        %771 = vmatmul.mubr.bf16.gmra.mxu0 %v733
        %v772 = vpop.f32.mrf.mxu0
        %v773 = vadd.f32 0.0, %v772
        %v774 = vpop.f32.mrf.mxu0
        %v775 = vpop.f32.mrf.mxu0
        %v776 = vpop.f32.mrf.mxu0
        %777 = vdwg.mxu0
        %v778 = vadd.f32 %v722, %v773
        %779 = vrot.lane.b32.xlu0 %v616, 125
        %v780 = vpop.permute.xlu0 %779
        %v781 = vpack.c.bf16 %v780, %v780
        %s782 = scalar_lea.vmem %s3, 6
        %v783 = vld [vmem:[%s782] sm:$0x3]
        %v785 = vsel %vm633, %v783, 0
        %v788 = vsel %vm637, %v781, 0
        %790 = vmatprep.subr.bf16.mxu0 0
        %791 = vmatpush1.bf16.msra.mxu0 0
        %792 = vmatprep.subr.bf16.mxu0 0
        %793 = vmatpush1.bf16.msra.mxu0 0
        %794 = vmatprep.subr.bf16.mxu0 0
        %795 = vmatpush1.bf16.msra.mxu0 0
        %796 = vmatprep.subr.bf16.mxu0 0
        %797 = vmatpush1.bf16.msra.mxu0 0
        %798 = vmatprep.subr.bf16.mxu0 0
        %799 = vmatpush1.bf16.msra.mxu0 0
        %800 = vmatprep.subr.bf16.mxu0 0
        %801 = vmatpush1.bf16.msra.mxu0 0
        %802 = vmatprep.subr.bf16.mxu0 0
        %803 = vmatpush1.bf16.msra.mxu0 0
        %804 = vmatprep.subr.bf16.mxu0 0
        %805 = vmatpush1.bf16.msra.mxu0 %v788
        %806 = vmatprep.subr.bf16.mxu0 0
        %807 = vmatpush2.bf16.msra.mxu0 0
        %808 = vmatprep.subr.bf16.mxu0 0
        %809 = vmatpush2.bf16.msra.mxu0 0
        %810 = vmatprep.subr.bf16.mxu0 0
        %811 = vmatpush2.bf16.msra.mxu0 0
        %812 = vmatprep.subr.bf16.mxu0 0
        %813 = vmatpush2.bf16.msra.mxu0 0
        %814 = vmatprep.subr.bf16.mxu0 0
        %815 = vmatpush2.bf16.msra.mxu0 0
        %816 = vmatprep.subr.bf16.mxu0 0
        %817 = vmatpush2.bf16.msra.mxu0 0
        %818 = vmatprep.subr.bf16.mxu0 0
        %819 = vmatpush2.bf16.msra.mxu0 0
        %820 = vmatprep.subr.bf16.mxu0 0
        %821 = vmatpush2.bf16.msra.mxu0 0
        %822 = vmatprep.mubr.bf16.mxu0 0
        %823 = vmatmul.mubr.bf16.gmra.mxu0 %v785
        %v824 = vpop.f32.mrf.mxu0
        %v825 = vadd.f32 0.0, %v824
        %v826 = vpop.f32.mrf.mxu0
        %v827 = vpop.f32.mrf.mxu0
        %v828 = vpop.f32.mrf.mxu0
        %829 = vdwg.mxu0
        %v830 = vadd.f32 %v778, %v825
        %831 = vrot.lane.b32.xlu0 %v616, 124
        %v832 = vpop.permute.xlu0 %831
        %v833 = vpack.c.bf16 %v832, %v832
        %s834 = scalar_lea.vmem %s3, 8
        %v835 = vld [vmem:[%s834] sm:$0x3]
        %v837 = vsel %vm633, %v835, 0
        %v840 = vsel %vm637, %v833, 0
        %842 = vmatprep.subr.bf16.mxu0 0
        %843 = vmatpush1.bf16.msra.mxu0 0
        %844 = vmatprep.subr.bf16.mxu0 0
        %845 = vmatpush1.bf16.msra.mxu0 0
        %846 = vmatprep.subr.bf16.mxu0 0
        %847 = vmatpush1.bf16.msra.mxu0 0
        %848 = vmatprep.subr.bf16.mxu0 0
        %849 = vmatpush1.bf16.msra.mxu0 0
        %850 = vmatprep.subr.bf16.mxu0 0
        %851 = vmatpush1.bf16.msra.mxu0 0
        %852 = vmatprep.subr.bf16.mxu0 0
        %853 = vmatpush1.bf16.msra.mxu0 0
        %854 = vmatprep.subr.bf16.mxu0 0
        %855 = vmatpush1.bf16.msra.mxu0 0
        %856 = vmatprep.subr.bf16.mxu0 0
        %857 = vmatpush1.bf16.msra.mxu0 %v840
        %858 = vmatprep.subr.bf16.mxu0 0
        %859 = vmatpush2.bf16.msra.mxu0 0
        %860 = vmatprep.subr.bf16.mxu0 0
        %861 = vmatpush2.bf16.msra.mxu0 0
        %862 = vmatprep.subr.bf16.mxu0 0
        %863 = vmatpush2.bf16.msra.mxu0 0
        %864 = vmatprep.subr.bf16.mxu0 0
        %865 = vmatpush2.bf16.msra.mxu0 0
        %866 = vmatprep.subr.bf16.mxu0 0
        %867 = vmatpush2.bf16.msra.mxu0 0
        %868 = vmatprep.subr.bf16.mxu0 0
        %869 = vmatpush2.bf16.msra.mxu0 0
        %870 = vmatprep.subr.bf16.mxu0 0
        %871 = vmatpush2.bf16.msra.mxu0 0
        %872 = vmatprep.subr.bf16.mxu0 0
        %873 = vmatpush2.bf16.msra.mxu0 0
        %874 = vmatprep.mubr.bf16.mxu0 0
        %875 = vmatmul.mubr.bf16.gmra.mxu0 %v837
        %v876 = vpop.f32.mrf.mxu0
        %v877 = vadd.f32 0.0, %v876
        %v878 = vpop.f32.mrf.mxu0
        %v879 = vpop.f32.mrf.mxu0
        %v880 = vpop.f32.mrf.mxu0
        %881 = vdwg.mxu0
        %v882 = vadd.f32 %v830, %v877
        %884 = vset.pattern.permute.xlu0 0
        %885 = vperm.xlu0 %884, %v625
        %v886 = vpop.permute.xlu0 %885
        %v888 = vadd.f32 %v882, %v886
        %vm889 = vcmp.ge.f32.partialorder %v888, 0.0
        %v890 = vmul.f32 %v888, 0.01
        %v891 = vsel %vm889, %v888, %v890
        %v892 = vld [vmem:[%s6] sm:$0xf]
        %v893 = vpack.c.bf16 %v891, %v891
        %v894 = vld [vmem:[%s5] sm:$0x3]
        %895 = vrot.lane.b32.xlu0 %v891, 127
        %v896 = vpop.permute.xlu0 %895
        %v897 = vpack.c.bf16 %v896, %v896
        %s898 = scalar_lea.vmem %s5, 2
        %v899 = vld [vmem:[%s898] sm:$0x3]
        %v901 = vsel %vm633, %v899, 0
        %v904 = vsel %vm637, %v897, 0
        %906 = vmatprep.subr.bf16.mxu0 0
        %907 = vmatpush1.bf16.msra.mxu0 0
        %908 = vmatprep.subr.bf16.mxu0 0
        %909 = vmatpush1.bf16.msra.mxu0 0
        %910 = vmatprep.subr.bf16.mxu0 0
        %911 = vmatpush1.bf16.msra.mxu0 0
        %912 = vmatprep.subr.bf16.mxu0 0
        %913 = vmatpush1.bf16.msra.mxu0 0
        %914 = vmatprep.subr.bf16.mxu0 0
        %915 = vmatpush1.bf16.msra.mxu0 0
        %916 = vmatprep.subr.bf16.mxu0 0
        %917 = vmatpush1.bf16.msra.mxu0 0
        %918 = vmatprep.subr.bf16.mxu0 0
        %919 = vmatpush1.bf16.msra.mxu0 0
        %920 = vmatprep.subr.bf16.mxu0 0
        %921 = vmatpush1.bf16.msra.mxu0 %v904
        %922 = vmatprep.subr.bf16.mxu0 0
        %923 = vmatpush2.bf16.msra.mxu0 0
        %924 = vmatprep.subr.bf16.mxu0 0
        %925 = vmatpush2.bf16.msra.mxu0 0
        %926 = vmatprep.subr.bf16.mxu0 0
        %927 = vmatpush2.bf16.msra.mxu0 0
        %928 = vmatprep.subr.bf16.mxu0 0
        %929 = vmatpush2.bf16.msra.mxu0 0
        %930 = vmatprep.subr.bf16.mxu0 0
        %931 = vmatpush2.bf16.msra.mxu0 0
        %932 = vmatprep.subr.bf16.mxu0 0
        %933 = vmatpush2.bf16.msra.mxu0 0
        %934 = vmatprep.subr.bf16.mxu0 0
        %935 = vmatpush2.bf16.msra.mxu0 0
        %936 = vmatprep.subr.bf16.mxu0 0
        %937 = vmatpush2.bf16.msra.mxu0 0
        %938 = vmatprep.mubr.bf16.mxu0 0
        %939 = vmatmul.mubr.bf16.gmra.mxu0 %v901
        %v940 = vpop.f32.mrf.mxu0
        %v941 = vadd.f32 0.0, %v940
        %v942 = vpop.f32.mrf.mxu0
        %v943 = vpop.f32.mrf.mxu0
        %v944 = vpop.f32.mrf.mxu0
        %945 = vdwg.mxu0
        %v947 = vsel %vm633, %v894, 0
        %v950 = vsel %vm637, %v893, 0
        %952 = vmatprep.subr.bf16.mxu0 0
        %953 = vmatpush1.bf16.msra.mxu0 0
        %954 = vmatprep.subr.bf16.mxu0 0
        %955 = vmatpush1.bf16.msra.mxu0 0
        %956 = vmatprep.subr.bf16.mxu0 0
        %957 = vmatpush1.bf16.msra.mxu0 0
        %958 = vmatprep.subr.bf16.mxu0 0
        %959 = vmatpush1.bf16.msra.mxu0 0
        %960 = vmatprep.subr.bf16.mxu0 0
        %961 = vmatpush1.bf16.msra.mxu0 0
        %962 = vmatprep.subr.bf16.mxu0 0
        %963 = vmatpush1.bf16.msra.mxu0 0
        %964 = vmatprep.subr.bf16.mxu0 0
        %965 = vmatpush1.bf16.msra.mxu0 0
        %966 = vmatprep.subr.bf16.mxu0 0
        %967 = vmatpush1.bf16.msra.mxu0 %v950
        %968 = vmatprep.subr.bf16.mxu0 0
        %969 = vmatpush2.bf16.msra.mxu0 0
        %970 = vmatprep.subr.bf16.mxu0 0
        %971 = vmatpush2.bf16.msra.mxu0 0
        %972 = vmatprep.subr.bf16.mxu0 0
        %973 = vmatpush2.bf16.msra.mxu0 0
        %974 = vmatprep.subr.bf16.mxu0 0
        %975 = vmatpush2.bf16.msra.mxu0 0
        %976 = vmatprep.subr.bf16.mxu0 0
        %977 = vmatpush2.bf16.msra.mxu0 0
        %978 = vmatprep.subr.bf16.mxu0 0
        %979 = vmatpush2.bf16.msra.mxu0 0
        %980 = vmatprep.subr.bf16.mxu0 0
        %981 = vmatpush2.bf16.msra.mxu0 0
        %982 = vmatprep.subr.bf16.mxu0 0
        %983 = vmatpush2.bf16.msra.mxu0 0
        %984 = vmatprep.mubr.bf16.mxu0 0
        %985 = vmatmul.mubr.bf16.gmra.mxu0 %v947
        %v986 = vpop.f32.mrf.mxu0
        %v987 = vadd.f32 %v941, %v986
        %v988 = vpop.f32.mrf.mxu0
        %v989 = vpop.f32.mrf.mxu0
        %v990 = vpop.f32.mrf.mxu0
        %991 = vdwg.mxu0
        %992 = vrot.lane.b32.xlu0 %v891, 126
        %v993 = vpop.permute.xlu0 %992
        %v994 = vpack.c.bf16 %v993, %v993
        %s995 = scalar_lea.vmem %s5, 4
        %v996 = vld [vmem:[%s995] sm:$0x3]
        %v998 = vsel %vm633, %v996, 0
        %v1001 = vsel %vm637, %v994, 0
        %1003 = vmatprep.subr.bf16.mxu0 0
        %1004 = vmatpush1.bf16.msra.mxu0 0
        %1005 = vmatprep.subr.bf16.mxu0 0
        %1006 = vmatpush1.bf16.msra.mxu0 0
        %1007 = vmatprep.subr.bf16.mxu0 0
        %1008 = vmatpush1.bf16.msra.mxu0 0
        %1009 = vmatprep.subr.bf16.mxu0 0
        %1010 = vmatpush1.bf16.msra.mxu0 0
        %1011 = vmatprep.subr.bf16.mxu0 0
        %1012 = vmatpush1.bf16.msra.mxu0 0
        %1013 = vmatprep.subr.bf16.mxu0 0
        %1014 = vmatpush1.bf16.msra.mxu0 0
        %1015 = vmatprep.subr.bf16.mxu0 0
        %1016 = vmatpush1.bf16.msra.mxu0 0
        %1017 = vmatprep.subr.bf16.mxu0 0
        %1018 = vmatpush1.bf16.msra.mxu0 %v1001
        %1019 = vmatprep.subr.bf16.mxu0 0
        %1020 = vmatpush2.bf16.msra.mxu0 0
        %1021 = vmatprep.subr.bf16.mxu0 0
        %1022 = vmatpush2.bf16.msra.mxu0 0
        %1023 = vmatprep.subr.bf16.mxu0 0
        %1024 = vmatpush2.bf16.msra.mxu0 0
        %1025 = vmatprep.subr.bf16.mxu0 0
        %1026 = vmatpush2.bf16.msra.mxu0 0
        %1027 = vmatprep.subr.bf16.mxu0 0
        %1028 = vmatpush2.bf16.msra.mxu0 0
        %1029 = vmatprep.subr.bf16.mxu0 0
        %1030 = vmatpush2.bf16.msra.mxu0 0
        %1031 = vmatprep.subr.bf16.mxu0 0
        %1032 = vmatpush2.bf16.msra.mxu0 0
        %1033 = vmatprep.subr.bf16.mxu0 0
        %1034 = vmatpush2.bf16.msra.mxu0 0
        %1035 = vmatprep.mubr.bf16.mxu0 0
        %1036 = vmatmul.mubr.bf16.gmra.mxu0 %v998
        %v1037 = vpop.f32.mrf.mxu0
        %v1038 = vadd.f32 0.0, %v1037
        %v1039 = vpop.f32.mrf.mxu0
        %v1040 = vpop.f32.mrf.mxu0
        %v1041 = vpop.f32.mrf.mxu0
        %1042 = vdwg.mxu0
        %v1043 = vadd.f32 %v987, %v1038
        %1045 = vset.pattern.permute.xlu0 0
        %1046 = vperm.xlu0 %1045, %v892
        %v1047 = vpop.permute.xlu0 %1046
        %v1049 = vadd.f32 %v1043, %v1047
        %v1050 = vtanh.pop %v1049
        %1051 = vrot.lane.b32.xlu0 %v1050, 3
        %v1052 = vpop.permute.xlu0 %1051
        %v1053 = vmul.f32 %v1052, 1.442695
        %v1054 = vpow.pop %v1053
        %v1055 = vmul.f32 %v617, %v1054
        %v1056 = vld [vmem:[%s8] sm:$0xf]
        %v1057 = vpack.c.bf16 %v617, %v617
        %v1058 = vld [vmem:[%s7] sm:$0x3]
        %1059 = vrot.lane.b32.xlu0 %v617, 127
        %v1060 = vpop.permute.xlu0 %1059
        %v1061 = vpack.c.bf16 %v1060, %v1060
        %s1062 = scalar_lea.vmem %s7, 2
        %v1063 = vld [vmem:[%s1062] sm:$0x3]
        %v1065 = vsel %vm633, %v1063, 0
        %v1068 = vsel %vm637, %v1061, 0
        %1070 = vmatprep.subr.bf16.mxu0 0
        %1071 = vmatpush1.bf16.msra.mxu0 0
        %1072 = vmatprep.subr.bf16.mxu0 0
        %1073 = vmatpush1.bf16.msra.mxu0 0
        %1074 = vmatprep.subr.bf16.mxu0 0
        %1075 = vmatpush1.bf16.msra.mxu0 0
        %1076 = vmatprep.subr.bf16.mxu0 0
        %1077 = vmatpush1.bf16.msra.mxu0 0
        %1078 = vmatprep.subr.bf16.mxu0 0
        %1079 = vmatpush1.bf16.msra.mxu0 0
        %1080 = vmatprep.subr.bf16.mxu0 0
        %1081 = vmatpush1.bf16.msra.mxu0 0
        %1082 = vmatprep.subr.bf16.mxu0 0
        %1083 = vmatpush1.bf16.msra.mxu0 0
        %1084 = vmatprep.subr.bf16.mxu0 0
        %1085 = vmatpush1.bf16.msra.mxu0 %v1068
        %1086 = vmatprep.subr.bf16.mxu0 0
        %1087 = vmatpush2.bf16.msra.mxu0 0
        %1088 = vmatprep.subr.bf16.mxu0 0
        %1089 = vmatpush2.bf16.msra.mxu0 0
        %1090 = vmatprep.subr.bf16.mxu0 0
        %1091 = vmatpush2.bf16.msra.mxu0 0
        %1092 = vmatprep.subr.bf16.mxu0 0
        %1093 = vmatpush2.bf16.msra.mxu0 0
        %1094 = vmatprep.subr.bf16.mxu0 0
        %1095 = vmatpush2.bf16.msra.mxu0 0
        %1096 = vmatprep.subr.bf16.mxu0 0
        %1097 = vmatpush2.bf16.msra.mxu0 0
        %1098 = vmatprep.subr.bf16.mxu0 0
        %1099 = vmatpush2.bf16.msra.mxu0 0
        %1100 = vmatprep.subr.bf16.mxu0 0
        %1101 = vmatpush2.bf16.msra.mxu0 0
        %1102 = vmatprep.mubr.bf16.mxu0 0
        %1103 = vmatmul.mubr.bf16.gmra.mxu0 %v1065
        %v1104 = vpop.f32.mrf.mxu0
        %v1105 = vadd.f32 0.0, %v1104
        %v1106 = vpop.f32.mrf.mxu0
        %v1107 = vpop.f32.mrf.mxu0
        %v1108 = vpop.f32.mrf.mxu0
        %1109 = vdwg.mxu0
        %v1111 = vsel %vm633, %v1058, 0
        %v1114 = vsel %vm637, %v1057, 0
        %1116 = vmatprep.subr.bf16.mxu0 0
        %1117 = vmatpush1.bf16.msra.mxu0 0
        %1118 = vmatprep.subr.bf16.mxu0 0
        %1119 = vmatpush1.bf16.msra.mxu0 0
        %1120 = vmatprep.subr.bf16.mxu0 0
        %1121 = vmatpush1.bf16.msra.mxu0 0
        %1122 = vmatprep.subr.bf16.mxu0 0
        %1123 = vmatpush1.bf16.msra.mxu0 0
        %1124 = vmatprep.subr.bf16.mxu0 0
        %1125 = vmatpush1.bf16.msra.mxu0 0
        %1126 = vmatprep.subr.bf16.mxu0 0
        %1127 = vmatpush1.bf16.msra.mxu0 0
        %1128 = vmatprep.subr.bf16.mxu0 0
        %1129 = vmatpush1.bf16.msra.mxu0 0
        %1130 = vmatprep.subr.bf16.mxu0 0
        %1131 = vmatpush1.bf16.msra.mxu0 %v1114
        %1132 = vmatprep.subr.bf16.mxu0 0
        %1133 = vmatpush2.bf16.msra.mxu0 0
        %1134 = vmatprep.subr.bf16.mxu0 0
        %1135 = vmatpush2.bf16.msra.mxu0 0
        %1136 = vmatprep.subr.bf16.mxu0 0
        %1137 = vmatpush2.bf16.msra.mxu0 0
        %1138 = vmatprep.subr.bf16.mxu0 0
        %1139 = vmatpush2.bf16.msra.mxu0 0
        %1140 = vmatprep.subr.bf16.mxu0 0
        %1141 = vmatpush2.bf16.msra.mxu0 0
        %1142 = vmatprep.subr.bf16.mxu0 0
        %1143 = vmatpush2.bf16.msra.mxu0 0
        %1144 = vmatprep.subr.bf16.mxu0 0
        %1145 = vmatpush2.bf16.msra.mxu0 0
        %1146 = vmatprep.subr.bf16.mxu0 0
        %1147 = vmatpush2.bf16.msra.mxu0 0
        %1148 = vmatprep.mubr.bf16.mxu0 0
        %1149 = vmatmul.mubr.bf16.gmra.mxu0 %v1111
        %v1150 = vpop.f32.mrf.mxu0
        %v1151 = vadd.f32 %v1105, %v1150
        %v1152 = vpop.f32.mrf.mxu0
        %v1153 = vpop.f32.mrf.mxu0
        %v1154 = vpop.f32.mrf.mxu0
        %1155 = vdwg.mxu0
        %1156 = vrot.lane.b32.xlu0 %v617, 126
        %v1157 = vpop.permute.xlu0 %1156
        %v1158 = vpack.c.bf16 %v1157, %v1157
        %s1159 = scalar_lea.vmem %s7, 4
        %v1160 = vld [vmem:[%s1159] sm:$0x3]
        %v1162 = vsel %vm633, %v1160, 0
        %v1165 = vsel %vm637, %v1158, 0
        %1167 = vmatprep.subr.bf16.mxu0 0
        %1168 = vmatpush1.bf16.msra.mxu0 0
        %1169 = vmatprep.subr.bf16.mxu0 0
        %1170 = vmatpush1.bf16.msra.mxu0 0
        %1171 = vmatprep.subr.bf16.mxu0 0
        %1172 = vmatpush1.bf16.msra.mxu0 0
        %1173 = vmatprep.subr.bf16.mxu0 0
        %1174 = vmatpush1.bf16.msra.mxu0 0
        %1175 = vmatprep.subr.bf16.mxu0 0
        %1176 = vmatpush1.bf16.msra.mxu0 0
        %1177 = vmatprep.subr.bf16.mxu0 0
        %1178 = vmatpush1.bf16.msra.mxu0 0
        %1179 = vmatprep.subr.bf16.mxu0 0
        %1180 = vmatpush1.bf16.msra.mxu0 0
        %1181 = vmatprep.subr.bf16.mxu0 0
        %1182 = vmatpush1.bf16.msra.mxu0 %v1165
        %1183 = vmatprep.subr.bf16.mxu0 0
        %1184 = vmatpush2.bf16.msra.mxu0 0
        %1185 = vmatprep.subr.bf16.mxu0 0
        %1186 = vmatpush2.bf16.msra.mxu0 0
        %1187 = vmatprep.subr.bf16.mxu0 0
        %1188 = vmatpush2.bf16.msra.mxu0 0
        %1189 = vmatprep.subr.bf16.mxu0 0
        %1190 = vmatpush2.bf16.msra.mxu0 0
        %1191 = vmatprep.subr.bf16.mxu0 0
        %1192 = vmatpush2.bf16.msra.mxu0 0
        %1193 = vmatprep.subr.bf16.mxu0 0
        %1194 = vmatpush2.bf16.msra.mxu0 0
        %1195 = vmatprep.subr.bf16.mxu0 0
        %1196 = vmatpush2.bf16.msra.mxu0 0
        %1197 = vmatprep.subr.bf16.mxu0 0
        %1198 = vmatpush2.bf16.msra.mxu0 0
        %1199 = vmatprep.mubr.bf16.mxu0 0
        %1200 = vmatmul.mubr.bf16.gmra.mxu0 %v1162
        %v1201 = vpop.f32.mrf.mxu0
        %v1202 = vadd.f32 0.0, %v1201
        %v1203 = vpop.f32.mrf.mxu0
        %v1204 = vpop.f32.mrf.mxu0
        %v1205 = vpop.f32.mrf.mxu0
        %1206 = vdwg.mxu0
        %v1207 = vadd.f32 %v1151, %v1202
        %1208 = vrot.lane.b32.xlu0 %v617, 125
        %v1209 = vpop.permute.xlu0 %1208
        %v1210 = vpack.c.bf16 %v1209, %v1209
        %s1211 = scalar_lea.vmem %s7, 6
        %v1212 = vld [vmem:[%s1211] sm:$0x3]
        %v1214 = vsel %vm633, %v1212, 0
        %v1217 = vsel %vm637, %v1210, 0
        %1219 = vmatprep.subr.bf16.mxu0 0
        %1220 = vmatpush1.bf16.msra.mxu0 0
        %1221 = vmatprep.subr.bf16.mxu0 0
        %1222 = vmatpush1.bf16.msra.mxu0 0
        %1223 = vmatprep.subr.bf16.mxu0 0
        %1224 = vmatpush1.bf16.msra.mxu0 0
        %1225 = vmatprep.subr.bf16.mxu0 0
        %1226 = vmatpush1.bf16.msra.mxu0 0
        %1227 = vmatprep.subr.bf16.mxu0 0
        %1228 = vmatpush1.bf16.msra.mxu0 0
        %1229 = vmatprep.subr.bf16.mxu0 0
        %1230 = vmatpush1.bf16.msra.mxu0 0
        %1231 = vmatprep.subr.bf16.mxu0 0
        %1232 = vmatpush1.bf16.msra.mxu0 0
        %1233 = vmatprep.subr.bf16.mxu0 0
        %1234 = vmatpush1.bf16.msra.mxu0 %v1217
        %1235 = vmatprep.subr.bf16.mxu0 0
        %1236 = vmatpush2.bf16.msra.mxu0 0
        %1237 = vmatprep.subr.bf16.mxu0 0
        %1238 = vmatpush2.bf16.msra.mxu0 0
        %1239 = vmatprep.subr.bf16.mxu0 0
        %1240 = vmatpush2.bf16.msra.mxu0 0
        %1241 = vmatprep.subr.bf16.mxu0 0
        %1242 = vmatpush2.bf16.msra.mxu0 0
        %1243 = vmatprep.subr.bf16.mxu0 0
        %1244 = vmatpush2.bf16.msra.mxu0 0
        %1245 = vmatprep.subr.bf16.mxu0 0
        %1246 = vmatpush2.bf16.msra.mxu0 0
        %1247 = vmatprep.subr.bf16.mxu0 0
        %1248 = vmatpush2.bf16.msra.mxu0 0
        %1249 = vmatprep.subr.bf16.mxu0 0
        %1250 = vmatpush2.bf16.msra.mxu0 0
        %1251 = vmatprep.mubr.bf16.mxu0 0
        %1252 = vmatmul.mubr.bf16.gmra.mxu0 %v1214
        %v1253 = vpop.f32.mrf.mxu0
        %v1254 = vadd.f32 0.0, %v1253
        %v1255 = vpop.f32.mrf.mxu0
        %v1256 = vpop.f32.mrf.mxu0
        %v1257 = vpop.f32.mrf.mxu0
        %1258 = vdwg.mxu0
        %v1259 = vadd.f32 %v1207, %v1254
        %1260 = vrot.lane.b32.xlu0 %v617, 124
        %v1261 = vpop.permute.xlu0 %1260
        %v1262 = vpack.c.bf16 %v1261, %v1261
        %s1263 = scalar_lea.vmem %s7, 8
        %v1264 = vld [vmem:[%s1263] sm:$0x3]
        %v1266 = vsel %vm633, %v1264, 0
        %v1269 = vsel %vm637, %v1262, 0
        %1271 = vmatprep.subr.bf16.mxu0 0
        %1272 = vmatpush1.bf16.msra.mxu0 0
        %1273 = vmatprep.subr.bf16.mxu0 0
        %1274 = vmatpush1.bf16.msra.mxu0 0
        %1275 = vmatprep.subr.bf16.mxu0 0
        %1276 = vmatpush1.bf16.msra.mxu0 0
        %1277 = vmatprep.subr.bf16.mxu0 0
        %1278 = vmatpush1.bf16.msra.mxu0 0
        %1279 = vmatprep.subr.bf16.mxu0 0
        %1280 = vmatpush1.bf16.msra.mxu0 0
        %1281 = vmatprep.subr.bf16.mxu0 0
        %1282 = vmatpush1.bf16.msra.mxu0 0
        %1283 = vmatprep.subr.bf16.mxu0 0
        %1284 = vmatpush1.bf16.msra.mxu0 0
        %1285 = vmatprep.subr.bf16.mxu0 0
        %1286 = vmatpush1.bf16.msra.mxu0 %v1269
        %1287 = vmatprep.subr.bf16.mxu0 0
        %1288 = vmatpush2.bf16.msra.mxu0 0
        %1289 = vmatprep.subr.bf16.mxu0 0
        %1290 = vmatpush2.bf16.msra.mxu0 0
        %1291 = vmatprep.subr.bf16.mxu0 0
        %1292 = vmatpush2.bf16.msra.mxu0 0
        %1293 = vmatprep.subr.bf16.mxu0 0
        %1294 = vmatpush2.bf16.msra.mxu0 0
        %1295 = vmatprep.subr.bf16.mxu0 0
        %1296 = vmatpush2.bf16.msra.mxu0 0
        %1297 = vmatprep.subr.bf16.mxu0 0
        %1298 = vmatpush2.bf16.msra.mxu0 0
        %1299 = vmatprep.subr.bf16.mxu0 0
        %1300 = vmatpush2.bf16.msra.mxu0 0
        %1301 = vmatprep.subr.bf16.mxu0 0
        %1302 = vmatpush2.bf16.msra.mxu0 0
        %1303 = vmatprep.mubr.bf16.mxu0 0
        %1304 = vmatmul.mubr.bf16.gmra.mxu0 %v1266
        %v1305 = vpop.f32.mrf.mxu0
        %v1306 = vadd.f32 0.0, %v1305
        %v1307 = vpop.f32.mrf.mxu0
        %v1308 = vpop.f32.mrf.mxu0
        %v1309 = vpop.f32.mrf.mxu0
        %1310 = vdwg.mxu0
        %v1311 = vadd.f32 %v1259, %v1306
        %1313 = vset.pattern.permute.xlu0 0
        %1314 = vperm.xlu0 %1313, %v1056
        %v1315 = vpop.permute.xlu0 %1314
        %v1317 = vadd.f32 %v1311, %v1315
        %vm1318 = vcmp.ge.f32.partialorder %v1317, 0.0
        %v1319 = vmul.f32 %v1317, 0.01
        %v1320 = vsel %vm1318, %v1317, %v1319
        %v1321 = vld [vmem:[%s10] sm:$0xf]
        %v1322 = vpack.c.bf16 %v1320, %v1320
        %v1323 = vld [vmem:[%s9] sm:$0x3]
        %1324 = vrot.lane.b32.xlu0 %v1320, 127
        %v1325 = vpop.permute.xlu0 %1324
        %v1326 = vpack.c.bf16 %v1325, %v1325
        %s1327 = scalar_lea.vmem %s9, 2
        %v1328 = vld [vmem:[%s1327] sm:$0x3]
        %v1330 = vsel %vm633, %v1328, 0
        %v1333 = vsel %vm637, %v1326, 0
        %1335 = vmatprep.subr.bf16.mxu0 0
        %1336 = vmatpush1.bf16.msra.mxu0 0
        %1337 = vmatprep.subr.bf16.mxu0 0
        %1338 = vmatpush1.bf16.msra.mxu0 0
        %1339 = vmatprep.subr.bf16.mxu0 0
        %1340 = vmatpush1.bf16.msra.mxu0 0
        %1341 = vmatprep.subr.bf16.mxu0 0
        %1342 = vmatpush1.bf16.msra.mxu0 0
        %1343 = vmatprep.subr.bf16.mxu0 0
        %1344 = vmatpush1.bf16.msra.mxu0 0
        %1345 = vmatprep.subr.bf16.mxu0 0
        %1346 = vmatpush1.bf16.msra.mxu0 0
        %1347 = vmatprep.subr.bf16.mxu0 0
        %1348 = vmatpush1.bf16.msra.mxu0 0
        %1349 = vmatprep.subr.bf16.mxu0 0
        %1350 = vmatpush1.bf16.msra.mxu0 %v1333
        %1351 = vmatprep.subr.bf16.mxu0 0
        %1352 = vmatpush2.bf16.msra.mxu0 0
        %1353 = vmatprep.subr.bf16.mxu0 0
        %1354 = vmatpush2.bf16.msra.mxu0 0
        %1355 = vmatprep.subr.bf16.mxu0 0
        %1356 = vmatpush2.bf16.msra.mxu0 0
        %1357 = vmatprep.subr.bf16.mxu0 0
        %1358 = vmatpush2.bf16.msra.mxu0 0
        %1359 = vmatprep.subr.bf16.mxu0 0
        %1360 = vmatpush2.bf16.msra.mxu0 0
        %1361 = vmatprep.subr.bf16.mxu0 0
        %1362 = vmatpush2.bf16.msra.mxu0 0
        %1363 = vmatprep.subr.bf16.mxu0 0
        %1364 = vmatpush2.bf16.msra.mxu0 0
        %1365 = vmatprep.subr.bf16.mxu0 0
        %1366 = vmatpush2.bf16.msra.mxu0 0
        %1367 = vmatprep.mubr.bf16.mxu0 0
        %1368 = vmatmul.mubr.bf16.gmra.mxu0 %v1330
        %v1369 = vpop.f32.mrf.mxu0
        %v1370 = vadd.f32 0.0, %v1369
        %v1371 = vpop.f32.mrf.mxu0
        %v1372 = vpop.f32.mrf.mxu0
        %v1373 = vpop.f32.mrf.mxu0
        %1374 = vdwg.mxu0
        %v1376 = vsel %vm633, %v1323, 0
        %v1379 = vsel %vm637, %v1322, 0
        %1381 = vmatprep.subr.bf16.mxu0 0
        %1382 = vmatpush1.bf16.msra.mxu0 0
        %1383 = vmatprep.subr.bf16.mxu0 0
        %1384 = vmatpush1.bf16.msra.mxu0 0
        %1385 = vmatprep.subr.bf16.mxu0 0
        %1386 = vmatpush1.bf16.msra.mxu0 0
        %1387 = vmatprep.subr.bf16.mxu0 0
        %1388 = vmatpush1.bf16.msra.mxu0 0
        %1389 = vmatprep.subr.bf16.mxu0 0
        %1390 = vmatpush1.bf16.msra.mxu0 0
        %1391 = vmatprep.subr.bf16.mxu0 0
        %1392 = vmatpush1.bf16.msra.mxu0 0
        %1393 = vmatprep.subr.bf16.mxu0 0
        %1394 = vmatpush1.bf16.msra.mxu0 0
        %1395 = vmatprep.subr.bf16.mxu0 0
        %1396 = vmatpush1.bf16.msra.mxu0 %v1379
        %1397 = vmatprep.subr.bf16.mxu0 0
        %1398 = vmatpush2.bf16.msra.mxu0 0
        %1399 = vmatprep.subr.bf16.mxu0 0
        %1400 = vmatpush2.bf16.msra.mxu0 0
        %1401 = vmatprep.subr.bf16.mxu0 0
        %1402 = vmatpush2.bf16.msra.mxu0 0
        %1403 = vmatprep.subr.bf16.mxu0 0
        %1404 = vmatpush2.bf16.msra.mxu0 0
        %1405 = vmatprep.subr.bf16.mxu0 0
        %1406 = vmatpush2.bf16.msra.mxu0 0
        %1407 = vmatprep.subr.bf16.mxu0 0
        %1408 = vmatpush2.bf16.msra.mxu0 0
        %1409 = vmatprep.subr.bf16.mxu0 0
        %1410 = vmatpush2.bf16.msra.mxu0 0
        %1411 = vmatprep.subr.bf16.mxu0 0
        %1412 = vmatpush2.bf16.msra.mxu0 0
        %1413 = vmatprep.mubr.bf16.mxu0 0
        %1414 = vmatmul.mubr.bf16.gmra.mxu0 %v1376
        %v1415 = vpop.f32.mrf.mxu0
        %v1416 = vadd.f32 %v1370, %v1415
        %v1417 = vpop.f32.mrf.mxu0
        %v1418 = vpop.f32.mrf.mxu0
        %v1419 = vpop.f32.mrf.mxu0
        %1420 = vdwg.mxu0
        %1421 = vrot.lane.b32.xlu0 %v1320, 126
        %v1422 = vpop.permute.xlu0 %1421
        %v1423 = vpack.c.bf16 %v1422, %v1422
        %s1424 = scalar_lea.vmem %s9, 4
        %v1425 = vld [vmem:[%s1424] sm:$0x3]
        %v1427 = vsel %vm633, %v1425, 0
        %v1430 = vsel %vm637, %v1423, 0
        %1432 = vmatprep.subr.bf16.mxu0 0
        %1433 = vmatpush1.bf16.msra.mxu0 0
        %1434 = vmatprep.subr.bf16.mxu0 0
        %1435 = vmatpush1.bf16.msra.mxu0 0
        %1436 = vmatprep.subr.bf16.mxu0 0
        %1437 = vmatpush1.bf16.msra.mxu0 0
        %1438 = vmatprep.subr.bf16.mxu0 0
        %1439 = vmatpush1.bf16.msra.mxu0 0
        %1440 = vmatprep.subr.bf16.mxu0 0
        %1441 = vmatpush1.bf16.msra.mxu0 0
        %1442 = vmatprep.subr.bf16.mxu0 0
        %1443 = vmatpush1.bf16.msra.mxu0 0
        %1444 = vmatprep.subr.bf16.mxu0 0
        %1445 = vmatpush1.bf16.msra.mxu0 0
        %1446 = vmatprep.subr.bf16.mxu0 0
        %1447 = vmatpush1.bf16.msra.mxu0 %v1430
        %1448 = vmatprep.subr.bf16.mxu0 0
        %1449 = vmatpush2.bf16.msra.mxu0 0
        %1450 = vmatprep.subr.bf16.mxu0 0
        %1451 = vmatpush2.bf16.msra.mxu0 0
        %1452 = vmatprep.subr.bf16.mxu0 0
        %1453 = vmatpush2.bf16.msra.mxu0 0
        %1454 = vmatprep.subr.bf16.mxu0 0
        %1455 = vmatpush2.bf16.msra.mxu0 0
        %1456 = vmatprep.subr.bf16.mxu0 0
        %1457 = vmatpush2.bf16.msra.mxu0 0
        %1458 = vmatprep.subr.bf16.mxu0 0
        %1459 = vmatpush2.bf16.msra.mxu0 0
        %1460 = vmatprep.subr.bf16.mxu0 0
        %1461 = vmatpush2.bf16.msra.mxu0 0
        %1462 = vmatprep.subr.bf16.mxu0 0
        %1463 = vmatpush2.bf16.msra.mxu0 0
        %1464 = vmatprep.mubr.bf16.mxu0 0
        %1465 = vmatmul.mubr.bf16.gmra.mxu0 %v1427
        %v1466 = vpop.f32.mrf.mxu0
        %v1467 = vadd.f32 0.0, %v1466
        %v1468 = vpop.f32.mrf.mxu0
        %v1469 = vpop.f32.mrf.mxu0
        %v1470 = vpop.f32.mrf.mxu0
        %1471 = vdwg.mxu0
        %v1472 = vadd.f32 %v1416, %v1467
        %1474 = vset.pattern.permute.xlu0 0
        %1475 = vperm.xlu0 %1474, %v1321
        %v1476 = vpop.permute.xlu0 %1475
        %v1478 = vadd.f32 %v1472, %v1476
        %v1479 = vtanh.pop %v1478
        %1480 = vrot.lane.b32.xlu0 %v1479, 3
        %v1481 = vpop.permute.xlu0 %1480
        %v1482 = vmul.f32 %v1481, 1.442695
        %v1483 = vpow.pop %v1482
        %v1484 = vmul.f32 %v616, %v1483
        %1485 = vrot.lane.b32.xlu0 %v1055, 127
        %v1486 = vpop.permute.xlu0 %1485
        %v1487 = vsel %vm623, %v1486, %v1055
        %1488 = vrot.lane.b32.xlu0 %v1487, 127
        %v1489 = vpop.permute.xlu0 %1488
        %v1490 = vsel %vm623, %v1489, %v1055
        %1491 = vrot.lane.b32.xlu0 %v1490, 127
        %v1492 = vpop.permute.xlu0 %1491
        %v1493 = vsel %vm623, %v1492, %v1055
        %1494 = vrot.lane.b32.xlu0 %v1493, 1
        %v1495 = vpop.permute.xlu0 %1494
        %v1496 = vsel %vm624, %v1495, %v1493
        %1497 = vrot.lane.b32.xlu0 %v1496, 1
        %v1498 = vpop.permute.xlu0 %1497
        %v1499 = vsel %vm624, %v1498, %v1493
        %1500 = vrot.lane.b32.xlu0 %v1499, 1
        %v1501 = vpop.permute.xlu0 %1500
        %v1502 = vsel %vm624, %v1501, %v1493
        %1503 = vrot.lane.b32.xlu0 %v1484, 127
        %v1504 = vpop.permute.xlu0 %1503
        %v1505 = vsel %vm623, %v1504, %v1484
        %1506 = vrot.lane.b32.xlu0 %v1505, 127
        %v1507 = vpop.permute.xlu0 %1506
        %v1508 = vsel %vm623, %v1507, %v1484
        %1509 = vrot.lane.b32.xlu0 %v1508, 127
        %v1510 = vpop.permute.xlu0 %1509
        %v1511 = vsel %vm623, %v1510, %v1484
        %1512 = vrot.lane.b32.xlu0 %v1511, 1
        %v1513 = vpop.permute.xlu0 %1512
        %v1514 = vsel %vm624, %v1513, %v1511
        %1515 = vrot.lane.b32.xlu0 %v1514, 1
        %v1516 = vpop.permute.xlu0 %1515
        %v1517 = vsel %vm624, %v1516, %v1511
        %1518 = vrot.lane.b32.xlu0 %v1517, 1
        %v1519 = vpop.permute.xlu0 %1518
        %v1520 = vsel %vm624, %v1519, %v1511
        %v1521 = vld [vmem:[%s12] sm:$0xf]
        %v1522 = vpack.c.bf16 %v1502, %v1502
        %v1523 = vld [vmem:[%s11] sm:$0x3]
        %1524 = vrot.lane.b32.xlu0 %v1502, 127
        %v1525 = vpop.permute.xlu0 %1524
        %v1526 = vpack.c.bf16 %v1525, %v1525
        %s1527 = scalar_lea.vmem %s11, 2
        %v1528 = vld [vmem:[%s1527] sm:$0x3]
        %v1530 = vsel %vm633, %v1528, 0
        %v1533 = vsel %vm637, %v1526, 0
        %1535 = vmatprep.subr.bf16.mxu0 0
        %1536 = vmatpush1.bf16.msra.mxu0 0
        %1537 = vmatprep.subr.bf16.mxu0 0
        %1538 = vmatpush1.bf16.msra.mxu0 0
        %1539 = vmatprep.subr.bf16.mxu0 0
        %1540 = vmatpush1.bf16.msra.mxu0 0
        %1541 = vmatprep.subr.bf16.mxu0 0
        %1542 = vmatpush1.bf16.msra.mxu0 0
        %1543 = vmatprep.subr.bf16.mxu0 0
        %1544 = vmatpush1.bf16.msra.mxu0 0
        %1545 = vmatprep.subr.bf16.mxu0 0
        %1546 = vmatpush1.bf16.msra.mxu0 0
        %1547 = vmatprep.subr.bf16.mxu0 0
        %1548 = vmatpush1.bf16.msra.mxu0 0
        %1549 = vmatprep.subr.bf16.mxu0 0
        %1550 = vmatpush1.bf16.msra.mxu0 %v1533
        %1551 = vmatprep.subr.bf16.mxu0 0
        %1552 = vmatpush2.bf16.msra.mxu0 0
        %1553 = vmatprep.subr.bf16.mxu0 0
        %1554 = vmatpush2.bf16.msra.mxu0 0
        %1555 = vmatprep.subr.bf16.mxu0 0
        %1556 = vmatpush2.bf16.msra.mxu0 0
        %1557 = vmatprep.subr.bf16.mxu0 0
        %1558 = vmatpush2.bf16.msra.mxu0 0
        %1559 = vmatprep.subr.bf16.mxu0 0
        %1560 = vmatpush2.bf16.msra.mxu0 0
        %1561 = vmatprep.subr.bf16.mxu0 0
        %1562 = vmatpush2.bf16.msra.mxu0 0
        %1563 = vmatprep.subr.bf16.mxu0 0
        %1564 = vmatpush2.bf16.msra.mxu0 0
        %1565 = vmatprep.subr.bf16.mxu0 0
        %1566 = vmatpush2.bf16.msra.mxu0 0
        %1567 = vmatprep.mubr.bf16.mxu0 0
        %1568 = vmatmul.mubr.bf16.gmra.mxu0 %v1530
        %v1569 = vpop.f32.mrf.mxu0
        %v1570 = vadd.f32 0.0, %v1569
        %v1571 = vpop.f32.mrf.mxu0
        %v1572 = vpop.f32.mrf.mxu0
        %v1573 = vpop.f32.mrf.mxu0
        %1574 = vdwg.mxu0
        %v1576 = vsel %vm633, %v1523, 0
        %v1579 = vsel %vm637, %v1522, 0
        %1581 = vmatprep.subr.bf16.mxu0 0
        %1582 = vmatpush1.bf16.msra.mxu0 0
        %1583 = vmatprep.subr.bf16.mxu0 0
        %1584 = vmatpush1.bf16.msra.mxu0 0
        %1585 = vmatprep.subr.bf16.mxu0 0
        %1586 = vmatpush1.bf16.msra.mxu0 0
        %1587 = vmatprep.subr.bf16.mxu0 0
        %1588 = vmatpush1.bf16.msra.mxu0 0
        %1589 = vmatprep.subr.bf16.mxu0 0
        %1590 = vmatpush1.bf16.msra.mxu0 0
        %1591 = vmatprep.subr.bf16.mxu0 0
        %1592 = vmatpush1.bf16.msra.mxu0 0
        %1593 = vmatprep.subr.bf16.mxu0 0
        %1594 = vmatpush1.bf16.msra.mxu0 0
        %1595 = vmatprep.subr.bf16.mxu0 0
        %1596 = vmatpush1.bf16.msra.mxu0 %v1579
        %1597 = vmatprep.subr.bf16.mxu0 0
        %1598 = vmatpush2.bf16.msra.mxu0 0
        %1599 = vmatprep.subr.bf16.mxu0 0
        %1600 = vmatpush2.bf16.msra.mxu0 0
        %1601 = vmatprep.subr.bf16.mxu0 0
        %1602 = vmatpush2.bf16.msra.mxu0 0
        %1603 = vmatprep.subr.bf16.mxu0 0
        %1604 = vmatpush2.bf16.msra.mxu0 0
        %1605 = vmatprep.subr.bf16.mxu0 0
        %1606 = vmatpush2.bf16.msra.mxu0 0
        %1607 = vmatprep.subr.bf16.mxu0 0
        %1608 = vmatpush2.bf16.msra.mxu0 0
        %1609 = vmatprep.subr.bf16.mxu0 0
        %1610 = vmatpush2.bf16.msra.mxu0 0
        %1611 = vmatprep.subr.bf16.mxu0 0
        %1612 = vmatpush2.bf16.msra.mxu0 0
        %1613 = vmatprep.mubr.bf16.mxu0 0
        %1614 = vmatmul.mubr.bf16.gmra.mxu0 %v1576
        %v1615 = vpop.f32.mrf.mxu0
        %v1616 = vadd.f32 %v1570, %v1615
        %v1617 = vpop.f32.mrf.mxu0
        %v1618 = vpop.f32.mrf.mxu0
        %v1619 = vpop.f32.mrf.mxu0
        %1620 = vdwg.mxu0
        %1621 = vrot.lane.b32.xlu0 %v1502, 126
        %v1622 = vpop.permute.xlu0 %1621
        %v1623 = vpack.c.bf16 %v1622, %v1622
        %s1624 = scalar_lea.vmem %s11, 4
        %v1625 = vld [vmem:[%s1624] sm:$0x3]
        %v1627 = vsel %vm633, %v1625, 0
        %v1630 = vsel %vm637, %v1623, 0
        %1632 = vmatprep.subr.bf16.mxu0 0
        %1633 = vmatpush1.bf16.msra.mxu0 0
        %1634 = vmatprep.subr.bf16.mxu0 0
        %1635 = vmatpush1.bf16.msra.mxu0 0
        %1636 = vmatprep.subr.bf16.mxu0 0
        %1637 = vmatpush1.bf16.msra.mxu0 0
        %1638 = vmatprep.subr.bf16.mxu0 0
        %1639 = vmatpush1.bf16.msra.mxu0 0
        %1640 = vmatprep.subr.bf16.mxu0 0
        %1641 = vmatpush1.bf16.msra.mxu0 0
        %1642 = vmatprep.subr.bf16.mxu0 0
        %1643 = vmatpush1.bf16.msra.mxu0 0
        %1644 = vmatprep.subr.bf16.mxu0 0
        %1645 = vmatpush1.bf16.msra.mxu0 0
        %1646 = vmatprep.subr.bf16.mxu0 0
        %1647 = vmatpush1.bf16.msra.mxu0 %v1630
        %1648 = vmatprep.subr.bf16.mxu0 0
        %1649 = vmatpush2.bf16.msra.mxu0 0
        %1650 = vmatprep.subr.bf16.mxu0 0
        %1651 = vmatpush2.bf16.msra.mxu0 0
        %1652 = vmatprep.subr.bf16.mxu0 0
        %1653 = vmatpush2.bf16.msra.mxu0 0
        %1654 = vmatprep.subr.bf16.mxu0 0
        %1655 = vmatpush2.bf16.msra.mxu0 0
        %1656 = vmatprep.subr.bf16.mxu0 0
        %1657 = vmatpush2.bf16.msra.mxu0 0
        %1658 = vmatprep.subr.bf16.mxu0 0
        %1659 = vmatpush2.bf16.msra.mxu0 0
        %1660 = vmatprep.subr.bf16.mxu0 0
        %1661 = vmatpush2.bf16.msra.mxu0 0
        %1662 = vmatprep.subr.bf16.mxu0 0
        %1663 = vmatpush2.bf16.msra.mxu0 0
        %1664 = vmatprep.mubr.bf16.mxu0 0
        %1665 = vmatmul.mubr.bf16.gmra.mxu0 %v1627
        %v1666 = vpop.f32.mrf.mxu0
        %v1667 = vadd.f32 0.0, %v1666
        %v1668 = vpop.f32.mrf.mxu0
        %v1669 = vpop.f32.mrf.mxu0
        %v1670 = vpop.f32.mrf.mxu0
        %1671 = vdwg.mxu0
        %v1672 = vadd.f32 %v1616, %v1667
        %1673 = vrot.lane.b32.xlu0 %v1502, 125
        %v1674 = vpop.permute.xlu0 %1673
        %v1675 = vpack.c.bf16 %v1674, %v1674
        %s1676 = scalar_lea.vmem %s11, 6
        %v1677 = vld [vmem:[%s1676] sm:$0x3]
        %v1679 = vsel %vm633, %v1677, 0
        %v1682 = vsel %vm637, %v1675, 0
        %1684 = vmatprep.subr.bf16.mxu0 0
        %1685 = vmatpush1.bf16.msra.mxu0 0
        %1686 = vmatprep.subr.bf16.mxu0 0
        %1687 = vmatpush1.bf16.msra.mxu0 0
        %1688 = vmatprep.subr.bf16.mxu0 0
        %1689 = vmatpush1.bf16.msra.mxu0 0
        %1690 = vmatprep.subr.bf16.mxu0 0
        %1691 = vmatpush1.bf16.msra.mxu0 0
        %1692 = vmatprep.subr.bf16.mxu0 0
        %1693 = vmatpush1.bf16.msra.mxu0 0
        %1694 = vmatprep.subr.bf16.mxu0 0
        %1695 = vmatpush1.bf16.msra.mxu0 0
        %1696 = vmatprep.subr.bf16.mxu0 0
        %1697 = vmatpush1.bf16.msra.mxu0 0
        %1698 = vmatprep.subr.bf16.mxu0 0
        %1699 = vmatpush1.bf16.msra.mxu0 %v1682
        %1700 = vmatprep.subr.bf16.mxu0 0
        %1701 = vmatpush2.bf16.msra.mxu0 0
        %1702 = vmatprep.subr.bf16.mxu0 0
        %1703 = vmatpush2.bf16.msra.mxu0 0
        %1704 = vmatprep.subr.bf16.mxu0 0
        %1705 = vmatpush2.bf16.msra.mxu0 0
        %1706 = vmatprep.subr.bf16.mxu0 0
        %1707 = vmatpush2.bf16.msra.mxu0 0
        %1708 = vmatprep.subr.bf16.mxu0 0
        %1709 = vmatpush2.bf16.msra.mxu0 0
        %1710 = vmatprep.subr.bf16.mxu0 0
        %1711 = vmatpush2.bf16.msra.mxu0 0
        %1712 = vmatprep.subr.bf16.mxu0 0
        %1713 = vmatpush2.bf16.msra.mxu0 0
        %1714 = vmatprep.subr.bf16.mxu0 0
        %1715 = vmatpush2.bf16.msra.mxu0 0
        %1716 = vmatprep.mubr.bf16.mxu0 0
        %1717 = vmatmul.mubr.bf16.gmra.mxu0 %v1679
        %v1718 = vpop.f32.mrf.mxu0
        %v1719 = vadd.f32 0.0, %v1718
        %v1720 = vpop.f32.mrf.mxu0
        %v1721 = vpop.f32.mrf.mxu0
        %v1722 = vpop.f32.mrf.mxu0
        %1723 = vdwg.mxu0
        %v1724 = vadd.f32 %v1672, %v1719
        %1725 = vrot.lane.b32.xlu0 %v1502, 124
        %v1726 = vpop.permute.xlu0 %1725
        %v1727 = vpack.c.bf16 %v1726, %v1726
        %s1728 = scalar_lea.vmem %s11, 8
        %v1729 = vld [vmem:[%s1728] sm:$0x3]
        %v1731 = vsel %vm633, %v1729, 0
        %v1734 = vsel %vm637, %v1727, 0
        %1736 = vmatprep.subr.bf16.mxu0 0
        %1737 = vmatpush1.bf16.msra.mxu0 0
        %1738 = vmatprep.subr.bf16.mxu0 0
        %1739 = vmatpush1.bf16.msra.mxu0 0
        %1740 = vmatprep.subr.bf16.mxu0 0
        %1741 = vmatpush1.bf16.msra.mxu0 0
        %1742 = vmatprep.subr.bf16.mxu0 0
        %1743 = vmatpush1.bf16.msra.mxu0 0
        %1744 = vmatprep.subr.bf16.mxu0 0
        %1745 = vmatpush1.bf16.msra.mxu0 0
        %1746 = vmatprep.subr.bf16.mxu0 0
        %1747 = vmatpush1.bf16.msra.mxu0 0
        %1748 = vmatprep.subr.bf16.mxu0 0
        %1749 = vmatpush1.bf16.msra.mxu0 0
        %1750 = vmatprep.subr.bf16.mxu0 0
        %1751 = vmatpush1.bf16.msra.mxu0 %v1734
        %1752 = vmatprep.subr.bf16.mxu0 0
        %1753 = vmatpush2.bf16.msra.mxu0 0
        %1754 = vmatprep.subr.bf16.mxu0 0
        %1755 = vmatpush2.bf16.msra.mxu0 0
        %1756 = vmatprep.subr.bf16.mxu0 0
        %1757 = vmatpush2.bf16.msra.mxu0 0
        %1758 = vmatprep.subr.bf16.mxu0 0
        %1759 = vmatpush2.bf16.msra.mxu0 0
        %1760 = vmatprep.subr.bf16.mxu0 0
        %1761 = vmatpush2.bf16.msra.mxu0 0
        %1762 = vmatprep.subr.bf16.mxu0 0
        %1763 = vmatpush2.bf16.msra.mxu0 0
        %1764 = vmatprep.subr.bf16.mxu0 0
        %1765 = vmatpush2.bf16.msra.mxu0 0
        %1766 = vmatprep.subr.bf16.mxu0 0
        %1767 = vmatpush2.bf16.msra.mxu0 0
        %1768 = vmatprep.mubr.bf16.mxu0 0
        %1769 = vmatmul.mubr.bf16.gmra.mxu0 %v1731
        %v1770 = vpop.f32.mrf.mxu0
        %v1771 = vadd.f32 0.0, %v1770
        %v1772 = vpop.f32.mrf.mxu0
        %v1773 = vpop.f32.mrf.mxu0
        %v1774 = vpop.f32.mrf.mxu0
        %1775 = vdwg.mxu0
        %v1776 = vadd.f32 %v1724, %v1771
        %1778 = vset.pattern.permute.xlu0 0
        %1779 = vperm.xlu0 %1778, %v1521
        %v1780 = vpop.permute.xlu0 %1779
        %v1782 = vadd.f32 %v1776, %v1780
        %vm1783 = vcmp.ge.f32.partialorder %v1782, 0.0
        %v1784 = vmul.f32 %v1782, 0.01
        %v1785 = vsel %vm1783, %v1782, %v1784
        %v1786 = vld [vmem:[%s14] sm:$0xf]
        %v1787 = vpack.c.bf16 %v1785, %v1785
        %v1788 = vld [vmem:[%s13] sm:$0x3]
        %1789 = vrot.lane.b32.xlu0 %v1785, 127
        %v1790 = vpop.permute.xlu0 %1789
        %v1791 = vpack.c.bf16 %v1790, %v1790
        %s1792 = scalar_lea.vmem %s13, 2
        %v1793 = vld [vmem:[%s1792] sm:$0x3]
        %v1795 = vsel %vm633, %v1793, 0
        %v1798 = vsel %vm637, %v1791, 0
        %1800 = vmatprep.subr.bf16.mxu0 0
        %1801 = vmatpush1.bf16.msra.mxu0 0
        %1802 = vmatprep.subr.bf16.mxu0 0
        %1803 = vmatpush1.bf16.msra.mxu0 0
        %1804 = vmatprep.subr.bf16.mxu0 0
        %1805 = vmatpush1.bf16.msra.mxu0 0
        %1806 = vmatprep.subr.bf16.mxu0 0
        %1807 = vmatpush1.bf16.msra.mxu0 0
        %1808 = vmatprep.subr.bf16.mxu0 0
        %1809 = vmatpush1.bf16.msra.mxu0 0
        %1810 = vmatprep.subr.bf16.mxu0 0
        %1811 = vmatpush1.bf16.msra.mxu0 0
        %1812 = vmatprep.subr.bf16.mxu0 0
        %1813 = vmatpush1.bf16.msra.mxu0 0
        %1814 = vmatprep.subr.bf16.mxu0 0
        %1815 = vmatpush1.bf16.msra.mxu0 %v1798
        %1816 = vmatprep.subr.bf16.mxu0 0
        %1817 = vmatpush2.bf16.msra.mxu0 0
        %1818 = vmatprep.subr.bf16.mxu0 0
        %1819 = vmatpush2.bf16.msra.mxu0 0
        %1820 = vmatprep.subr.bf16.mxu0 0
        %1821 = vmatpush2.bf16.msra.mxu0 0
        %1822 = vmatprep.subr.bf16.mxu0 0
        %1823 = vmatpush2.bf16.msra.mxu0 0
        %1824 = vmatprep.subr.bf16.mxu0 0
        %1825 = vmatpush2.bf16.msra.mxu0 0
        %1826 = vmatprep.subr.bf16.mxu0 0
        %1827 = vmatpush2.bf16.msra.mxu0 0
        %1828 = vmatprep.subr.bf16.mxu0 0
        %1829 = vmatpush2.bf16.msra.mxu0 0
        %1830 = vmatprep.subr.bf16.mxu0 0
        %1831 = vmatpush2.bf16.msra.mxu0 0
        %1832 = vmatprep.mubr.bf16.mxu0 0
        %1833 = vmatmul.mubr.bf16.gmra.mxu0 %v1795
        %v1834 = vpop.f32.mrf.mxu0
        %v1835 = vadd.f32 0.0, %v1834
        %v1836 = vpop.f32.mrf.mxu0
        %v1837 = vpop.f32.mrf.mxu0
        %v1838 = vpop.f32.mrf.mxu0
        %1839 = vdwg.mxu0
        %v1841 = vsel %vm633, %v1788, 0
        %v1844 = vsel %vm637, %v1787, 0
        %1846 = vmatprep.subr.bf16.mxu0 0
        %1847 = vmatpush1.bf16.msra.mxu0 0
        %1848 = vmatprep.subr.bf16.mxu0 0
        %1849 = vmatpush1.bf16.msra.mxu0 0
        %1850 = vmatprep.subr.bf16.mxu0 0
        %1851 = vmatpush1.bf16.msra.mxu0 0
        %1852 = vmatprep.subr.bf16.mxu0 0
        %1853 = vmatpush1.bf16.msra.mxu0 0
        %1854 = vmatprep.subr.bf16.mxu0 0
        %1855 = vmatpush1.bf16.msra.mxu0 0
        %1856 = vmatprep.subr.bf16.mxu0 0
        %1857 = vmatpush1.bf16.msra.mxu0 0
        %1858 = vmatprep.subr.bf16.mxu0 0
        %1859 = vmatpush1.bf16.msra.mxu0 0
        %1860 = vmatprep.subr.bf16.mxu0 0
        %1861 = vmatpush1.bf16.msra.mxu0 %v1844
        %1862 = vmatprep.subr.bf16.mxu0 0
        %1863 = vmatpush2.bf16.msra.mxu0 0
        %1864 = vmatprep.subr.bf16.mxu0 0
        %1865 = vmatpush2.bf16.msra.mxu0 0
        %1866 = vmatprep.subr.bf16.mxu0 0
        %1867 = vmatpush2.bf16.msra.mxu0 0
        %1868 = vmatprep.subr.bf16.mxu0 0
        %1869 = vmatpush2.bf16.msra.mxu0 0
        %1870 = vmatprep.subr.bf16.mxu0 0
        %1871 = vmatpush2.bf16.msra.mxu0 0
        %1872 = vmatprep.subr.bf16.mxu0 0
        %1873 = vmatpush2.bf16.msra.mxu0 0
        %1874 = vmatprep.subr.bf16.mxu0 0
        %1875 = vmatpush2.bf16.msra.mxu0 0
        %1876 = vmatprep.subr.bf16.mxu0 0
        %1877 = vmatpush2.bf16.msra.mxu0 0
        %1878 = vmatprep.mubr.bf16.mxu0 0
        %1879 = vmatmul.mubr.bf16.gmra.mxu0 %v1841
        %v1880 = vpop.f32.mrf.mxu0
        %v1881 = vadd.f32 %v1835, %v1880
        %v1882 = vpop.f32.mrf.mxu0
        %v1883 = vpop.f32.mrf.mxu0
        %v1884 = vpop.f32.mrf.mxu0
        %1885 = vdwg.mxu0
        %1886 = vrot.lane.b32.xlu0 %v1785, 126
        %v1887 = vpop.permute.xlu0 %1886
        %v1888 = vpack.c.bf16 %v1887, %v1887
        %s1889 = scalar_lea.vmem %s13, 4
        %v1890 = vld [vmem:[%s1889] sm:$0x3]
        %v1892 = vsel %vm633, %v1890, 0
        %v1895 = vsel %vm637, %v1888, 0
        %1897 = vmatprep.subr.bf16.mxu0 0
        %1898 = vmatpush1.bf16.msra.mxu0 0
        %1899 = vmatprep.subr.bf16.mxu0 0
        %1900 = vmatpush1.bf16.msra.mxu0 0
        %1901 = vmatprep.subr.bf16.mxu0 0
        %1902 = vmatpush1.bf16.msra.mxu0 0
        %1903 = vmatprep.subr.bf16.mxu0 0
        %1904 = vmatpush1.bf16.msra.mxu0 0
        %1905 = vmatprep.subr.bf16.mxu0 0
        %1906 = vmatpush1.bf16.msra.mxu0 0
        %1907 = vmatprep.subr.bf16.mxu0 0
        %1908 = vmatpush1.bf16.msra.mxu0 0
        %1909 = vmatprep.subr.bf16.mxu0 0
        %1910 = vmatpush1.bf16.msra.mxu0 0
        %1911 = vmatprep.subr.bf16.mxu0 0
        %1912 = vmatpush1.bf16.msra.mxu0 %v1895
        %1913 = vmatprep.subr.bf16.mxu0 0
        %1914 = vmatpush2.bf16.msra.mxu0 0
        %1915 = vmatprep.subr.bf16.mxu0 0
        %1916 = vmatpush2.bf16.msra.mxu0 0
        %1917 = vmatprep.subr.bf16.mxu0 0
        %1918 = vmatpush2.bf16.msra.mxu0 0
        %1919 = vmatprep.subr.bf16.mxu0 0
        %1920 = vmatpush2.bf16.msra.mxu0 0
        %1921 = vmatprep.subr.bf16.mxu0 0
        %1922 = vmatpush2.bf16.msra.mxu0 0
        %1923 = vmatprep.subr.bf16.mxu0 0
        %1924 = vmatpush2.bf16.msra.mxu0 0
        %1925 = vmatprep.subr.bf16.mxu0 0
        %1926 = vmatpush2.bf16.msra.mxu0 0
        %1927 = vmatprep.subr.bf16.mxu0 0
        %1928 = vmatpush2.bf16.msra.mxu0 0
        %1929 = vmatprep.mubr.bf16.mxu0 0
        %1930 = vmatmul.mubr.bf16.gmra.mxu0 %v1892
        %v1931 = vpop.f32.mrf.mxu0
        %v1932 = vadd.f32 0.0, %v1931
        %v1933 = vpop.f32.mrf.mxu0
        %v1934 = vpop.f32.mrf.mxu0
        %v1935 = vpop.f32.mrf.mxu0
        %1936 = vdwg.mxu0
        %v1937 = vadd.f32 %v1881, %v1932
        %1939 = vset.pattern.permute.xlu0 0
        %1940 = vperm.xlu0 %1939, %v1786
        %v1941 = vpop.permute.xlu0 %1940
        %v1943 = vadd.f32 %v1937, %v1941
        %v1944 = vtanh.pop %v1943
        %1945 = vrot.lane.b32.xlu0 %v1944, 3
        %v1946 = vpop.permute.xlu0 %1945
        %v1947 = vadd.f32 %v1520, %v1946
        %v1948 = vld [vmem:[%s16] sm:$0xf]
        %v1949 = vpack.c.bf16 %v1520, %v1520
        %v1950 = vld [vmem:[%s15] sm:$0x3]
        %1951 = vrot.lane.b32.xlu0 %v1520, 127
        %v1952 = vpop.permute.xlu0 %1951
        %v1953 = vpack.c.bf16 %v1952, %v1952
        %s1954 = scalar_lea.vmem %s15, 2
        %v1955 = vld [vmem:[%s1954] sm:$0x3]
        %v1957 = vsel %vm633, %v1955, 0
        %v1960 = vsel %vm637, %v1953, 0
        %1962 = vmatprep.subr.bf16.mxu0 0
        %1963 = vmatpush1.bf16.msra.mxu0 0
        %1964 = vmatprep.subr.bf16.mxu0 0
        %1965 = vmatpush1.bf16.msra.mxu0 0
        %1966 = vmatprep.subr.bf16.mxu0 0
        %1967 = vmatpush1.bf16.msra.mxu0 0
        %1968 = vmatprep.subr.bf16.mxu0 0
        %1969 = vmatpush1.bf16.msra.mxu0 0
        %1970 = vmatprep.subr.bf16.mxu0 0
        %1971 = vmatpush1.bf16.msra.mxu0 0
        %1972 = vmatprep.subr.bf16.mxu0 0
        %1973 = vmatpush1.bf16.msra.mxu0 0
        %1974 = vmatprep.subr.bf16.mxu0 0
        %1975 = vmatpush1.bf16.msra.mxu0 0
        %1976 = vmatprep.subr.bf16.mxu0 0
        %1977 = vmatpush1.bf16.msra.mxu0 %v1960
        %1978 = vmatprep.subr.bf16.mxu0 0
        %1979 = vmatpush2.bf16.msra.mxu0 0
        %1980 = vmatprep.subr.bf16.mxu0 0
        %1981 = vmatpush2.bf16.msra.mxu0 0
        %1982 = vmatprep.subr.bf16.mxu0 0
        %1983 = vmatpush2.bf16.msra.mxu0 0
        %1984 = vmatprep.subr.bf16.mxu0 0
        %1985 = vmatpush2.bf16.msra.mxu0 0
        %1986 = vmatprep.subr.bf16.mxu0 0
        %1987 = vmatpush2.bf16.msra.mxu0 0
        %1988 = vmatprep.subr.bf16.mxu0 0
        %1989 = vmatpush2.bf16.msra.mxu0 0
        %1990 = vmatprep.subr.bf16.mxu0 0
        %1991 = vmatpush2.bf16.msra.mxu0 0
        %1992 = vmatprep.subr.bf16.mxu0 0
        %1993 = vmatpush2.bf16.msra.mxu0 0
        %1994 = vmatprep.mubr.bf16.mxu0 0
        %1995 = vmatmul.mubr.bf16.gmra.mxu0 %v1957
        %v1996 = vpop.f32.mrf.mxu0
        %v1997 = vadd.f32 0.0, %v1996
        %v1998 = vpop.f32.mrf.mxu0
        %v1999 = vpop.f32.mrf.mxu0
        %v2000 = vpop.f32.mrf.mxu0
        %2001 = vdwg.mxu0
        %v2003 = vsel %vm633, %v1950, 0
        %v2006 = vsel %vm637, %v1949, 0
        %2008 = vmatprep.subr.bf16.mxu0 0
        %2009 = vmatpush1.bf16.msra.mxu0 0
        %2010 = vmatprep.subr.bf16.mxu0 0
        %2011 = vmatpush1.bf16.msra.mxu0 0
        %2012 = vmatprep.subr.bf16.mxu0 0
        %2013 = vmatpush1.bf16.msra.mxu0 0
        %2014 = vmatprep.subr.bf16.mxu0 0
        %2015 = vmatpush1.bf16.msra.mxu0 0
        %2016 = vmatprep.subr.bf16.mxu0 0
        %2017 = vmatpush1.bf16.msra.mxu0 0
        %2018 = vmatprep.subr.bf16.mxu0 0
        %2019 = vmatpush1.bf16.msra.mxu0 0
        %2020 = vmatprep.subr.bf16.mxu0 0
        %2021 = vmatpush1.bf16.msra.mxu0 0
        %2022 = vmatprep.subr.bf16.mxu0 0
        %2023 = vmatpush1.bf16.msra.mxu0 %v2006
        %2024 = vmatprep.subr.bf16.mxu0 0
        %2025 = vmatpush2.bf16.msra.mxu0 0
        %2026 = vmatprep.subr.bf16.mxu0 0
        %2027 = vmatpush2.bf16.msra.mxu0 0
        %2028 = vmatprep.subr.bf16.mxu0 0
        %2029 = vmatpush2.bf16.msra.mxu0 0
        %2030 = vmatprep.subr.bf16.mxu0 0
        %2031 = vmatpush2.bf16.msra.mxu0 0
        %2032 = vmatprep.subr.bf16.mxu0 0
        %2033 = vmatpush2.bf16.msra.mxu0 0
        %2034 = vmatprep.subr.bf16.mxu0 0
        %2035 = vmatpush2.bf16.msra.mxu0 0
        %2036 = vmatprep.subr.bf16.mxu0 0
        %2037 = vmatpush2.bf16.msra.mxu0 0
        %2038 = vmatprep.subr.bf16.mxu0 0
        %2039 = vmatpush2.bf16.msra.mxu0 0
        %2040 = vmatprep.mubr.bf16.mxu0 0
        %2041 = vmatmul.mubr.bf16.gmra.mxu0 %v2003
        %v2042 = vpop.f32.mrf.mxu0
        %v2043 = vadd.f32 %v1997, %v2042
        %v2044 = vpop.f32.mrf.mxu0
        %v2045 = vpop.f32.mrf.mxu0
        %v2046 = vpop.f32.mrf.mxu0
        %2047 = vdwg.mxu0
        %2048 = vrot.lane.b32.xlu0 %v1520, 126
        %v2049 = vpop.permute.xlu0 %2048
        %v2050 = vpack.c.bf16 %v2049, %v2049
        %s2051 = scalar_lea.vmem %s15, 4
        %v2052 = vld [vmem:[%s2051] sm:$0x3]
        %v2054 = vsel %vm633, %v2052, 0
        %v2057 = vsel %vm637, %v2050, 0
        %2059 = vmatprep.subr.bf16.mxu0 0
        %2060 = vmatpush1.bf16.msra.mxu0 0
        %2061 = vmatprep.subr.bf16.mxu0 0
        %2062 = vmatpush1.bf16.msra.mxu0 0
        %2063 = vmatprep.subr.bf16.mxu0 0
        %2064 = vmatpush1.bf16.msra.mxu0 0
        %2065 = vmatprep.subr.bf16.mxu0 0
        %2066 = vmatpush1.bf16.msra.mxu0 0
        %2067 = vmatprep.subr.bf16.mxu0 0
        %2068 = vmatpush1.bf16.msra.mxu0 0
        %2069 = vmatprep.subr.bf16.mxu0 0
        %2070 = vmatpush1.bf16.msra.mxu0 0
        %2071 = vmatprep.subr.bf16.mxu0 0
        %2072 = vmatpush1.bf16.msra.mxu0 0
        %2073 = vmatprep.subr.bf16.mxu0 0
        %2074 = vmatpush1.bf16.msra.mxu0 %v2057
        %2075 = vmatprep.subr.bf16.mxu0 0
        %2076 = vmatpush2.bf16.msra.mxu0 0
        %2077 = vmatprep.subr.bf16.mxu0 0
        %2078 = vmatpush2.bf16.msra.mxu0 0
        %2079 = vmatprep.subr.bf16.mxu0 0
        %2080 = vmatpush2.bf16.msra.mxu0 0
        %2081 = vmatprep.subr.bf16.mxu0 0
        %2082 = vmatpush2.bf16.msra.mxu0 0
        %2083 = vmatprep.subr.bf16.mxu0 0
        %2084 = vmatpush2.bf16.msra.mxu0 0
        %2085 = vmatprep.subr.bf16.mxu0 0
        %2086 = vmatpush2.bf16.msra.mxu0 0
        %2087 = vmatprep.subr.bf16.mxu0 0
        %2088 = vmatpush2.bf16.msra.mxu0 0
        %2089 = vmatprep.subr.bf16.mxu0 0
        %2090 = vmatpush2.bf16.msra.mxu0 0
        %2091 = vmatprep.mubr.bf16.mxu0 0
        %2092 = vmatmul.mubr.bf16.gmra.mxu0 %v2054
        %v2093 = vpop.f32.mrf.mxu0
        %v2094 = vadd.f32 0.0, %v2093
        %v2095 = vpop.f32.mrf.mxu0
        %v2096 = vpop.f32.mrf.mxu0
        %v2097 = vpop.f32.mrf.mxu0
        %2098 = vdwg.mxu0
        %v2099 = vadd.f32 %v2043, %v2094
        %2100 = vrot.lane.b32.xlu0 %v1520, 125
        %v2101 = vpop.permute.xlu0 %2100
        %v2102 = vpack.c.bf16 %v2101, %v2101
        %s2103 = scalar_lea.vmem %s15, 6
        %v2104 = vld [vmem:[%s2103] sm:$0x3]
        %v2106 = vsel %vm633, %v2104, 0
        %v2109 = vsel %vm637, %v2102, 0
        %2111 = vmatprep.subr.bf16.mxu0 0
        %2112 = vmatpush1.bf16.msra.mxu0 0
        %2113 = vmatprep.subr.bf16.mxu0 0
        %2114 = vmatpush1.bf16.msra.mxu0 0
        %2115 = vmatprep.subr.bf16.mxu0 0
        %2116 = vmatpush1.bf16.msra.mxu0 0
        %2117 = vmatprep.subr.bf16.mxu0 0
        %2118 = vmatpush1.bf16.msra.mxu0 0
        %2119 = vmatprep.subr.bf16.mxu0 0
        %2120 = vmatpush1.bf16.msra.mxu0 0
        %2121 = vmatprep.subr.bf16.mxu0 0
        %2122 = vmatpush1.bf16.msra.mxu0 0
        %2123 = vmatprep.subr.bf16.mxu0 0
        %2124 = vmatpush1.bf16.msra.mxu0 0
        %2125 = vmatprep.subr.bf16.mxu0 0
        %2126 = vmatpush1.bf16.msra.mxu0 %v2109
        %2127 = vmatprep.subr.bf16.mxu0 0
        %2128 = vmatpush2.bf16.msra.mxu0 0
        %2129 = vmatprep.subr.bf16.mxu0 0
        %2130 = vmatpush2.bf16.msra.mxu0 0
        %2131 = vmatprep.subr.bf16.mxu0 0
        %2132 = vmatpush2.bf16.msra.mxu0 0
        %2133 = vmatprep.subr.bf16.mxu0 0
        %2134 = vmatpush2.bf16.msra.mxu0 0
        %2135 = vmatprep.subr.bf16.mxu0 0
        %2136 = vmatpush2.bf16.msra.mxu0 0
        %2137 = vmatprep.subr.bf16.mxu0 0
        %2138 = vmatpush2.bf16.msra.mxu0 0
        %2139 = vmatprep.subr.bf16.mxu0 0
        %2140 = vmatpush2.bf16.msra.mxu0 0
        %2141 = vmatprep.subr.bf16.mxu0 0
        %2142 = vmatpush2.bf16.msra.mxu0 0
        %2143 = vmatprep.mubr.bf16.mxu0 0
        %2144 = vmatmul.mubr.bf16.gmra.mxu0 %v2106
        %v2145 = vpop.f32.mrf.mxu0
        %v2146 = vadd.f32 0.0, %v2145
        %v2147 = vpop.f32.mrf.mxu0
        %v2148 = vpop.f32.mrf.mxu0
        %v2149 = vpop.f32.mrf.mxu0
        %2150 = vdwg.mxu0
        %v2151 = vadd.f32 %v2099, %v2146
        %2152 = vrot.lane.b32.xlu0 %v1520, 124
        %v2153 = vpop.permute.xlu0 %2152
        %v2154 = vpack.c.bf16 %v2153, %v2153
        %s2155 = scalar_lea.vmem %s15, 8
        %v2156 = vld [vmem:[%s2155] sm:$0x3]
        %v2158 = vsel %vm633, %v2156, 0
        %v2161 = vsel %vm637, %v2154, 0
        %2163 = vmatprep.subr.bf16.mxu0 0
        %2164 = vmatpush1.bf16.msra.mxu0 0
        %2165 = vmatprep.subr.bf16.mxu0 0
        %2166 = vmatpush1.bf16.msra.mxu0 0
        %2167 = vmatprep.subr.bf16.mxu0 0
        %2168 = vmatpush1.bf16.msra.mxu0 0
        %2169 = vmatprep.subr.bf16.mxu0 0
        %2170 = vmatpush1.bf16.msra.mxu0 0
        %2171 = vmatprep.subr.bf16.mxu0 0
        %2172 = vmatpush1.bf16.msra.mxu0 0
        %2173 = vmatprep.subr.bf16.mxu0 0
        %2174 = vmatpush1.bf16.msra.mxu0 0
        %2175 = vmatprep.subr.bf16.mxu0 0
        %2176 = vmatpush1.bf16.msra.mxu0 0
        %2177 = vmatprep.subr.bf16.mxu0 0
        %2178 = vmatpush1.bf16.msra.mxu0 %v2161
        %2179 = vmatprep.subr.bf16.mxu0 0
        %2180 = vmatpush2.bf16.msra.mxu0 0
        %2181 = vmatprep.subr.bf16.mxu0 0
        %2182 = vmatpush2.bf16.msra.mxu0 0
        %2183 = vmatprep.subr.bf16.mxu0 0
        %2184 = vmatpush2.bf16.msra.mxu0 0
        %2185 = vmatprep.subr.bf16.mxu0 0
        %2186 = vmatpush2.bf16.msra.mxu0 0
        %2187 = vmatprep.subr.bf16.mxu0 0
        %2188 = vmatpush2.bf16.msra.mxu0 0
        %2189 = vmatprep.subr.bf16.mxu0 0
        %2190 = vmatpush2.bf16.msra.mxu0 0
        %2191 = vmatprep.subr.bf16.mxu0 0
        %2192 = vmatpush2.bf16.msra.mxu0 0
        %2193 = vmatprep.subr.bf16.mxu0 0
        %2194 = vmatpush2.bf16.msra.mxu0 0
        %2195 = vmatprep.mubr.bf16.mxu0 0
        %2196 = vmatmul.mubr.bf16.gmra.mxu0 %v2158
        %v2197 = vpop.f32.mrf.mxu0
        %v2198 = vadd.f32 0.0, %v2197
        %v2199 = vpop.f32.mrf.mxu0
        %v2200 = vpop.f32.mrf.mxu0
        %v2201 = vpop.f32.mrf.mxu0
        %2202 = vdwg.mxu0
        %v2203 = vadd.f32 %v2151, %v2198
        %2205 = vset.pattern.permute.xlu0 0
        %2206 = vperm.xlu0 %2205, %v1948
        %v2207 = vpop.permute.xlu0 %2206
        %v2209 = vadd.f32 %v2203, %v2207
        %vm2210 = vcmp.ge.f32.partialorder %v2209, 0.0
        %v2211 = vmul.f32 %v2209, 0.01
        %v2212 = vsel %vm2210, %v2209, %v2211
        %v2213 = vld [vmem:[%s18] sm:$0xf]
        %v2214 = vpack.c.bf16 %v2212, %v2212
        %v2215 = vld [vmem:[%s17] sm:$0x3]
        %2216 = vrot.lane.b32.xlu0 %v2212, 127
        %v2217 = vpop.permute.xlu0 %2216
        %v2218 = vpack.c.bf16 %v2217, %v2217
        %s2219 = scalar_lea.vmem %s17, 2
        %v2220 = vld [vmem:[%s2219] sm:$0x3]
        %v2222 = vsel %vm633, %v2220, 0
        %v2225 = vsel %vm637, %v2218, 0
        %2227 = vmatprep.subr.bf16.mxu0 0
        %2228 = vmatpush1.bf16.msra.mxu0 0
        %2229 = vmatprep.subr.bf16.mxu0 0
        %2230 = vmatpush1.bf16.msra.mxu0 0
        %2231 = vmatprep.subr.bf16.mxu0 0
        %2232 = vmatpush1.bf16.msra.mxu0 0
        %2233 = vmatprep.subr.bf16.mxu0 0
        %2234 = vmatpush1.bf16.msra.mxu0 0
        %2235 = vmatprep.subr.bf16.mxu0 0
        %2236 = vmatpush1.bf16.msra.mxu0 0
        %2237 = vmatprep.subr.bf16.mxu0 0
        %2238 = vmatpush1.bf16.msra.mxu0 0
        %2239 = vmatprep.subr.bf16.mxu0 0
        %2240 = vmatpush1.bf16.msra.mxu0 0
        %2241 = vmatprep.subr.bf16.mxu0 0
        %2242 = vmatpush1.bf16.msra.mxu0 %v2225
        %2243 = vmatprep.subr.bf16.mxu0 0
        %2244 = vmatpush2.bf16.msra.mxu0 0
        %2245 = vmatprep.subr.bf16.mxu0 0
        %2246 = vmatpush2.bf16.msra.mxu0 0
        %2247 = vmatprep.subr.bf16.mxu0 0
        %2248 = vmatpush2.bf16.msra.mxu0 0
        %2249 = vmatprep.subr.bf16.mxu0 0
        %2250 = vmatpush2.bf16.msra.mxu0 0
        %2251 = vmatprep.subr.bf16.mxu0 0
        %2252 = vmatpush2.bf16.msra.mxu0 0
        %2253 = vmatprep.subr.bf16.mxu0 0
        %2254 = vmatpush2.bf16.msra.mxu0 0
        %2255 = vmatprep.subr.bf16.mxu0 0
        %2256 = vmatpush2.bf16.msra.mxu0 0
        %2257 = vmatprep.subr.bf16.mxu0 0
        %2258 = vmatpush2.bf16.msra.mxu0 0
        %2259 = vmatprep.mubr.bf16.mxu0 0
        %2260 = vmatmul.mubr.bf16.gmra.mxu0 %v2222
        %v2261 = vpop.f32.mrf.mxu0
        %v2262 = vadd.f32 0.0, %v2261
        %v2263 = vpop.f32.mrf.mxu0
        %v2264 = vpop.f32.mrf.mxu0
        %v2265 = vpop.f32.mrf.mxu0
        %2266 = vdwg.mxu0
        %v2268 = vsel %vm633, %v2215, 0
        %v2271 = vsel %vm637, %v2214, 0
        %2273 = vmatprep.subr.bf16.mxu0 0
        %2274 = vmatpush1.bf16.msra.mxu0 0
        %2275 = vmatprep.subr.bf16.mxu0 0
        %2276 = vmatpush1.bf16.msra.mxu0 0
        %2277 = vmatprep.subr.bf16.mxu0 0
        %2278 = vmatpush1.bf16.msra.mxu0 0
        %2279 = vmatprep.subr.bf16.mxu0 0
        %2280 = vmatpush1.bf16.msra.mxu0 0
        %2281 = vmatprep.subr.bf16.mxu0 0
        %2282 = vmatpush1.bf16.msra.mxu0 0
        %2283 = vmatprep.subr.bf16.mxu0 0
        %2284 = vmatpush1.bf16.msra.mxu0 0
        %2285 = vmatprep.subr.bf16.mxu0 0
        %2286 = vmatpush1.bf16.msra.mxu0 0
        %2287 = vmatprep.subr.bf16.mxu0 0
        %2288 = vmatpush1.bf16.msra.mxu0 %v2271
        %2289 = vmatprep.subr.bf16.mxu0 0
        %2290 = vmatpush2.bf16.msra.mxu0 0
        %2291 = vmatprep.subr.bf16.mxu0 0
        %2292 = vmatpush2.bf16.msra.mxu0 0
        %2293 = vmatprep.subr.bf16.mxu0 0
        %2294 = vmatpush2.bf16.msra.mxu0 0
        %2295 = vmatprep.subr.bf16.mxu0 0
        %2296 = vmatpush2.bf16.msra.mxu0 0
        %2297 = vmatprep.subr.bf16.mxu0 0
        %2298 = vmatpush2.bf16.msra.mxu0 0
        %2299 = vmatprep.subr.bf16.mxu0 0
        %2300 = vmatpush2.bf16.msra.mxu0 0
        %2301 = vmatprep.subr.bf16.mxu0 0
        %2302 = vmatpush2.bf16.msra.mxu0 0
        %2303 = vmatprep.subr.bf16.mxu0 0
        %2304 = vmatpush2.bf16.msra.mxu0 0
        %2305 = vmatprep.mubr.bf16.mxu0 0
        %2306 = vmatmul.mubr.bf16.gmra.mxu0 %v2268
        %v2307 = vpop.f32.mrf.mxu0
        %v2308 = vadd.f32 %v2262, %v2307
        %v2309 = vpop.f32.mrf.mxu0
        %v2310 = vpop.f32.mrf.mxu0
        %v2311 = vpop.f32.mrf.mxu0
        %2312 = vdwg.mxu0
        %2313 = vrot.lane.b32.xlu0 %v2212, 126
        %v2314 = vpop.permute.xlu0 %2313
        %v2315 = vpack.c.bf16 %v2314, %v2314
        %s2316 = scalar_lea.vmem %s17, 4
        %v2317 = vld [vmem:[%s2316] sm:$0x3]
        %v2319 = vsel %vm633, %v2317, 0
        %v2322 = vsel %vm637, %v2315, 0
        %2324 = vmatprep.subr.bf16.mxu0 0
        %2325 = vmatpush1.bf16.msra.mxu0 0
        %2326 = vmatprep.subr.bf16.mxu0 0
        %2327 = vmatpush1.bf16.msra.mxu0 0
        %2328 = vmatprep.subr.bf16.mxu0 0
        %2329 = vmatpush1.bf16.msra.mxu0 0
        %2330 = vmatprep.subr.bf16.mxu0 0
        %2331 = vmatpush1.bf16.msra.mxu0 0
        %2332 = vmatprep.subr.bf16.mxu0 0
        %2333 = vmatpush1.bf16.msra.mxu0 0
        %2334 = vmatprep.subr.bf16.mxu0 0
        %2335 = vmatpush1.bf16.msra.mxu0 0
        %2336 = vmatprep.subr.bf16.mxu0 0
        %2337 = vmatpush1.bf16.msra.mxu0 0
        %2338 = vmatprep.subr.bf16.mxu0 0
        %2339 = vmatpush1.bf16.msra.mxu0 %v2322
        %2340 = vmatprep.subr.bf16.mxu0 0
        %2341 = vmatpush2.bf16.msra.mxu0 0
        %2342 = vmatprep.subr.bf16.mxu0 0
        %2343 = vmatpush2.bf16.msra.mxu0 0
        %2344 = vmatprep.subr.bf16.mxu0 0
        %2345 = vmatpush2.bf16.msra.mxu0 0
        %2346 = vmatprep.subr.bf16.mxu0 0
        %2347 = vmatpush2.bf16.msra.mxu0 0
        %2348 = vmatprep.subr.bf16.mxu0 0
        %2349 = vmatpush2.bf16.msra.mxu0 0
        %2350 = vmatprep.subr.bf16.mxu0 0
        %2351 = vmatpush2.bf16.msra.mxu0 0
        %2352 = vmatprep.subr.bf16.mxu0 0
        %2353 = vmatpush2.bf16.msra.mxu0 0
        %2354 = vmatprep.subr.bf16.mxu0 0
        %2355 = vmatpush2.bf16.msra.mxu0 0
        %2356 = vmatprep.mubr.bf16.mxu0 0
        %2357 = vmatmul.mubr.bf16.gmra.mxu0 %v2319
        %v2358 = vpop.f32.mrf.mxu0
        %v2359 = vadd.f32 0.0, %v2358
        %v2360 = vpop.f32.mrf.mxu0
        %v2361 = vpop.f32.mrf.mxu0
        %v2362 = vpop.f32.mrf.mxu0
        %2363 = vdwg.mxu0
        %v2364 = vadd.f32 %v2308, %v2359
        %2366 = vset.pattern.permute.xlu0 0
        %2367 = vperm.xlu0 %2366, %v2213
        %v2368 = vpop.permute.xlu0 %2367
        %v2370 = vadd.f32 %v2364, %v2368
        %v2371 = vtanh.pop %v2370
        %2372 = vrot.lane.b32.xlu0 %v2371, 3
        %v2373 = vpop.permute.xlu0 %2372
        %v2374 = vsub.f32 %v1502, %v2373
        %v2376 = vrot.slane %v2374, 4
        %vm2378 = vcmask 1043456
        %v2379 = vsel %vm2378, %v1947, %v2376
        %2380 = vst [vmem:[%s606] sm:$0xff] %v2379
        %s2381 = sand.u32 %s450, 1
        %s2382 = scalar_lea.sflag [#allocation3], %s2381
        %s2383 = sand.u32 %s450, 1
        %s2384 = smul.addr %s2383, 8
        %s2385 = scalar_lea.vmem [#allocation2], %s2384
        // Predicated region
        $region97: #{tpu_custom_call.1} parent=95 // pred_check
          %p2386 = pneg %p460
        $region98: #{tpu_custom_call.1} parent=95 // pred_check_branch
          %2388 = sbr.rel (%p2386) target = $region100
        $region99: #{tpu_custom_call.1} parent=95 // pred_region
          %s2390 = ssub.s32 128, 128
          %2391 = vsyncadd %s2382, %s2390
          %s2392 = smul.addr %s33, 128
          %s2393 = scalar_lea.hbm %s19, %s2392
          %s2395 = sshll.u32 %s2385, 4
          %s2396 = int_to_ptr.vmem [resolvable:$true] %s2395
          %2398 = dma.vmem_to_hbm [thread:$0]  %s2396, 128, %s2393, %s2382
        $region100: #{tpu_custom_call.1} parent=95 // pred_fallthru
          _
      $region96: #{tpu_custom_call.1} parent=5 // pred_fallthru
        _
      %p2399 = scmp.le.s32.totalorder 2, %s28
      // Predicated region
      $region101: #{tpu_custom_call.1} parent=5 // pred_check
        %p2400 = pneg %p2399
      $region102: #{tpu_custom_call.1} parent=5 // pred_check_branch
        %2402 = sbr.rel (%p2400) target = $region104
      $region103: #{tpu_custom_call.1} parent=5 // pred_region
        %s2403 = ssub.s32 %s28, 2
        // Predicated region
        $region105: #{tpu_custom_call.1} parent=103 // pred_check
          %p2404 = pneg %p466
        $region106: #{tpu_custom_call.1} parent=103 // pred_check_branch
          %2406 = sbr.rel (%p2404) target = $region108
        $region107: #{tpu_custom_call.1} parent=103 // pred_region
          %s2407 = sand.u32 %s451, 1
          %s2408 = scalar_lea.sflag [#allocation3], %s2407
          %s2409 = sand.u32 %s451, 1
          %s2410 = smul.addr %s2409, 8
          %s2411 = scalar_lea.vmem [#allocation2], %s2410
          %2412 = dma.done %s2408, 128
        $region108: #{tpu_custom_call.1} parent=103 // pred_fallthru
          _
      $region104: #{tpu_custom_call.1} parent=5 // pred_fallthru
        _
    $region6: #{tpu_custom_call.1} parent=1 // loop_footer
      %s32 = sadd.s32 1, %s28
    $region7: #{tpu_custom_call.1} parent=1 // loop_footer_branch
      %27 = sbr.rel target = $region3
    $region8: #{tpu_custom_call.1} parent=1 // loop_exit
      _
    %2413 = vsyncpa [#allocation3], 1
    %s2414 = scalar_lea.sflag [#allocation3], 1
    %2415 = vsyncpa %s2414, 1

// kernel: tpu_custom_call.1
$region0: #{tpu_custom_call.1}
  #allocation0 [shape = 'u32[]', space=smem, size = 0x4, offset = 0x4, fixed_abs, tag = 'smem constant byte address 0x4 - core index']
  #allocation1 [shape = 'u32[144,128]{1,0:T(1,128)}', space=vmem, size = 0x12000, scoped, tag = 'internal scratch']
  %s0 = inlined_call_operand.vmem [shape: f32[2,4,128], index: 0, kind: input, shape index: {}]
  %s1 = inlined_call_operand.vmem [shape: f32[2,4,128], index: 1, kind: input, shape index: {}]
  %s2 = inlined_call_operand.vmem [shape: s32[1,128], index: 2, kind: input, shape index: {}]
  %s3 = inlined_call_operand.vmem [shape: bf16[5,4,4], index: 3, kind: input, shape index: {}]
  %s4 = inlined_call_operand.vmem [shape: f32[4,1], index: 4, kind: input, shape index: {}]
  %s5 = inlined_call_operand.vmem [shape: bf16[3,4,4], index: 5, kind: input, shape index: {}]
  %s6 = inlined_call_operand.vmem [shape: f32[4,1], index: 6, kind: input, shape index: {}]
  %s7 = inlined_call_operand.vmem [shape: bf16[5,4,4], index: 7, kind: input, shape index: {}]
  %s8 = inlined_call_operand.vmem [shape: f32[4,1], index: 8, kind: input, shape index: {}]
  %s9 = inlined_call_operand.vmem [shape: bf16[3,4,4], index: 9, kind: input, shape index: {}]
  %s10 = inlined_call_operand.vmem [shape: f32[4,1], index: 10, kind: input, shape index: {}]
  %s11 = inlined_call_operand.vmem [shape: bf16[5,4,4], index: 11, kind: input, shape index: {}]
  %s12 = inlined_call_operand.vmem [shape: f32[4,1], index: 12, kind: input, shape index: {}]
  %s13 = inlined_call_operand.vmem [shape: bf16[3,4,4], index: 13, kind: input, shape index: {}]
  %s14 = inlined_call_operand.vmem [shape: f32[4,1], index: 14, kind: input, shape index: {}]
  %s15 = inlined_call_operand.vmem [shape: bf16[5,4,4], index: 15, kind: input, shape index: {}]
  %s16 = inlined_call_operand.vmem [shape: f32[4,1], index: 16, kind: input, shape index: {}]
  %s17 = inlined_call_operand.vmem [shape: bf16[3,4,4], index: 17, kind: input, shape index: {}]
  %s18 = inlined_call_operand.vmem [shape: f32[4,1], index: 18, kind: input, shape index: {}]
  %s19 = inlined_call_operand.hbm [shape: f32[2,8,128], index: 19, kind: output, shape index: {}]
  %s20 = sld [smem:[#allocation0]]
  $region109: #{tpu_custom_call.1} parent=0
    _
  %s22 = ssub.s32 1, %s20
  %s23 = scalar_select 0, %s22, %s20
  $region1: #{tpu_custom_call.1} parent=0
    #allocation2 [shape = 'u8[8192]{0}', space=vmem, size = 0x2000, scoped, tag = 'output window, operand 0']
    #allocation3 [shape = 's32[2]{0}', space=sflag, size = 0x8, scoped, tag = 'scoped memory for tpu_custom_call.1']
    %24 = vsyncpa [#allocation3], 0
    %s25 = scalar_lea.sflag [#allocation3], 1
    %26 = vsyncpa %s25, 0
    loop: start=0, step=1, limit=4
    $region2: #{tpu_custom_call.1} parent=1 // loop_pre_header
      _
    $region3: #{tpu_custom_call.1} parent=1 // loop_header
      %s28 = sphi 0, %s32
      %p29 = scmp.ge.s32.totalorder %s28, 4
      %s38 = sphi 0, %s40
      %s41 = sphi 0, %s38
      %s42 = sphi 0, %s41
      %s58 = sphi 0, %s42
      %s64 = sphi 0, %s66
      %s67 = sphi 0, %s64
      %s68 = sphi 0, %s67
      %s84 = sphi 0, %s68
      %s88 = sphi 0, %s88
      %s90 = sphi 0, %s88
      %s91 = sphi 0, %s90
      %s105 = sphi 0, %s91
      %s109 = sphi 0, %s109
      %s111 = sphi 0, %s109
      %s112 = sphi 0, %s111
      %s126 = sphi 0, %s112
      %s130 = sphi 0, %s130
      %s132 = sphi 0, %s130
      %s133 = sphi 0, %s132
      %s147 = sphi 0, %s133
      %s151 = sphi 0, %s151
      %s153 = sphi 0, %s151
      %s154 = sphi 0, %s153
      %s168 = sphi 0, %s154
      %s172 = sphi 0, %s172
      %s174 = sphi 0, %s172
      %s175 = sphi 0, %s174
      %s189 = sphi 0, %s175
      %s193 = sphi 0, %s193
      %s195 = sphi 0, %s193
      %s196 = sphi 0, %s195
      %s210 = sphi 0, %s196
      %s214 = sphi 0, %s214
      %s216 = sphi 0, %s214
      %s217 = sphi 0, %s216
      %s231 = sphi 0, %s217
      %s235 = sphi 0, %s235
      %s237 = sphi 0, %s235
      %s238 = sphi 0, %s237
      %s252 = sphi 0, %s238
      %s256 = sphi 0, %s256
      %s258 = sphi 0, %s256
      %s259 = sphi 0, %s258
      %s273 = sphi 0, %s259
      %s277 = sphi 0, %s277
      %s279 = sphi 0, %s277
      %s280 = sphi 0, %s279
      %s294 = sphi 0, %s280
      %s298 = sphi 0, %s298
      %s300 = sphi 0, %s298
      %s301 = sphi 0, %s300
      %s315 = sphi 0, %s301
      %s319 = sphi 0, %s319
      %s321 = sphi 0, %s319
      %s322 = sphi 0, %s321
      %s336 = sphi 0, %s322
      %s340 = sphi 0, %s340
      %s342 = sphi 0, %s340
      %s343 = sphi 0, %s342
      %s357 = sphi 0, %s343
      %s361 = sphi 0, %s361
      %s363 = sphi 0, %s361
      %s364 = sphi 0, %s363
      %s378 = sphi 0, %s364
      %s382 = sphi 0, %s382
      %s384 = sphi 0, %s382
      %s385 = sphi 0, %s384
      %s399 = sphi 0, %s385
      %s403 = sphi 0, %s403
      %s405 = sphi 0, %s403
      %s406 = sphi 0, %s405
      %s420 = sphi 0, %s406
      %s424 = sphi 0, %s424
      %s426 = sphi 0, %s424
      %s427 = sphi 0, %s426
      %s441 = sphi 0, %s427
      %s447 = sphi 0, %s449
      %s450 = sphi 0, %s447
      %s451 = sphi 0, %s450
      %s467 = sphi 0, %s451
    $region4: #{tpu_custom_call.1} parent=1 // loop_header_branch
      %31 = sbr.rel (%p29) target = $region8
    $region5: #{tpu_custom_call.1} parent=1 // loop_body
      %s33 = ssub.s32 %s28, 1
      %s34 = ssub.s32 %s28, 2
      %s35 = sadd.s32 %s28, 1
      %s36 = ssub.s32 %s28, %s35
      %p37 = scmp.eq.s32.totalorder %s36, 0
      %s39 = sadd.s32 %s38, 1
      %s40 = scalar_select %p37, %s38, %s39
      %p43 = pneg %p37
      %p44 = scmp.eq.s32.totalorder %s28, 1
      %p45 = por %p43, %p44
      %p46 = scmp.ne.s32.totalorder %s38, %s41
      %p47 = scmp.eq.s32.totalorder %s28, 0
      %p48 = por %p46, %p47
      %p49 = scmp.ne.s32.totalorder %s38, %s41
      %p50 = scmp.eq.s32.totalorder %s33, 1
      %p51 = por %p49, %p50
      %p52 = scmp.ne.s32.totalorder %s41, %s42
      %p53 = scmp.eq.s32.totalorder %s33, 0
      %p54 = por %p52, %p53
      %p55 = scmp.ne.s32.totalorder %s41, %s42
      %p56 = scmp.eq.s32.totalorder %s34, 1
      %p57 = por %p55, %p56
      %p59 = scmp.ne.s32.totalorder %s42, %s58
      %p60 = scmp.eq.s32.totalorder %s34, 0
      %p61 = por %p59, %p60
      %s62 = ssub.s32 %s28, %s35
      %p63 = scmp.eq.s32.totalorder %s62, 0
      %s65 = sadd.s32 %s64, 1
      %s66 = scalar_select %p63, %s64, %s65
      %p69 = pneg %p63
      %p70 = scmp.eq.s32.totalorder %s28, 1
      %p71 = por %p69, %p70
      %p72 = scmp.ne.s32.totalorder %s64, %s67
      %p73 = scmp.eq.s32.totalorder %s28, 0
      %p74 = por %p72, %p73
      %p75 = scmp.ne.s32.totalorder %s64, %s67
      %p76 = scmp.eq.s32.totalorder %s33, 1
      %p77 = por %p75, %p76
      %p78 = scmp.ne.s32.totalorder %s67, %s68
      %p79 = scmp.eq.s32.totalorder %s33, 0
      %p80 = por %p78, %p79
      %p81 = scmp.ne.s32.totalorder %s67, %s68
      %p82 = scmp.eq.s32.totalorder %s34, 1
      %p83 = por %p81, %p82
      %p85 = scmp.ne.s32.totalorder %s68, %s84
      %p86 = scmp.eq.s32.totalorder %s34, 0
      %p87 = por %p85, %p86
      %s89 = sadd.s32 %s88, 1
      %p92 = scmp.eq.s32.totalorder %s28, 1
      %p93 = scmp.ne.s32.totalorder %s88, %s90
      %p94 = scmp.eq.s32.totalorder %s28, 0
      %p95 = por %p93, %p94
      %p96 = scmp.ne.s32.totalorder %s88, %s90
      %p97 = scmp.eq.s32.totalorder %s33, 1
      %p98 = por %p96, %p97
      %p99 = scmp.ne.s32.totalorder %s90, %s91
      %p100 = scmp.eq.s32.totalorder %s33, 0
      %p101 = por %p99, %p100
      %p102 = scmp.ne.s32.totalorder %s90, %s91
      %p103 = scmp.eq.s32.totalorder %s34, 1
      %p104 = por %p102, %p103
      %p106 = scmp.ne.s32.totalorder %s91, %s105
      %p107 = scmp.eq.s32.totalorder %s34, 0
      %p108 = por %p106, %p107
      %s110 = sadd.s32 %s109, 1
      %p113 = scmp.eq.s32.totalorder %s28, 1
      %p114 = scmp.ne.s32.totalorder %s109, %s111
      %p115 = scmp.eq.s32.totalorder %s28, 0
      %p116 = por %p114, %p115
      %p117 = scmp.ne.s32.totalorder %s109, %s111
      %p118 = scmp.eq.s32.totalorder %s33, 1
      %p119 = por %p117, %p118
      %p120 = scmp.ne.s32.totalorder %s111, %s112
      %p121 = scmp.eq.s32.totalorder %s33, 0
      %p122 = por %p120, %p121
      %p123 = scmp.ne.s32.totalorder %s111, %s112
      %p124 = scmp.eq.s32.totalorder %s34, 1
      %p125 = por %p123, %p124
      %p127 = scmp.ne.s32.totalorder %s112, %s126
      %p128 = scmp.eq.s32.totalorder %s34, 0
      %p129 = por %p127, %p128
      %s131 = sadd.s32 %s130, 1
      %p134 = scmp.eq.s32.totalorder %s28, 1
      %p135 = scmp.ne.s32.totalorder %s130, %s132
      %p136 = scmp.eq.s32.totalorder %s28, 0
      %p137 = por %p135, %p136
      %p138 = scmp.ne.s32.totalorder %s130, %s132
      %p139 = scmp.eq.s32.totalorder %s33, 1
      %p140 = por %p138, %p139
      %p141 = scmp.ne.s32.totalorder %s132, %s133
      %p142 = scmp.eq.s32.totalorder %s33, 0
      %p143 = por %p141, %p142
      %p144 = scmp.ne.s32.totalorder %s132, %s133
      %p145 = scmp.eq.s32.totalorder %s34, 1
      %p146 = por %p144, %p145
      %p148 = scmp.ne.s32.totalorder %s133, %s147
      %p149 = scmp.eq.s32.totalorder %s34, 0
      %p150 = por %p148, %p149
      %s152 = sadd.s32 %s151, 1
      %p155 = scmp.eq.s32.totalorder %s28, 1
      %p156 = scmp.ne.s32.totalorder %s151, %s153
      %p157 = scmp.eq.s32.totalorder %s28, 0
      %p158 = por %p156, %p157
      %p159 = scmp.ne.s32.totalorder %s151, %s153
      %p160 = scmp.eq.s32.totalorder %s33, 1
      %p161 = por %p159, %p160
      %p162 = scmp.ne.s32.totalorder %s153, %s154
      %p163 = scmp.eq.s32.totalorder %s33, 0
      %p164 = por %p162, %p163
      %p165 = scmp.ne.s32.totalorder %s153, %s154
      %p166 = scmp.eq.s32.totalorder %s34, 1
      %p167 = por %p165, %p166
      %p169 = scmp.ne.s32.totalorder %s154, %s168
      %p170 = scmp.eq.s32.totalorder %s34, 0
      %p171 = por %p169, %p170
      %s173 = sadd.s32 %s172, 1
      %p176 = scmp.eq.s32.totalorder %s28, 1
      %p177 = scmp.ne.s32.totalorder %s172, %s174
      %p178 = scmp.eq.s32.totalorder %s28, 0
      %p179 = por %p177, %p178
      %p180 = scmp.ne.s32.totalorder %s172, %s174
      %p181 = scmp.eq.s32.totalorder %s33, 1
      %p182 = por %p180, %p181
      %p183 = scmp.ne.s32.totalorder %s174, %s175
      %p184 = scmp.eq.s32.totalorder %s33, 0
      %p185 = por %p183, %p184
      %p186 = scmp.ne.s32.totalorder %s174, %s175
      %p187 = scmp.eq.s32.totalorder %s34, 1
      %p188 = por %p186, %p187
      %p190 = scmp.ne.s32.totalorder %s175, %s189
      %p191 = scmp.eq.s32.totalorder %s34, 0
      %p192 = por %p190, %p191
      %s194 = sadd.s32 %s193, 1
      %p197 = scmp.eq.s32.totalorder %s28, 1
      %p198 = scmp.ne.s32.totalorder %s193, %s195
      %p199 = scmp.eq.s32.totalorder %s28, 0
      %p200 = por %p198, %p199
      %p201 = scmp.ne.s32.totalorder %s193, %s195
      %p202 = scmp.eq.s32.totalorder %s33, 1
      %p203 = por %p201, %p202
      %p204 = scmp.ne.s32.totalorder %s195, %s196
      %p205 = scmp.eq.s32.totalorder %s33, 0
      %p206 = por %p204, %p205
      %p207 = scmp.ne.s32.totalorder %s195, %s196
      %p208 = scmp.eq.s32.totalorder %s34, 1
      %p209 = por %p207, %p208
      %p211 = scmp.ne.s32.totalorder %s196, %s210
      %p212 = scmp.eq.s32.totalorder %s34, 0
      %p213 = por %p211, %p212
      %s215 = sadd.s32 %s214, 1
      %p218 = scmp.eq.s32.totalorder %s28, 1
      %p219 = scmp.ne.s32.totalorder %s214, %s216
      %p220 = scmp.eq.s32.totalorder %s28, 0
      %p221 = por %p219, %p220
      %p222 = scmp.ne.s32.totalorder %s214, %s216
      %p223 = scmp.eq.s32.totalorder %s33, 1
      %p224 = por %p222, %p223
      %p225 = scmp.ne.s32.totalorder %s216, %s217
      %p226 = scmp.eq.s32.totalorder %s33, 0
      %p227 = por %p225, %p226
      %p228 = scmp.ne.s32.totalorder %s216, %s217
      %p229 = scmp.eq.s32.totalorder %s34, 1
      %p230 = por %p228, %p229
      %p232 = scmp.ne.s32.totalorder %s217, %s231
      %p233 = scmp.eq.s32.totalorder %s34, 0
      %p234 = por %p232, %p233
      %s236 = sadd.s32 %s235, 1
      %p239 = scmp.eq.s32.totalorder %s28, 1
      %p240 = scmp.ne.s32.totalorder %s235, %s237
      %p241 = scmp.eq.s32.totalorder %s28, 0
      %p242 = por %p240, %p241
      %p243 = scmp.ne.s32.totalorder %s235, %s237
      %p244 = scmp.eq.s32.totalorder %s33, 1
      %p245 = por %p243, %p244
      %p246 = scmp.ne.s32.totalorder %s237, %s238
      %p247 = scmp.eq.s32.totalorder %s33, 0
      %p248 = por %p246, %p247
      %p249 = scmp.ne.s32.totalorder %s237, %s238
      %p250 = scmp.eq.s32.totalorder %s34, 1
      %p251 = por %p249, %p250
      %p253 = scmp.ne.s32.totalorder %s238, %s252
      %p254 = scmp.eq.s32.totalorder %s34, 0
      %p255 = por %p253, %p254
      %s257 = sadd.s32 %s256, 1
      %p260 = scmp.eq.s32.totalorder %s28, 1
      %p261 = scmp.ne.s32.totalorder %s256, %s258
      %p262 = scmp.eq.s32.totalorder %s28, 0
      %p263 = por %p261, %p262
      %p264 = scmp.ne.s32.totalorder %s256, %s258
      %p265 = scmp.eq.s32.totalorder %s33, 1
      %p266 = por %p264, %p265
      %p267 = scmp.ne.s32.totalorder %s258, %s259
      %p268 = scmp.eq.s32.totalorder %s33, 0
      %p269 = por %p267, %p268
      %p270 = scmp.ne.s32.totalorder %s258, %s259
      %p271 = scmp.eq.s32.totalorder %s34, 1
      %p272 = por %p270, %p271
      %p274 = scmp.ne.s32.totalorder %s259, %s273
      %p275 = scmp.eq.s32.totalorder %s34, 0
      %p276 = por %p274, %p275
      %s278 = sadd.s32 %s277, 1
      %p281 = scmp.eq.s32.totalorder %s28, 1
      %p282 = scmp.ne.s32.totalorder %s277, %s279
      %p283 = scmp.eq.s32.totalorder %s28, 0
      %p284 = por %p282, %p283
      %p285 = scmp.ne.s32.totalorder %s277, %s279
      %p286 = scmp.eq.s32.totalorder %s33, 1
      %p287 = por %p285, %p286
      %p288 = scmp.ne.s32.totalorder %s279, %s280
      %p289 = scmp.eq.s32.totalorder %s33, 0
      %p290 = por %p288, %p289
      %p291 = scmp.ne.s32.totalorder %s279, %s280
      %p292 = scmp.eq.s32.totalorder %s34, 1
      %p293 = por %p291, %p292
      %p295 = scmp.ne.s32.totalorder %s280, %s294
      %p296 = scmp.eq.s32.totalorder %s34, 0
      %p297 = por %p295, %p296
      %s299 = sadd.s32 %s298, 1
      %p302 = scmp.eq.s32.totalorder %s28, 1
      %p303 = scmp.ne.s32.totalorder %s298, %s300
      %p304 = scmp.eq.s32.totalorder %s28, 0
      %p305 = por %p303, %p304
      %p306 = scmp.ne.s32.totalorder %s298, %s300
      %p307 = scmp.eq.s32.totalorder %s33, 1
      %p308 = por %p306, %p307
      %p309 = scmp.ne.s32.totalorder %s300, %s301
      %p310 = scmp.eq.s32.totalorder %s33, 0
      %p311 = por %p309, %p310
      %p312 = scmp.ne.s32.totalorder %s300, %s301
      %p313 = scmp.eq.s32.totalorder %s34, 1
      %p314 = por %p312, %p313
      %p316 = scmp.ne.s32.totalorder %s301, %s315
      %p317 = scmp.eq.s32.totalorder %s34, 0
      %p318 = por %p316, %p317
      %s320 = sadd.s32 %s319, 1
      %p323 = scmp.eq.s32.totalorder %s28, 1
      %p324 = scmp.ne.s32.totalorder %s319, %s321
      %p325 = scmp.eq.s32.totalorder %s28, 0
      %p326 = por %p324, %p325
      %p327 = scmp.ne.s32.totalorder %s319, %s321
      %p328 = scmp.eq.s32.totalorder %s33, 1
      %p329 = por %p327, %p328
      %p330 = scmp.ne.s32.totalorder %s321, %s322
      %p331 = scmp.eq.s32.totalorder %s33, 0
      %p332 = por %p330, %p331
      %p333 = scmp.ne.s32.totalorder %s321, %s322
      %p334 = scmp.eq.s32.totalorder %s34, 1
      %p335 = por %p333, %p334
      %p337 = scmp.ne.s32.totalorder %s322, %s336
      %p338 = scmp.eq.s32.totalorder %s34, 0
      %p339 = por %p337, %p338
      %s341 = sadd.s32 %s340, 1
      %p344 = scmp.eq.s32.totalorder %s28, 1
      %p345 = scmp.ne.s32.totalorder %s340, %s342
      %p346 = scmp.eq.s32.totalorder %s28, 0
      %p347 = por %p345, %p346
      %p348 = scmp.ne.s32.totalorder %s340, %s342
      %p349 = scmp.eq.s32.totalorder %s33, 1
      %p350 = por %p348, %p349
      %p351 = scmp.ne.s32.totalorder %s342, %s343
      %p352 = scmp.eq.s32.totalorder %s33, 0
      %p353 = por %p351, %p352
      %p354 = scmp.ne.s32.totalorder %s342, %s343
      %p355 = scmp.eq.s32.totalorder %s34, 1
      %p356 = por %p354, %p355
      %p358 = scmp.ne.s32.totalorder %s343, %s357
      %p359 = scmp.eq.s32.totalorder %s34, 0
      %p360 = por %p358, %p359
      %s362 = sadd.s32 %s361, 1
      %p365 = scmp.eq.s32.totalorder %s28, 1
      %p366 = scmp.ne.s32.totalorder %s361, %s363
      %p367 = scmp.eq.s32.totalorder %s28, 0
      %p368 = por %p366, %p367
      %p369 = scmp.ne.s32.totalorder %s361, %s363
      %p370 = scmp.eq.s32.totalorder %s33, 1
      %p371 = por %p369, %p370
      %p372 = scmp.ne.s32.totalorder %s363, %s364
      %p373 = scmp.eq.s32.totalorder %s33, 0
      %p374 = por %p372, %p373
      %p375 = scmp.ne.s32.totalorder %s363, %s364
      %p376 = scmp.eq.s32.totalorder %s34, 1
      %p377 = por %p375, %p376
      %p379 = scmp.ne.s32.totalorder %s364, %s378
      %p380 = scmp.eq.s32.totalorder %s34, 0
      %p381 = por %p379, %p380
      %s383 = sadd.s32 %s382, 1
      %p386 = scmp.eq.s32.totalorder %s28, 1
      %p387 = scmp.ne.s32.totalorder %s382, %s384
      %p388 = scmp.eq.s32.totalorder %s28, 0
      %p389 = por %p387, %p388
      %p390 = scmp.ne.s32.totalorder %s382, %s384
      %p391 = scmp.eq.s32.totalorder %s33, 1
      %p392 = por %p390, %p391
      %p393 = scmp.ne.s32.totalorder %s384, %s385
      %p394 = scmp.eq.s32.totalorder %s33, 0
      %p395 = por %p393, %p394
      %p396 = scmp.ne.s32.totalorder %s384, %s385
      %p397 = scmp.eq.s32.totalorder %s34, 1
      %p398 = por %p396, %p397
      %p400 = scmp.ne.s32.totalorder %s385, %s399
      %p401 = scmp.eq.s32.totalorder %s34, 0
      %p402 = por %p400, %p401
      %s404 = sadd.s32 %s403, 1
      %p407 = scmp.eq.s32.totalorder %s28, 1
      %p408 = scmp.ne.s32.totalorder %s403, %s405
      %p409 = scmp.eq.s32.totalorder %s28, 0
      %p410 = por %p408, %p409
      %p411 = scmp.ne.s32.totalorder %s403, %s405
      %p412 = scmp.eq.s32.totalorder %s33, 1
      %p413 = por %p411, %p412
      %p414 = scmp.ne.s32.totalorder %s405, %s406
      %p415 = scmp.eq.s32.totalorder %s33, 0
      %p416 = por %p414, %p415
      %p417 = scmp.ne.s32.totalorder %s405, %s406
      %p418 = scmp.eq.s32.totalorder %s34, 1
      %p419 = por %p417, %p418
      %p421 = scmp.ne.s32.totalorder %s406, %s420
      %p422 = scmp.eq.s32.totalorder %s34, 0
      %p423 = por %p421, %p422
      %s425 = sadd.s32 %s424, 1
      %p428 = scmp.eq.s32.totalorder %s28, 1
      %p429 = scmp.ne.s32.totalorder %s424, %s426
      %p430 = scmp.eq.s32.totalorder %s28, 0
      %p431 = por %p429, %p430
      %p432 = scmp.ne.s32.totalorder %s424, %s426
      %p433 = scmp.eq.s32.totalorder %s33, 1
      %p434 = por %p432, %p433
      %p435 = scmp.ne.s32.totalorder %s426, %s427
      %p436 = scmp.eq.s32.totalorder %s33, 0
      %p437 = por %p435, %p436
      %p438 = scmp.ne.s32.totalorder %s426, %s427
      %p439 = scmp.eq.s32.totalorder %s34, 1
      %p440 = por %p438, %p439
      %p442 = scmp.ne.s32.totalorder %s427, %s441
      %p443 = scmp.eq.s32.totalorder %s34, 0
      %p444 = por %p442, %p443
      %s445 = ssub.s32 %s28, %s35
      %p446 = scmp.eq.s32.totalorder %s445, 0
      %s448 = sadd.s32 %s447, 1
      %s449 = scalar_select %p446, %s447, %s448
      %p452 = pneg %p446
      %p453 = scmp.eq.s32.totalorder %s28, 1
      %p454 = por %p452, %p453
      %p455 = scmp.ne.s32.totalorder %s447, %s450
      %p456 = scmp.eq.s32.totalorder %s28, 0
      %p457 = por %p455, %p456
      %p458 = scmp.ne.s32.totalorder %s447, %s450
      %p459 = scmp.eq.s32.totalorder %s33, 1
      %p460 = por %p458, %p459
      %p461 = scmp.ne.s32.totalorder %s450, %s451
      %p462 = scmp.eq.s32.totalorder %s33, 0
      %p463 = por %p461, %p462
      %p464 = scmp.ne.s32.totalorder %s450, %s451
      %p465 = scmp.eq.s32.totalorder %s34, 1
      %p466 = por %p464, %p465
      %p468 = scmp.ne.s32.totalorder %s451, %s467
      %p469 = scmp.eq.s32.totalorder %s34, 0
      %p470 = por %p468, %p469
      %p471 = scmp.le.s32.totalorder 1, %s28
      %p472 = scmp.lt.s32.totalorder %s28, 3
      %p473 = pnand %p471, %p472
      %p474 = pneg %p473
      // Predicated region
      $region9: #{tpu_custom_call.1} parent=5 // pred_check
        _
      $region10: #{tpu_custom_call.1} parent=5 // pred_check_branch
        %476 = sbr.rel (%p473) target = $region12
      $region11: #{tpu_custom_call.1} parent=5 // pred_region
        %s477 = ssub.s32 %s28, 1
        // Predicated region
        $region13: #{tpu_custom_call.1} parent=11 // pred_check
          %p478 = pneg %p101
        $region14: #{tpu_custom_call.1} parent=11 // pred_check_branch
          %480 = sbr.rel (%p478) target = $region16
        $region15: #{tpu_custom_call.1} parent=11 // pred_region
          _
        $region16: #{tpu_custom_call.1} parent=11 // pred_fallthru
          _
        // Predicated region
        $region17: #{tpu_custom_call.1} parent=11 // pred_check
          %p481 = pneg %p122
        $region18: #{tpu_custom_call.1} parent=11 // pred_check_branch
          %483 = sbr.rel (%p481) target = $region20
        $region19: #{tpu_custom_call.1} parent=11 // pred_region
          _
        $region20: #{tpu_custom_call.1} parent=11 // pred_fallthru
          _
        // Predicated region
        $region21: #{tpu_custom_call.1} parent=11 // pred_check
          %p484 = pneg %p143
        $region22: #{tpu_custom_call.1} parent=11 // pred_check_branch
          %486 = sbr.rel (%p484) target = $region24
        $region23: #{tpu_custom_call.1} parent=11 // pred_region
          _
        $region24: #{tpu_custom_call.1} parent=11 // pred_fallthru
          _
        // Predicated region
        $region25: #{tpu_custom_call.1} parent=11 // pred_check
          %p487 = pneg %p164
        $region26: #{tpu_custom_call.1} parent=11 // pred_check_branch
          %489 = sbr.rel (%p487) target = $region28
        $region27: #{tpu_custom_call.1} parent=11 // pred_region
          _
        $region28: #{tpu_custom_call.1} parent=11 // pred_fallthru
          _
        // Predicated region
        $region29: #{tpu_custom_call.1} parent=11 // pred_check
          %p490 = pneg %p185
        $region30: #{tpu_custom_call.1} parent=11 // pred_check_branch
          %492 = sbr.rel (%p490) target = $region32
        $region31: #{tpu_custom_call.1} parent=11 // pred_region
          _
        $region32: #{tpu_custom_call.1} parent=11 // pred_fallthru
          _
        // Predicated region
        $region33: #{tpu_custom_call.1} parent=11 // pred_check
          %p493 = pneg %p206
        $region34: #{tpu_custom_call.1} parent=11 // pred_check_branch
          %495 = sbr.rel (%p493) target = $region36
        $region35: #{tpu_custom_call.1} parent=11 // pred_region
          _
        $region36: #{tpu_custom_call.1} parent=11 // pred_fallthru
          _
        // Predicated region
        $region37: #{tpu_custom_call.1} parent=11 // pred_check
          %p496 = pneg %p227
        $region38: #{tpu_custom_call.1} parent=11 // pred_check_branch
          %498 = sbr.rel (%p496) target = $region40
        $region39: #{tpu_custom_call.1} parent=11 // pred_region
          _
        $region40: #{tpu_custom_call.1} parent=11 // pred_fallthru
          _
        // Predicated region
        $region41: #{tpu_custom_call.1} parent=11 // pred_check
          %p499 = pneg %p248
        $region42: #{tpu_custom_call.1} parent=11 // pred_check_branch
          %501 = sbr.rel (%p499) target = $region44
        $region43: #{tpu_custom_call.1} parent=11 // pred_region
          _
        $region44: #{tpu_custom_call.1} parent=11 // pred_fallthru
          _
        // Predicated region
        $region45: #{tpu_custom_call.1} parent=11 // pred_check
          %p502 = pneg %p269
        $region46: #{tpu_custom_call.1} parent=11 // pred_check_branch
          %504 = sbr.rel (%p502) target = $region48
        $region47: #{tpu_custom_call.1} parent=11 // pred_region
          _
        $region48: #{tpu_custom_call.1} parent=11 // pred_fallthru
          _
        // Predicated region
        $region49: #{tpu_custom_call.1} parent=11 // pred_check
          %p505 = pneg %p290
        $region50: #{tpu_custom_call.1} parent=11 // pred_check_branch
          %507 = sbr.rel (%p505) target = $region52
        $region51: #{tpu_custom_call.1} parent=11 // pred_region
          _
        $region52: #{tpu_custom_call.1} parent=11 // pred_fallthru
          _
        // Predicated region
        $region53: #{tpu_custom_call.1} parent=11 // pred_check
          %p508 = pneg %p311
        $region54: #{tpu_custom_call.1} parent=11 // pred_check_branch
          %510 = sbr.rel (%p508) target = $region56
        $region55: #{tpu_custom_call.1} parent=11 // pred_region
          _
        $region56: #{tpu_custom_call.1} parent=11 // pred_fallthru
          _
        // Predicated region
        $region57: #{tpu_custom_call.1} parent=11 // pred_check
          %p511 = pneg %p332
        $region58: #{tpu_custom_call.1} parent=11 // pred_check_branch
          %513 = sbr.rel (%p511) target = $region60
        $region59: #{tpu_custom_call.1} parent=11 // pred_region
          _
        $region60: #{tpu_custom_call.1} parent=11 // pred_fallthru
          _
        // Predicated region
        $region61: #{tpu_custom_call.1} parent=11 // pred_check
          %p514 = pneg %p353
        $region62: #{tpu_custom_call.1} parent=11 // pred_check_branch
          %516 = sbr.rel (%p514) target = $region64
        $region63: #{tpu_custom_call.1} parent=11 // pred_region
          _
        $region64: #{tpu_custom_call.1} parent=11 // pred_fallthru
          _
        // Predicated region
        $region65: #{tpu_custom_call.1} parent=11 // pred_check
          %p517 = pneg %p374
        $region66: #{tpu_custom_call.1} parent=11 // pred_check_branch
          %519 = sbr.rel (%p517) target = $region68
        $region67: #{tpu_custom_call.1} parent=11 // pred_region
          _
        $region68: #{tpu_custom_call.1} parent=11 // pred_fallthru
          _
        // Predicated region
        $region69: #{tpu_custom_call.1} parent=11 // pred_check
          %p520 = pneg %p395
        $region70: #{tpu_custom_call.1} parent=11 // pred_check_branch
          %522 = sbr.rel (%p520) target = $region72
        $region71: #{tpu_custom_call.1} parent=11 // pred_region
          _
        $region72: #{tpu_custom_call.1} parent=11 // pred_fallthru
          _
        // Predicated region
        $region73: #{tpu_custom_call.1} parent=11 // pred_check
          %p523 = pneg %p416
        $region74: #{tpu_custom_call.1} parent=11 // pred_check_branch
          %525 = sbr.rel (%p523) target = $region76
        $region75: #{tpu_custom_call.1} parent=11 // pred_region
          _
        $region76: #{tpu_custom_call.1} parent=11 // pred_fallthru
          _
        // Predicated region
        $region77: #{tpu_custom_call.1} parent=11 // pred_check
          %p526 = pneg %p437
        $region78: #{tpu_custom_call.1} parent=11 // pred_check_branch
          %528 = sbr.rel (%p526) target = $region80
        $region79: #{tpu_custom_call.1} parent=11 // pred_region
          _
        $region80: #{tpu_custom_call.1} parent=11 // pred_fallthru
          _
      $region12: #{tpu_custom_call.1} parent=5 // pred_fallthru
        _
      %p529 = scmp.lt.s32.totalorder %s28, 2
      // Predicated region
      $region81: #{tpu_custom_call.1} parent=5 // pred_check
        %p530 = pneg %p529
      $region82: #{tpu_custom_call.1} parent=5 // pred_check_branch
        %532 = sbr.rel (%p530) target = $region84
      $region83: #{tpu_custom_call.1} parent=5 // pred_region
        // Predicated region
        $region85: #{tpu_custom_call.1} parent=83 // pred_check
          %p533 = pneg %p48
        $region86: #{tpu_custom_call.1} parent=83 // pred_check_branch
          %535 = sbr.rel (%p533) target = $region88
        $region87: #{tpu_custom_call.1} parent=83 // pred_region
          %p536 = scmp.lt.s32.totalorder %s28, 1
          %s537 = scalar_select %p536, %s28, 1
          %s538 = smul.addr %s537, 4
          %s539 = scalar_lea.vmem %s0, %s538
        $region88: #{tpu_custom_call.1} parent=83 // pred_fallthru
          _
        // Predicated region
        $region89: #{tpu_custom_call.1} parent=83 // pred_check
          %p540 = pneg %p74
        $region90: #{tpu_custom_call.1} parent=83 // pred_check_branch
          %542 = sbr.rel (%p540) target = $region92
        $region91: #{tpu_custom_call.1} parent=83 // pred_region
          %p543 = scmp.lt.s32.totalorder %s28, 1
          %s544 = scalar_select %p543, %s28, 1
          %s545 = smul.addr %s544, 4
          %s546 = scalar_lea.vmem %s1, %s545
        $region92: #{tpu_custom_call.1} parent=83 // pred_fallthru
          _
      $region84: #{tpu_custom_call.1} parent=5 // pred_fallthru
        _
      %p547 = scmp.le.s32.totalorder 1, %s28
      %p548 = scmp.lt.s32.totalorder %s28, 3
      %p549 = pnand %p547, %p548
      %p550 = pneg %p549
      // Predicated region
      $region93: #{tpu_custom_call.1} parent=5 // pred_check
        _
      $region94: #{tpu_custom_call.1} parent=5 // pred_check_branch
        %552 = sbr.rel (%p549) target = $region96
      $region95: #{tpu_custom_call.1} parent=5 // pred_region
        %s553 = ssub.s32 %s28, 1
        %p554 = scmp.lt.s32.totalorder %s33, 1
        %s555 = scalar_select %p554, %s33, 1
        %s556 = smul.addr %s555, 4
        %s557 = scalar_lea.vmem %s0, %s556
        %p558 = pneg %p54
        %p559 = pneg %p51
        %p560 = scmp.lt.s32.totalorder %s33, 1
        %s561 = scalar_select %p560, %s33, 1
        %s562 = smul.addr %s561, 4
        %s563 = scalar_lea.vmem %s1, %s562
        %p564 = pneg %p80
        %p565 = pneg %p77
        %p566 = pneg %p101
        %p567 = pneg %p98
        %p568 = pneg %p122
        %p569 = pneg %p119
        %p570 = pneg %p143
        %p571 = pneg %p140
        %p572 = pneg %p164
        %p573 = pneg %p161
        %p574 = pneg %p185
        %p575 = pneg %p182
        %p576 = pneg %p206
        %p577 = pneg %p203
        %p578 = pneg %p227
        %p579 = pneg %p224
        %p580 = pneg %p248
        %p581 = pneg %p245
        %p582 = pneg %p269
        %p583 = pneg %p266
        %p584 = pneg %p290
        %p585 = pneg %p287
        %p586 = pneg %p311
        %p587 = pneg %p308
        %p588 = pneg %p332
        %p589 = pneg %p329
        %p590 = pneg %p353
        %p591 = pneg %p350
        %p592 = pneg %p374
        %p593 = pneg %p371
        %p594 = pneg %p395
        %p595 = pneg %p392
        %p596 = pneg %p416
        %p597 = pneg %p413
        %p598 = pneg %p437
        %p599 = pneg %p434
        %p600 = pneg %p463
        %p601 = pneg %p460
        %s602 = sand.u32 %s450, 1
        %s603 = scalar_lea.sflag [#allocation3], %s602
        %s604 = sand.u32 %s450, 1
        %s605 = smul.addr %s604, 8
        %s606 = scalar_lea.vmem [#allocation2], %s605
        %p607 = scmp.lt.s32.totalorder %s33, 1
        %s608 = scalar_select %p607, %s33, 1
        %s609 = smul.addr %s608, 4
        %s610 = scalar_lea.vmem %s0, %s609
        %p611 = scmp.lt.s32.totalorder %s33, 1
        %s612 = scalar_select %p611, %s33, 1
        %s613 = smul.addr %s612, 4
        %s614 = scalar_lea.vmem %s1, %s613
        %v616 = vld [vmem:[%s610] sm:$0xf]
        %v617 = vld [vmem:[%s614] sm:$0xf]
        %v618 = vld [vmem:[%s2] sm:$0x1]
        %v619 = vlaneseq
        %v620 = vshrl.u32 %v619, 7
        %v621 = vsub.s32 0, %v620
        %v622 = vrot.slane %v618, %v621
        %vm623 = vcmp.lt.s32.totalorder %v622, 3
        %vm624 = vcmp.ge.s32.totalorder %v622, 11
        %v625 = vld [vmem:[%s4] sm:$0xf]
        %v626 = vpack.c.bf16 %v616, %v616
        %v627 = vld [vmem:[%s3] sm:$0x3]
        %628 = vrot.lane.b32.xlu0 %v616, 127
        %v629 = vpop.permute.xlu0 %628
        %v630 = vpack.c.bf16 %v629, %v629
        %s631 = scalar_lea.vmem %s3, 2
        %v632 = vld [vmem:[%s631] sm:$0x3]
        %vm633 = vcmask 31744
        %v635 = vsel %vm633, %v632, 0
        %vm637 = vcmask 1041408
        %v639 = vsel %vm637, %v630, 0
        %641 = vmatprep.subr.bf16.mxu0 0
        %642 = vmatpush1.bf16.msra.mxu0 0
        %643 = vmatprep.subr.bf16.mxu0 0
        %644 = vmatpush1.bf16.msra.mxu0 0
        %645 = vmatprep.subr.bf16.mxu0 0
        %646 = vmatpush1.bf16.msra.mxu0 0
        %647 = vmatprep.subr.bf16.mxu0 0
        %648 = vmatpush1.bf16.msra.mxu0 0
        %649 = vmatprep.subr.bf16.mxu0 0
        %650 = vmatpush1.bf16.msra.mxu0 0
        %651 = vmatprep.subr.bf16.mxu0 0
        %652 = vmatpush1.bf16.msra.mxu0 0
        %653 = vmatprep.subr.bf16.mxu0 0
        %654 = vmatpush1.bf16.msra.mxu0 0
        %655 = vmatprep.subr.bf16.mxu0 0
        %656 = vmatpush1.bf16.msra.mxu0 %v639
        %657 = vmatprep.subr.bf16.mxu0 0
        %658 = vmatpush2.bf16.msra.mxu0 0
        %659 = vmatprep.subr.bf16.mxu0 0
        %660 = vmatpush2.bf16.msra.mxu0 0
        %661 = vmatprep.subr.bf16.mxu0 0
        %662 = vmatpush2.bf16.msra.mxu0 0
        %663 = vmatprep.subr.bf16.mxu0 0
        %664 = vmatpush2.bf16.msra.mxu0 0
        %665 = vmatprep.subr.bf16.mxu0 0
        %666 = vmatpush2.bf16.msra.mxu0 0
        %667 = vmatprep.subr.bf16.mxu0 0
        %668 = vmatpush2.bf16.msra.mxu0 0
        %669 = vmatprep.subr.bf16.mxu0 0
        %670 = vmatpush2.bf16.msra.mxu0 0
        %671 = vmatprep.subr.bf16.mxu0 0
        %672 = vmatpush2.bf16.msra.mxu0 0
        %673 = vmatprep.mubr.bf16.mxu0 0
        %674 = vmatmul.mubr.bf16.gmra.mxu0 %v635
        %v675 = vpop.f32.mrf.mxu0
        %v676 = vadd.f32 0.0, %v675
        %v677 = vpop.f32.mrf.mxu0
        %v678 = vpop.f32.mrf.mxu0
        %v679 = vpop.f32.mrf.mxu0
        %680 = vdwg.mxu0
        %v682 = vsel %vm633, %v627, 0
        %v685 = vsel %vm637, %v626, 0
        %687 = vmatprep.subr.bf16.mxu0 0
        %688 = vmatpush1.bf16.msra.mxu0 0
        %689 = vmatprep.subr.bf16.mxu0 0
        %690 = vmatpush1.bf16.msra.mxu0 0
        %691 = vmatprep.subr.bf16.mxu0 0
        %692 = vmatpush1.bf16.msra.mxu0 0
        %693 = vmatprep.subr.bf16.mxu0 0
        %694 = vmatpush1.bf16.msra.mxu0 0
        %695 = vmatprep.subr.bf16.mxu0 0
        %696 = vmatpush1.bf16.msra.mxu0 0
        %697 = vmatprep.subr.bf16.mxu0 0
        %698 = vmatpush1.bf16.msra.mxu0 0
        %699 = vmatprep.subr.bf16.mxu0 0
        %700 = vmatpush1.bf16.msra.mxu0 0
        %701 = vmatprep.subr.bf16.mxu0 0
        %702 = vmatpush1.bf16.msra.mxu0 %v685
        %703 = vmatprep.subr.bf16.mxu0 0
        %704 = vmatpush2.bf16.msra.mxu0 0
        %705 = vmatprep.subr.bf16.mxu0 0
        %706 = vmatpush2.bf16.msra.mxu0 0
        %707 = vmatprep.subr.bf16.mxu0 0
        %708 = vmatpush2.bf16.msra.mxu0 0
        %709 = vmatprep.subr.bf16.mxu0 0
        %710 = vmatpush2.bf16.msra.mxu0 0
        %711 = vmatprep.subr.bf16.mxu0 0
        %712 = vmatpush2.bf16.msra.mxu0 0
        %713 = vmatprep.subr.bf16.mxu0 0
        %714 = vmatpush2.bf16.msra.mxu0 0
        %715 = vmatprep.subr.bf16.mxu0 0
        %716 = vmatpush2.bf16.msra.mxu0 0
        %717 = vmatprep.subr.bf16.mxu0 0
        %718 = vmatpush2.bf16.msra.mxu0 0
        %719 = vmatprep.mubr.bf16.mxu0 0
        %720 = vmatmul.mubr.bf16.gmra.mxu0 %v682
        %v721 = vpop.f32.mrf.mxu0
        %v722 = vadd.f32 %v676, %v721
        %v723 = vpop.f32.mrf.mxu0
        %v724 = vpop.f32.mrf.mxu0
        %v725 = vpop.f32.mrf.mxu0
        %726 = vdwg.mxu0
        %727 = vrot.lane.b32.xlu0 %v616, 126
        %v728 = vpop.permute.xlu0 %727
        %v729 = vpack.c.bf16 %v728, %v728
        %s730 = scalar_lea.vmem %s3, 4
        %v731 = vld [vmem:[%s730] sm:$0x3]
        %v733 = vsel %vm633, %v731, 0
        %v736 = vsel %vm637, %v729, 0
        %738 = vmatprep.subr.bf16.mxu0 0
        %739 = vmatpush1.bf16.msra.mxu0 0
        %740 = vmatprep.subr.bf16.mxu0 0
        %741 = vmatpush1.bf16.msra.mxu0 0
        %742 = vmatprep.subr.bf16.mxu0 0
        %743 = vmatpush1.bf16.msra.mxu0 0
        %744 = vmatprep.subr.bf16.mxu0 0
        %745 = vmatpush1.bf16.msra.mxu0 0
        %746 = vmatprep.subr.bf16.mxu0 0
        %747 = vmatpush1.bf16.msra.mxu0 0
        %748 = vmatprep.subr.bf16.mxu0 0
        %749 = vmatpush1.bf16.msra.mxu0 0
        %750 = vmatprep.subr.bf16.mxu0 0
        %751 = vmatpush1.bf16.msra.mxu0 0
        %752 = vmatprep.subr.bf16.mxu0 0
        %753 = vmatpush1.bf16.msra.mxu0 %v736
        %754 = vmatprep.subr.bf16.mxu0 0
        %755 = vmatpush2.bf16.msra.mxu0 0
        %756 = vmatprep.subr.bf16.mxu0 0
        %757 = vmatpush2.bf16.msra.mxu0 0
        %758 = vmatprep.subr.bf16.mxu0 0
        %759 = vmatpush2.bf16.msra.mxu0 0
        %760 = vmatprep.subr.bf16.mxu0 0
        %761 = vmatpush2.bf16.msra.mxu0 0
        %762 = vmatprep.subr.bf16.mxu0 0
        %763 = vmatpush2.bf16.msra.mxu0 0
        %764 = vmatprep.subr.bf16.mxu0 0
        %765 = vmatpush2.bf16.msra.mxu0 0
        %766 = vmatprep.subr.bf16.mxu0 0
        %767 = vmatpush2.bf16.msra.mxu0 0
        %768 = vmatprep.subr.bf16.mxu0 0
        %769 = vmatpush2.bf16.msra.mxu0 0
        %770 = vmatprep.mubr.bf16.mxu0 0
        %771 = vmatmul.mubr.bf16.gmra.mxu0 %v733
        %v772 = vpop.f32.mrf.mxu0
        %v773 = vadd.f32 0.0, %v772
        %v774 = vpop.f32.mrf.mxu0
        %v775 = vpop.f32.mrf.mxu0
        %v776 = vpop.f32.mrf.mxu0
        %777 = vdwg.mxu0
        %v778 = vadd.f32 %v722, %v773
        %779 = vrot.lane.b32.xlu0 %v616, 125
        %v780 = vpop.permute.xlu0 %779
        %v781 = vpack.c.bf16 %v780, %v780
        %s782 = scalar_lea.vmem %s3, 6
        %v783 = vld [vmem:[%s782] sm:$0x3]
        %v785 = vsel %vm633, %v783, 0
        %v788 = vsel %vm637, %v781, 0
        %790 = vmatprep.subr.bf16.mxu0 0
        %791 = vmatpush1.bf16.msra.mxu0 0
        %792 = vmatprep.subr.bf16.mxu0 0
        %793 = vmatpush1.bf16.msra.mxu0 0
        %794 = vmatprep.subr.bf16.mxu0 0
        %795 = vmatpush1.bf16.msra.mxu0 0
        %796 = vmatprep.subr.bf16.mxu0 0
        %797 = vmatpush1.bf16.msra.mxu0 0
        %798 = vmatprep.subr.bf16.mxu0 0
        %799 = vmatpush1.bf16.msra.mxu0 0
        %800 = vmatprep.subr.bf16.mxu0 0
        %801 = vmatpush1.bf16.msra.mxu0 0
        %802 = vmatprep.subr.bf16.mxu0 0
        %803 = vmatpush1.bf16.msra.mxu0 0
        %804 = vmatprep.subr.bf16.mxu0 0
        %805 = vmatpush1.bf16.msra.mxu0 %v788
        %806 = vmatprep.subr.bf16.mxu0 0
        %807 = vmatpush2.bf16.msra.mxu0 0
        %808 = vmatprep.subr.bf16.mxu0 0
        %809 = vmatpush2.bf16.msra.mxu0 0
        %810 = vmatprep.subr.bf16.mxu0 0
        %811 = vmatpush2.bf16.msra.mxu0 0
        %812 = vmatprep.subr.bf16.mxu0 0
        %813 = vmatpush2.bf16.msra.mxu0 0
        %814 = vmatprep.subr.bf16.mxu0 0
        %815 = vmatpush2.bf16.msra.mxu0 0
        %816 = vmatprep.subr.bf16.mxu0 0
        %817 = vmatpush2.bf16.msra.mxu0 0
        %818 = vmatprep.subr.bf16.mxu0 0
        %819 = vmatpush2.bf16.msra.mxu0 0
        %820 = vmatprep.subr.bf16.mxu0 0
        %821 = vmatpush2.bf16.msra.mxu0 0
        %822 = vmatprep.mubr.bf16.mxu0 0
        %823 = vmatmul.mubr.bf16.gmra.mxu0 %v785
        %v824 = vpop.f32.mrf.mxu0
        %v825 = vadd.f32 0.0, %v824
        %v826 = vpop.f32.mrf.mxu0
        %v827 = vpop.f32.mrf.mxu0
        %v828 = vpop.f32.mrf.mxu0
        %829 = vdwg.mxu0
        %v830 = vadd.f32 %v778, %v825
        %831 = vrot.lane.b32.xlu0 %v616, 124
        %v832 = vpop.permute.xlu0 %831
        %v833 = vpack.c.bf16 %v832, %v832
        %s834 = scalar_lea.vmem %s3, 8
        %v835 = vld [vmem:[%s834] sm:$0x3]
        %v837 = vsel %vm633, %v835, 0
        %v840 = vsel %vm637, %v833, 0
        %842 = vmatprep.subr.bf16.mxu0 0
        %843 = vmatpush1.bf16.msra.mxu0 0
        %844 = vmatprep.subr.bf16.mxu0 0
        %845 = vmatpush1.bf16.msra.mxu0 0
        %846 = vmatprep.subr.bf16.mxu0 0
        %847 = vmatpush1.bf16.msra.mxu0 0
        %848 = vmatprep.subr.bf16.mxu0 0
        %849 = vmatpush1.bf16.msra.mxu0 0
        %850 = vmatprep.subr.bf16.mxu0 0
        %851 = vmatpush1.bf16.msra.mxu0 0
        %852 = vmatprep.subr.bf16.mxu0 0
        %853 = vmatpush1.bf16.msra.mxu0 0
        %854 = vmatprep.subr.bf16.mxu0 0
        %855 = vmatpush1.bf16.msra.mxu0 0
        %856 = vmatprep.subr.bf16.mxu0 0
        %857 = vmatpush1.bf16.msra.mxu0 %v840
        %858 = vmatprep.subr.bf16.mxu0 0
        %859 = vmatpush2.bf16.msra.mxu0 0
        %860 = vmatprep.subr.bf16.mxu0 0
        %861 = vmatpush2.bf16.msra.mxu0 0
        %862 = vmatprep.subr.bf16.mxu0 0
        %863 = vmatpush2.bf16.msra.mxu0 0
        %864 = vmatprep.subr.bf16.mxu0 0
        %865 = vmatpush2.bf16.msra.mxu0 0
        %866 = vmatprep.subr.bf16.mxu0 0
        %867 = vmatpush2.bf16.msra.mxu0 0
        %868 = vmatprep.subr.bf16.mxu0 0
        %869 = vmatpush2.bf16.msra.mxu0 0
        %870 = vmatprep.subr.bf16.mxu0 0
        %871 = vmatpush2.bf16.msra.mxu0 0
        %872 = vmatprep.subr.bf16.mxu0 0
        %873 = vmatpush2.bf16.msra.mxu0 0
        %874 = vmatprep.mubr.bf16.mxu0 0
        %875 = vmatmul.mubr.bf16.gmra.mxu0 %v837
        %v876 = vpop.f32.mrf.mxu0
        %v877 = vadd.f32 0.0, %v876
        %v878 = vpop.f32.mrf.mxu0
        %v879 = vpop.f32.mrf.mxu0
        %v880 = vpop.f32.mrf.mxu0
        %881 = vdwg.mxu0
        %v882 = vadd.f32 %v830, %v877
        %884 = vset.pattern.permute.xlu0 0
        %885 = vperm.xlu0 %884, %v625
        %v886 = vpop.permute.xlu0 %885
        %v888 = vadd.f32 %v882, %v886
        %vm889 = vcmp.ge.f32.partialorder %v888, 0.0
        %v890 = vmul.f32 %v888, 0.01
        %v891 = vsel %vm889, %v888, %v890
        %v892 = vld [vmem:[%s6] sm:$0xf]
        %v893 = vpack.c.bf16 %v891, %v891
        %v894 = vld [vmem:[%s5] sm:$0x3]
        %895 = vrot.lane.b32.xlu0 %v891, 127
        %v896 = vpop.permute.xlu0 %895
        %v897 = vpack.c.bf16 %v896, %v896
        %s898 = scalar_lea.vmem %s5, 2
        %v899 = vld [vmem:[%s898] sm:$0x3]
        %v901 = vsel %vm633, %v899, 0
        %v904 = vsel %vm637, %v897, 0
        %906 = vmatprep.subr.bf16.mxu0 0
        %907 = vmatpush1.bf16.msra.mxu0 0
        %908 = vmatprep.subr.bf16.mxu0 0
        %909 = vmatpush1.bf16.msra.mxu0 0
        %910 = vmatprep.subr.bf16.mxu0 0
        %911 = vmatpush1.bf16.msra.mxu0 0
        %912 = vmatprep.subr.bf16.mxu0 0
        %913 = vmatpush1.bf16.msra.mxu0 0
        %914 = vmatprep.subr.bf16.mxu0 0
        %915 = vmatpush1.bf16.msra.mxu0 0
        %916 = vmatprep.subr.bf16.mxu0 0
        %917 = vmatpush1.bf16.msra.mxu0 0
        %918 = vmatprep.subr.bf16.mxu0 0
        %919 = vmatpush1.bf16.msra.mxu0 0
        %920 = vmatprep.subr.bf16.mxu0 0
        %921 = vmatpush1.bf16.msra.mxu0 %v904
        %922 = vmatprep.subr.bf16.mxu0 0
        %923 = vmatpush2.bf16.msra.mxu0 0
        %924 = vmatprep.subr.bf16.mxu0 0
        %925 = vmatpush2.bf16.msra.mxu0 0
        %926 = vmatprep.subr.bf16.mxu0 0
        %927 = vmatpush2.bf16.msra.mxu0 0
        %928 = vmatprep.subr.bf16.mxu0 0
        %929 = vmatpush2.bf16.msra.mxu0 0
        %930 = vmatprep.subr.bf16.mxu0 0
        %931 = vmatpush2.bf16.msra.mxu0 0
        %932 = vmatprep.subr.bf16.mxu0 0
        %933 = vmatpush2.bf16.msra.mxu0 0
        %934 = vmatprep.subr.bf16.mxu0 0
        %935 = vmatpush2.bf16.msra.mxu0 0
        %936 = vmatprep.subr.bf16.mxu0 0
        %937 = vmatpush2.bf16.msra.mxu0 0
        %938 = vmatprep.mubr.bf16.mxu0 0
        %939 = vmatmul.mubr.bf16.gmra.mxu0 %v901
        %v940 = vpop.f32.mrf.mxu0
        %v941 = vadd.f32 0.0, %v940
        %v942 = vpop.f32.mrf.mxu0
        %v943 = vpop.f32.mrf.mxu0
        %v944 = vpop.f32.mrf.mxu0
        %945 = vdwg.mxu0
        %v947 = vsel %vm633, %v894, 0
        %v950 = vsel %vm637, %v893, 0
        %952 = vmatprep.subr.bf16.mxu0 0
        %953 = vmatpush1.bf16.msra.mxu0 0
        %954 = vmatprep.subr.bf16.mxu0 0
        %955 = vmatpush1.bf16.msra.mxu0 0
        %956 = vmatprep.subr.bf16.mxu0 0
        %957 = vmatpush1.bf16.msra.mxu0 0
        %958 = vmatprep.subr.bf16.mxu0 0
        %959 = vmatpush1.bf16.msra.mxu0 0
        %960 = vmatprep.subr.bf16.mxu0 0
        %961 = vmatpush1.bf16.msra.mxu0 0
        %962 = vmatprep.subr.bf16.mxu0 0
        %963 = vmatpush1.bf16.msra.mxu0 0
        %964 = vmatprep.subr.bf16.mxu0 0
        %965 = vmatpush1.bf16.msra.mxu0 0
        %966 = vmatprep.subr.bf16.mxu0 0
        %967 = vmatpush1.bf16.msra.mxu0 %v950
        %968 = vmatprep.subr.bf16.mxu0 0
        %969 = vmatpush2.bf16.msra.mxu0 0
        %970 = vmatprep.subr.bf16.mxu0 0
        %971 = vmatpush2.bf16.msra.mxu0 0
        %972 = vmatprep.subr.bf16.mxu0 0
        %973 = vmatpush2.bf16.msra.mxu0 0
        %974 = vmatprep.subr.bf16.mxu0 0
        %975 = vmatpush2.bf16.msra.mxu0 0
        %976 = vmatprep.subr.bf16.mxu0 0
        %977 = vmatpush2.bf16.msra.mxu0 0
        %978 = vmatprep.subr.bf16.mxu0 0
        %979 = vmatpush2.bf16.msra.mxu0 0
        %980 = vmatprep.subr.bf16.mxu0 0
        %981 = vmatpush2.bf16.msra.mxu0 0
        %982 = vmatprep.subr.bf16.mxu0 0
        %983 = vmatpush2.bf16.msra.mxu0 0
        %984 = vmatprep.mubr.bf16.mxu0 0
        %985 = vmatmul.mubr.bf16.gmra.mxu0 %v947
        %v986 = vpop.f32.mrf.mxu0
        %v987 = vadd.f32 %v941, %v986
        %v988 = vpop.f32.mrf.mxu0
        %v989 = vpop.f32.mrf.mxu0
        %v990 = vpop.f32.mrf.mxu0
        %991 = vdwg.mxu0
        %992 = vrot.lane.b32.xlu0 %v891, 126
        %v993 = vpop.permute.xlu0 %992
        %v994 = vpack.c.bf16 %v993, %v993
        %s995 = scalar_lea.vmem %s5, 4
        %v996 = vld [vmem:[%s995] sm:$0x3]
        %v998 = vsel %vm633, %v996, 0
        %v1001 = vsel %vm637, %v994, 0
        %1003 = vmatprep.subr.bf16.mxu0 0
        %1004 = vmatpush1.bf16.msra.mxu0 0
        %1005 = vmatprep.subr.bf16.mxu0 0
        %1006 = vmatpush1.bf16.msra.mxu0 0
        %1007 = vmatprep.subr.bf16.mxu0 0
        %1008 = vmatpush1.bf16.msra.mxu0 0
        %1009 = vmatprep.subr.bf16.mxu0 0
        %1010 = vmatpush1.bf16.msra.mxu0 0
        %1011 = vmatprep.subr.bf16.mxu0 0
        %1012 = vmatpush1.bf16.msra.mxu0 0
        %1013 = vmatprep.subr.bf16.mxu0 0
        %1014 = vmatpush1.bf16.msra.mxu0 0
        %1015 = vmatprep.subr.bf16.mxu0 0
        %1016 = vmatpush1.bf16.msra.mxu0 0
        %1017 = vmatprep.subr.bf16.mxu0 0
        %1018 = vmatpush1.bf16.msra.mxu0 %v1001
        %1019 = vmatprep.subr.bf16.mxu0 0
        %1020 = vmatpush2.bf16.msra.mxu0 0
        %1021 = vmatprep.subr.bf16.mxu0 0
        %1022 = vmatpush2.bf16.msra.mxu0 0
        %1023 = vmatprep.subr.bf16.mxu0 0
        %1024 = vmatpush2.bf16.msra.mxu0 0
        %1025 = vmatprep.subr.bf16.mxu0 0
        %1026 = vmatpush2.bf16.msra.mxu0 0
        %1027 = vmatprep.subr.bf16.mxu0 0
        %1028 = vmatpush2.bf16.msra.mxu0 0
        %1029 = vmatprep.subr.bf16.mxu0 0
        %1030 = vmatpush2.bf16.msra.mxu0 0
        %1031 = vmatprep.subr.bf16.mxu0 0
        %1032 = vmatpush2.bf16.msra.mxu0 0
        %1033 = vmatprep.subr.bf16.mxu0 0
        %1034 = vmatpush2.bf16.msra.mxu0 0
        %1035 = vmatprep.mubr.bf16.mxu0 0
        %1036 = vmatmul.mubr.bf16.gmra.mxu0 %v998
        %v1037 = vpop.f32.mrf.mxu0
        %v1038 = vadd.f32 0.0, %v1037
        %v1039 = vpop.f32.mrf.mxu0
        %v1040 = vpop.f32.mrf.mxu0
        %v1041 = vpop.f32.mrf.mxu0
        %1042 = vdwg.mxu0
        %v1043 = vadd.f32 %v987, %v1038
        %1045 = vset.pattern.permute.xlu0 0
        %1046 = vperm.xlu0 %1045, %v892
        %v1047 = vpop.permute.xlu0 %1046
        %v1049 = vadd.f32 %v1043, %v1047
        %v1050 = vtanh.pop %v1049
        %1051 = vrot.lane.b32.xlu0 %v1050, 3
        %v1052 = vpop.permute.xlu0 %1051
        %v1053 = vmul.f32 %v1052, 1.442695
        %v1054 = vpow.pop %v1053
        %v1055 = vmul.f32 %v617, %v1054
        %v1056 = vld [vmem:[%s8] sm:$0xf]
        %v1057 = vpack.c.bf16 %v617, %v617
        %v1058 = vld [vmem:[%s7] sm:$0x3]
        %1059 = vrot.lane.b32.xlu0 %v617, 127
        %v1060 = vpop.permute.xlu0 %1059
        %v1061 = vpack.c.bf16 %v1060, %v1060
        %s1062 = scalar_lea.vmem %s7, 2
        %v1063 = vld [vmem:[%s1062] sm:$0x3]
        %v1065 = vsel %vm633, %v1063, 0
        %v1068 = vsel %vm637, %v1061, 0
        %1070 = vmatprep.subr.bf16.mxu0 0
        %1071 = vmatpush1.bf16.msra.mxu0 0
        %1072 = vmatprep.subr.bf16.mxu0 0
        %1073 = vmatpush1.bf16.msra.mxu0 0
        %1074 = vmatprep.subr.bf16.mxu0 0
        %1075 = vmatpush1.bf16.msra.mxu0 0
        %1076 = vmatprep.subr.bf16.mxu0 0
        %1077 = vmatpush1.bf16.msra.mxu0 0
        %1078 = vmatprep.subr.bf16.mxu0 0
        %1079 = vmatpush1.bf16.msra.mxu0 0
        %1080 = vmatprep.subr.bf16.mxu0 0
        %1081 = vmatpush1.bf16.msra.mxu0 0
        %1082 = vmatprep.subr.bf16.mxu0 0
        %1083 = vmatpush1.bf16.msra.mxu0 0
        %1084 = vmatprep.subr.bf16.mxu0 0
        %1085 = vmatpush1.bf16.msra.mxu0 %v1068
        %1086 = vmatprep.subr.bf16.mxu0 0
        %1087 = vmatpush2.bf16.msra.mxu0 0
        %1088 = vmatprep.subr.bf16.mxu0 0
        %1089 = vmatpush2.bf16.msra.mxu0 0
        %1090 = vmatprep.subr.bf16.mxu0 0
        %1091 = vmatpush2.bf16.msra.mxu0 0
        %1092 = vmatprep.subr.bf16.mxu0 0
        %1093 = vmatpush2.bf16.msra.mxu0 0
        %1094 = vmatprep.subr.bf16.mxu0 0
        %1095 = vmatpush2.bf16.msra.mxu0 0
        %1096 = vmatprep.subr.bf16.mxu0 0
        %1097 = vmatpush2.bf16.msra.mxu0 0
        %1098 = vmatprep.subr.bf16.mxu0 0
        %1099 = vmatpush2.bf16.msra.mxu0 0
        %1100 = vmatprep.subr.bf16.mxu0 0
        %1101 = vmatpush2.bf16.msra.mxu0 0
        %1102 = vmatprep.mubr.bf16.mxu0 0
        %1103 = vmatmul.mubr.bf16.gmra.mxu0 %v1065
        %v1104 = vpop.f32.mrf.mxu0
        %v1105 = vadd.f32 0.0, %v1104
        %v1106 = vpop.f32.mrf.mxu0
        %v1107 = vpop.f32.mrf.mxu0
        %v1108 = vpop.f32.mrf.mxu0
        %1109 = vdwg.mxu0
        %v1111 = vsel %vm633, %v1058, 0
        %v1114 = vsel %vm637, %v1057, 0
        %1116 = vmatprep.subr.bf16.mxu0 0
        %1117 = vmatpush1.bf16.msra.mxu0 0
        %1118 = vmatprep.subr.bf16.mxu0 0
        %1119 = vmatpush1.bf16.msra.mxu0 0
        %1120 = vmatprep.subr.bf16.mxu0 0
        %1121 = vmatpush1.bf16.msra.mxu0 0
        %1122 = vmatprep.subr.bf16.mxu0 0
        %1123 = vmatpush1.bf16.msra.mxu0 0
        %1124 = vmatprep.subr.bf16.mxu0 0
        %1125 = vmatpush1.bf16.msra.mxu0 0
        %1126 = vmatprep.subr.bf16.mxu0 0
        %1127 = vmatpush1.bf16.msra.mxu0 0
        %1128 = vmatprep.subr.bf16.mxu0 0
        %1129 = vmatpush1.bf16.msra.mxu0 0
        %1130 = vmatprep.subr.bf16.mxu0 0
        %1131 = vmatpush1.bf16.msra.mxu0 %v1114
        %1132 = vmatprep.subr.bf16.mxu0 0
        %1133 = vmatpush2.bf16.msra.mxu0 0
        %1134 = vmatprep.subr.bf16.mxu0 0
        %1135 = vmatpush2.bf16.msra.mxu0 0
        %1136 = vmatprep.subr.bf16.mxu0 0
        %1137 = vmatpush2.bf16.msra.mxu0 0
        %1138 = vmatprep.subr.bf16.mxu0 0
        %1139 = vmatpush2.bf16.msra.mxu0 0
        %1140 = vmatprep.subr.bf16.mxu0 0
        %1141 = vmatpush2.bf16.msra.mxu0 0
        %1142 = vmatprep.subr.bf16.mxu0 0
        %1143 = vmatpush2.bf16.msra.mxu0 0
        %1144 = vmatprep.subr.bf16.mxu0 0
        %1145 = vmatpush2.bf16.msra.mxu0 0
        %1146 = vmatprep.subr.bf16.mxu0 0
        %1147 = vmatpush2.bf16.msra.mxu0 0
        %1148 = vmatprep.mubr.bf16.mxu0 0
        %1149 = vmatmul.mubr.bf16.gmra.mxu0 %v1111
        %v1150 = vpop.f32.mrf.mxu0
        %v1151 = vadd.f32 %v1105, %v1150
        %v1152 = vpop.f32.mrf.mxu0
        %v1153 = vpop.f32.mrf.mxu0
        %v1154 = vpop.f32.mrf.mxu0
        %1155 = vdwg.mxu0
        %1156 = vrot.lane.b32.xlu0 %v617, 126
        %v1157 = vpop.permute.xlu0 %1156
        %v1158 = vpack.c.bf16 %v1157, %v1157
        %s1159 = scalar_lea.vmem %s7, 4
        %v1160 = vld [vmem:[%s1159] sm:$0x3]
        %v1162 = vsel %vm633, %v1160, 0
        %v1165 = vsel %vm637, %v1158, 0
        %1167 = vmatprep.subr.bf16.mxu0 0
        %1168 = vmatpush1.bf16.msra.mxu0 0
        %1169 = vmatprep.subr.bf16.mxu0 0
        %1170 = vmatpush1.bf16.msra.mxu0 0
        %1171 = vmatprep.subr.bf16.mxu0 0
        %1172 = vmatpush1.bf16.msra.mxu0 0
        %1173 = vmatprep.subr.bf16.mxu0 0
        %1174 = vmatpush1.bf16.msra.mxu0 0
        %1175 = vmatprep.subr.bf16.mxu0 0
        %1176 = vmatpush1.bf16.msra.mxu0 0
        %1177 = vmatprep.subr.bf16.mxu0 0
        %1178 = vmatpush1.bf16.msra.mxu0 0
        %1179 = vmatprep.subr.bf16.mxu0 0
        %1180 = vmatpush1.bf16.msra.mxu0 0
        %1181 = vmatprep.subr.bf16.mxu0 0
        %1182 = vmatpush1.bf16.msra.mxu0 %v1165
        %1183 = vmatprep.subr.bf16.mxu0 0
        %1184 = vmatpush2.bf16.msra.mxu0 0
        %1185 = vmatprep.subr.bf16.mxu0 0
        %1186 = vmatpush2.bf16.msra.mxu0 0
        %1187 = vmatprep.subr.bf16.mxu0 0
        %1188 = vmatpush2.bf16.msra.mxu0 0
        %1189 = vmatprep.subr.bf16.mxu0 0
        %1190 = vmatpush2.bf16.msra.mxu0 0
        %1191 = vmatprep.subr.bf16.mxu0 0
        %1192 = vmatpush2.bf16.msra.mxu0 0
        %1193 = vmatprep.subr.bf16.mxu0 0
        %1194 = vmatpush2.bf16.msra.mxu0 0
        %1195 = vmatprep.subr.bf16.mxu0 0
        %1196 = vmatpush2.bf16.msra.mxu0 0
        %1197 = vmatprep.subr.bf16.mxu0 0
        %1198 = vmatpush2.bf16.msra.mxu0 0
        %1199 = vmatprep.mubr.bf16.mxu0 0
        %1200 = vmatmul.mubr.bf16.gmra.mxu0 %v1162
        %v1201 = vpop.f32.mrf.mxu0
        %v1202 = vadd.f32 0.0, %v1201
        %v1203 = vpop.f32.mrf.mxu0
        %v1204 = vpop.f32.mrf.mxu0
        %v1205 = vpop.f32.mrf.mxu0
        %1206 = vdwg.mxu0
        %v1207 = vadd.f32 %v1151, %v1202
        %1208 = vrot.lane.b32.xlu0 %v617, 125
        %v1209 = vpop.permute.xlu0 %1208
        %v1210 = vpack.c.bf16 %v1209, %v1209
        %s1211 = scalar_lea.vmem %s7, 6
        %v1212 = vld [vmem:[%s1211] sm:$0x3]
        %v1214 = vsel %vm633, %v1212, 0
        %v1217 = vsel %vm637, %v1210, 0
        %1219 = vmatprep.subr.bf16.mxu0 0
        %1220 = vmatpush1.bf16.msra.mxu0 0
        %1221 = vmatprep.subr.bf16.mxu0 0
        %1222 = vmatpush1.bf16.msra.mxu0 0
        %1223 = vmatprep.subr.bf16.mxu0 0
        %1224 = vmatpush1.bf16.msra.mxu0 0
        %1225 = vmatprep.subr.bf16.mxu0 0
        %1226 = vmatpush1.bf16.msra.mxu0 0
        %1227 = vmatprep.subr.bf16.mxu0 0
        %1228 = vmatpush1.bf16.msra.mxu0 0
        %1229 = vmatprep.subr.bf16.mxu0 0
        %1230 = vmatpush1.bf16.msra.mxu0 0
        %1231 = vmatprep.subr.bf16.mxu0 0
        %1232 = vmatpush1.bf16.msra.mxu0 0
        %1233 = vmatprep.subr.bf16.mxu0 0
        %1234 = vmatpush1.bf16.msra.mxu0 %v1217
        %1235 = vmatprep.subr.bf16.mxu0 0
        %1236 = vmatpush2.bf16.msra.mxu0 0
        %1237 = vmatprep.subr.bf16.mxu0 0
        %1238 = vmatpush2.bf16.msra.mxu0 0
        %1239 = vmatprep.subr.bf16.mxu0 0
        %1240 = vmatpush2.bf16.msra.mxu0 0
        %1241 = vmatprep.subr.bf16.mxu0 0
        %1242 = vmatpush2.bf16.msra.mxu0 0
        %1243 = vmatprep.subr.bf16.mxu0 0
        %1244 = vmatpush2.bf16.msra.mxu0 0
        %1245 = vmatprep.subr.bf16.mxu0 0
        %1246 = vmatpush2.bf16.msra.mxu0 0
        %1247 = vmatprep.subr.bf16.mxu0 0
        %1248 = vmatpush2.bf16.msra.mxu0 0
        %1249 = vmatprep.subr.bf16.mxu0 0
        %1250 = vmatpush2.bf16.msra.mxu0 0
        %1251 = vmatprep.mubr.bf16.mxu0 0
        %1252 = vmatmul.mubr.bf16.gmra.mxu0 %v1214
        %v1253 = vpop.f32.mrf.mxu0
        %v1254 = vadd.f32 0.0, %v1253
        %v1255 = vpop.f32.mrf.mxu0
        %v1256 = vpop.f32.mrf.mxu0
        %v1257 = vpop.f32.mrf.mxu0
        %1258 = vdwg.mxu0
        %v1259 = vadd.f32 %v1207, %v1254
        %1260 = vrot.lane.b32.xlu0 %v617, 124
        %v1261 = vpop.permute.xlu0 %1260
        %v1262 = vpack.c.bf16 %v1261, %v1261
        %s1263 = scalar_lea.vmem %s7, 8
        %v1264 = vld [vmem:[%s1263] sm:$0x3]
        %v1266 = vsel %vm633, %v1264, 0
        %v1269 = vsel %vm637, %v1262, 0
        %1271 = vmatprep.subr.bf16.mxu0 0
        %1272 = vmatpush1.bf16.msra.mxu0 0
        %1273 = vmatprep.subr.bf16.mxu0 0
        %1274 = vmatpush1.bf16.msra.mxu0 0
        %1275 = vmatprep.subr.bf16.mxu0 0
        %1276 = vmatpush1.bf16.msra.mxu0 0
        %1277 = vmatprep.subr.bf16.mxu0 0
        %1278 = vmatpush1.bf16.msra.mxu0 0
        %1279 = vmatprep.subr.bf16.mxu0 0
        %1280 = vmatpush1.bf16.msra.mxu0 0
        %1281 = vmatprep.subr.bf16.mxu0 0
        %1282 = vmatpush1.bf16.msra.mxu0 0
        %1283 = vmatprep.subr.bf16.mxu0 0
        %1284 = vmatpush1.bf16.msra.mxu0 0
        %1285 = vmatprep.subr.bf16.mxu0 0
        %1286 = vmatpush1.bf16.msra.mxu0 %v1269
        %1287 = vmatprep.subr.bf16.mxu0 0
        %1288 = vmatpush2.bf16.msra.mxu0 0
        %1289 = vmatprep.subr.bf16.mxu0 0
        %1290 = vmatpush2.bf16.msra.mxu0 0
        %1291 = vmatprep.subr.bf16.mxu0 0
        %1292 = vmatpush2.bf16.msra.mxu0 0
        %1293 = vmatprep.subr.bf16.mxu0 0
        %1294 = vmatpush2.bf16.msra.mxu0 0
        %1295 = vmatprep.subr.bf16.mxu0 0
        %1296 = vmatpush2.bf16.msra.mxu0 0
        %1297 = vmatprep.subr.bf16.mxu0 0
        %1298 = vmatpush2.bf16.msra.mxu0 0
        %1299 = vmatprep.subr.bf16.mxu0 0
        %1300 = vmatpush2.bf16.msra.mxu0 0
        %1301 = vmatprep.subr.bf16.mxu0 0
        %1302 = vmatpush2.bf16.msra.mxu0 0
        %1303 = vmatprep.mubr.bf16.mxu0 0
        %1304 = vmatmul.mubr.bf16.gmra.mxu0 %v1266
        %v1305 = vpop.f32.mrf.mxu0
        %v1306 = vadd.f32 0.0, %v1305
        %v1307 = vpop.f32.mrf.mxu0
        %v1308 = vpop.f32.mrf.mxu0
        %v1309 = vpop.f32.mrf.mxu0
        %1310 = vdwg.mxu0
        %v1311 = vadd.f32 %v1259, %v1306
        %1313 = vset.pattern.permute.xlu0 0
        %1314 = vperm.xlu0 %1313, %v1056
        %v1315 = vpop.permute.xlu0 %1314
        %v1317 = vadd.f32 %v1311, %v1315
        %vm1318 = vcmp.ge.f32.partialorder %v1317, 0.0
        %v1319 = vmul.f32 %v1317, 0.01
        %v1320 = vsel %vm1318, %v1317, %v1319
        %v1321 = vld [vmem:[%s10] sm:$0xf]
        %v1322 = vpack.c.bf16 %v1320, %v1320
        %v1323 = vld [vmem:[%s9] sm:$0x3]
        %1324 = vrot.lane.b32.xlu0 %v1320, 127
        %v1325 = vpop.permute.xlu0 %1324
        %v1326 = vpack.c.bf16 %v1325, %v1325
        %s1327 = scalar_lea.vmem %s9, 2
        %v1328 = vld [vmem:[%s1327] sm:$0x3]
        %v1330 = vsel %vm633, %v1328, 0
        %v1333 = vsel %vm637, %v1326, 0
        %1335 = vmatprep.subr.bf16.mxu0 0
        %1336 = vmatpush1.bf16.msra.mxu0 0
        %1337 = vmatprep.subr.bf16.mxu0 0
        %1338 = vmatpush1.bf16.msra.mxu0 0
        %1339 = vmatprep.subr.bf16.mxu0 0
        %1340 = vmatpush1.bf16.msra.mxu0 0
        %1341 = vmatprep.subr.bf16.mxu0 0
        %1342 = vmatpush1.bf16.msra.mxu0 0
        %1343 = vmatprep.subr.bf16.mxu0 0
        %1344 = vmatpush1.bf16.msra.mxu0 0
        %1345 = vmatprep.subr.bf16.mxu0 0
        %1346 = vmatpush1.bf16.msra.mxu0 0
        %1347 = vmatprep.subr.bf16.mxu0 0
        %1348 = vmatpush1.bf16.msra.mxu0 0
        %1349 = vmatprep.subr.bf16.mxu0 0
        %1350 = vmatpush1.bf16.msra.mxu0 %v1333
        %1351 = vmatprep.subr.bf16.mxu0 0
        %1352 = vmatpush2.bf16.msra.mxu0 0
        %1353 = vmatprep.subr.bf16.mxu0 0
        %1354 = vmatpush2.bf16.msra.mxu0 0
        %1355 = vmatprep.subr.bf16.mxu0 0
        %1356 = vmatpush2.bf16.msra.mxu0 0
        %1357 = vmatprep.subr.bf16.mxu0 0
        %1358 = vmatpush2.bf16.msra.mxu0 0
        %1359 = vmatprep.subr.bf16.mxu0 0
        %1360 = vmatpush2.bf16.msra.mxu0 0
        %1361 = vmatprep.subr.bf16.mxu0 0
        %1362 = vmatpush2.bf16.msra.mxu0 0
        %1363 = vmatprep.subr.bf16.mxu0 0
        %1364 = vmatpush2.bf16.msra.mxu0 0
        %1365 = vmatprep.subr.bf16.mxu0 0
        %1366 = vmatpush2.bf16.msra.mxu0 0
        %1367 = vmatprep.mubr.bf16.mxu0 0
        %1368 = vmatmul.mubr.bf16.gmra.mxu0 %v1330
        %v1369 = vpop.f32.mrf.mxu0
        %v1370 = vadd.f32 0.0, %v1369
        %v1371 = vpop.f32.mrf.mxu0
        %v1372 = vpop.f32.mrf.mxu0
        %v1373 = vpop.f32.mrf.mxu0
        %1374 = vdwg.mxu0
        %v1376 = vsel %vm633, %v1323, 0
        %v1379 = vsel %vm637, %v1322, 0
        %1381 = vmatprep.subr.bf16.mxu0 0
        %1382 = vmatpush1.bf16.msra.mxu0 0
        %1383 = vmatprep.subr.bf16.mxu0 0
        %1384 = vmatpush1.bf16.msra.mxu0 0
        %1385 = vmatprep.subr.bf16.mxu0 0
        %1386 = vmatpush1.bf16.msra.mxu0 0
        %1387 = vmatprep.subr.bf16.mxu0 0
        %1388 = vmatpush1.bf16.msra.mxu0 0
        %1389 = vmatprep.subr.bf16.mxu0 0
        %1390 = vmatpush1.bf16.msra.mxu0 0
        %1391 = vmatprep.subr.bf16.mxu0 0
        %1392 = vmatpush1.bf16.msra.mxu0 0
        %1393 = vmatprep.subr.bf16.mxu0 0
        %1394 = vmatpush1.bf16.msra.mxu0 0
        %1395 = vmatprep.subr.bf16.mxu0 0
        %1396 = vmatpush1.bf16.msra.mxu0 %v1379
        %1397 = vmatprep.subr.bf16.mxu0 0
        %1398 = vmatpush2.bf16.msra.mxu0 0
        %1399 = vmatprep.subr.bf16.mxu0 0
        %1400 = vmatpush2.bf16.msra.mxu0 0
        %1401 = vmatprep.subr.bf16.mxu0 0
        %1402 = vmatpush2.bf16.msra.mxu0 0
        %1403 = vmatprep.subr.bf16.mxu0 0
        %1404 = vmatpush2.bf16.msra.mxu0 0
        %1405 = vmatprep.subr.bf16.mxu0 0
        %1406 = vmatpush2.bf16.msra.mxu0 0
        %1407 = vmatprep.subr.bf16.mxu0 0
        %1408 = vmatpush2.bf16.msra.mxu0 0
        %1409 = vmatprep.subr.bf16.mxu0 0
        %1410 = vmatpush2.bf16.msra.mxu0 0
        %1411 = vmatprep.subr.bf16.mxu0 0
        %1412 = vmatpush2.bf16.msra.mxu0 0
        %1413 = vmatprep.mubr.bf16.mxu0 0
        %1414 = vmatmul.mubr.bf16.gmra.mxu0 %v1376
        %v1415 = vpop.f32.mrf.mxu0
        %v1416 = vadd.f32 %v1370, %v1415
        %v1417 = vpop.f32.mrf.mxu0
        %v1418 = vpop.f32.mrf.mxu0
        %v1419 = vpop.f32.mrf.mxu0
        %1420 = vdwg.mxu0
        %1421 = vrot.lane.b32.xlu0 %v1320, 126
        %v1422 = vpop.permute.xlu0 %1421
        %v1423 = vpack.c.bf16 %v1422, %v1422
        %s1424 = scalar_lea.vmem %s9, 4
        %v1425 = vld [vmem:[%s1424] sm:$0x3]
        %v1427 = vsel %vm633, %v1425, 0
        %v1430 = vsel %vm637, %v1423, 0
        %1432 = vmatprep.subr.bf16.mxu0 0
        %1433 = vmatpush1.bf16.msra.mxu0 0
        %1434 = vmatprep.subr.bf16.mxu0 0
        %1435 = vmatpush1.bf16.msra.mxu0 0
        %1436 = vmatprep.subr.bf16.mxu0 0
        %1437 = vmatpush1.bf16.msra.mxu0 0
        %1438 = vmatprep.subr.bf16.mxu0 0
        %1439 = vmatpush1.bf16.msra.mxu0 0
        %1440 = vmatprep.subr.bf16.mxu0 0
        %1441 = vmatpush1.bf16.msra.mxu0 0
        %1442 = vmatprep.subr.bf16.mxu0 0
        %1443 = vmatpush1.bf16.msra.mxu0 0
        %1444 = vmatprep.subr.bf16.mxu0 0
        %1445 = vmatpush1.bf16.msra.mxu0 0
        %1446 = vmatprep.subr.bf16.mxu0 0
        %1447 = vmatpush1.bf16.msra.mxu0 %v1430
        %1448 = vmatprep.subr.bf16.mxu0 0
        %1449 = vmatpush2.bf16.msra.mxu0 0
        %1450 = vmatprep.subr.bf16.mxu0 0
        %1451 = vmatpush2.bf16.msra.mxu0 0
        %1452 = vmatprep.subr.bf16.mxu0 0
        %1453 = vmatpush2.bf16.msra.mxu0 0
        %1454 = vmatprep.subr.bf16.mxu0 0
        %1455 = vmatpush2.bf16.msra.mxu0 0
        %1456 = vmatprep.subr.bf16.mxu0 0
        %1457 = vmatpush2.bf16.msra.mxu0 0
        %1458 = vmatprep.subr.bf16.mxu0 0
        %1459 = vmatpush2.bf16.msra.mxu0 0
        %1460 = vmatprep.subr.bf16.mxu0 0
        %1461 = vmatpush2.bf16.msra.mxu0 0
        %1462 = vmatprep.subr.bf16.mxu0 0
        %1463 = vmatpush2.bf16.msra.mxu0 0
        %1464 = vmatprep.mubr.bf16.mxu0 0
        %1465 = vmatmul.mubr.bf16.gmra.mxu0 %v1427
        %v1466 = vpop.f32.mrf.mxu0
        %v1467 = vadd.f32 0.0, %v1466
        %v1468 = vpop.f32.mrf.mxu0
        %v1469 = vpop.f32.mrf.mxu0
        %v1470 = vpop.f32.mrf.mxu0
        %1471 = vdwg.mxu0
        %v1472 = vadd.f32 %v1416, %v1467
        %1474 = vset.pattern.permute.xlu0 0
        %1475 = vperm.xlu0 %1474, %v1321
        %v1476 = vpop.permute.xlu0 %1475
        %v1478 = vadd.f32 %v1472, %v1476
        %v1479 = vtanh.pop %v1478
        %1480 = vrot.lane.b32.xlu0 %v1479, 3
        %v1481 = vpop.permute.xlu0 %1480
        %v1482 = vmul.f32 %v1481, 1.442695
        %v1483 = vpow.pop %v1482
        %v1484 = vmul.f32 %v616, %v1483
        %1485 = vrot.lane.b32.xlu0 %v1055, 127
        %v1486 = vpop.permute.xlu0 %1485
        %v1487 = vsel %vm623, %v1486, %v1055
        %1488 = vrot.lane.b32.xlu0 %v1487, 127
        %v1489 = vpop.permute.xlu0 %1488
        %v1490 = vsel %vm623, %v1489, %v1055
        %1491 = vrot.lane.b32.xlu0 %v1490, 127
        %v1492 = vpop.permute.xlu0 %1491
        %v1493 = vsel %vm623, %v1492, %v1055
        %1494 = vrot.lane.b32.xlu0 %v1493, 1
        %v1495 = vpop.permute.xlu0 %1494
        %v1496 = vsel %vm624, %v1495, %v1493
        %1497 = vrot.lane.b32.xlu0 %v1496, 1
        %v1498 = vpop.permute.xlu0 %1497
        %v1499 = vsel %vm624, %v1498, %v1493
        %1500 = vrot.lane.b32.xlu0 %v1499, 1
        %v1501 = vpop.permute.xlu0 %1500
        %v1502 = vsel %vm624, %v1501, %v1493
        %1503 = vrot.lane.b32.xlu0 %v1484, 127
        %v1504 = vpop.permute.xlu0 %1503
        %v1505 = vsel %vm623, %v1504, %v1484
        %1506 = vrot.lane.b32.xlu0 %v1505, 127
        %v1507 = vpop.permute.xlu0 %1506
        %v1508 = vsel %vm623, %v1507, %v1484
        %1509 = vrot.lane.b32.xlu0 %v1508, 127
        %v1510 = vpop.permute.xlu0 %1509
        %v1511 = vsel %vm623, %v1510, %v1484
        %1512 = vrot.lane.b32.xlu0 %v1511, 1
        %v1513 = vpop.permute.xlu0 %1512
        %v1514 = vsel %vm624, %v1513, %v1511
        %1515 = vrot.lane.b32.xlu0 %v1514, 1
        %v1516 = vpop.permute.xlu0 %1515
        %v1517 = vsel %vm624, %v1516, %v1511
        %1518 = vrot.lane.b32.xlu0 %v1517, 1
        %v1519 = vpop.permute.xlu0 %1518
        %v1520 = vsel %vm624, %v1519, %v1511
        %v1521 = vld [vmem:[%s12] sm:$0xf]
        %v1522 = vpack.c.bf16 %v1502, %v1502
        %v1523 = vld [vmem:[%s11] sm:$0x3]
        %1524 = vrot.lane.b32.xlu0 %v1502, 127
        %v1525 = vpop.permute.xlu0 %1524
        %v1526 = vpack.c.bf16 %v1525, %v1525
        %s1527 = scalar_lea.vmem %s11, 2
        %v1528 = vld [vmem:[%s1527] sm:$0x3]
        %v1530 = vsel %vm633, %v1528, 0
        %v1533 = vsel %vm637, %v1526, 0
        %1535 = vmatprep.subr.bf16.mxu0 0
        %1536 = vmatpush1.bf16.msra.mxu0 0
        %1537 = vmatprep.subr.bf16.mxu0 0
        %1538 = vmatpush1.bf16.msra.mxu0 0
        %1539 = vmatprep.subr.bf16.mxu0 0
        %1540 = vmatpush1.bf16.msra.mxu0 0
        %1541 = vmatprep.subr.bf16.mxu0 0
        %1542 = vmatpush1.bf16.msra.mxu0 0
        %1543 = vmatprep.subr.bf16.mxu0 0
        %1544 = vmatpush1.bf16.msra.mxu0 0
        %1545 = vmatprep.subr.bf16.mxu0 0
        %1546 = vmatpush1.bf16.msra.mxu0 0
        %1547 = vmatprep.subr.bf16.mxu0 0
        %1548 = vmatpush1.bf16.msra.mxu0 0
        %1549 = vmatprep.subr.bf16.mxu0 0
        %1550 = vmatpush1.bf16.msra.mxu0 %v1533
        %1551 = vmatprep.subr.bf16.mxu0 0
        %1552 = vmatpush2.bf16.msra.mxu0 0
        %1553 = vmatprep.subr.bf16.mxu0 0
        %1554 = vmatpush2.bf16.msra.mxu0 0
        %1555 = vmatprep.subr.bf16.mxu0 0
        %1556 = vmatpush2.bf16.msra.mxu0 0
        %1557 = vmatprep.subr.bf16.mxu0 0
        %1558 = vmatpush2.bf16.msra.mxu0 0
        %1559 = vmatprep.subr.bf16.mxu0 0
        %1560 = vmatpush2.bf16.msra.mxu0 0
        %1561 = vmatprep.subr.bf16.mxu0 0
        %1562 = vmatpush2.bf16.msra.mxu0 0
        %1563 = vmatprep.subr.bf16.mxu0 0
        %1564 = vmatpush2.bf16.msra.mxu0 0
        %1565 = vmatprep.subr.bf16.mxu0 0
        %1566 = vmatpush2.bf16.msra.mxu0 0
        %1567 = vmatprep.mubr.bf16.mxu0 0
        %1568 = vmatmul.mubr.bf16.gmra.mxu0 %v1530
        %v1569 = vpop.f32.mrf.mxu0
        %v1570 = vadd.f32 0.0, %v1569
        %v1571 = vpop.f32.mrf.mxu0
        %v1572 = vpop.f32.mrf.mxu0
        %v1573 = vpop.f32.mrf.mxu0
        %1574 = vdwg.mxu0
        %v1576 = vsel %vm633, %v1523, 0
        %v1579 = vsel %vm637, %v1522, 0
        %1581 = vmatprep.subr.bf16.mxu0 0
        %1582 = vmatpush1.bf16.msra.mxu0 0
        %1583 = vmatprep.subr.bf16.mxu0 0
        %1584 = vmatpush1.bf16.msra.mxu0 0
        %1585 = vmatprep.subr.bf16.mxu0 0
        %1586 = vmatpush1.bf16.msra.mxu0 0
        %1587 = vmatprep.subr.bf16.mxu0 0
        %1588 = vmatpush1.bf16.msra.mxu0 0
        %1589 = vmatprep.subr.bf16.mxu0 0
        %1590 = vmatpush1.bf16.msra.mxu0 0
        %1591 = vmatprep.subr.bf16.mxu0 0
        %1592 = vmatpush1.bf16.msra.mxu0 0
        %1593 = vmatprep.subr.bf16.mxu0 0
        %1594 = vmatpush1.bf16.msra.mxu0 0
        %1595 = vmatprep.subr.bf16.mxu0 0
        %1596 = vmatpush1.bf16.msra.mxu0 %v1579
        %1597 = vmatprep.subr.bf16.mxu0 0
        %1598 = vmatpush2.bf16.msra.mxu0 0
        %1599 = vmatprep.subr.bf16.mxu0 0
        %1600 = vmatpush2.bf16.msra.mxu0 0
        %1601 = vmatprep.subr.bf16.mxu0 0
        %1602 = vmatpush2.bf16.msra.mxu0 0
        %1603 = vmatprep.subr.bf16.mxu0 0
        %1604 = vmatpush2.bf16.msra.mxu0 0
        %1605 = vmatprep.subr.bf16.mxu0 0
        %1606 = vmatpush2.bf16.msra.mxu0 0
        %1607 = vmatprep.subr.bf16.mxu0 0
        %1608 = vmatpush2.bf16.msra.mxu0 0
        %1609 = vmatprep.subr.bf16.mxu0 0
        %1610 = vmatpush2.bf16.msra.mxu0 0
        %1611 = vmatprep.subr.bf16.mxu0 0
        %1612 = vmatpush2.bf16.msra.mxu0 0
        %1613 = vmatprep.mubr.bf16.mxu0 0
        %1614 = vmatmul.mubr.bf16.gmra.mxu0 %v1576
        %v1615 = vpop.f32.mrf.mxu0
        %v1616 = vadd.f32 %v1570, %v1615
        %v1617 = vpop.f32.mrf.mxu0
        %v1618 = vpop.f32.mrf.mxu0
        %v1619 = vpop.f32.mrf.mxu0
        %1620 = vdwg.mxu0
        %1621 = vrot.lane.b32.xlu0 %v1502, 126
        %v1622 = vpop.permute.xlu0 %1621
        %v1623 = vpack.c.bf16 %v1622, %v1622
        %s1624 = scalar_lea.vmem %s11, 4
        %v1625 = vld [vmem:[%s1624] sm:$0x3]
        %v1627 = vsel %vm633, %v1625, 0
        %v1630 = vsel %vm637, %v1623, 0
        %1632 = vmatprep.subr.bf16.mxu0 0
        %1633 = vmatpush1.bf16.msra.mxu0 0
        %1634 = vmatprep.subr.bf16.mxu0 0
        %1635 = vmatpush1.bf16.msra.mxu0 0
        %1636 = vmatprep.subr.bf16.mxu0 0
        %1637 = vmatpush1.bf16.msra.mxu0 0
        %1638 = vmatprep.subr.bf16.mxu0 0
        %1639 = vmatpush1.bf16.msra.mxu0 0
        %1640 = vmatprep.subr.bf16.mxu0 0
        %1641 = vmatpush1.bf16.msra.mxu0 0
        %1642 = vmatprep.subr.bf16.mxu0 0
        %1643 = vmatpush1.bf16.msra.mxu0 0
        %1644 = vmatprep.subr.bf16.mxu0 0
        %1645 = vmatpush1.bf16.msra.mxu0 0
        %1646 = vmatprep.subr.bf16.mxu0 0
        %1647 = vmatpush1.bf16.msra.mxu0 %v1630
        %1648 = vmatprep.subr.bf16.mxu0 0
        %1649 = vmatpush2.bf16.msra.mxu0 0
        %1650 = vmatprep.subr.bf16.mxu0 0
        %1651 = vmatpush2.bf16.msra.mxu0 0
        %1652 = vmatprep.subr.bf16.mxu0 0
        %1653 = vmatpush2.bf16.msra.mxu0 0
        %1654 = vmatprep.subr.bf16.mxu0 0
        %1655 = vmatpush2.bf16.msra.mxu0 0
        %1656 = vmatprep.subr.bf16.mxu0 0
        %1657 = vmatpush2.bf16.msra.mxu0 0
        %1658 = vmatprep.subr.bf16.mxu0 0
        %1659 = vmatpush2.bf16.msra.mxu0 0
        %1660 = vmatprep.subr.bf16.mxu0 0
        %1661 = vmatpush2.bf16.msra.mxu0 0
        %1662 = vmatprep.subr.bf16.mxu0 0
        %1663 = vmatpush2.bf16.msra.mxu0 0
        %1664 = vmatprep.mubr.bf16.mxu0 0
        %1665 = vmatmul.mubr.bf16.gmra.mxu0 %v1627
        %v1666 = vpop.f32.mrf.mxu0
        %v1667 = vadd.f32 0.0, %v1666
        %v1668 = vpop.f32.mrf.mxu0
        %v1669 = vpop.f32.mrf.mxu0
        %v1670 = vpop.f32.mrf.mxu0
        %1671 = vdwg.mxu0
        %v1672 = vadd.f32 %v1616, %v1667
        %1673 = vrot.lane.b32.xlu0 %v1502, 125
        %v1674 = vpop.permute.xlu0 %1673
        %v1675 = vpack.c.bf16 %v1674, %v1674
        %s1676 = scalar_lea.vmem %s11, 6
        %v1677 = vld [vmem:[%s1676] sm:$0x3]
        %v1679 = vsel %vm633, %v1677, 0
        %v1682 = vsel %vm637, %v1675, 0
        %1684 = vmatprep.subr.bf16.mxu0 0
        %1685 = vmatpush1.bf16.msra.mxu0 0
        %1686 = vmatprep.subr.bf16.mxu0 0
        %1687 = vmatpush1.bf16.msra.mxu0 0
        %1688 = vmatprep.subr.bf16.mxu0 0
        %1689 = vmatpush1.bf16.msra.mxu0 0
        %1690 = vmatprep.subr.bf16.mxu0 0
        %1691 = vmatpush1.bf16.msra.mxu0 0
        %1692 = vmatprep.subr.bf16.mxu0 0
        %1693 = vmatpush1.bf16.msra.mxu0 0
        %1694 = vmatprep.subr.bf16.mxu0 0
        %1695 = vmatpush1.bf16.msra.mxu0 0
        %1696 = vmatprep.subr.bf16.mxu0 0
        %1697 = vmatpush1.bf16.msra.mxu0 0
        %1698 = vmatprep.subr.bf16.mxu0 0
        %1699 = vmatpush1.bf16.msra.mxu0 %v1682
        %1700 = vmatprep.subr.bf16.mxu0 0
        %1701 = vmatpush2.bf16.msra.mxu0 0
        %1702 = vmatprep.subr.bf16.mxu0 0
        %1703 = vmatpush2.bf16.msra.mxu0 0
        %1704 = vmatprep.subr.bf16.mxu0 0
        %1705 = vmatpush2.bf16.msra.mxu0 0
        %1706 = vmatprep.subr.bf16.mxu0 0
        %1707 = vmatpush2.bf16.msra.mxu0 0
        %1708 = vmatprep.subr.bf16.mxu0 0
        %1709 = vmatpush2.bf16.msra.mxu0 0
        %1710 = vmatprep.subr.bf16.mxu0 0
        %1711 = vmatpush2.bf16.msra.mxu0 0
        %1712 = vmatprep.subr.bf16.mxu0 0
        %1713 = vmatpush2.bf16.msra.mxu0 0
        %1714 = vmatprep.subr.bf16.mxu0 0
        %1715 = vmatpush2.bf16.msra.mxu0 0
        %1716 = vmatprep.mubr.bf16.mxu0 0
        %1717 = vmatmul.mubr.bf16.gmra.mxu0 %v1679
        %v1718 = vpop.f32.mrf.mxu0
        %v1719 = vadd.f32 0.0, %v1718
        %v1720 = vpop.f32.mrf.mxu0
        %v1721 = vpop.f32.mrf.mxu0
        %v1722 = vpop.f32.mrf.mxu0
        %1723 = vdwg.mxu0
        %v1724 = vadd.f32 %v1672, %v1719
        %1725 = vrot.lane.b32.xlu0 %v1502, 124
        %v1726 = vpop.permute.xlu0 %1725
        %v1727 = vpack.c.bf16 %v1726, %v1726
        %s1728 = scalar_lea.vmem %s11, 8
        %v1729 = vld [vmem:[%s1728] sm:$0x3]
        %v1731 = vsel %vm633, %v1729, 0
        %v1734 = vsel %vm637, %v1727, 0
        %1736 = vmatprep.subr.bf16.mxu0 0
        %1737 = vmatpush1.bf16.msra.mxu0 0
        %1738 = vmatprep.subr.bf16.mxu0 0
        %1739 = vmatpush1.bf16.msra.mxu0 0
        %1740 = vmatprep.subr.bf16.mxu0 0
        %1741 = vmatpush1.bf16.msra.mxu0 0
        %1742 = vmatprep.subr.bf16.mxu0 0
        %1743 = vmatpush1.bf16.msra.mxu0 0
        %1744 = vmatprep.subr.bf16.mxu0 0
        %1745 = vmatpush1.bf16.msra.mxu0 0
        %1746 = vmatprep.subr.bf16.mxu0 0
        %1747 = vmatpush1.bf16.msra.mxu0 0
        %1748 = vmatprep.subr.bf16.mxu0 0
        %1749 = vmatpush1.bf16.msra.mxu0 0
        %1750 = vmatprep.subr.bf16.mxu0 0
        %1751 = vmatpush1.bf16.msra.mxu0 %v1734
        %1752 = vmatprep.subr.bf16.mxu0 0
        %1753 = vmatpush2.bf16.msra.mxu0 0
        %1754 = vmatprep.subr.bf16.mxu0 0
        %1755 = vmatpush2.bf16.msra.mxu0 0
        %1756 = vmatprep.subr.bf16.mxu0 0
        %1757 = vmatpush2.bf16.msra.mxu0 0
        %1758 = vmatprep.subr.bf16.mxu0 0
        %1759 = vmatpush2.bf16.msra.mxu0 0
        %1760 = vmatprep.subr.bf16.mxu0 0
        %1761 = vmatpush2.bf16.msra.mxu0 0
        %1762 = vmatprep.subr.bf16.mxu0 0
        %1763 = vmatpush2.bf16.msra.mxu0 0
        %1764 = vmatprep.subr.bf16.mxu0 0
        %1765 = vmatpush2.bf16.msra.mxu0 0
        %1766 = vmatprep.subr.bf16.mxu0 0
        %1767 = vmatpush2.bf16.msra.mxu0 0
        %1768 = vmatprep.mubr.bf16.mxu0 0
        %1769 = vmatmul.mubr.bf16.gmra.mxu0 %v1731
        %v1770 = vpop.f32.mrf.mxu0
        %v1771 = vadd.f32 0.0, %v1770
        %v1772 = vpop.f32.mrf.mxu0
        %v1773 = vpop.f32.mrf.mxu0
        %v1774 = vpop.f32.mrf.mxu0
        %1775 = vdwg.mxu0
        %v1776 = vadd.f32 %v1724, %v1771
        %1778 = vset.pattern.permute.xlu0 0
        %1779 = vperm.xlu0 %1778, %v1521
        %v1780 = vpop.permute.xlu0 %1779
        %v1782 = vadd.f32 %v1776, %v1780
        %vm1783 = vcmp.ge.f32.partialorder %v1782, 0.0
        %v1784 = vmul.f32 %v1782, 0.01
        %v1785 = vsel %vm1783, %v1782, %v1784
        %v1786 = vld [vmem:[%s14] sm:$0xf]
        %v1787 = vpack.c.bf16 %v1785, %v1785
        %v1788 = vld [vmem:[%s13] sm:$0x3]
        %1789 = vrot.lane.b32.xlu0 %v1785, 127
        %v1790 = vpop.permute.xlu0 %1789
        %v1791 = vpack.c.bf16 %v1790, %v1790
        %s1792 = scalar_lea.vmem %s13, 2
        %v1793 = vld [vmem:[%s1792] sm:$0x3]
        %v1795 = vsel %vm633, %v1793, 0
        %v1798 = vsel %vm637, %v1791, 0
        %1800 = vmatprep.subr.bf16.mxu0 0
        %1801 = vmatpush1.bf16.msra.mxu0 0
        %1802 = vmatprep.subr.bf16.mxu0 0
        %1803 = vmatpush1.bf16.msra.mxu0 0
        %1804 = vmatprep.subr.bf16.mxu0 0
        %1805 = vmatpush1.bf16.msra.mxu0 0
        %1806 = vmatprep.subr.bf16.mxu0 0
        %1807 = vmatpush1.bf16.msra.mxu0 0
        %1808 = vmatprep.subr.bf16.mxu0 0
        %1809 = vmatpush1.bf16.msra.mxu0 0
        %1810 = vmatprep.subr.bf16.mxu0 0
        %1811 = vmatpush1.bf16.msra.mxu0 0
        %1812 = vmatprep.subr.bf16.mxu0 0
        %1813 = vmatpush1.bf16.msra.mxu0 0
        %1814 = vmatprep.subr.bf16.mxu0 0
        %1815 = vmatpush1.bf16.msra.mxu0 %v1798
        %1816 = vmatprep.subr.bf16.mxu0 0
        %1817 = vmatpush2.bf16.msra.mxu0 0
        %1818 = vmatprep.subr.bf16.mxu0 0
        %1819 = vmatpush2.bf16.msra.mxu0 0
        %1820 = vmatprep.subr.bf16.mxu0 0
        %1821 = vmatpush2.bf16.msra.mxu0 0
        %1822 = vmatprep.subr.bf16.mxu0 0
        %1823 = vmatpush2.bf16.msra.mxu0 0
        %1824 = vmatprep.subr.bf16.mxu0 0
        %1825 = vmatpush2.bf16.msra.mxu0 0
        %1826 = vmatprep.subr.bf16.mxu0 0
        %1827 = vmatpush2.bf16.msra.mxu0 0
        %1828 = vmatprep.subr.bf16.mxu0 0
        %1829 = vmatpush2.bf16.msra.mxu0 0
        %1830 = vmatprep.subr.bf16.mxu0 0
        %1831 = vmatpush2.bf16.msra.mxu0 0
        %1832 = vmatprep.mubr.bf16.mxu0 0
        %1833 = vmatmul.mubr.bf16.gmra.mxu0 %v1795
        %v1834 = vpop.f32.mrf.mxu0
        %v1835 = vadd.f32 0.0, %v1834
        %v1836 = vpop.f32.mrf.mxu0
        %v1837 = vpop.f32.mrf.mxu0
        %v1838 = vpop.f32.mrf.mxu0
        %1839 = vdwg.mxu0
        %v1841 = vsel %vm633, %v1788, 0
        %v1844 = vsel %vm637, %v1787, 0
        %1846 = vmatprep.subr.bf16.mxu0 0
        %1847 = vmatpush1.bf16.msra.mxu0 0
        %1848 = vmatprep.subr.bf16.mxu0 0
        %1849 = vmatpush1.bf16.msra.mxu0 0
        %1850 = vmatprep.subr.bf16.mxu0 0
        %1851 = vmatpush1.bf16.msra.mxu0 0
        %1852 = vmatprep.subr.bf16.mxu0 0
        %1853 = vmatpush1.bf16.msra.mxu0 0
        %1854 = vmatprep.subr.bf16.mxu0 0
        %1855 = vmatpush1.bf16.msra.mxu0 0
        %1856 = vmatprep.subr.bf16.mxu0 0
        %1857 = vmatpush1.bf16.msra.mxu0 0
        %1858 = vmatprep.subr.bf16.mxu0 0
        %1859 = vmatpush1.bf16.msra.mxu0 0
        %1860 = vmatprep.subr.bf16.mxu0 0
        %1861 = vmatpush1.bf16.msra.mxu0 %v1844
        %1862 = vmatprep.subr.bf16.mxu0 0
        %1863 = vmatpush2.bf16.msra.mxu0 0
        %1864 = vmatprep.subr.bf16.mxu0 0
        %1865 = vmatpush2.bf16.msra.mxu0 0
        %1866 = vmatprep.subr.bf16.mxu0 0
        %1867 = vmatpush2.bf16.msra.mxu0 0
        %1868 = vmatprep.subr.bf16.mxu0 0
        %1869 = vmatpush2.bf16.msra.mxu0 0
        %1870 = vmatprep.subr.bf16.mxu0 0
        %1871 = vmatpush2.bf16.msra.mxu0 0
        %1872 = vmatprep.subr.bf16.mxu0 0
        %1873 = vmatpush2.bf16.msra.mxu0 0
        %1874 = vmatprep.subr.bf16.mxu0 0
        %1875 = vmatpush2.bf16.msra.mxu0 0
        %1876 = vmatprep.subr.bf16.mxu0 0
        %1877 = vmatpush2.bf16.msra.mxu0 0
        %1878 = vmatprep.mubr.bf16.mxu0 0
        %1879 = vmatmul.mubr.bf16.gmra.mxu0 %v1841
        %v1880 = vpop.f32.mrf.mxu0
        %v1881 = vadd.f32 %v1835, %v1880
        %v1882 = vpop.f32.mrf.mxu0
        %v1883 = vpop.f32.mrf.mxu0
        %v1884 = vpop.f32.mrf.mxu0
        %1885 = vdwg.mxu0
        %1886 = vrot.lane.b32.xlu0 %v1785, 126
        %v1887 = vpop.permute.xlu0 %1886
        %v1888 = vpack.c.bf16 %v1887, %v1887
        %s1889 = scalar_lea.vmem %s13, 4
        %v1890 = vld [vmem:[%s1889] sm:$0x3]
        %v1892 = vsel %vm633, %v1890, 0
        %v1895 = vsel %vm637, %v1888, 0
        %1897 = vmatprep.subr.bf16.mxu0 0
        %1898 = vmatpush1.bf16.msra.mxu0 0
        %1899 = vmatprep.subr.bf16.mxu0 0
        %1900 = vmatpush1.bf16.msra.mxu0 0
        %1901 = vmatprep.subr.bf16.mxu0 0
        %1902 = vmatpush1.bf16.msra.mxu0 0
        %1903 = vmatprep.subr.bf16.mxu0 0
        %1904 = vmatpush1.bf16.msra.mxu0 0
        %1905 = vmatprep.subr.bf16.mxu0 0
        %1906 = vmatpush1.bf16.msra.mxu0 0
        %1907 = vmatprep.subr.bf16.mxu0 0
        %1908 = vmatpush1.bf16.msra.mxu0 0
        %1909 = vmatprep.subr.bf16.mxu0 0
        %1910 = vmatpush1.bf16.msra.mxu0 0
        %1911 = vmatprep.subr.bf16.mxu0 0
        %1912 = vmatpush1.bf16.msra.mxu0 %v1895
        %1913 = vmatprep.subr.bf16.mxu0 0
        %1914 = vmatpush2.bf16.msra.mxu0 0
        %1915 = vmatprep.subr.bf16.mxu0 0
        %1916 = vmatpush2.bf16.msra.mxu0 0
        %1917 = vmatprep.subr.bf16.mxu0 0
        %1918 = vmatpush2.bf16.msra.mxu0 0
        %1919 = vmatprep.subr.bf16.mxu0 0
        %1920 = vmatpush2.bf16.msra.mxu0 0
        %1921 = vmatprep.subr.bf16.mxu0 0
        %1922 = vmatpush2.bf16.msra.mxu0 0
        %1923 = vmatprep.subr.bf16.mxu0 0
        %1924 = vmatpush2.bf16.msra.mxu0 0
        %1925 = vmatprep.subr.bf16.mxu0 0
        %1926 = vmatpush2.bf16.msra.mxu0 0
        %1927 = vmatprep.subr.bf16.mxu0 0
        %1928 = vmatpush2.bf16.msra.mxu0 0
        %1929 = vmatprep.mubr.bf16.mxu0 0
        %1930 = vmatmul.mubr.bf16.gmra.mxu0 %v1892
        %v1931 = vpop.f32.mrf.mxu0
        %v1932 = vadd.f32 0.0, %v1931
        %v1933 = vpop.f32.mrf.mxu0
        %v1934 = vpop.f32.mrf.mxu0
        %v1935 = vpop.f32.mrf.mxu0
        %1936 = vdwg.mxu0
        %v1937 = vadd.f32 %v1881, %v1932
        %1939 = vset.pattern.permute.xlu0 0
        %1940 = vperm.xlu0 %1939, %v1786
        %v1941 = vpop.permute.xlu0 %1940
        %v1943 = vadd.f32 %v1937, %v1941
        %v1944 = vtanh.pop %v1943
        %1945 = vrot.lane.b32.xlu0 %v1944, 3
        %v1946 = vpop.permute.xlu0 %1945
        %v1947 = vadd.f32 %v1520, %v1946
        %v1948 = vld [vmem:[%s16] sm:$0xf]
        %v1949 = vpack.c.bf16 %v1520, %v1520
        %v1950 = vld [vmem:[%s15] sm:$0x3]
        %1951 = vrot.lane.b32.xlu0 %v1520, 127
        %v1952 = vpop.permute.xlu0 %1951
        %v1953 = vpack.c.bf16 %v1952, %v1952
        %s1954 = scalar_lea.vmem %s15, 2
        %v1955 = vld [vmem:[%s1954] sm:$0x3]
        %v1957 = vsel %vm633, %v1955, 0
        %v1960 = vsel %vm637, %v1953, 0
        %1962 = vmatprep.subr.bf16.mxu0 0
        %1963 = vmatpush1.bf16.msra.mxu0 0
        %1964 = vmatprep.subr.bf16.mxu0 0
        %1965 = vmatpush1.bf16.msra.mxu0 0
        %1966 = vmatprep.subr.bf16.mxu0 0
        %1967 = vmatpush1.bf16.msra.mxu0 0
        %1968 = vmatprep.subr.bf16.mxu0 0
        %1969 = vmatpush1.bf16.msra.mxu0 0
        %1970 = vmatprep.subr.bf16.mxu0 0
        %1971 = vmatpush1.bf16.msra.mxu0 0
        %1972 = vmatprep.subr.bf16.mxu0 0
        %1973 = vmatpush1.bf16.msra.mxu0 0
        %1974 = vmatprep.subr.bf16.mxu0 0
        %1975 = vmatpush1.bf16.msra.mxu0 0
        %1976 = vmatprep.subr.bf16.mxu0 0
        %1977 = vmatpush1.bf16.msra.mxu0 %v1960
        %1978 = vmatprep.subr.bf16.mxu0 0
        %1979 = vmatpush2.bf16.msra.mxu0 0
        %1980 = vmatprep.subr.bf16.mxu0 0
        %1981 = vmatpush2.bf16.msra.mxu0 0
        %1982 = vmatprep.subr.bf16.mxu0 0
        %1983 = vmatpush2.bf16.msra.mxu0 0
        %1984 = vmatprep.subr.bf16.mxu0 0
        %1985 = vmatpush2.bf16.msra.mxu0 0
        %1986 = vmatprep.subr.bf16.mxu0 0
        %1987 = vmatpush2.bf16.msra.mxu0 0
        %1988 = vmatprep.subr.bf16.mxu0 0
        %1989 = vmatpush2.bf16.msra.mxu0 0
        %1990 = vmatprep.subr.bf16.mxu0 0
        %1991 = vmatpush2.bf16.msra.mxu0 0
        %1992 = vmatprep.subr.bf16.mxu0 0
        %1993 = vmatpush2.bf16.msra.mxu0 0
        %1994 = vmatprep.mubr.bf16.mxu0 0
        %1995 = vmatmul.mubr.bf16.gmra.mxu0 %v1957
        %v1996 = vpop.f32.mrf.mxu0
        %v1997 = vadd.f32 0.0, %v1996
        %v1998 = vpop.f32.mrf.mxu0
        %v1999 = vpop.f32.mrf.mxu0
        %v2000 = vpop.f32.mrf.mxu0
        %2001 = vdwg.mxu0
        %v2003 = vsel %vm633, %v1950, 0
        %v2006 = vsel %vm637, %v1949, 0
        %2008 = vmatprep.subr.bf16.mxu0 0
        %2009 = vmatpush1.bf16.msra.mxu0 0
        %2010 = vmatprep.subr.bf16.mxu0 0
        %2011 = vmatpush1.bf16.msra.mxu0 0
        %2012 = vmatprep.subr.bf16.mxu0 0
        %2013 = vmatpush1.bf16.msra.mxu0 0
        %2014 = vmatprep.subr.bf16.mxu0 0
        %2015 = vmatpush1.bf16.msra.mxu0 0
        %2016 = vmatprep.subr.bf16.mxu0 0
        %2017 = vmatpush1.bf16.msra.mxu0 0
        %2018 = vmatprep.subr.bf16.mxu0 0
        %2019 = vmatpush1.bf16.msra.mxu0 0
        %2020 = vmatprep.subr.bf16.mxu0 0
        %2021 = vmatpush1.bf16.msra.mxu0 0
        %2022 = vmatprep.subr.bf16.mxu0 0
        %2023 = vmatpush1.bf16.msra.mxu0 %v2006
        %2024 = vmatprep.subr.bf16.mxu0 0
        %2025 = vmatpush2.bf16.msra.mxu0 0
        %2026 = vmatprep.subr.bf16.mxu0 0
        %2027 = vmatpush2.bf16.msra.mxu0 0
        %2028 = vmatprep.subr.bf16.mxu0 0
        %2029 = vmatpush2.bf16.msra.mxu0 0
        %2030 = vmatprep.subr.bf16.mxu0 0
        %2031 = vmatpush2.bf16.msra.mxu0 0
        %2032 = vmatprep.subr.bf16.mxu0 0
        %2033 = vmatpush2.bf16.msra.mxu0 0
        %2034 = vmatprep.subr.bf16.mxu0 0
        %2035 = vmatpush2.bf16.msra.mxu0 0
        %2036 = vmatprep.subr.bf16.mxu0 0
        %2037 = vmatpush2.bf16.msra.mxu0 0
        %2038 = vmatprep.subr.bf16.mxu0 0
        %2039 = vmatpush2.bf16.msra.mxu0 0
        %2040 = vmatprep.mubr.bf16.mxu0 0
        %2041 = vmatmul.mubr.bf16.gmra.mxu0 %v2003
        %v2042 = vpop.f32.mrf.mxu0
        %v2043 = vadd.f32 %v1997, %v2042
        %v2044 = vpop.f32.mrf.mxu0
        %v2045 = vpop.f32.mrf.mxu0
        %v2046 = vpop.f32.mrf.mxu0
        %2047 = vdwg.mxu0
        %2048 = vrot.lane.b32.xlu0 %v1520, 126
        %v2049 = vpop.permute.xlu0 %2048
        %v2050 = vpack.c.bf16 %v2049, %v2049
        %s2051 = scalar_lea.vmem %s15, 4
        %v2052 = vld [vmem:[%s2051] sm:$0x3]
        %v2054 = vsel %vm633, %v2052, 0
        %v2057 = vsel %vm637, %v2050, 0
        %2059 = vmatprep.subr.bf16.mxu0 0
        %2060 = vmatpush1.bf16.msra.mxu0 0
        %2061 = vmatprep.subr.bf16.mxu0 0
        %2062 = vmatpush1.bf16.msra.mxu0 0
        %2063 = vmatprep.subr.bf16.mxu0 0
        %2064 = vmatpush1.bf16.msra.mxu0 0
        %2065 = vmatprep.subr.bf16.mxu0 0
        %2066 = vmatpush1.bf16.msra.mxu0 0
        %2067 = vmatprep.subr.bf16.mxu0 0
        %2068 = vmatpush1.bf16.msra.mxu0 0
        %2069 = vmatprep.subr.bf16.mxu0 0
        %2070 = vmatpush1.bf16.msra.mxu0 0
        %2071 = vmatprep.subr.bf16.mxu0 0
        %2072 = vmatpush1.bf16.msra.mxu0 0
        %2073 = vmatprep.subr.bf16.mxu0 0
        %2074 = vmatpush1.bf16.msra.mxu0 %v2057
        %2075 = vmatprep.subr.bf16.mxu0 0
        %2076 = vmatpush2.bf16.msra.mxu0 0
        %2077 = vmatprep.subr.bf16.mxu0 0
        %2078 = vmatpush2.bf16.msra.mxu0 0
        %2079 = vmatprep.subr.bf16.mxu0 0
        %2080 = vmatpush2.bf16.msra.mxu0 0
        %2081 = vmatprep.subr.bf16.mxu0 0
        %2082 = vmatpush2.bf16.msra.mxu0 0
        %2083 = vmatprep.subr.bf16.mxu0 0
        %2084 = vmatpush2.bf16.msra.mxu0 0
        %2085 = vmatprep.subr.bf16.mxu0 0
        %2086 = vmatpush2.bf16.msra.mxu0 0
        %2087 = vmatprep.subr.bf16.mxu0 0
        %2088 = vmatpush2.bf16.msra.mxu0 0
        %2089 = vmatprep.subr.bf16.mxu0 0
        %2090 = vmatpush2.bf16.msra.mxu0 0
        %2091 = vmatprep.mubr.bf16.mxu0 0
        %2092 = vmatmul.mubr.bf16.gmra.mxu0 %v2054
        %v2093 = vpop.f32.mrf.mxu0
        %v2094 = vadd.f32 0.0, %v2093
        %v2095 = vpop.f32.mrf.mxu0
        %v2096 = vpop.f32.mrf.mxu0
        %v2097 = vpop.f32.mrf.mxu0
        %2098 = vdwg.mxu0
        %v2099 = vadd.f32 %v2043, %v2094
        %2100 = vrot.lane.b32.xlu0 %v1520, 125
        %v2101 = vpop.permute.xlu0 %2100
        %v2102 = vpack.c.bf16 %v2101, %v2101
        %s2103 = scalar_lea.vmem %s15, 6
        %v2104 = vld [vmem:[%s2103] sm:$0x3]
        %v2106 = vsel %vm633, %v2104, 0
        %v2109 = vsel %vm637, %v2102, 0
        %2111 = vmatprep.subr.bf16.mxu0 0
        %2112 = vmatpush1.bf16.msra.mxu0 0
        %2113 = vmatprep.subr.bf16.mxu0 0
        %2114 = vmatpush1.bf16.msra.mxu0 0
        %2115 = vmatprep.subr.bf16.mxu0 0
        %2116 = vmatpush1.bf16.msra.mxu0 0
        %2117 = vmatprep.subr.bf16.mxu0 0
        %2118 = vmatpush1.bf16.msra.mxu0 0
        %2119 = vmatprep.subr.bf16.mxu0 0
        %2120 = vmatpush1.bf16.msra.mxu0 0
        %2121 = vmatprep.subr.bf16.mxu0 0
        %2122 = vmatpush1.bf16.msra.mxu0 0
        %2123 = vmatprep.subr.bf16.mxu0 0
        %2124 = vmatpush1.bf16.msra.mxu0 0
        %2125 = vmatprep.subr.bf16.mxu0 0
        %2126 = vmatpush1.bf16.msra.mxu0 %v2109
        %2127 = vmatprep.subr.bf16.mxu0 0
        %2128 = vmatpush2.bf16.msra.mxu0 0
        %2129 = vmatprep.subr.bf16.mxu0 0
        %2130 = vmatpush2.bf16.msra.mxu0 0
        %2131 = vmatprep.subr.bf16.mxu0 0
        %2132 = vmatpush2.bf16.msra.mxu0 0
        %2133 = vmatprep.subr.bf16.mxu0 0
        %2134 = vmatpush2.bf16.msra.mxu0 0
        %2135 = vmatprep.subr.bf16.mxu0 0
        %2136 = vmatpush2.bf16.msra.mxu0 0
        %2137 = vmatprep.subr.bf16.mxu0 0
        %2138 = vmatpush2.bf16.msra.mxu0 0
        %2139 = vmatprep.subr.bf16.mxu0 0
        %2140 = vmatpush2.bf16.msra.mxu0 0
        %2141 = vmatprep.subr.bf16.mxu0 0
        %2142 = vmatpush2.bf16.msra.mxu0 0
        %2143 = vmatprep.mubr.bf16.mxu0 0
        %2144 = vmatmul.mubr.bf16.gmra.mxu0 %v2106
        %v2145 = vpop.f32.mrf.mxu0
        %v2146 = vadd.f32 0.0, %v2145
        %v2147 = vpop.f32.mrf.mxu0
        %v2148 = vpop.f32.mrf.mxu0
        %v2149 = vpop.f32.mrf.mxu0
        %2150 = vdwg.mxu0
        %v2151 = vadd.f32 %v2099, %v2146
        %2152 = vrot.lane.b32.xlu0 %v1520, 124
        %v2153 = vpop.permute.xlu0 %2152
        %v2154 = vpack.c.bf16 %v2153, %v2153
        %s2155 = scalar_lea.vmem %s15, 8
        %v2156 = vld [vmem:[%s2155] sm:$0x3]
        %v2158 = vsel %vm633, %v2156, 0
        %v2161 = vsel %vm637, %v2154, 0
        %2163 = vmatprep.subr.bf16.mxu0 0
        %2164 = vmatpush1.bf16.msra.mxu0 0
        %2165 = vmatprep.subr.bf16.mxu0 0
        %2166 = vmatpush1.bf16.msra.mxu0 0
        %2167 = vmatprep.subr.bf16.mxu0 0
        %2168 = vmatpush1.bf16.msra.mxu0 0
        %2169 = vmatprep.subr.bf16.mxu0 0
        %2170 = vmatpush1.bf16.msra.mxu0 0
        %2171 = vmatprep.subr.bf16.mxu0 0
        %2172 = vmatpush1.bf16.msra.mxu0 0
        %2173 = vmatprep.subr.bf16.mxu0 0
        %2174 = vmatpush1.bf16.msra.mxu0 0
        %2175 = vmatprep.subr.bf16.mxu0 0
        %2176 = vmatpush1.bf16.msra.mxu0 0
        %2177 = vmatprep.subr.bf16.mxu0 0
        %2178 = vmatpush1.bf16.msra.mxu0 %v2161
        %2179 = vmatprep.subr.bf16.mxu0 0
        %2180 = vmatpush2.bf16.msra.mxu0 0
        %2181 = vmatprep.subr.bf16.mxu0 0
        %2182 = vmatpush2.bf16.msra.mxu0 0
        %2183 = vmatprep.subr.bf16.mxu0 0
        %2184 = vmatpush2.bf16.msra.mxu0 0
        %2185 = vmatprep.subr.bf16.mxu0 0
        %2186 = vmatpush2.bf16.msra.mxu0 0
        %2187 = vmatprep.subr.bf16.mxu0 0
        %2188 = vmatpush2.bf16.msra.mxu0 0
        %2189 = vmatprep.subr.bf16.mxu0 0
        %2190 = vmatpush2.bf16.msra.mxu0 0
        %2191 = vmatprep.subr.bf16.mxu0 0
        %2192 = vmatpush2.bf16.msra.mxu0 0
        %2193 = vmatprep.subr.bf16.mxu0 0
        %2194 = vmatpush2.bf16.msra.mxu0 0
        %2195 = vmatprep.mubr.bf16.mxu0 0
        %2196 = vmatmul.mubr.bf16.gmra.mxu0 %v2158
        %v2197 = vpop.f32.mrf.mxu0
        %v2198 = vadd.f32 0.0, %v2197
        %v2199 = vpop.f32.mrf.mxu0
        %v2200 = vpop.f32.mrf.mxu0
        %v2201 = vpop.f32.mrf.mxu0
        %2202 = vdwg.mxu0
        %v2203 = vadd.f32 %v2151, %v2198
        %2205 = vset.pattern.permute.xlu0 0
        %2206 = vperm.xlu0 %2205, %v1948
        %v2207 = vpop.permute.xlu0 %2206
        %v2209 = vadd.f32 %v2203, %v2207
        %vm2210 = vcmp.ge.f32.partialorder %v2209, 0.0
        %v2211 = vmul.f32 %v2209, 0.01
        %v2212 = vsel %vm2210, %v2209, %v2211
        %v2213 = vld [vmem:[%s18] sm:$0xf]
        %v2214 = vpack.c.bf16 %v2212, %v2212
        %v2215 = vld [vmem:[%s17] sm:$0x3]
        %2216 = vrot.lane.b32.xlu0 %v2212, 127
        %v2217 = vpop.permute.xlu0 %2216
        %v2218 = vpack.c.bf16 %v2217, %v2217
        %s2219 = scalar_lea.vmem %s17, 2
        %v2220 = vld [vmem:[%s2219] sm:$0x3]
        %v2222 = vsel %vm633, %v2220, 0
        %v2225 = vsel %vm637, %v2218, 0
        %2227 = vmatprep.subr.bf16.mxu0 0
        %2228 = vmatpush1.bf16.msra.mxu0 0
        %2229 = vmatprep.subr.bf16.mxu0 0
        %2230 = vmatpush1.bf16.msra.mxu0 0
        %2231 = vmatprep.subr.bf16.mxu0 0
        %2232 = vmatpush1.bf16.msra.mxu0 0
        %2233 = vmatprep.subr.bf16.mxu0 0
        %2234 = vmatpush1.bf16.msra.mxu0 0
        %2235 = vmatprep.subr.bf16.mxu0 0
        %2236 = vmatpush1.bf16.msra.mxu0 0
        %2237 = vmatprep.subr.bf16.mxu0 0
        %2238 = vmatpush1.bf16.msra.mxu0 0
        %2239 = vmatprep.subr.bf16.mxu0 0
        %2240 = vmatpush1.bf16.msra.mxu0 0
        %2241 = vmatprep.subr.bf16.mxu0 0
        %2242 = vmatpush1.bf16.msra.mxu0 %v2225
        %2243 = vmatprep.subr.bf16.mxu0 0
        %2244 = vmatpush2.bf16.msra.mxu0 0
        %2245 = vmatprep.subr.bf16.mxu0 0
        %2246 = vmatpush2.bf16.msra.mxu0 0
        %2247 = vmatprep.subr.bf16.mxu0 0
        %2248 = vmatpush2.bf16.msra.mxu0 0
        %2249 = vmatprep.subr.bf16.mxu0 0
        %2250 = vmatpush2.bf16.msra.mxu0 0
        %2251 = vmatprep.subr.bf16.mxu0 0
        %2252 = vmatpush2.bf16.msra.mxu0 0
        %2253 = vmatprep.subr.bf16.mxu0 0
        %2254 = vmatpush2.bf16.msra.mxu0 0
        %2255 = vmatprep.subr.bf16.mxu0 0
        %2256 = vmatpush2.bf16.msra.mxu0 0
        %2257 = vmatprep.subr.bf16.mxu0 0
        %2258 = vmatpush2.bf16.msra.mxu0 0
        %2259 = vmatprep.mubr.bf16.mxu0 0
        %2260 = vmatmul.mubr.bf16.gmra.mxu0 %v2222
        %v2261 = vpop.f32.mrf.mxu0
        %v2262 = vadd.f32 0.0, %v2261
        %v2263 = vpop.f32.mrf.mxu0
        %v2264 = vpop.f32.mrf.mxu0
        %v2265 = vpop.f32.mrf.mxu0
        %2266 = vdwg.mxu0
        %v2268 = vsel %vm633, %v2215, 0
        %v2271 = vsel %vm637, %v2214, 0
        %2273 = vmatprep.subr.bf16.mxu0 0
        %2274 = vmatpush1.bf16.msra.mxu0 0
        %2275 = vmatprep.subr.bf16.mxu0 0
        %2276 = vmatpush1.bf16.msra.mxu0 0
        %2277 = vmatprep.subr.bf16.mxu0 0
        %2278 = vmatpush1.bf16.msra.mxu0 0
        %2279 = vmatprep.subr.bf16.mxu0 0
        %2280 = vmatpush1.bf16.msra.mxu0 0
        %2281 = vmatprep.subr.bf16.mxu0 0
        %2282 = vmatpush1.bf16.msra.mxu0 0
        %2283 = vmatprep.subr.bf16.mxu0 0
        %2284 = vmatpush1.bf16.msra.mxu0 0
        %2285 = vmatprep.subr.bf16.mxu0 0
        %2286 = vmatpush1.bf16.msra.mxu0 0
        %2287 = vmatprep.subr.bf16.mxu0 0
        %2288 = vmatpush1.bf16.msra.mxu0 %v2271
        %2289 = vmatprep.subr.bf16.mxu0 0
        %2290 = vmatpush2.bf16.msra.mxu0 0
        %2291 = vmatprep.subr.bf16.mxu0 0
        %2292 = vmatpush2.bf16.msra.mxu0 0
        %2293 = vmatprep.subr.bf16.mxu0 0
        %2294 = vmatpush2.bf16.msra.mxu0 0
        %2295 = vmatprep.subr.bf16.mxu0 0
        %2296 = vmatpush2.bf16.msra.mxu0 0
        %2297 = vmatprep.subr.bf16.mxu0 0
        %2298 = vmatpush2.bf16.msra.mxu0 0
        %2299 = vmatprep.subr.bf16.mxu0 0
        %2300 = vmatpush2.bf16.msra.mxu0 0
        %2301 = vmatprep.subr.bf16.mxu0 0
        %2302 = vmatpush2.bf16.msra.mxu0 0
        %2303 = vmatprep.subr.bf16.mxu0 0
        %2304 = vmatpush2.bf16.msra.mxu0 0
        %2305 = vmatprep.mubr.bf16.mxu0 0
        %2306 = vmatmul.mubr.bf16.gmra.mxu0 %v2268
        %v2307 = vpop.f32.mrf.mxu0
        %v2308 = vadd.f32 %v2262, %v2307
        %v2309 = vpop.f32.mrf.mxu0
        %v2310 = vpop.f32.mrf.mxu0
        %v2311 = vpop.f32.mrf.mxu0
        %2312 = vdwg.mxu0
        %2313 = vrot.lane.b32.xlu0 %v2212, 126
        %v2314 = vpop.permute.xlu0 %2313
        %v2315 = vpack.c.bf16 %v2314, %v2314
        %s2316 = scalar_lea.vmem %s17, 4
        %v2317 = vld [vmem:[%s2316] sm:$0x3]
        %v2319 = vsel %vm633, %v2317, 0
        %v2322 = vsel %vm637, %v2315, 0
        %2324 = vmatprep.subr.bf16.mxu0 0
        %2325 = vmatpush1.bf16.msra.mxu0 0
        %2326 = vmatprep.subr.bf16.mxu0 0
        %2327 = vmatpush1.bf16.msra.mxu0 0
        %2328 = vmatprep.subr.bf16.mxu0 0
        %2329 = vmatpush1.bf16.msra.mxu0 0
        %2330 = vmatprep.subr.bf16.mxu0 0
        %2331 = vmatpush1.bf16.msra.mxu0 0
        %2332 = vmatprep.subr.bf16.mxu0 0
        %2333 = vmatpush1.bf16.msra.mxu0 0
        %2334 = vmatprep.subr.bf16.mxu0 0
        %2335 = vmatpush1.bf16.msra.mxu0 0
        %2336 = vmatprep.subr.bf16.mxu0 0
        %2337 = vmatpush1.bf16.msra.mxu0 0
        %2338 = vmatprep.subr.bf16.mxu0 0
        %2339 = vmatpush1.bf16.msra.mxu0 %v2322
        %2340 = vmatprep.subr.bf16.mxu0 0
        %2341 = vmatpush2.bf16.msra.mxu0 0
        %2342 = vmatprep.subr.bf16.mxu0 0
        %2343 = vmatpush2.bf16.msra.mxu0 0
        %2344 = vmatprep.subr.bf16.mxu0 0
        %2345 = vmatpush2.bf16.msra.mxu0 0
        %2346 = vmatprep.subr.bf16.mxu0 0
        %2347 = vmatpush2.bf16.msra.mxu0 0
        %2348 = vmatprep.subr.bf16.mxu0 0
        %2349 = vmatpush2.bf16.msra.mxu0 0
        %2350 = vmatprep.subr.bf16.mxu0 0
        %2351 = vmatpush2.bf16.msra.mxu0 0
        %2352 = vmatprep.subr.bf16.mxu0 0
        %2353 = vmatpush2.bf16.msra.mxu0 0
        %2354 = vmatprep.subr.bf16.mxu0 0
        %2355 = vmatpush2.bf16.msra.mxu0 0
        %2356 = vmatprep.mubr.bf16.mxu0 0
        %2357 = vmatmul.mubr.bf16.gmra.mxu0 %v2319
        %v2358 = vpop.f32.mrf.mxu0
        %v2359 = vadd.f32 0.0, %v2358
        %v2360 = vpop.f32.mrf.mxu0
        %v2361 = vpop.f32.mrf.mxu0
        %v2362 = vpop.f32.mrf.mxu0
        %2363 = vdwg.mxu0
        %v2364 = vadd.f32 %v2308, %v2359
        %2366 = vset.pattern.permute.xlu0 0
        %2367 = vperm.xlu0 %2366, %v2213
        %v2368 = vpop.permute.xlu0 %2367
        %v2370 = vadd.f32 %v2364, %v2368
        %v2371 = vtanh.pop %v2370
        %2372 = vrot.lane.b32.xlu0 %v2371, 3
        %v2373 = vpop.permute.xlu0 %2372
        %v2374 = vsub.f32 %v1502, %v2373
        %v2376 = vrot.slane %v2374, 4
        %vm2378 = vcmask 1043456
        %v2379 = vsel %vm2378, %v1947, %v2376
        %2380 = vst [vmem:[%s606] sm:$0xff] %v2379
        %s2381 = sand.u32 %s450, 1
        %s2382 = scalar_lea.sflag [#allocation3], %s2381
        %s2383 = sand.u32 %s450, 1
        %s2384 = smul.addr %s2383, 8
        %s2385 = scalar_lea.vmem [#allocation2], %s2384
        // Predicated region
        $region97: #{tpu_custom_call.1} parent=95 // pred_check
          %p2386 = pneg %p460
        $region98: #{tpu_custom_call.1} parent=95 // pred_check_branch
          %2388 = sbr.rel (%p2386) target = $region100
        $region99: #{tpu_custom_call.1} parent=95 // pred_region
          %s2390 = ssub.s32 128, 128
          %2391 = vsyncadd %s2382, %s2390
          %s2392 = smul.addr %s33, 128
          %s2393 = scalar_lea.hbm %s19, %s2392
          %s2395 = sshll.u32 %s2385, 4
          %s2396 = int_to_ptr.vmem [resolvable:$true] %s2395
          %2398 = dma.vmem_to_hbm [thread:$0]  %s2396, 128, %s2393, %s2382
        $region100: #{tpu_custom_call.1} parent=95 // pred_fallthru
          _
      $region96: #{tpu_custom_call.1} parent=5 // pred_fallthru
        _
      %p2399 = scmp.le.s32.totalorder 2, %s28
      // Predicated region
      $region101: #{tpu_custom_call.1} parent=5 // pred_check
        %p2400 = pneg %p2399
      $region102: #{tpu_custom_call.1} parent=5 // pred_check_branch
        %2402 = sbr.rel (%p2400) target = $region104
      $region103: #{tpu_custom_call.1} parent=5 // pred_region
        %s2403 = ssub.s32 %s28, 2
        // Predicated region
        $region105: #{tpu_custom_call.1} parent=103 // pred_check
          %p2404 = pneg %p466
        $region106: #{tpu_custom_call.1} parent=103 // pred_check_branch
          %2406 = sbr.rel (%p2404) target = $region108
        $region107: #{tpu_custom_call.1} parent=103 // pred_region
          %s2407 = sand.u32 %s451, 1
          %s2408 = scalar_lea.sflag [#allocation3], %s2407
          %s2409 = sand.u32 %s451, 1
          %s2410 = smul.addr %s2409, 8
          %s2411 = scalar_lea.vmem [#allocation2], %s2410
          %2412 = dma.done %s2408, 128
        $region108: #{tpu_custom_call.1} parent=103 // pred_fallthru
          _
      $region104: #{tpu_custom_call.1} parent=5 // pred_fallthru
        _
    $region6: #{tpu_custom_call.1} parent=1 // loop_footer
      %s32 = sadd.s32 1, %s28
    $region7: #{tpu_custom_call.1} parent=1 // loop_footer_branch
      %27 = sbr.rel target = $region3
    $region8: #{tpu_custom_call.1} parent=1 // loop_exit
      _
    %2413 = vsyncpa [#allocation3], 1
    %s2414 = scalar_lea.sflag [#allocation3], 1
    %2415 = vsyncpa %s2414, 1

</llo_original>
